<compile_context>
chip_gen: v7x
topology: tpu7x:2x2x1
jax: 0.10.0
libtpu: 0.0.40
codegen_flags: <defaults>
</compile_context>

<pallas_src>
import functools

import jax
import jax.numpy as jnp
from jax.experimental import pallas as pl
from jax.experimental.pallas import tpu as pltpu

_LANE = 128


def _next_word_kernel(tok_ref,        # SMEM (B*T,) int32, t-major (scalar prefetch)
                      emb_ref,        # HBM  (V, E) f32 (memory_space=pl.ANY)
                      w1_ref,         # VMEM (T, E, H) f32
                      b1_ref,         # VMEM (1, H) f32
                      w2_ref,         # VMEM (H, vt) bf16/f32 vocab tile
                      b2_ref,         # VMEM (1, vt) f32 vocab tile
                      o_ref,          # VMEM (B, vt) out tile
                      x_scratch,      # VMEM (B*T, E) f32 gathered embeddings
                      h_scratch,      # VMEM (B, H) f32 cached hidden activation
                      gather_sem,     # DMA sems (B*T,)
                      *, activation, B, T, E, cache_hidden):
    H = w1_ref.shape[-1]

    def compute_hidden():
        # Fused embedding gather: DMA the B*T needed rows from the HBM table.
        # Row order is t-major (i = t*B + b) so each t-block is contiguous.
        copies = []
        for i in range(B * T):
            cp = pltpu.make_async_copy(
                emb_ref.at[pl.ds(tok_ref[i], 1), :],
                x_scratch.at[pl.ds(i, 1), :],
                gather_sem.at[i])
            cp.start()
            copies.append(cp)
        for cp in copies:
            cp.wait()
        # lin1: x.view(B, -1) @ w1 + b1  ==  sum_t emb_t @ w1[t]  (no reshape).
        h = jnp.zeros((B, H), jnp.float32)
        for t in range(T):
            h = h + jnp.dot(x_scratch[pl.ds(t * B, B), :], w1_ref[t],
                            preferred_element_type=jnp.float32)
        h = h + b1_ref[...]
        if activation == "ReLU":
            h = jnp.maximum(h, 0.0)
        else:  # nn.Softmax(dim=-1) branch of the PyTorch module
            h = h - jnp.max(h, axis=-1, keepdims=True)
            e = jnp.exp(h)
            h = e / jnp.sum(e, axis=-1, keepdims=True)
        return h

    if cache_hidden:
        # "arbitrary" grid: step 0 computes h, later vocab tiles reuse it.
        @pl.when(pl.program_id(0) == 0)
        def _():
            h_scratch[...] = compute_hidden()
        h = h_scratch[...]
    else:
        # "parallel" grid (e.g. v7x megacore): each tile recomputes the tiny h.
        h = compute_hidden()

    # lin2 on this vocab tile: streamed w2 (bf16/f32), f32 MXU accumulation.
    out = jnp.dot(h.astype(w2_ref.dtype), w2_ref[...],
                  preferred_element_type=jnp.float32)
    o_ref[...] = (out + b2_ref[...]).astype(o_ref.dtype)


def prepare_params(params, *, num_vocab_tiles=2, w2_dtype=jnp.bfloat16):
    """One-time weight prep (no per-call padding / casting / HBM traffic).

    Pads the vocab axis to `num_vocab_tiles` lane-aligned tiles, casts w2 to
    the streaming dtype, and reshapes w1 to (T, E, H) for the fused gather.
    Use num_vocab_tiles=2 on v5e/v6e; 4 (with parallel_vocab_tiles=True) on v7x.
    """
    emb, w1, b1, w2, b2 = (params[k] for k in ("emb", "w1", "b1", "w2", "b2"))
    V, E = emb.shape
    K, H = w1.shape
    T = K // E
    vocab_tile = pl.cdiv(pl.cdiv(V, num_vocab_tiles), _LANE) * _LANE
    v_pad = vocab_tile * num_vocab_tiles
    w2_p = jnp.zeros((H, v_pad), w2_dtype).at[:, :V].set(w2.astype(w2_dtype))
    b2_p = jnp.zeros((1, v_pad), jnp.float32).at[:, :V].set(b2.astype(jnp.float32))
    return {
        "emb": emb.astype(jnp.float32),
        "w1": w1.reshape(T, E, H).astype(jnp.float32),
        "b1": b1.reshape(1, -1).astype(jnp.float32),
        "w2": w2_p,
        "b2": b2_p,
        "vocab_size": V,
        "emb_dim": E,
        "block_size": T,
        "hidden": H,
        "vocab_tile": vocab_tile,
        "num_vocab_tiles": num_vocab_tiles,
    }


def next_word_forward(x_tokens, prepared, *, activation="ReLU",
                      out_dtype=jnp.float32, parallel_vocab_tiles=False):
    """Forward pass equivalent to NextWord.forward. Returns (B, V) logits."""
    emb, w1, b1, w2, b2 = (prepared[k] for k in ("emb", "w1", "b1", "w2", "b2"))
    V = prepared["vocab_size"]
    E = prepared["emb_dim"]
    vt = prepared["vocab_tile"]
    nt = prepared["num_vocab_tiles"]
    T, _, H = w1.shape
    B, T_in = x_tokens.shape
    assert T_in == T, "token sequence length must equal block_size"
    v_pad = vt * nt

    # t-major flattening: flat index i = t*B + b, matching the kernel's gather.
    tok_flat = x_tokens.T.reshape(-1).astype(jnp.int32)

    cache_hidden = not parallel_vocab_tiles
    kernel = functools.partial(_next_word_kernel, activation=activation,
                               B=B, T=T, E=E, cache_hidden=cache_hidden)

    flops = 2 * B * (T * E * H + H * v_pad)
    bytes_accessed = (w2.size * w2.dtype.itemsize            # streamed vocab weights
                      + b2.size * 4
                      + B * v_pad * jnp.dtype(out_dtype).itemsize
                      + w1.size * 4 + b1.size * 4
                      + B * T * (E * 4 + 4))                  # gathered emb rows + ids

    padded = pl.pallas_call(
        kernel,
        out_shape=jax.ShapeDtypeStruct((B, v_pad), out_dtype),
        grid_spec=pltpu.PrefetchScalarGridSpec(
            num_scalar_prefetch=1,              # token ids -> SMEM
            grid=(nt,),
            in_specs=[
                pl.BlockSpec(memory_space=pl.ANY),                  # emb stays in HBM
                pl.BlockSpec((T, E, H), lambda j, tok: (0, 0, 0)),  # w1 (whole)
                pl.BlockSpec((1, H), lambda j, tok: (0, 0)),        # b1 (whole)
                pl.BlockSpec((H, vt), lambda j, tok: (0, j)),       # w2 vocab tile
                pl.BlockSpec((1, vt), lambda j, tok: (0, j)),       # b2 vocab tile
            ],
            # Padded output: every tile is lane-aligned -> unmasked writeback.
            out_specs=pl.BlockSpec((B, vt), lambda j, tok: (0, j)),
            scratch_shapes=[
                pltpu.VMEM((B * T, E), jnp.float32),   # gathered embedding rows
                pltpu.VMEM((B, H), jnp.float32),       # cached hidden activation
                pltpu.SemaphoreType.DMA((B * T,)),     # one sem per gather DMA
            ],
        ),
        compiler_params=pltpu.CompilerParams(
            dimension_semantics=(("parallel",) if parallel_vocab_tiles
                                 else ("arbitrary",)),
            vmem_limit_bytes=32 * 1024 * 1024,
        ),
        cost_estimate=pl.CostEstimate(
            flops=flops,
            transcendentals=(0 if activation == "ReLU" else B * H),
            bytes_accessed=bytes_accessed),
    )(tok_flat, emb, w1, b1, w2, b2)

    # Trim the lane padding; downstream code may also consume the padded slab.
    return padded[:, :V]


def init_params(key, block_size, vocab_size, emb_dim, hidden_size):
    """Deterministic synthetic parameter init (shapes match the torch module)."""
    k_emb, k_w1, k_b1, k_w2, k_b2 = jax.random.split(key, 5)
    fan1 = block_size * emb_dim
    fan2 = hidden_size
    return {
        "emb": jax.random.normal(k_emb, (vocab_size, emb_dim), jnp.float32),
        "w1": jax.random.uniform(k_w1, (fan1, hidden_size), jnp.float32,
                                 -1.0 / fan1 ** 0.5, 1.0 / fan1 ** 0.5),
        "b1": jax.random.uniform(k_b1, (hidden_size,), jnp.float32,
                                 -1.0 / fan1 ** 0.5, 1.0 / fan1 ** 0.5),
        "w2": jax.random.uniform(k_w2, (hidden_size, vocab_size), jnp.float32,
                                 -1.0 / fan2 ** 0.5, 1.0 / fan2 ** 0.5),
        "b2": jax.random.uniform(k_b2, (vocab_size,), jnp.float32,
                                 -1.0 / fan2 ** 0.5, 1.0 / fan2 ** 0.5),
    }


def reference_forward(x_tokens, params, activation="ReLU"):
    e = jnp.take(params["emb"], x_tokens, axis=0)
    x = e.reshape(x_tokens.shape[0], -1)
    h = x @ params["w1"] + params["b1"]
    h = jnp.maximum(h, 0.0) if activation == "ReLU" else jax.nn.softmax(h, -1)
    return h @ params["w2"] + params["b2"]


if __name__ == "__main__":
    vocab_size = 20068
    block_size = 8     # sequence length T
    emb_dim = 16
    hidden_size = 32
    batch = 2

    key = jax.random.PRNGKey(0)
    k_params, k_tokens = jax.random.split(key)
    params = init_params(k_params, block_size, vocab_size, emb_dim, hidden_size)
    x_tokens = jax.random.randint(k_tokens, (batch, block_size), 0, vocab_size,
                                  dtype=jnp.int32)

    ref_relu = reference_forward(x_tokens, params, "ReLU")
    ref_soft = reference_forward(x_tokens, params, "Softmax")

    # 1) Tight validation of the fused kernel with f32 weights (ReLU branch).
    prep_f32 = prepare_params(params, w2_dtype=jnp.float32)
    out_f32 = jax.block_until_ready(
        next_word_forward(x_tokens, prep_f32, activation="ReLU"))
    assert out_f32.shape == (batch, vocab_size)
    assert jnp.allclose(out_f32, ref_relu, atol=5e-4, rtol=5e-4)

    # 2) Softmax activation branch (previously untested).
    out_sm = jax.block_until_ready(
        next_word_forward(x_tokens, prep_f32, activation="Softmax"))
    assert jnp.allclose(out_sm, ref_soft, atol=1e-3, rtol=1e-3)

    # 3) Optimized serving path: bf16-streamed w2, f32 MXU accumulation.
    prep_bf16 = prepare_params(params)  # default w2_dtype=bfloat16, nt=2
    out_bf16 = jax.block_until_ready(
        next_word_forward(x_tokens, prep_bf16, activation="ReLU"))
    assert out_bf16.shape == (batch, vocab_size)
    assert jnp.allclose(out_bf16, ref_relu, atol=3e-2, rtol=3e-2)

    # 4) v7x-style config: 4 vocab tiles, parallel grid (>=2 tiles per core),
    #    bf16 logits to halve output writeback. Correct on any generation.
    prep_v7 = prepare_params(params, num_vocab_tiles=4)
    out_v7 = jax.block_until_ready(
        next_word_forward(x_tokens, prep_v7, activation="ReLU",
                          out_dtype=jnp.bfloat16, parallel_vocab_tiles=True))
    assert out_v7.shape == (batch, vocab_size)
    assert out_v7.dtype == jnp.bfloat16
    assert jnp.allclose(out_v7.astype(jnp.float32), ref_relu, atol=5e-2, rtol=5e-2)

    print("KERNEL_OK")
</pallas_src>

<mosaic_0001>
module attributes {stable_mosaic.version = 11 : i64} {
  func.func @_next_word_kernel(%arg0: i32, %arg1: memref<16xi32, #tpu.memory_space<smem>>, %arg2: memref<20068x16xf32, #tpu.memory_space<any>>, %arg3: memref<8x16x32xf32, #tpu.memory_space<vmem>>, %arg4: memref<1x32xf32, #tpu.memory_space<vmem>>, %arg5: memref<32x10112xf32, #tpu.memory_space<vmem>>, %arg6: memref<1x10112xf32, #tpu.memory_space<vmem>>, %arg7: memref<2x10112xf32, #tpu.memory_space<vmem>>, %arg8: memref<16x16xf32, #tpu.memory_space<vmem>>, %arg9: memref<2x32xf32, #tpu.memory_space<vmem>>, %arg10: memref<16x!tpu.dma_semaphore, #tpu.memory_space<semaphore_mem>>) attributes {dimension_semantics = [#tpu.dimension_semantics<arbitrary>], iteration_bounds = array<i64: 2>, scalar_prefetch = 1 : i64, scratch_operands = 3 : i64, tpu.core_type = #tpu.core_type<tc>, window_params = [{}, {pipeline_mode = #tpu.pipeline_mode<synchronous>, transform_indices = @transform_1, window_bounds = array<i64: 8, 16, 32>}, {pipeline_mode = #tpu.pipeline_mode<synchronous>, transform_indices = @transform_2, window_bounds = array<i64: 1, 32>}, {transform_indices = @transform_3, window_bounds = array<i64: 32, 10112>}, {transform_indices = @transform_4, window_bounds = array<i64: 1, 10112>}, {transform_indices = @transform_5, window_bounds = array<i64: 2, 10112>}]} {
    %c0_i32 = arith.constant 0 : i32
    %0 = arith.cmpi eq, %arg0, %c0_i32 : i32
    %1 = arith.extui %0 : i1 to i32
    %c0_i32_0 = arith.constant 0 : i32
    %2 = arith.cmpi ne, %1, %c0_i32_0 : i32
    scf.if %2 {
      %c0_8 = arith.constant 0 : index
      %10 = memref.load %arg1[%c0_8] : memref<16xi32, #tpu.memory_space<smem>>
      %c0_i32_9 = arith.constant 0 : i32
      %c0_i32_10 = arith.constant 0 : i32
      %11 = tpu.memref_slice %arg2[%10, %c0_i32_10] : memref<20068x16xf32, #tpu.memory_space<any>> -> memref<1x16xf32, #tpu.memory_space<any>>
      %c0_i32_11 = arith.constant 0 : i32
      %c0_i32_12 = arith.constant 0 : i32
      %12 = tpu.memref_slice %arg8[%c0_i32_11, %c0_i32_12] : memref<16x16xf32, #tpu.memory_space<vmem>> -> memref<1x16xf32, #tpu.memory_space<vmem>>
      %13 = tpu.memref_slice %arg10[%c0_i32_9] : memref<16x!tpu.dma_semaphore, #tpu.memory_space<semaphore_mem>> -> memref<1x!tpu.dma_semaphore, #tpu.memory_space<semaphore_mem>>
      %14 = tpu.memref_squeeze %13 : memref<1x!tpu.dma_semaphore, #tpu.memory_space<semaphore_mem>> -> memref<!tpu.dma_semaphore, #tpu.memory_space<semaphore_mem>>
      tpu.enqueue_dma source(%11 : memref<1x16xf32, #tpu.memory_space<any>>) target(%12 : memref<1x16xf32, #tpu.memory_space<vmem>>) target_semaphore(%14 : memref<!tpu.dma_semaphore, #tpu.memory_space<semaphore_mem>>)
      %c1 = arith.constant 1 : index
      %15 = memref.load %arg1[%c1] : memref<16xi32, #tpu.memory_space<smem>>
      %c1_i32 = arith.constant 1 : i32
      %c0_i32_13 = arith.constant 0 : i32
      %16 = tpu.memref_slice %arg2[%15, %c0_i32_13] : memref<20068x16xf32, #tpu.memory_space<any>> -> memref<1x16xf32, #tpu.memory_space<any>>
      %c1_i32_14 = arith.constant 1 : i32
      %c0_i32_15 = arith.constant 0 : i32
      %17 = tpu.memref_slice %arg8[%c1_i32_14, %c0_i32_15] : memref<16x16xf32, #tpu.memory_space<vmem>> -> memref<1x16xf32, #tpu.memory_space<vmem>>
      %18 = tpu.memref_slice %arg10[%c1_i32] : memref<16x!tpu.dma_semaphore, #tpu.memory_space<semaphore_mem>> -> memref<1x!tpu.dma_semaphore, #tpu.memory_space<semaphore_mem>>
      %19 = tpu.memref_squeeze %18 : memref<1x!tpu.dma_semaphore, #tpu.memory_space<semaphore_mem>> -> memref<!tpu.dma_semaphore, #tpu.memory_space<semaphore_mem>>
      tpu.enqueue_dma source(%16 : memref<1x16xf32, #tpu.memory_space<any>>) target(%17 : memref<1x16xf32, #tpu.memory_space<vmem>>) target_semaphore(%19 : memref<!tpu.dma_semaphore, #tpu.memory_space<semaphore_mem>>)
      %c2 = arith.constant 2 : index
      %20 = memref.load %arg1[%c2] : memref<16xi32, #tpu.memory_space<smem>>
      %c2_i32 = arith.constant 2 : i32
      %c0_i32_16 = arith.constant 0 : i32
      %21 = tpu.memref_slice %arg2[%20, %c0_i32_16] : memref<20068x16xf32, #tpu.memory_space<any>> -> memref<1x16xf32, #tpu.memory_space<any>>
      %c2_i32_17 = arith.constant 2 : i32
      %c0_i32_18 = arith.constant 0 : i32
      %22 = tpu.memref_slice %arg8[%c2_i32_17, %c0_i32_18] : memref<16x16xf32, #tpu.memory_space<vmem>> -> memref<1x16xf32, #tpu.memory_space<vmem>>
      %23 = tpu.memref_slice %arg10[%c2_i32] : memref<16x!tpu.dma_semaphore, #tpu.memory_space<semaphore_mem>> -> memref<1x!tpu.dma_semaphore, #tpu.memory_space<semaphore_mem>>
      %24 = tpu.memref_squeeze %23 : memref<1x!tpu.dma_semaphore, #tpu.memory_space<semaphore_mem>> -> memref<!tpu.dma_semaphore, #tpu.memory_space<semaphore_mem>>
      tpu.enqueue_dma source(%21 : memref<1x16xf32, #tpu.memory_space<any>>) target(%22 : memref<1x16xf32, #tpu.memory_space<vmem>>) target_semaphore(%24 : memref<!tpu.dma_semaphore, #tpu.memory_space<semaphore_mem>>)
      %c3 = arith.constant 3 : index
      %25 = memref.load %arg1[%c3] : memref<16xi32, #tpu.memory_space<smem>>
      %c3_i32 = arith.constant 3 : i32
      %c0_i32_19 = arith.constant 0 : i32
      %26 = tpu.memref_slice %arg2[%25, %c0_i32_19] : memref<20068x16xf32, #tpu.memory_space<any>> -> memref<1x16xf32, #tpu.memory_space<any>>
      %c3_i32_20 = arith.constant 3 : i32
      %c0_i32_21 = arith.constant 0 : i32
      %27 = tpu.memref_slice %arg8[%c3_i32_20, %c0_i32_21] : memref<16x16xf32, #tpu.memory_space<vmem>> -> memref<1x16xf32, #tpu.memory_space<vmem>>
      %28 = tpu.memref_slice %arg10[%c3_i32] : memref<16x!tpu.dma_semaphore, #tpu.memory_space<semaphore_mem>> -> memref<1x!tpu.dma_semaphore, #tpu.memory_space<semaphore_mem>>
      %29 = tpu.memref_squeeze %28 : memref<1x!tpu.dma_semaphore, #tpu.memory_space<semaphore_mem>> -> memref<!tpu.dma_semaphore, #tpu.memory_space<semaphore_mem>>
      tpu.enqueue_dma source(%26 : memref<1x16xf32, #tpu.memory_space<any>>) target(%27 : memref<1x16xf32, #tpu.memory_space<vmem>>) target_semaphore(%29 : memref<!tpu.dma_semaphore, #tpu.memory_space<semaphore_mem>>)
      %c4 = arith.constant 4 : index
      %30 = memref.load %arg1[%c4] : memref<16xi32, #tpu.memory_space<smem>>
      %c4_i32 = arith.constant 4 : i32
      %c0_i32_22 = arith.constant 0 : i32
      %31 = tpu.memref_slice %arg2[%30, %c0_i32_22] : memref<20068x16xf32, #tpu.memory_space<any>> -> memref<1x16xf32, #tpu.memory_space<any>>
      %c4_i32_23 = arith.constant 4 : i32
      %c0_i32_24 = arith.constant 0 : i32
      %32 = tpu.memref_slice %arg8[%c4_i32_23, %c0_i32_24] : memref<16x16xf32, #tpu.memory_space<vmem>> -> memref<1x16xf32, #tpu.memory_space<vmem>>
      %33 = tpu.memref_slice %arg10[%c4_i32] : memref<16x!tpu.dma_semaphore, #tpu.memory_space<semaphore_mem>> -> memref<1x!tpu.dma_semaphore, #tpu.memory_space<semaphore_mem>>
      %34 = tpu.memref_squeeze %33 : memref<1x!tpu.dma_semaphore, #tpu.memory_space<semaphore_mem>> -> memref<!tpu.dma_semaphore, #tpu.memory_space<semaphore_mem>>
      tpu.enqueue_dma source(%31 : memref<1x16xf32, #tpu.memory_space<any>>) target(%32 : memref<1x16xf32, #tpu.memory_space<vmem>>) target_semaphore(%34 : memref<!tpu.dma_semaphore, #tpu.memory_space<semaphore_mem>>)
      %c5 = arith.constant 5 : index
      %35 = memref.load %arg1[%c5] : memref<16xi32, #tpu.memory_space<smem>>
      %c5_i32 = arith.constant 5 : i32
      %c0_i32_25 = arith.constant 0 : i32
      %36 = tpu.memref_slice %arg2[%35, %c0_i32_25] : memref<20068x16xf32, #tpu.memory_space<any>> -> memref<1x16xf32, #tpu.memory_space<any>>
      %c5_i32_26 = arith.constant 5 : i32
      %c0_i32_27 = arith.constant 0 : i32
      %37 = tpu.memref_slice %arg8[%c5_i32_26, %c0_i32_27] : memref<16x16xf32, #tpu.memory_space<vmem>> -> memref<1x16xf32, #tpu.memory_space<vmem>>
      %38 = tpu.memref_slice %arg10[%c5_i32] : memref<16x!tpu.dma_semaphore, #tpu.memory_space<semaphore_mem>> -> memref<1x!tpu.dma_semaphore, #tpu.memory_space<semaphore_mem>>
      %39 = tpu.memref_squeeze %38 : memref<1x!tpu.dma_semaphore, #tpu.memory_space<semaphore_mem>> -> memref<!tpu.dma_semaphore, #tpu.memory_space<semaphore_mem>>
      tpu.enqueue_dma source(%36 : memref<1x16xf32, #tpu.memory_space<any>>) target(%37 : memref<1x16xf32, #tpu.memory_space<vmem>>) target_semaphore(%39 : memref<!tpu.dma_semaphore, #tpu.memory_space<semaphore_mem>>)
      %c6 = arith.constant 6 : index
      %40 = memref.load %arg1[%c6] : memref<16xi32, #tpu.memory_space<smem>>
      %c6_i32 = arith.constant 6 : i32
      %c0_i32_28 = arith.constant 0 : i32
      %41 = tpu.memref_slice %arg2[%40, %c0_i32_28] : memref<20068x16xf32, #tpu.memory_space<any>> -> memref<1x16xf32, #tpu.memory_space<any>>
      %c6_i32_29 = arith.constant 6 : i32
      %c0_i32_30 = arith.constant 0 : i32
      %42 = tpu.memref_slice %arg8[%c6_i32_29, %c0_i32_30] : memref<16x16xf32, #tpu.memory_space<vmem>> -> memref<1x16xf32, #tpu.memory_space<vmem>>
      %43 = tpu.memref_slice %arg10[%c6_i32] : memref<16x!tpu.dma_semaphore, #tpu.memory_space<semaphore_mem>> -> memref<1x!tpu.dma_semaphore, #tpu.memory_space<semaphore_mem>>
      %44 = tpu.memref_squeeze %43 : memref<1x!tpu.dma_semaphore, #tpu.memory_space<semaphore_mem>> -> memref<!tpu.dma_semaphore, #tpu.memory_space<semaphore_mem>>
      tpu.enqueue_dma source(%41 : memref<1x16xf32, #tpu.memory_space<any>>) target(%42 : memref<1x16xf32, #tpu.memory_space<vmem>>) target_semaphore(%44 : memref<!tpu.dma_semaphore, #tpu.memory_space<semaphore_mem>>)
      %c7 = arith.constant 7 : index
      %45 = memref.load %arg1[%c7] : memref<16xi32, #tpu.memory_space<smem>>
      %c7_i32 = arith.constant 7 : i32
      %c0_i32_31 = arith.constant 0 : i32
      %46 = tpu.memref_slice %arg2[%45, %c0_i32_31] : memref<20068x16xf32, #tpu.memory_space<any>> -> memref<1x16xf32, #tpu.memory_space<any>>
      %c7_i32_32 = arith.constant 7 : i32
      %c0_i32_33 = arith.constant 0 : i32
      %47 = tpu.memref_slice %arg8[%c7_i32_32, %c0_i32_33] : memref<16x16xf32, #tpu.memory_space<vmem>> -> memref<1x16xf32, #tpu.memory_space<vmem>>
      %48 = tpu.memref_slice %arg10[%c7_i32] : memref<16x!tpu.dma_semaphore, #tpu.memory_space<semaphore_mem>> -> memref<1x!tpu.dma_semaphore, #tpu.memory_space<semaphore_mem>>
      %49 = tpu.memref_squeeze %48 : memref<1x!tpu.dma_semaphore, #tpu.memory_space<semaphore_mem>> -> memref<!tpu.dma_semaphore, #tpu.memory_space<semaphore_mem>>
      tpu.enqueue_dma source(%46 : memref<1x16xf32, #tpu.memory_space<any>>) target(%47 : memref<1x16xf32, #tpu.memory_space<vmem>>) target_semaphore(%49 : memref<!tpu.dma_semaphore, #tpu.memory_space<semaphore_mem>>)
      %c8 = arith.constant 8 : index
      %50 = memref.load %arg1[%c8] : memref<16xi32, #tpu.memory_space<smem>>
      %c8_i32 = arith.constant 8 : i32
      %c0_i32_34 = arith.constant 0 : i32
      %51 = tpu.memref_slice %arg2[%50, %c0_i32_34] : memref<20068x16xf32, #tpu.memory_space<any>> -> memref<1x16xf32, #tpu.memory_space<any>>
      %c8_i32_35 = arith.constant 8 : i32
      %c0_i32_36 = arith.constant 0 : i32
      %52 = tpu.memref_slice %arg8[%c8_i32_35, %c0_i32_36] : memref<16x16xf32, #tpu.memory_space<vmem>> -> memref<1x16xf32, #tpu.memory_space<vmem>>
      %53 = tpu.memref_slice %arg10[%c8_i32] : memref<16x!tpu.dma_semaphore, #tpu.memory_space<semaphore_mem>> -> memref<1x!tpu.dma_semaphore, #tpu.memory_space<semaphore_mem>>
      %54 = tpu.memref_squeeze %53 : memref<1x!tpu.dma_semaphore, #tpu.memory_space<semaphore_mem>> -> memref<!tpu.dma_semaphore, #tpu.memory_space<semaphore_mem>>
      tpu.enqueue_dma source(%51 : memref<1x16xf32, #tpu.memory_space<any>>) target(%52 : memref<1x16xf32, #tpu.memory_space<vmem>>) target_semaphore(%54 : memref<!tpu.dma_semaphore, #tpu.memory_space<semaphore_mem>>)
      %c9 = arith.constant 9 : index
      %55 = memref.load %arg1[%c9] : memref<16xi32, #tpu.memory_space<smem>>
      %c9_i32 = arith.constant 9 : i32
      %c0_i32_37 = arith.constant 0 : i32
      %56 = tpu.memref_slice %arg2[%55, %c0_i32_37] : memref<20068x16xf32, #tpu.memory_space<any>> -> memref<1x16xf32, #tpu.memory_space<any>>
      %c9_i32_38 = arith.constant 9 : i32
      %c0_i32_39 = arith.constant 0 : i32
      %57 = tpu.memref_slice %arg8[%c9_i32_38, %c0_i32_39] : memref<16x16xf32, #tpu.memory_space<vmem>> -> memref<1x16xf32, #tpu.memory_space<vmem>>
      %58 = tpu.memref_slice %arg10[%c9_i32] : memref<16x!tpu.dma_semaphore, #tpu.memory_space<semaphore_mem>> -> memref<1x!tpu.dma_semaphore, #tpu.memory_space<semaphore_mem>>
      %59 = tpu.memref_squeeze %58 : memref<1x!tpu.dma_semaphore, #tpu.memory_space<semaphore_mem>> -> memref<!tpu.dma_semaphore, #tpu.memory_space<semaphore_mem>>
      tpu.enqueue_dma source(%56 : memref<1x16xf32, #tpu.memory_space<any>>) target(%57 : memref<1x16xf32, #tpu.memory_space<vmem>>) target_semaphore(%59 : memref<!tpu.dma_semaphore, #tpu.memory_space<semaphore_mem>>)
      %c10 = arith.constant 10 : index
      %60 = memref.load %arg1[%c10] : memref<16xi32, #tpu.memory_space<smem>>
      %c10_i32 = arith.constant 10 : i32
      %c0_i32_40 = arith.constant 0 : i32
      %61 = tpu.memref_slice %arg2[%60, %c0_i32_40] : memref<20068x16xf32, #tpu.memory_space<any>> -> memref<1x16xf32, #tpu.memory_space<any>>
      %c10_i32_41 = arith.constant 10 : i32
      %c0_i32_42 = arith.constant 0 : i32
      %62 = tpu.memref_slice %arg8[%c10_i32_41, %c0_i32_42] : memref<16x16xf32, #tpu.memory_space<vmem>> -> memref<1x16xf32, #tpu.memory_space<vmem>>
      %63 = tpu.memref_slice %arg10[%c10_i32] : memref<16x!tpu.dma_semaphore, #tpu.memory_space<semaphore_mem>> -> memref<1x!tpu.dma_semaphore, #tpu.memory_space<semaphore_mem>>
      %64 = tpu.memref_squeeze %63 : memref<1x!tpu.dma_semaphore, #tpu.memory_space<semaphore_mem>> -> memref<!tpu.dma_semaphore, #tpu.memory_space<semaphore_mem>>
      tpu.enqueue_dma source(%61 : memref<1x16xf32, #tpu.memory_space<any>>) target(%62 : memref<1x16xf32, #tpu.memory_space<vmem>>) target_semaphore(%64 : memref<!tpu.dma_semaphore, #tpu.memory_space<semaphore_mem>>)
      %c11 = arith.constant 11 : index
      %65 = memref.load %arg1[%c11] : memref<16xi32, #tpu.memory_space<smem>>
      %c11_i32 = arith.constant 11 : i32
      %c0_i32_43 = arith.constant 0 : i32
      %66 = tpu.memref_slice %arg2[%65, %c0_i32_43] : memref<20068x16xf32, #tpu.memory_space<any>> -> memref<1x16xf32, #tpu.memory_space<any>>
      %c11_i32_44 = arith.constant 11 : i32
      %c0_i32_45 = arith.constant 0 : i32
      %67 = tpu.memref_slice %arg8[%c11_i32_44, %c0_i32_45] : memref<16x16xf32, #tpu.memory_space<vmem>> -> memref<1x16xf32, #tpu.memory_space<vmem>>
      %68 = tpu.memref_slice %arg10[%c11_i32] : memref<16x!tpu.dma_semaphore, #tpu.memory_space<semaphore_mem>> -> memref<1x!tpu.dma_semaphore, #tpu.memory_space<semaphore_mem>>
      %69 = tpu.memref_squeeze %68 : memref<1x!tpu.dma_semaphore, #tpu.memory_space<semaphore_mem>> -> memref<!tpu.dma_semaphore, #tpu.memory_space<semaphore_mem>>
      tpu.enqueue_dma source(%66 : memref<1x16xf32, #tpu.memory_space<any>>) target(%67 : memref<1x16xf32, #tpu.memory_space<vmem>>) target_semaphore(%69 : memref<!tpu.dma_semaphore, #tpu.memory_space<semaphore_mem>>)
      %c12 = arith.constant 12 : index
      %70 = memref.load %arg1[%c12] : memref<16xi32, #tpu.memory_space<smem>>
      %c12_i32 = arith.constant 12 : i32
      %c0_i32_46 = arith.constant 0 : i32
      %71 = tpu.memref_slice %arg2[%70, %c0_i32_46] : memref<20068x16xf32, #tpu.memory_space<any>> -> memref<1x16xf32, #tpu.memory_space<any>>
      %c12_i32_47 = arith.constant 12 : i32
      %c0_i32_48 = arith.constant 0 : i32
      %72 = tpu.memref_slice %arg8[%c12_i32_47, %c0_i32_48] : memref<16x16xf32, #tpu.memory_space<vmem>> -> memref<1x16xf32, #tpu.memory_space<vmem>>
      %73 = tpu.memref_slice %arg10[%c12_i32] : memref<16x!tpu.dma_semaphore, #tpu.memory_space<semaphore_mem>> -> memref<1x!tpu.dma_semaphore, #tpu.memory_space<semaphore_mem>>
      %74 = tpu.memref_squeeze %73 : memref<1x!tpu.dma_semaphore, #tpu.memory_space<semaphore_mem>> -> memref<!tpu.dma_semaphore, #tpu.memory_space<semaphore_mem>>
      tpu.enqueue_dma source(%71 : memref<1x16xf32, #tpu.memory_space<any>>) target(%72 : memref<1x16xf32, #tpu.memory_space<vmem>>) target_semaphore(%74 : memref<!tpu.dma_semaphore, #tpu.memory_space<semaphore_mem>>)
      %c13 = arith.constant 13 : index
      %75 = memref.load %arg1[%c13] : memref<16xi32, #tpu.memory_space<smem>>
      %c13_i32 = arith.constant 13 : i32
      %c0_i32_49 = arith.constant 0 : i32
      %76 = tpu.memref_slice %arg2[%75, %c0_i32_49] : memref<20068x16xf32, #tpu.memory_space<any>> -> memref<1x16xf32, #tpu.memory_space<any>>
      %c13_i32_50 = arith.constant 13 : i32
      %c0_i32_51 = arith.constant 0 : i32
      %77 = tpu.memref_slice %arg8[%c13_i32_50, %c0_i32_51] : memref<16x16xf32, #tpu.memory_space<vmem>> -> memref<1x16xf32, #tpu.memory_space<vmem>>
      %78 = tpu.memref_slice %arg10[%c13_i32] : memref<16x!tpu.dma_semaphore, #tpu.memory_space<semaphore_mem>> -> memref<1x!tpu.dma_semaphore, #tpu.memory_space<semaphore_mem>>
      %79 = tpu.memref_squeeze %78 : memref<1x!tpu.dma_semaphore, #tpu.memory_space<semaphore_mem>> -> memref<!tpu.dma_semaphore, #tpu.memory_space<semaphore_mem>>
      tpu.enqueue_dma source(%76 : memref<1x16xf32, #tpu.memory_space<any>>) target(%77 : memref<1x16xf32, #tpu.memory_space<vmem>>) target_semaphore(%79 : memref<!tpu.dma_semaphore, #tpu.memory_space<semaphore_mem>>)
      %c14 = arith.constant 14 : index
      %80 = memref.load %arg1[%c14] : memref<16xi32, #tpu.memory_space<smem>>
      %c14_i32 = arith.constant 14 : i32
      %c0_i32_52 = arith.constant 0 : i32
      %81 = tpu.memref_slice %arg2[%80, %c0_i32_52] : memref<20068x16xf32, #tpu.memory_space<any>> -> memref<1x16xf32, #tpu.memory_space<any>>
      %c14_i32_53 = arith.constant 14 : i32
      %c0_i32_54 = arith.constant 0 : i32
      %82 = tpu.memref_slice %arg8[%c14_i32_53, %c0_i32_54] : memref<16x16xf32, #tpu.memory_space<vmem>> -> memref<1x16xf32, #tpu.memory_space<vmem>>
      %83 = tpu.memref_slice %arg10[%c14_i32] : memref<16x!tpu.dma_semaphore, #tpu.memory_space<semaphore_mem>> -> memref<1x!tpu.dma_semaphore, #tpu.memory_space<semaphore_mem>>
      %84 = tpu.memref_squeeze %83 : memref<1x!tpu.dma_semaphore, #tpu.memory_space<semaphore_mem>> -> memref<!tpu.dma_semaphore, #tpu.memory_space<semaphore_mem>>
      tpu.enqueue_dma source(%81 : memref<1x16xf32, #tpu.memory_space<any>>) target(%82 : memref<1x16xf32, #tpu.memory_space<vmem>>) target_semaphore(%84 : memref<!tpu.dma_semaphore, #tpu.memory_space<semaphore_mem>>)
      %c15 = arith.constant 15 : index
      %85 = memref.load %arg1[%c15] : memref<16xi32, #tpu.memory_space<smem>>
      %c15_i32 = arith.constant 15 : i32
      %c0_i32_55 = arith.constant 0 : i32
      %86 = tpu.memref_slice %arg2[%85, %c0_i32_55] : memref<20068x16xf32, #tpu.memory_space<any>> -> memref<1x16xf32, #tpu.memory_space<any>>
      %c15_i32_56 = arith.constant 15 : i32
      %c0_i32_57 = arith.constant 0 : i32
      %87 = tpu.memref_slice %arg8[%c15_i32_56, %c0_i32_57] : memref<16x16xf32, #tpu.memory_space<vmem>> -> memref<1x16xf32, #tpu.memory_space<vmem>>
      %88 = tpu.memref_slice %arg10[%c15_i32] : memref<16x!tpu.dma_semaphore, #tpu.memory_space<semaphore_mem>> -> memref<1x!tpu.dma_semaphore, #tpu.memory_space<semaphore_mem>>
      %89 = tpu.memref_squeeze %88 : memref<1x!tpu.dma_semaphore, #tpu.memory_space<semaphore_mem>> -> memref<!tpu.dma_semaphore, #tpu.memory_space<semaphore_mem>>
      tpu.enqueue_dma source(%86 : memref<1x16xf32, #tpu.memory_space<any>>) target(%87 : memref<1x16xf32, #tpu.memory_space<vmem>>) target_semaphore(%89 : memref<!tpu.dma_semaphore, #tpu.memory_space<semaphore_mem>>)
      %c0_i32_58 = arith.constant 0 : i32
      %c0_i32_59 = arith.constant 0 : i32
      %90 = tpu.memref_slice %arg2[%10, %c0_i32_59] : memref<20068x16xf32, #tpu.memory_space<any>> -> memref<1x16xf32, #tpu.memory_space<any>>
      %c0_i32_60 = arith.constant 0 : i32
      %c0_i32_61 = arith.constant 0 : i32
      %91 = tpu.memref_slice %arg8[%c0_i32_60, %c0_i32_61] : memref<16x16xf32, #tpu.memory_space<vmem>> -> memref<1x16xf32, #tpu.memory_space<vmem>>
      %92 = tpu.memref_slice %arg10[%c0_i32_58] : memref<16x!tpu.dma_semaphore, #tpu.memory_space<semaphore_mem>> -> memref<1x!tpu.dma_semaphore, #tpu.memory_space<semaphore_mem>>
      %93 = tpu.memref_squeeze %92 : memref<1x!tpu.dma_semaphore, #tpu.memory_space<semaphore_mem>> -> memref<!tpu.dma_semaphore, #tpu.memory_space<semaphore_mem>>
      tpu.wait_dma2 semaphore(%93 : memref<!tpu.dma_semaphore, #tpu.memory_space<semaphore_mem>>) src(%90 : memref<1x16xf32, #tpu.memory_space<any>>) dst(%91 : memref<1x16xf32, #tpu.memory_space<vmem>>)
      %c1_i32_62 = arith.constant 1 : i32
      %c0_i32_63 = arith.constant 0 : i32
      %94 = tpu.memref_slice %arg2[%15, %c0_i32_63] : memref<20068x16xf32, #tpu.memory_space<any>> -> memref<1x16xf32, #tpu.memory_space<any>>
      %c1_i32_64 = arith.constant 1 : i32
      %c0_i32_65 = arith.constant 0 : i32
      %95 = tpu.memref_slice %arg8[%c1_i32_64, %c0_i32_65] : memref<16x16xf32, #tpu.memory_space<vmem>> -> memref<1x16xf32, #tpu.memory_space<vmem>>
      %96 = tpu.memref_slice %arg10[%c1_i32_62] : memref<16x!tpu.dma_semaphore, #tpu.memory_space<semaphore_mem>> -> memref<1x!tpu.dma_semaphore, #tpu.memory_space<semaphore_mem>>
      %97 = tpu.memref_squeeze %96 : memref<1x!tpu.dma_semaphore, #tpu.memory_space<semaphore_mem>> -> memref<!tpu.dma_semaphore, #tpu.memory_space<semaphore_mem>>
      tpu.wait_dma2 semaphore(%97 : memref<!tpu.dma_semaphore, #tpu.memory_space<semaphore_mem>>) src(%94 : memref<1x16xf32, #tpu.memory_space<any>>) dst(%95 : memref<1x16xf32, #tpu.memory_space<vmem>>)
      %c2_i32_66 = arith.constant 2 : i32
      %c0_i32_67 = arith.constant 0 : i32
      %98 = tpu.memref_slice %arg2[%20, %c0_i32_67] : memref<20068x16xf32, #tpu.memory_space<any>> -> memref<1x16xf32, #tpu.memory_space<any>>
      %c2_i32_68 = arith.constant 2 : i32
      %c0_i32_69 = arith.constant 0 : i32
      %99 = tpu.memref_slice %arg8[%c2_i32_68, %c0_i32_69] : memref<16x16xf32, #tpu.memory_space<vmem>> -> memref<1x16xf32, #tpu.memory_space<vmem>>
      %100 = tpu.memref_slice %arg10[%c2_i32_66] : memref<16x!tpu.dma_semaphore, #tpu.memory_space<semaphore_mem>> -> memref<1x!tpu.dma_semaphore, #tpu.memory_space<semaphore_mem>>
      %101 = tpu.memref_squeeze %100 : memref<1x!tpu.dma_semaphore, #tpu.memory_space<semaphore_mem>> -> memref<!tpu.dma_semaphore, #tpu.memory_space<semaphore_mem>>
      tpu.wait_dma2 semaphore(%101 : memref<!tpu.dma_semaphore, #tpu.memory_space<semaphore_mem>>) src(%98 : memref<1x16xf32, #tpu.memory_space<any>>) dst(%99 : memref<1x16xf32, #tpu.memory_space<vmem>>)
      %c3_i32_70 = arith.constant 3 : i32
      %c0_i32_71 = arith.constant 0 : i32
      %102 = tpu.memref_slice %arg2[%25, %c0_i32_71] : memref<20068x16xf32, #tpu.memory_space<any>> -> memref<1x16xf32, #tpu.memory_space<any>>
      %c3_i32_72 = arith.constant 3 : i32
      %c0_i32_73 = arith.constant 0 : i32
      %103 = tpu.memref_slice %arg8[%c3_i32_72, %c0_i32_73] : memref<16x16xf32, #tpu.memory_space<vmem>> -> memref<1x16xf32, #tpu.memory_space<vmem>>
      %104 = tpu.memref_slice %arg10[%c3_i32_70] : memref<16x!tpu.dma_semaphore, #tpu.memory_space<semaphore_mem>> -> memref<1x!tpu.dma_semaphore, #tpu.memory_space<semaphore_mem>>
      %105 = tpu.memref_squeeze %104 : memref<1x!tpu.dma_semaphore, #tpu.memory_space<semaphore_mem>> -> memref<!tpu.dma_semaphore, #tpu.memory_space<semaphore_mem>>
      tpu.wait_dma2 semaphore(%105 : memref<!tpu.dma_semaphore, #tpu.memory_space<semaphore_mem>>) src(%102 : memref<1x16xf32, #tpu.memory_space<any>>) dst(%103 : memref<1x16xf32, #tpu.memory_space<vmem>>)
      %c4_i32_74 = arith.constant 4 : i32
      %c0_i32_75 = arith.constant 0 : i32
      %106 = tpu.memref_slice %arg2[%30, %c0_i32_75] : memref<20068x16xf32, #tpu.memory_space<any>> -> memref<1x16xf32, #tpu.memory_space<any>>
      %c4_i32_76 = arith.constant 4 : i32
      %c0_i32_77 = arith.constant 0 : i32
      %107 = tpu.memref_slice %arg8[%c4_i32_76, %c0_i32_77] : memref<16x16xf32, #tpu.memory_space<vmem>> -> memref<1x16xf32, #tpu.memory_space<vmem>>
      %108 = tpu.memref_slice %arg10[%c4_i32_74] : memref<16x!tpu.dma_semaphore, #tpu.memory_space<semaphore_mem>> -> memref<1x!tpu.dma_semaphore, #tpu.memory_space<semaphore_mem>>
      %109 = tpu.memref_squeeze %108 : memref<1x!tpu.dma_semaphore, #tpu.memory_space<semaphore_mem>> -> memref<!tpu.dma_semaphore, #tpu.memory_space<semaphore_mem>>
      tpu.wait_dma2 semaphore(%109 : memref<!tpu.dma_semaphore, #tpu.memory_space<semaphore_mem>>) src(%106 : memref<1x16xf32, #tpu.memory_space<any>>) dst(%107 : memref<1x16xf32, #tpu.memory_space<vmem>>)
      %c5_i32_78 = arith.constant 5 : i32
      %c0_i32_79 = arith.constant 0 : i32
      %110 = tpu.memref_slice %arg2[%35, %c0_i32_79] : memref<20068x16xf32, #tpu.memory_space<any>> -> memref<1x16xf32, #tpu.memory_space<any>>
      %c5_i32_80 = arith.constant 5 : i32
      %c0_i32_81 = arith.constant 0 : i32
      %111 = tpu.memref_slice %arg8[%c5_i32_80, %c0_i32_81] : memref<16x16xf32, #tpu.memory_space<vmem>> -> memref<1x16xf32, #tpu.memory_space<vmem>>
      %112 = tpu.memref_slice %arg10[%c5_i32_78] : memref<16x!tpu.dma_semaphore, #tpu.memory_space<semaphore_mem>> -> memref<1x!tpu.dma_semaphore, #tpu.memory_space<semaphore_mem>>
      %113 = tpu.memref_squeeze %112 : memref<1x!tpu.dma_semaphore, #tpu.memory_space<semaphore_mem>> -> memref<!tpu.dma_semaphore, #tpu.memory_space<semaphore_mem>>
      tpu.wait_dma2 semaphore(%113 : memref<!tpu.dma_semaphore, #tpu.memory_space<semaphore_mem>>) src(%110 : memref<1x16xf32, #tpu.memory_space<any>>) dst(%111 : memref<1x16xf32, #tpu.memory_space<vmem>>)
      %c6_i32_82 = arith.constant 6 : i32
      %c0_i32_83 = arith.constant 0 : i32
      %114 = tpu.memref_slice %arg2[%40, %c0_i32_83] : memref<20068x16xf32, #tpu.memory_space<any>> -> memref<1x16xf32, #tpu.memory_space<any>>
      %c6_i32_84 = arith.constant 6 : i32
      %c0_i32_85 = arith.constant 0 : i32
      %115 = tpu.memref_slice %arg8[%c6_i32_84, %c0_i32_85] : memref<16x16xf32, #tpu.memory_space<vmem>> -> memref<1x16xf32, #tpu.memory_space<vmem>>
      %116 = tpu.memref_slice %arg10[%c6_i32_82] : memref<16x!tpu.dma_semaphore, #tpu.memory_space<semaphore_mem>> -> memref<1x!tpu.dma_semaphore, #tpu.memory_space<semaphore_mem>>
      %117 = tpu.memref_squeeze %116 : memref<1x!tpu.dma_semaphore, #tpu.memory_space<semaphore_mem>> -> memref<!tpu.dma_semaphore, #tpu.memory_space<semaphore_mem>>
      tpu.wait_dma2 semaphore(%117 : memref<!tpu.dma_semaphore, #tpu.memory_space<semaphore_mem>>) src(%114 : memref<1x16xf32, #tpu.memory_space<any>>) dst(%115 : memref<1x16xf32, #tpu.memory_space<vmem>>)
      %c7_i32_86 = arith.constant 7 : i32
      %c0_i32_87 = arith.constant 0 : i32
      %118 = tpu.memref_slice %arg2[%45, %c0_i32_87] : memref<20068x16xf32, #tpu.memory_space<any>> -> memref<1x16xf32, #tpu.memory_space<any>>
      %c7_i32_88 = arith.constant 7 : i32
      %c0_i32_89 = arith.constant 0 : i32
      %119 = tpu.memref_slice %arg8[%c7_i32_88, %c0_i32_89] : memref<16x16xf32, #tpu.memory_space<vmem>> -> memref<1x16xf32, #tpu.memory_space<vmem>>
      %120 = tpu.memref_slice %arg10[%c7_i32_86] : memref<16x!tpu.dma_semaphore, #tpu.memory_space<semaphore_mem>> -> memref<1x!tpu.dma_semaphore, #tpu.memory_space<semaphore_mem>>
      %121 = tpu.memref_squeeze %120 : memref<1x!tpu.dma_semaphore, #tpu.memory_space<semaphore_mem>> -> memref<!tpu.dma_semaphore, #tpu.memory_space<semaphore_mem>>
      tpu.wait_dma2 semaphore(%121 : memref<!tpu.dma_semaphore, #tpu.memory_space<semaphore_mem>>) src(%118 : memref<1x16xf32, #tpu.memory_space<any>>) dst(%119 : memref<1x16xf32, #tpu.memory_space<vmem>>)
      %c8_i32_90 = arith.constant 8 : i32
      %c0_i32_91 = arith.constant 0 : i32
      %122 = tpu.memref_slice %arg2[%50, %c0_i32_91] : memref<20068x16xf32, #tpu.memory_space<any>> -> memref<1x16xf32, #tpu.memory_space<any>>
      %c8_i32_92 = arith.constant 8 : i32
      %c0_i32_93 = arith.constant 0 : i32
      %123 = tpu.memref_slice %arg8[%c8_i32_92, %c0_i32_93] : memref<16x16xf32, #tpu.memory_space<vmem>> -> memref<1x16xf32, #tpu.memory_space<vmem>>
      %124 = tpu.memref_slice %arg10[%c8_i32_90] : memref<16x!tpu.dma_semaphore, #tpu.memory_space<semaphore_mem>> -> memref<1x!tpu.dma_semaphore, #tpu.memory_space<semaphore_mem>>
      %125 = tpu.memref_squeeze %124 : memref<1x!tpu.dma_semaphore, #tpu.memory_space<semaphore_mem>> -> memref<!tpu.dma_semaphore, #tpu.memory_space<semaphore_mem>>
      tpu.wait_dma2 semaphore(%125 : memref<!tpu.dma_semaphore, #tpu.memory_space<semaphore_mem>>) src(%122 : memref<1x16xf32, #tpu.memory_space<any>>) dst(%123 : memref<1x16xf32, #tpu.memory_space<vmem>>)
      %c9_i32_94 = arith.constant 9 : i32
      %c0_i32_95 = arith.constant 0 : i32
      %126 = tpu.memref_slice %arg2[%55, %c0_i32_95] : memref<20068x16xf32, #tpu.memory_space<any>> -> memref<1x16xf32, #tpu.memory_space<any>>
      %c9_i32_96 = arith.constant 9 : i32
      %c0_i32_97 = arith.constant 0 : i32
      %127 = tpu.memref_slice %arg8[%c9_i32_96, %c0_i32_97] : memref<16x16xf32, #tpu.memory_space<vmem>> -> memref<1x16xf32, #tpu.memory_space<vmem>>
      %128 = tpu.memref_slice %arg10[%c9_i32_94] : memref<16x!tpu.dma_semaphore, #tpu.memory_space<semaphore_mem>> -> memref<1x!tpu.dma_semaphore, #tpu.memory_space<semaphore_mem>>
      %129 = tpu.memref_squeeze %128 : memref<1x!tpu.dma_semaphore, #tpu.memory_space<semaphore_mem>> -> memref<!tpu.dma_semaphore, #tpu.memory_space<semaphore_mem>>
      tpu.wait_dma2 semaphore(%129 : memref<!tpu.dma_semaphore, #tpu.memory_space<semaphore_mem>>) src(%126 : memref<1x16xf32, #tpu.memory_space<any>>) dst(%127 : memref<1x16xf32, #tpu.memory_space<vmem>>)
      %c10_i32_98 = arith.constant 10 : i32
      %c0_i32_99 = arith.constant 0 : i32
      %130 = tpu.memref_slice %arg2[%60, %c0_i32_99] : memref<20068x16xf32, #tpu.memory_space<any>> -> memref<1x16xf32, #tpu.memory_space<any>>
      %c10_i32_100 = arith.constant 10 : i32
      %c0_i32_101 = arith.constant 0 : i32
      %131 = tpu.memref_slice %arg8[%c10_i32_100, %c0_i32_101] : memref<16x16xf32, #tpu.memory_space<vmem>> -> memref<1x16xf32, #tpu.memory_space<vmem>>
      %132 = tpu.memref_slice %arg10[%c10_i32_98] : memref<16x!tpu.dma_semaphore, #tpu.memory_space<semaphore_mem>> -> memref<1x!tpu.dma_semaphore, #tpu.memory_space<semaphore_mem>>
      %133 = tpu.memref_squeeze %132 : memref<1x!tpu.dma_semaphore, #tpu.memory_space<semaphore_mem>> -> memref<!tpu.dma_semaphore, #tpu.memory_space<semaphore_mem>>
      tpu.wait_dma2 semaphore(%133 : memref<!tpu.dma_semaphore, #tpu.memory_space<semaphore_mem>>) src(%130 : memref<1x16xf32, #tpu.memory_space<any>>) dst(%131 : memref<1x16xf32, #tpu.memory_space<vmem>>)
      %c11_i32_102 = arith.constant 11 : i32
      %c0_i32_103 = arith.constant 0 : i32
      %134 = tpu.memref_slice %arg2[%65, %c0_i32_103] : memref<20068x16xf32, #tpu.memory_space<any>> -> memref<1x16xf32, #tpu.memory_space<any>>
      %c11_i32_104 = arith.constant 11 : i32
      %c0_i32_105 = arith.constant 0 : i32
      %135 = tpu.memref_slice %arg8[%c11_i32_104, %c0_i32_105] : memref<16x16xf32, #tpu.memory_space<vmem>> -> memref<1x16xf32, #tpu.memory_space<vmem>>
      %136 = tpu.memref_slice %arg10[%c11_i32_102] : memref<16x!tpu.dma_semaphore, #tpu.memory_space<semaphore_mem>> -> memref<1x!tpu.dma_semaphore, #tpu.memory_space<semaphore_mem>>
      %137 = tpu.memref_squeeze %136 : memref<1x!tpu.dma_semaphore, #tpu.memory_space<semaphore_mem>> -> memref<!tpu.dma_semaphore, #tpu.memory_space<semaphore_mem>>
      tpu.wait_dma2 semaphore(%137 : memref<!tpu.dma_semaphore, #tpu.memory_space<semaphore_mem>>) src(%134 : memref<1x16xf32, #tpu.memory_space<any>>) dst(%135 : memref<1x16xf32, #tpu.memory_space<vmem>>)
      %c12_i32_106 = arith.constant 12 : i32
      %c0_i32_107 = arith.constant 0 : i32
      %138 = tpu.memref_slice %arg2[%70, %c0_i32_107] : memref<20068x16xf32, #tpu.memory_space<any>> -> memref<1x16xf32, #tpu.memory_space<any>>
      %c12_i32_108 = arith.constant 12 : i32
      %c0_i32_109 = arith.constant 0 : i32
      %139 = tpu.memref_slice %arg8[%c12_i32_108, %c0_i32_109] : memref<16x16xf32, #tpu.memory_space<vmem>> -> memref<1x16xf32, #tpu.memory_space<vmem>>
      %140 = tpu.memref_slice %arg10[%c12_i32_106] : memref<16x!tpu.dma_semaphore, #tpu.memory_space<semaphore_mem>> -> memref<1x!tpu.dma_semaphore, #tpu.memory_space<semaphore_mem>>
      %141 = tpu.memref_squeeze %140 : memref<1x!tpu.dma_semaphore, #tpu.memory_space<semaphore_mem>> -> memref<!tpu.dma_semaphore, #tpu.memory_space<semaphore_mem>>
      tpu.wait_dma2 semaphore(%141 : memref<!tpu.dma_semaphore, #tpu.memory_space<semaphore_mem>>) src(%138 : memref<1x16xf32, #tpu.memory_space<any>>) dst(%139 : memref<1x16xf32, #tpu.memory_space<vmem>>)
      %c13_i32_110 = arith.constant 13 : i32
      %c0_i32_111 = arith.constant 0 : i32
      %142 = tpu.memref_slice %arg2[%75, %c0_i32_111] : memref<20068x16xf32, #tpu.memory_space<any>> -> memref<1x16xf32, #tpu.memory_space<any>>
      %c13_i32_112 = arith.constant 13 : i32
      %c0_i32_113 = arith.constant 0 : i32
      %143 = tpu.memref_slice %arg8[%c13_i32_112, %c0_i32_113] : memref<16x16xf32, #tpu.memory_space<vmem>> -> memref<1x16xf32, #tpu.memory_space<vmem>>
      %144 = tpu.memref_slice %arg10[%c13_i32_110] : memref<16x!tpu.dma_semaphore, #tpu.memory_space<semaphore_mem>> -> memref<1x!tpu.dma_semaphore, #tpu.memory_space<semaphore_mem>>
      %145 = tpu.memref_squeeze %144 : memref<1x!tpu.dma_semaphore, #tpu.memory_space<semaphore_mem>> -> memref<!tpu.dma_semaphore, #tpu.memory_space<semaphore_mem>>
      tpu.wait_dma2 semaphore(%145 : memref<!tpu.dma_semaphore, #tpu.memory_space<semaphore_mem>>) src(%142 : memref<1x16xf32, #tpu.memory_space<any>>) dst(%143 : memref<1x16xf32, #tpu.memory_space<vmem>>)
      %c14_i32_114 = arith.constant 14 : i32
      %c0_i32_115 = arith.constant 0 : i32
      %146 = tpu.memref_slice %arg2[%80, %c0_i32_115] : memref<20068x16xf32, #tpu.memory_space<any>> -> memref<1x16xf32, #tpu.memory_space<any>>
      %c14_i32_116 = arith.constant 14 : i32
      %c0_i32_117 = arith.constant 0 : i32
      %147 = tpu.memref_slice %arg8[%c14_i32_116, %c0_i32_117] : memref<16x16xf32, #tpu.memory_space<vmem>> -> memref<1x16xf32, #tpu.memory_space<vmem>>
      %148 = tpu.memref_slice %arg10[%c14_i32_114] : memref<16x!tpu.dma_semaphore, #tpu.memory_space<semaphore_mem>> -> memref<1x!tpu.dma_semaphore, #tpu.memory_space<semaphore_mem>>
      %149 = tpu.memref_squeeze %148 : memref<1x!tpu.dma_semaphore, #tpu.memory_space<semaphore_mem>> -> memref<!tpu.dma_semaphore, #tpu.memory_space<semaphore_mem>>
      tpu.wait_dma2 semaphore(%149 : memref<!tpu.dma_semaphore, #tpu.memory_space<semaphore_mem>>) src(%146 : memref<1x16xf32, #tpu.memory_space<any>>) dst(%147 : memref<1x16xf32, #tpu.memory_space<vmem>>)
      %c15_i32_118 = arith.constant 15 : i32
      %c0_i32_119 = arith.constant 0 : i32
      %150 = tpu.memref_slice %arg2[%85, %c0_i32_119] : memref<20068x16xf32, #tpu.memory_space<any>> -> memref<1x16xf32, #tpu.memory_space<any>>
      %c15_i32_120 = arith.constant 15 : i32
      %c0_i32_121 = arith.constant 0 : i32
      %151 = tpu.memref_slice %arg8[%c15_i32_120, %c0_i32_121] : memref<16x16xf32, #tpu.memory_space<vmem>> -> memref<1x16xf32, #tpu.memory_space<vmem>>
      %152 = tpu.memref_slice %arg10[%c15_i32_118] : memref<16x!tpu.dma_semaphore, #tpu.memory_space<semaphore_mem>> -> memref<1x!tpu.dma_semaphore, #tpu.memory_space<semaphore_mem>>
      %153 = tpu.memref_squeeze %152 : memref<1x!tpu.dma_semaphore, #tpu.memory_space<semaphore_mem>> -> memref<!tpu.dma_semaphore, #tpu.memory_space<semaphore_mem>>
      tpu.wait_dma2 semaphore(%153 : memref<!tpu.dma_semaphore, #tpu.memory_space<semaphore_mem>>) src(%150 : memref<1x16xf32, #tpu.memory_space<any>>) dst(%151 : memref<1x16xf32, #tpu.memory_space<vmem>>)
      %cst_122 = arith.constant 0.000000e+00 : f32
      %154 = vector.broadcast %cst_122 : f32 to vector<2x32xf32>
      %c0_123 = arith.constant 0 : index
      %c0_124 = arith.constant 0 : index
      %155 = vector.load %arg8[%c0_123, %c0_124] : memref<16x16xf32, #tpu.memory_space<vmem>>, vector<2x16xf32>
      %c0_125 = arith.constant 0 : index
      %c0_126 = arith.constant 0 : index
      %c0_127 = arith.constant 0 : index
      %156 = vector.load %arg3[%c0_125, %c0_126, %c0_127] : memref<8x16x32xf32, #tpu.memory_space<vmem>>, vector<1x16x32xf32>
      %157 = vector.shape_cast %156 : vector<1x16x32xf32> to vector<16x32xf32>
      %cst_128 = arith.constant dense<0.000000e+00> : vector<2x32xf32>
      %158 = tpu.matmul %155, %157, %cst_128 {dimension_numbers = #tpu.dot_dimension_numbers<[1], [0], [0], [1], [0, 0, 1, 1], [], []>} : vector<2x16xf32>, vector<16x32xf32>, vector<2x32xf32> -> vector<2x32xf32>
      %159 = arith.addf %154, %158 : vector<2x32xf32>
      %c2_129 = arith.constant 2 : index
      %c0_130 = arith.constant 0 : index
      %160 = vector.load %arg8[%c2_129, %c0_130] : memref<16x16xf32, #tpu.memory_space<vmem>>, vector<2x16xf32>
      %c1_131 = arith.constant 1 : index
      %c0_132 = arith.constant 0 : index
      %c0_133 = arith.constant 0 : index
      %161 = vector.load %arg3[%c1_131, %c0_132, %c0_133] : memref<8x16x32xf32, #tpu.memory_space<vmem>>, vector<1x16x32xf32>
      %162 = vector.shape_cast %161 : vector<1x16x32xf32> to vector<16x32xf32>
      %cst_134 = arith.constant dense<0.000000e+00> : vector<2x32xf32>
      %163 = tpu.matmul %160, %162, %cst_134 {dimension_numbers = #tpu.dot_dimension_numbers<[1], [0], [0], [1], [0, 0, 1, 1], [], []>} : vector<2x16xf32>, vector<16x32xf32>, vector<2x32xf32> -> vector<2x32xf32>
      %164 = arith.addf %159, %163 : vector<2x32xf32>
      %c4_135 = arith.constant 4 : index
      %c0_136 = arith.constant 0 : index
      %165 = vector.load %arg8[%c4_135, %c0_136] : memref<16x16xf32, #tpu.memory_space<vmem>>, vector<2x16xf32>
      %c2_137 = arith.constant 2 : index
      %c0_138 = arith.constant 0 : index
      %c0_139 = arith.constant 0 : index
      %166 = vector.load %arg3[%c2_137, %c0_138, %c0_139] : memref<8x16x32xf32, #tpu.memory_space<vmem>>, vector<1x16x32xf32>
      %167 = vector.shape_cast %166 : vector<1x16x32xf32> to vector<16x32xf32>
      %cst_140 = arith.constant dense<0.000000e+00> : vector<2x32xf32>
      %168 = tpu.matmul %165, %167, %cst_140 {dimension_numbers = #tpu.dot_dimension_numbers<[1], [0], [0], [1], [0, 0, 1, 1], [], []>} : vector<2x16xf32>, vector<16x32xf32>, vector<2x32xf32> -> vector<2x32xf32>
      %169 = arith.addf %164, %168 : vector<2x32xf32>
      %c6_141 = arith.constant 6 : index
      %c0_142 = arith.constant 0 : index
      %170 = vector.load %arg8[%c6_141, %c0_142] : memref<16x16xf32, #tpu.memory_space<vmem>>, vector<2x16xf32>
      %c3_143 = arith.constant 3 : index
      %c0_144 = arith.constant 0 : index
      %c0_145 = arith.constant 0 : index
      %171 = vector.load %arg3[%c3_143, %c0_144, %c0_145] : memref<8x16x32xf32, #tpu.memory_space<vmem>>, vector<1x16x32xf32>
      %172 = vector.shape_cast %171 : vector<1x16x32xf32> to vector<16x32xf32>
      %cst_146 = arith.constant dense<0.000000e+00> : vector<2x32xf32>
      %173 = tpu.matmul %170, %172, %cst_146 {dimension_numbers = #tpu.dot_dimension_numbers<[1], [0], [0], [1], [0, 0, 1, 1], [], []>} : vector<2x16xf32>, vector<16x32xf32>, vector<2x32xf32> -> vector<2x32xf32>
      %174 = arith.addf %169, %173 : vector<2x32xf32>
      %c8_147 = arith.constant 8 : index
      %c0_148 = arith.constant 0 : index
      %175 = vector.load %arg8[%c8_147, %c0_148] : memref<16x16xf32, #tpu.memory_space<vmem>>, vector<2x16xf32>
      %c4_149 = arith.constant 4 : index
      %c0_150 = arith.constant 0 : index
      %c0_151 = arith.constant 0 : index
      %176 = vector.load %arg3[%c4_149, %c0_150, %c0_151] : memref<8x16x32xf32, #tpu.memory_space<vmem>>, vector<1x16x32xf32>
      %177 = vector.shape_cast %176 : vector<1x16x32xf32> to vector<16x32xf32>
      %cst_152 = arith.constant dense<0.000000e+00> : vector<2x32xf32>
      %178 = tpu.matmul %175, %177, %cst_152 {dimension_numbers = #tpu.dot_dimension_numbers<[1], [0], [0], [1], [0, 0, 1, 1], [], []>} : vector<2x16xf32>, vector<16x32xf32>, vector<2x32xf32> -> vector<2x32xf32>
      %179 = arith.addf %174, %178 : vector<2x32xf32>
      %c10_153 = arith.constant 10 : index
      %c0_154 = arith.constant 0 : index
      %180 = vector.load %arg8[%c10_153, %c0_154] : memref<16x16xf32, #tpu.memory_space<vmem>>, vector<2x16xf32>
      %c5_155 = arith.constant 5 : index
      %c0_156 = arith.constant 0 : index
      %c0_157 = arith.constant 0 : index
      %181 = vector.load %arg3[%c5_155, %c0_156, %c0_157] : memref<8x16x32xf32, #tpu.memory_space<vmem>>, vector<1x16x32xf32>
      %182 = vector.shape_cast %181 : vector<1x16x32xf32> to vector<16x32xf32>
      %cst_158 = arith.constant dense<0.000000e+00> : vector<2x32xf32>
      %183 = tpu.matmul %180, %182, %cst_158 {dimension_numbers = #tpu.dot_dimension_numbers<[1], [0], [0], [1], [0, 0, 1, 1], [], []>} : vector<2x16xf32>, vector<16x32xf32>, vector<2x32xf32> -> vector<2x32xf32>
      %184 = arith.addf %179, %183 : vector<2x32xf32>
      %c12_159 = arith.constant 12 : index
      %c0_160 = arith.constant 0 : index
      %185 = vector.load %arg8[%c12_159, %c0_160] : memref<16x16xf32, #tpu.memory_space<vmem>>, vector<2x16xf32>
      %c6_161 = arith.constant 6 : index
      %c0_162 = arith.constant 0 : index
      %c0_163 = arith.constant 0 : index
      %186 = vector.load %arg3[%c6_161, %c0_162, %c0_163] : memref<8x16x32xf32, #tpu.memory_space<vmem>>, vector<1x16x32xf32>
      %187 = vector.shape_cast %186 : vector<1x16x32xf32> to vector<16x32xf32>
      %cst_164 = arith.constant dense<0.000000e+00> : vector<2x32xf32>
      %188 = tpu.matmul %185, %187, %cst_164 {dimension_numbers = #tpu.dot_dimension_numbers<[1], [0], [0], [1], [0, 0, 1, 1], [], []>} : vector<2x16xf32>, vector<16x32xf32>, vector<2x32xf32> -> vector<2x32xf32>
      %189 = arith.addf %184, %188 : vector<2x32xf32>
      %c14_165 = arith.constant 14 : index
      %c0_166 = arith.constant 0 : index
      %190 = vector.load %arg8[%c14_165, %c0_166] : memref<16x16xf32, #tpu.memory_space<vmem>>, vector<2x16xf32>
      %c7_167 = arith.constant 7 : index
      %c0_168 = arith.constant 0 : index
      %c0_169 = arith.constant 0 : index
      %191 = vector.load %arg3[%c7_167, %c0_168, %c0_169] : memref<8x16x32xf32, #tpu.memory_space<vmem>>, vector<1x16x32xf32>
      %192 = vector.shape_cast %191 : vector<1x16x32xf32> to vector<16x32xf32>
      %cst_170 = arith.constant dense<0.000000e+00> : vector<2x32xf32>
      %193 = tpu.matmul %190, %192, %cst_170 {dimension_numbers = #tpu.dot_dimension_numbers<[1], [0], [0], [1], [0, 0, 1, 1], [], []>} : vector<2x16xf32>, vector<16x32xf32>, vector<2x32xf32> -> vector<2x32xf32>
      %194 = arith.addf %189, %193 : vector<2x32xf32>
      %c0_171 = arith.constant 0 : index
      %c0_172 = arith.constant 0 : index
      %195 = vector.load %arg4[%c0_171, %c0_172] : memref<1x32xf32, #tpu.memory_space<vmem>>, vector<1x32xf32>
      %196 = vector.broadcast %195 : vector<1x32xf32> to vector<2x32xf32>
      %197 = arith.addf %194, %196 : vector<2x32xf32>
      %cst_173 = arith.constant 0.000000e+00 : f32
      %198 = vector.broadcast %cst_173 : f32 to vector<2x32xf32>
      %199 = arith.maximumf %197, %198 : vector<2x32xf32>
      %c0_174 = arith.constant 0 : index
      %c0_175 = arith.constant 0 : index
      %200 = vector.load %arg9[%c0_174, %c0_175] : memref<2x32xf32, #tpu.memory_space<vmem>>, vector<2x32xf32>
      tpu.vector_store %arg9[%c0_174, %c0_175], %199 {strides = array<i32>} : memref<2x32xf32, #tpu.memory_space<vmem>>, vector<2x32xf32>,
    } else {
    }
    %c0 = arith.constant 0 : index
    %c0_1 = arith.constant 0 : index
    %3 = vector.load %arg9[%c0, %c0_1] : memref<2x32xf32, #tpu.memory_space<vmem>>, vector<2x32xf32>
    %c0_2 = arith.constant 0 : index
    %c0_3 = arith.constant 0 : index
    %4 = vector.load %arg5[%c0_2, %c0_3] : memref<32x10112xf32, #tpu.memory_space<vmem>>, vector<32x10112xf32>
    %cst = arith.constant dense<0.000000e+00> : vector<2x10112xf32>
    %5 = tpu.matmul %3, %4, %cst {dimension_numbers = #tpu.dot_dimension_numbers<[1], [0], [0], [1], [0, 0, 1, 1], [], []>} : vector<2x32xf32>, vector<32x10112xf32>, vector<2x10112xf32> -> vector<2x10112xf32>
    %c0_4 = arith.constant 0 : index
    %c0_5 = arith.constant 0 : index
    %6 = vector.load %arg6[%c0_4, %c0_5] : memref<1x10112xf32, #tpu.memory_space<vmem>>, vector<1x10112xf32>
    %7 = vector.broadcast %6 : vector<1x10112xf32> to vector<2x10112xf32>
    %8 = arith.addf %5, %7 : vector<2x10112xf32>
    %c0_6 = arith.constant 0 : index
    %c0_7 = arith.constant 0 : index
    %9 = vector.load %arg7[%c0_6, %c0_7] : memref<2x10112xf32, #tpu.memory_space<vmem>>, vector<2x10112xf32>
    tpu.vector_store %arg7[%c0_6, %c0_7], %8 {strides = array<i32>} : memref<2x10112xf32, #tpu.memory_space<vmem>>, vector<2x10112xf32>,
    return
  }
  func.func @transform_1(%arg0: i32, %arg1: memref<16xi32, #tpu.memory_space<smem>>) -> (i32, i32, i32) {
    %c0_i32 = arith.constant 0 : i32
    %c0_i32_0 = arith.constant 0 : i32
    %c0_i32_1 = arith.constant 0 : i32
    %c0_i32_2 = arith.constant 0 : i32
    return %c0_i32, %c0_i32_0, %c0_i32_1 : i32, i32, i32
  }
  func.func @transform_2(%arg0: i32, %arg1: memref<16xi32, #tpu.memory_space<smem>>) -> (i32, i32) {
    %c0_i32 = arith.constant 0 : i32
    %c0_i32_0 = arith.constant 0 : i32
    %c0_i32_1 = arith.constant 0 : i32
    return %c0_i32, %c0_i32_0 : i32, i32
  }
  func.func @transform_3(%arg0: i32, %arg1: memref<16xi32, #tpu.memory_space<smem>>) -> (i32, i32) {
    %c0_i32 = arith.constant 0 : i32
    %c0_i32_0 = arith.constant 0 : i32
    return %c0_i32, %arg0 : i32, i32
  }
  func.func @transform_4(%arg0: i32, %arg1: memref<16xi32, #tpu.memory_space<smem>>) -> (i32, i32) {
    %c0_i32 = arith.constant 0 : i32
    %c0_i32_0 = arith.constant 0 : i32
    return %c0_i32, %arg0 : i32, i32
  }
  func.func @transform_5(%arg0: i32, %arg1: memref<16xi32, #tpu.memory_space<smem>>) -> (i32, i32) {
    %c0_i32 = arith.constant 0 : i32
    %c0_i32_0 = arith.constant 0 : i32
    return %c0_i32, %arg0 : i32, i32
  }
}

</mosaic_0001>

<llo_original>
// kernel: tpu_custom_call.1
$region0: #{tpu_custom_call.1}
  #allocation0 [shape = 'u32[]', space=smem, size = 0x4, offset = 0x4, fixed_abs, tag = 'smem constant byte address 0x4 - core index']
  #allocation1 [shape = 'u32[144,128]{1,0:T(1,128)}', space=vmem, size = 0x12000, scoped, tag = 'internal scratch']
  #allocation2 [shape = 'f32[16,16]{1,0:T(8,128)}', space=vmem, size = 0x2000, scoped, tag = 'scratch operand']
  #allocation3 [shape = 'f32[2,32]{1,0:T(2,128)}', space=vmem, size = 0x400, scoped, tag = 'scratch operand']
  #allocation4 [shape = 's32[16]{0}', space=sflag, size = 0x40, scoped, tag = 'scratch operand']
  #allocation5 [shape = 's32[1]{0}', space=sflag, size = 0x4, scoped, tag = 'scoped memory for tpu_custom_call.1']
  #allocation6 [shape = 'u8[512]{0}', space=smem, size = 0x200, scoped, tag = 'prefetched SMEM operand 0']
  #allocation10 [shape = 's32[]', space=sflag, size = 0x4, offset = 0, fixed_abs, tag = 'sflag constant byte address 0x0 - dummy sync flag']
  #allocation11 [shape = 's32[]', space=sflag, size = 0x4, offset = 0, fixed_abs, tag = 'sflag constant byte address 0x0 - dummy sync flag']
  #allocation12 [shape = 's32[]', space=sflag, size = 0x4, offset = 0, fixed_abs, tag = 'sflag constant byte address 0x0 - dummy sync flag']
  #allocation13 [shape = 's32[]', space=sflag, size = 0x4, offset = 0, fixed_abs, tag = 'sflag constant byte address 0x0 - dummy sync flag']
  #allocation14 [shape = 's32[]', space=sflag, size = 0x4, offset = 0, fixed_abs, tag = 'sflag constant byte address 0x0 - dummy sync flag']
  #allocation15 [shape = 's32[]', space=sflag, size = 0x4, offset = 0, fixed_abs, tag = 'sflag constant byte address 0x0 - dummy sync flag']
  #allocation16 [shape = 's32[]', space=sflag, size = 0x4, offset = 0, fixed_abs, tag = 'sflag constant byte address 0x0 - dummy sync flag']
  #allocation17 [shape = 's32[]', space=sflag, size = 0x4, offset = 0, fixed_abs, tag = 'sflag constant byte address 0x0 - dummy sync flag']
  #allocation18 [shape = 's32[]', space=sflag, size = 0x4, offset = 0, fixed_abs, tag = 'sflag constant byte address 0x0 - dummy sync flag']
  #allocation19 [shape = 's32[]', space=sflag, size = 0x4, offset = 0, fixed_abs, tag = 'sflag constant byte address 0x0 - dummy sync flag']
  #allocation20 [shape = 's32[]', space=sflag, size = 0x4, offset = 0, fixed_abs, tag = 'sflag constant byte address 0x0 - dummy sync flag']
  #allocation21 [shape = 's32[]', space=sflag, size = 0x4, offset = 0, fixed_abs, tag = 'sflag constant byte address 0x0 - dummy sync flag']
  #allocation22 [shape = 's32[]', space=sflag, size = 0x4, offset = 0, fixed_abs, tag = 'sflag constant byte address 0x0 - dummy sync flag']
  #allocation23 [shape = 's32[]', space=sflag, size = 0x4, offset = 0, fixed_abs, tag = 'sflag constant byte address 0x0 - dummy sync flag']
  #allocation24 [shape = 's32[]', space=sflag, size = 0x4, offset = 0, fixed_abs, tag = 'sflag constant byte address 0x0 - dummy sync flag']
  #allocation25 [shape = 's32[]', space=sflag, size = 0x4, offset = 0, fixed_abs, tag = 'sflag constant byte address 0x0 - dummy sync flag']
  %s0 = inlined_call_operand.vmem [shape: s32[16], index: 0, kind: input, shape index: {}]
  %s1 = inlined_call_operand.vmem [shape: f32[20068,16], index: 1, kind: input, shape index: {}]
  %s2 = inlined_call_operand.vmem [shape: f32[8,16,32], index: 2, kind: input, shape index: {}]
  %s3 = inlined_call_operand.vmem [shape: f32[1,32], index: 3, kind: input, shape index: {}]
  %s4 = inlined_call_operand.vmem [shape: f32[32,20224], index: 4, kind: input, shape index: {}]
  %s5 = inlined_call_operand.vmem [shape: f32[1,20224], index: 5, kind: input, shape index: {}]
  %s6 = inlined_call_operand.hbm [shape: f32[2,20224], index: 6, kind: output, shape index: {}]
  %s7 = sld [smem:[#allocation0]]
  $region556: #{tpu_custom_call.1} parent=0
    _
  %s9 = ssub.s32 1, %s7
  %s10 = scalar_select 0, %s9, %s7
  %s11 = sshll.u32 %s0, 4
  %s12 = int_to_ptr.vmem [resolvable:$true] %s11
  %14 = dma.vmem_to_smem %s12, 16, [#allocation6], [#allocation5]
  %15 = dma.done [#allocation5], 16
  %16 = sfence
  $region1: #{tpu_custom_call.1} parent=0
    #allocation7 [shape = 'u8[2588672]{0}', space=vmem, size = 0x278000, scoped, tag = 'input window, operand 4']
    #allocation8 [shape = 'u8[161792]{0}', space=vmem, size = 0x27800, scoped, tag = 'output window, operand 0']
    #allocation9 [shape = 's32[2]{0}', space=sflag, size = 0x8, scoped, tag = 'scoped memory for tpu_custom_call.1']
    %17 = vsyncpa [#allocation9], 0
    %s18 = scalar_lea.sflag [#allocation9], 1
    %19 = vsyncpa %s18, 0
    loop: start=0, step=1, limit=4
    $region2: #{tpu_custom_call.1} parent=1 // loop_pre_header
      _
    $region3: #{tpu_custom_call.1} parent=1 // loop_header
      %s21 = sphi 0, %s25
      %p22 = scmp.ge.s32.totalorder %s21, 4
      %s29 = sphi 0, %s29
      %s31 = sphi 0, %s29
      %s32 = sphi 0, %s31
      %s46 = sphi 0, %s32
      %s50 = sphi 0, %s50
      %s52 = sphi 0, %s50
      %s53 = sphi 0, %s52
      %s67 = sphi 0, %s53
      %s73 = sphi 0, %s75
      %s76 = sphi 0, %s73
      %s77 = sphi 0, %s76
      %s93 = sphi 0, %s77
      %s99 = sphi 0, %s101
      %s102 = sphi 0, %s99
      %s103 = sphi 0, %s102
      %s119 = sphi 0, %s103
      %s125 = sphi 0, %s127
      %s128 = sphi 0, %s125
      %s129 = sphi 0, %s128
      %s145 = sphi 0, %s129
    $region4: #{tpu_custom_call.1} parent=1 // loop_header_branch
      %24 = sbr.rel (%p22) target = $region8
    $region5: #{tpu_custom_call.1} parent=1 // loop_body
      %s26 = ssub.s32 %s21, 1
      %s27 = ssub.s32 %s21, 2
      %s28 = sadd.s32 %s21, 1
      %s30 = sadd.s32 %s29, 1
      %p33 = scmp.eq.s32.totalorder %s21, 1
      %p34 = scmp.ne.s32.totalorder %s29, %s31
      %p35 = scmp.eq.s32.totalorder %s21, 0
      %p36 = por %p34, %p35
      %p37 = scmp.ne.s32.totalorder %s29, %s31
      %p38 = scmp.eq.s32.totalorder %s26, 1
      %p39 = por %p37, %p38
      %p40 = scmp.ne.s32.totalorder %s31, %s32
      %p41 = scmp.eq.s32.totalorder %s26, 0
      %p42 = por %p40, %p41
      %p43 = scmp.ne.s32.totalorder %s31, %s32
      %p44 = scmp.eq.s32.totalorder %s27, 1
      %p45 = por %p43, %p44
      %p47 = scmp.ne.s32.totalorder %s32, %s46
      %p48 = scmp.eq.s32.totalorder %s27, 0
      %p49 = por %p47, %p48
      %s51 = sadd.s32 %s50, 1
      %p54 = scmp.eq.s32.totalorder %s21, 1
      %p55 = scmp.ne.s32.totalorder %s50, %s52
      %p56 = scmp.eq.s32.totalorder %s21, 0
      %p57 = por %p55, %p56
      %p58 = scmp.ne.s32.totalorder %s50, %s52
      %p59 = scmp.eq.s32.totalorder %s26, 1
      %p60 = por %p58, %p59
      %p61 = scmp.ne.s32.totalorder %s52, %s53
      %p62 = scmp.eq.s32.totalorder %s26, 0
      %p63 = por %p61, %p62
      %p64 = scmp.ne.s32.totalorder %s52, %s53
      %p65 = scmp.eq.s32.totalorder %s27, 1
      %p66 = por %p64, %p65
      %p68 = scmp.ne.s32.totalorder %s53, %s67
      %p69 = scmp.eq.s32.totalorder %s27, 0
      %p70 = por %p68, %p69
      %s71 = ssub.s32 %s21, %s28
      %p72 = scmp.eq.s32.totalorder %s71, 0
      %s74 = sadd.s32 %s73, 1
      %s75 = scalar_select %p72, %s73, %s74
      %p78 = pneg %p72
      %p79 = scmp.eq.s32.totalorder %s21, 1
      %p80 = por %p78, %p79
      %p81 = scmp.ne.s32.totalorder %s73, %s76
      %p82 = scmp.eq.s32.totalorder %s21, 0
      %p83 = por %p81, %p82
      %p84 = scmp.ne.s32.totalorder %s73, %s76
      %p85 = scmp.eq.s32.totalorder %s26, 1
      %p86 = por %p84, %p85
      %p87 = scmp.ne.s32.totalorder %s76, %s77
      %p88 = scmp.eq.s32.totalorder %s26, 0
      %p89 = por %p87, %p88
      %p90 = scmp.ne.s32.totalorder %s76, %s77
      %p91 = scmp.eq.s32.totalorder %s27, 1
      %p92 = por %p90, %p91
      %p94 = scmp.ne.s32.totalorder %s77, %s93
      %p95 = scmp.eq.s32.totalorder %s27, 0
      %p96 = por %p94, %p95
      %s97 = ssub.s32 %s21, %s28
      %p98 = scmp.eq.s32.totalorder %s97, 0
      %s100 = sadd.s32 %s99, 1
      %s101 = scalar_select %p98, %s99, %s100
      %p104 = pneg %p98
      %p105 = scmp.eq.s32.totalorder %s21, 1
      %p106 = por %p104, %p105
      %p107 = scmp.ne.s32.totalorder %s99, %s102
      %p108 = scmp.eq.s32.totalorder %s21, 0
      %p109 = por %p107, %p108
      %p110 = scmp.ne.s32.totalorder %s99, %s102
      %p111 = scmp.eq.s32.totalorder %s26, 1
      %p112 = por %p110, %p111
      %p113 = scmp.ne.s32.totalorder %s102, %s103
      %p114 = scmp.eq.s32.totalorder %s26, 0
      %p115 = por %p113, %p114
      %p116 = scmp.ne.s32.totalorder %s102, %s103
      %p117 = scmp.eq.s32.totalorder %s27, 1
      %p118 = por %p116, %p117
      %p120 = scmp.ne.s32.totalorder %s103, %s119
      %p121 = scmp.eq.s32.totalorder %s27, 0
      %p122 = por %p120, %p121
      %s123 = ssub.s32 %s21, %s28
      %p124 = scmp.eq.s32.totalorder %s123, 0
      %s126 = sadd.s32 %s125, 1
      %s127 = scalar_select %p124, %s125, %s126
      %p130 = pneg %p124
      %p131 = scmp.eq.s32.totalorder %s21, 1
      %p132 = por %p130, %p131
      %p133 = scmp.ne.s32.totalorder %s125, %s128
      %p134 = scmp.eq.s32.totalorder %s21, 0
      %p135 = por %p133, %p134
      %p136 = scmp.ne.s32.totalorder %s125, %s128
      %p137 = scmp.eq.s32.totalorder %s26, 1
      %p138 = por %p136, %p137
      %p139 = scmp.ne.s32.totalorder %s128, %s129
      %p140 = scmp.eq.s32.totalorder %s26, 0
      %p141 = por %p139, %p140
      %p142 = scmp.ne.s32.totalorder %s128, %s129
      %p143 = scmp.eq.s32.totalorder %s27, 1
      %p144 = por %p142, %p143
      %p146 = scmp.ne.s32.totalorder %s129, %s145
      %p147 = scmp.eq.s32.totalorder %s27, 0
      %p148 = por %p146, %p147
      %p149 = scmp.le.s32.totalorder 1, %s21
      %p150 = scmp.lt.s32.totalorder %s21, 3
      %p151 = pnand %p149, %p150
      %p152 = pneg %p151
      // Predicated region
      $region9: #{tpu_custom_call.1} parent=5 // pred_check
        _
      $region10: #{tpu_custom_call.1} parent=5 // pred_check_branch
        %154 = sbr.rel (%p151) target = $region12
      $region11: #{tpu_custom_call.1} parent=5 // pred_region
        %s155 = ssub.s32 %s21, 1
        // Predicated region
        $region13: #{tpu_custom_call.1} parent=11 // pred_check
          %p156 = pneg %p42
        $region14: #{tpu_custom_call.1} parent=11 // pred_check_branch
          %158 = sbr.rel (%p156) target = $region16
        $region15: #{tpu_custom_call.1} parent=11 // pred_region
          _
        $region16: #{tpu_custom_call.1} parent=11 // pred_fallthru
          _
        // Predicated region
        $region17: #{tpu_custom_call.1} parent=11 // pred_check
          %p159 = pneg %p63
        $region18: #{tpu_custom_call.1} parent=11 // pred_check_branch
          %161 = sbr.rel (%p159) target = $region20
        $region19: #{tpu_custom_call.1} parent=11 // pred_region
          _
        $region20: #{tpu_custom_call.1} parent=11 // pred_fallthru
          _
      $region12: #{tpu_custom_call.1} parent=5 // pred_fallthru
        _
      %p162 = scmp.lt.s32.totalorder %s21, 2
      // Predicated region
      $region21: #{tpu_custom_call.1} parent=5 // pred_check
        %p163 = pneg %p162
      $region22: #{tpu_custom_call.1} parent=5 // pred_check_branch
        %165 = sbr.rel (%p163) target = $region24
      $region23: #{tpu_custom_call.1} parent=5 // pred_region
        // Predicated region
        $region25: #{tpu_custom_call.1} parent=23 // pred_check
          %p166 = pneg %p83
        $region26: #{tpu_custom_call.1} parent=23 // pred_check_branch
          %168 = sbr.rel (%p166) target = $region28
        $region27: #{tpu_custom_call.1} parent=23 // pred_region
          %s169 = sand.u32 %s73, 1
          %s170 = sand.u32 %s73, 1
          %s171 = smul.addr %s170, 2528
          %s172 = scalar_lea.vmem [#allocation7], %s171
          %s173 = smul.u32 79, %s21
          %s174 = smul.addr %s173, 8
          %s175 = scalar_lea.vmem %s4, %s174
          // Predicated region
          $region29: #{tpu_custom_call.1} parent=27 // pred_check
            _
          $region30: #{tpu_custom_call.1} parent=27 // pred_check_branch
            %177 = sbr.rel (0) target = $region32
          $region31: #{tpu_custom_call.1} parent=27 // pred_region
            // Predicated region
            $region33: #{tpu_custom_call.1} parent=31 // pred_check
              _
            $region34: #{tpu_custom_call.1} parent=31 // pred_check_branch
              %179 = sbr.rel (0) target = $region36
            $region35: #{tpu_custom_call.1} parent=31 // pred_region
              loop: start=0, step=1, limit=1
              $region37: #{tpu_custom_call.1} parent=35 // loop_pre_header
                _
              $region38: #{tpu_custom_call.1} parent=35 // loop_header
                %s181 = sphi 0, %s185
                %p182 = scmp.ge.s32.totalorder %s181, 1
                %s186 = sphi %s175, %s175
                %s187 = sphi %s172, %s172
              $region39: #{tpu_custom_call.1} parent=35 // loop_header_branch
                %184 = sbr.rel (%p182) target = $region43
              $region40: #{tpu_custom_call.1} parent=35 // loop_body
                %v188 = vld [vmem:[%s186] sm:$0xff]
                %189 = vst [vmem:[%s187] sm:$0xff] %v188
                %v190 = vld [vmem:[%s186 + $0x8] sm:$0xff]
                %191 = vst [vmem:[%s187 + $0x8] sm:$0xff] %v190
                %v192 = vld [vmem:[%s186 + $0x10] sm:$0xff]
                %193 = vst [vmem:[%s187 + $0x10] sm:$0xff] %v192
                %v194 = vld [vmem:[%s186 + $0x18] sm:$0xff]
                %195 = vst [vmem:[%s187 + $0x18] sm:$0xff] %v194
                %v196 = vld [vmem:[%s186 + $0x20] sm:$0xff]
                %197 = vst [vmem:[%s187 + $0x20] sm:$0xff] %v196
                %v198 = vld [vmem:[%s186 + $0x28] sm:$0xff]
                %199 = vst [vmem:[%s187 + $0x28] sm:$0xff] %v198
                %v200 = vld [vmem:[%s186 + $0x30] sm:$0xff]
                %201 = vst [vmem:[%s187 + $0x30] sm:$0xff] %v200
                %v202 = vld [vmem:[%s186 + $0x38] sm:$0xff]
                %203 = vst [vmem:[%s187 + $0x38] sm:$0xff] %v202
                %v204 = vld [vmem:[%s186 + $0x40] sm:$0xff]
                %205 = vst [vmem:[%s187 + $0x40] sm:$0xff] %v204
                %v206 = vld [vmem:[%s186 + $0x48] sm:$0xff]
                %207 = vst [vmem:[%s187 + $0x48] sm:$0xff] %v206
                %v208 = vld [vmem:[%s186 + $0x50] sm:$0xff]
                %209 = vst [vmem:[%s187 + $0x50] sm:$0xff] %v208
                %v210 = vld [vmem:[%s186 + $0x58] sm:$0xff]
                %211 = vst [vmem:[%s187 + $0x58] sm:$0xff] %v210
                %v212 = vld [vmem:[%s186 + $0x60] sm:$0xff]
                %213 = vst [vmem:[%s187 + $0x60] sm:$0xff] %v212
                %v214 = vld [vmem:[%s186 + $0x68] sm:$0xff]
                %215 = vst [vmem:[%s187 + $0x68] sm:$0xff] %v214
                %v216 = vld [vmem:[%s186 + $0x70] sm:$0xff]
                %217 = vst [vmem:[%s187 + $0x70] sm:$0xff] %v216
                %v218 = vld [vmem:[%s186 + $0x78] sm:$0xff]
                %219 = vst [vmem:[%s187 + $0x78] sm:$0xff] %v218
                %v220 = vld [vmem:[%s186 + $0x80] sm:$0xff]
                %221 = vst [vmem:[%s187 + $0x80] sm:$0xff] %v220
                %v222 = vld [vmem:[%s186 + $0x88] sm:$0xff]
                %223 = vst [vmem:[%s187 + $0x88] sm:$0xff] %v222
                %v224 = vld [vmem:[%s186 + $0x90] sm:$0xff]
                %225 = vst [vmem:[%s187 + $0x90] sm:$0xff] %v224
                %v226 = vld [vmem:[%s186 + $0x98] sm:$0xff]
                %227 = vst [vmem:[%s187 + $0x98] sm:$0xff] %v226
                %v228 = vld [vmem:[%s186 + $0xa0] sm:$0xff]
                %229 = vst [vmem:[%s187 + $0xa0] sm:$0xff] %v228
                %v230 = vld [vmem:[%s186 + $0xa8] sm:$0xff]
                %231 = vst [vmem:[%s187 + $0xa8] sm:$0xff] %v230
                %v232 = vld [vmem:[%s186 + $0xb0] sm:$0xff]
                %233 = vst [vmem:[%s187 + $0xb0] sm:$0xff] %v232
                %v234 = vld [vmem:[%s186 + $0xb8] sm:$0xff]
                %235 = vst [vmem:[%s187 + $0xb8] sm:$0xff] %v234
                %v236 = vld [vmem:[%s186 + $0xc0] sm:$0xff]
                %237 = vst [vmem:[%s187 + $0xc0] sm:$0xff] %v236
                %v238 = vld [vmem:[%s186 + $0xc8] sm:$0xff]
                %239 = vst [vmem:[%s187 + $0xc8] sm:$0xff] %v238
                %v240 = vld [vmem:[%s186 + $0xd0] sm:$0xff]
                %241 = vst [vmem:[%s187 + $0xd0] sm:$0xff] %v240
                %v242 = vld [vmem:[%s186 + $0xd8] sm:$0xff]
                %243 = vst [vmem:[%s187 + $0xd8] sm:$0xff] %v242
                %v244 = vld [vmem:[%s186 + $0xe0] sm:$0xff]
                %245 = vst [vmem:[%s187 + $0xe0] sm:$0xff] %v244
                %v246 = vld [vmem:[%s186 + $0xe8] sm:$0xff]
                %247 = vst [vmem:[%s187 + $0xe8] sm:$0xff] %v246
                %v248 = vld [vmem:[%s186 + $0xf0] sm:$0xff]
                %249 = vst [vmem:[%s187 + $0xf0] sm:$0xff] %v248
                %v250 = vld [vmem:[%s186 + $0xf8] sm:$0xff]
                %251 = vst [vmem:[%s187 + $0xf8] sm:$0xff] %v250
                %v252 = vld [vmem:[%s186 + $0x100] sm:$0xff]
                %253 = vst [vmem:[%s187 + $0x100] sm:$0xff] %v252
                %v254 = vld [vmem:[%s186 + $0x108] sm:$0xff]
                %255 = vst [vmem:[%s187 + $0x108] sm:$0xff] %v254
                %v256 = vld [vmem:[%s186 + $0x110] sm:$0xff]
                %257 = vst [vmem:[%s187 + $0x110] sm:$0xff] %v256
                %v258 = vld [vmem:[%s186 + $0x118] sm:$0xff]
                %259 = vst [vmem:[%s187 + $0x118] sm:$0xff] %v258
                %v260 = vld [vmem:[%s186 + $0x120] sm:$0xff]
                %261 = vst [vmem:[%s187 + $0x120] sm:$0xff] %v260
                %v262 = vld [vmem:[%s186 + $0x128] sm:$0xff]
                %263 = vst [vmem:[%s187 + $0x128] sm:$0xff] %v262
                %v264 = vld [vmem:[%s186 + $0x130] sm:$0xff]
                %265 = vst [vmem:[%s187 + $0x130] sm:$0xff] %v264
                %v266 = vld [vmem:[%s186 + $0x138] sm:$0xff]
                %267 = vst [vmem:[%s187 + $0x138] sm:$0xff] %v266
                %v268 = vld [vmem:[%s186 + $0x140] sm:$0xff]
                %269 = vst [vmem:[%s187 + $0x140] sm:$0xff] %v268
                %v270 = vld [vmem:[%s186 + $0x148] sm:$0xff]
                %271 = vst [vmem:[%s187 + $0x148] sm:$0xff] %v270
                %v272 = vld [vmem:[%s186 + $0x150] sm:$0xff]
                %273 = vst [vmem:[%s187 + $0x150] sm:$0xff] %v272
                %v274 = vld [vmem:[%s186 + $0x158] sm:$0xff]
                %275 = vst [vmem:[%s187 + $0x158] sm:$0xff] %v274
                %v276 = vld [vmem:[%s186 + $0x160] sm:$0xff]
                %277 = vst [vmem:[%s187 + $0x160] sm:$0xff] %v276
                %v278 = vld [vmem:[%s186 + $0x168] sm:$0xff]
                %279 = vst [vmem:[%s187 + $0x168] sm:$0xff] %v278
                %v280 = vld [vmem:[%s186 + $0x170] sm:$0xff]
                %281 = vst [vmem:[%s187 + $0x170] sm:$0xff] %v280
                %v282 = vld [vmem:[%s186 + $0x178] sm:$0xff]
                %283 = vst [vmem:[%s187 + $0x178] sm:$0xff] %v282
                %v284 = vld [vmem:[%s186 + $0x180] sm:$0xff]
                %285 = vst [vmem:[%s187 + $0x180] sm:$0xff] %v284
                %v286 = vld [vmem:[%s186 + $0x188] sm:$0xff]
                %287 = vst [vmem:[%s187 + $0x188] sm:$0xff] %v286
                %v288 = vld [vmem:[%s186 + $0x190] sm:$0xff]
                %289 = vst [vmem:[%s187 + $0x190] sm:$0xff] %v288
                %v290 = vld [vmem:[%s186 + $0x198] sm:$0xff]
                %291 = vst [vmem:[%s187 + $0x198] sm:$0xff] %v290
                %v292 = vld [vmem:[%s186 + $0x1a0] sm:$0xff]
                %293 = vst [vmem:[%s187 + $0x1a0] sm:$0xff] %v292
                %v294 = vld [vmem:[%s186 + $0x1a8] sm:$0xff]
                %295 = vst [vmem:[%s187 + $0x1a8] sm:$0xff] %v294
                %v296 = vld [vmem:[%s186 + $0x1b0] sm:$0xff]
                %297 = vst [vmem:[%s187 + $0x1b0] sm:$0xff] %v296
                %v298 = vld [vmem:[%s186 + $0x1b8] sm:$0xff]
                %299 = vst [vmem:[%s187 + $0x1b8] sm:$0xff] %v298
                %v300 = vld [vmem:[%s186 + $0x1c0] sm:$0xff]
                %301 = vst [vmem:[%s187 + $0x1c0] sm:$0xff] %v300
                %v302 = vld [vmem:[%s186 + $0x1c8] sm:$0xff]
                %303 = vst [vmem:[%s187 + $0x1c8] sm:$0xff] %v302
                %v304 = vld [vmem:[%s186 + $0x1d0] sm:$0xff]
                %305 = vst [vmem:[%s187 + $0x1d0] sm:$0xff] %v304
                %v306 = vld [vmem:[%s186 + $0x1d8] sm:$0xff]
                %307 = vst [vmem:[%s187 + $0x1d8] sm:$0xff] %v306
                %v308 = vld [vmem:[%s186 + $0x1e0] sm:$0xff]
                %309 = vst [vmem:[%s187 + $0x1e0] sm:$0xff] %v308
                %v310 = vld [vmem:[%s186 + $0x1e8] sm:$0xff]
                %311 = vst [vmem:[%s187 + $0x1e8] sm:$0xff] %v310
                %v312 = vld [vmem:[%s186 + $0x1f0] sm:$0xff]
                %313 = vst [vmem:[%s187 + $0x1f0] sm:$0xff] %v312
                %v314 = vld [vmem:[%s186 + $0x1f8] sm:$0xff]
                %315 = vst [vmem:[%s187 + $0x1f8] sm:$0xff] %v314
                %v316 = vld [vmem:[%s186 + $0x200] sm:$0xff]
                %317 = vst [vmem:[%s187 + $0x200] sm:$0xff] %v316
                %v318 = vld [vmem:[%s186 + $0x208] sm:$0xff]
                %319 = vst [vmem:[%s187 + $0x208] sm:$0xff] %v318
                %v320 = vld [vmem:[%s186 + $0x210] sm:$0xff]
                %321 = vst [vmem:[%s187 + $0x210] sm:$0xff] %v320
                %v322 = vld [vmem:[%s186 + $0x218] sm:$0xff]
                %323 = vst [vmem:[%s187 + $0x218] sm:$0xff] %v322
                %v324 = vld [vmem:[%s186 + $0x220] sm:$0xff]
                %325 = vst [vmem:[%s187 + $0x220] sm:$0xff] %v324
                %v326 = vld [vmem:[%s186 + $0x228] sm:$0xff]
                %327 = vst [vmem:[%s187 + $0x228] sm:$0xff] %v326
                %v328 = vld [vmem:[%s186 + $0x230] sm:$0xff]
                %329 = vst [vmem:[%s187 + $0x230] sm:$0xff] %v328
                %v330 = vld [vmem:[%s186 + $0x238] sm:$0xff]
                %331 = vst [vmem:[%s187 + $0x238] sm:$0xff] %v330
                %v332 = vld [vmem:[%s186 + $0x240] sm:$0xff]
                %333 = vst [vmem:[%s187 + $0x240] sm:$0xff] %v332
                %v334 = vld [vmem:[%s186 + $0x248] sm:$0xff]
                %335 = vst [vmem:[%s187 + $0x248] sm:$0xff] %v334
                %v336 = vld [vmem:[%s186 + $0x250] sm:$0xff]
                %337 = vst [vmem:[%s187 + $0x250] sm:$0xff] %v336
                %v338 = vld [vmem:[%s186 + $0x258] sm:$0xff]
                %339 = vst [vmem:[%s187 + $0x258] sm:$0xff] %v338
                %v340 = vld [vmem:[%s186 + $0x260] sm:$0xff]
                %341 = vst [vmem:[%s187 + $0x260] sm:$0xff] %v340
                %v342 = vld [vmem:[%s186 + $0x268] sm:$0xff]
                %343 = vst [vmem:[%s187 + $0x268] sm:$0xff] %v342
                %v344 = vld [vmem:[%s186 + $0x270] sm:$0xff]
                %345 = vst [vmem:[%s187 + $0x270] sm:$0xff] %v344
                %v346 = vld [vmem:[%s186 + $0x4f0] sm:$0xff]
                %347 = vst [vmem:[%s187 + $0x278] sm:$0xff] %v346
                %v348 = vld [vmem:[%s186 + $0x4f8] sm:$0xff]
                %349 = vst [vmem:[%s187 + $0x280] sm:$0xff] %v348
                %v350 = vld [vmem:[%s186 + $0x500] sm:$0xff]
                %351 = vst [vmem:[%s187 + $0x288] sm:$0xff] %v350
                %v352 = vld [vmem:[%s186 + $0x508] sm:$0xff]
                %353 = vst [vmem:[%s187 + $0x290] sm:$0xff] %v352
                %v354 = vld [vmem:[%s186 + $0x510] sm:$0xff]
                %355 = vst [vmem:[%s187 + $0x298] sm:$0xff] %v354
                %v356 = vld [vmem:[%s186 + $0x518] sm:$0xff]
                %357 = vst [vmem:[%s187 + $0x2a0] sm:$0xff] %v356
                %v358 = vld [vmem:[%s186 + $0x520] sm:$0xff]
                %359 = vst [vmem:[%s187 + $0x2a8] sm:$0xff] %v358
                %v360 = vld [vmem:[%s186 + $0x528] sm:$0xff]
                %361 = vst [vmem:[%s187 + $0x2b0] sm:$0xff] %v360
                %v362 = vld [vmem:[%s186 + $0x530] sm:$0xff]
                %363 = vst [vmem:[%s187 + $0x2b8] sm:$0xff] %v362
                %v364 = vld [vmem:[%s186 + $0x538] sm:$0xff]
                %365 = vst [vmem:[%s187 + $0x2c0] sm:$0xff] %v364
                %v366 = vld [vmem:[%s186 + $0x540] sm:$0xff]
                %367 = vst [vmem:[%s187 + $0x2c8] sm:$0xff] %v366
                %v368 = vld [vmem:[%s186 + $0x548] sm:$0xff]
                %369 = vst [vmem:[%s187 + $0x2d0] sm:$0xff] %v368
                %v370 = vld [vmem:[%s186 + $0x550] sm:$0xff]
                %371 = vst [vmem:[%s187 + $0x2d8] sm:$0xff] %v370
                %v372 = vld [vmem:[%s186 + $0x558] sm:$0xff]
                %373 = vst [vmem:[%s187 + $0x2e0] sm:$0xff] %v372
                %v374 = vld [vmem:[%s186 + $0x560] sm:$0xff]
                %375 = vst [vmem:[%s187 + $0x2e8] sm:$0xff] %v374
                %v376 = vld [vmem:[%s186 + $0x568] sm:$0xff]
                %377 = vst [vmem:[%s187 + $0x2f0] sm:$0xff] %v376
                %v378 = vld [vmem:[%s186 + $0x570] sm:$0xff]
                %379 = vst [vmem:[%s187 + $0x2f8] sm:$0xff] %v378
                %v380 = vld [vmem:[%s186 + $0x578] sm:$0xff]
                %381 = vst [vmem:[%s187 + $0x300] sm:$0xff] %v380
                %v382 = vld [vmem:[%s186 + $0x580] sm:$0xff]
                %383 = vst [vmem:[%s187 + $0x308] sm:$0xff] %v382
                %v384 = vld [vmem:[%s186 + $0x588] sm:$0xff]
                %385 = vst [vmem:[%s187 + $0x310] sm:$0xff] %v384
                %v386 = vld [vmem:[%s186 + $0x590] sm:$0xff]
                %387 = vst [vmem:[%s187 + $0x318] sm:$0xff] %v386
                %v388 = vld [vmem:[%s186 + $0x598] sm:$0xff]
                %389 = vst [vmem:[%s187 + $0x320] sm:$0xff] %v388
                %v390 = vld [vmem:[%s186 + $0x5a0] sm:$0xff]
                %391 = vst [vmem:[%s187 + $0x328] sm:$0xff] %v390
                %v392 = vld [vmem:[%s186 + $0x5a8] sm:$0xff]
                %393 = vst [vmem:[%s187 + $0x330] sm:$0xff] %v392
                %v394 = vld [vmem:[%s186 + $0x5b0] sm:$0xff]
                %395 = vst [vmem:[%s187 + $0x338] sm:$0xff] %v394
                %v396 = vld [vmem:[%s186 + $0x5b8] sm:$0xff]
                %397 = vst [vmem:[%s187 + $0x340] sm:$0xff] %v396
                %v398 = vld [vmem:[%s186 + $0x5c0] sm:$0xff]
                %399 = vst [vmem:[%s187 + $0x348] sm:$0xff] %v398
                %v400 = vld [vmem:[%s186 + $0x5c8] sm:$0xff]
                %401 = vst [vmem:[%s187 + $0x350] sm:$0xff] %v400
                %v402 = vld [vmem:[%s186 + $0x5d0] sm:$0xff]
                %403 = vst [vmem:[%s187 + $0x358] sm:$0xff] %v402
                %v404 = vld [vmem:[%s186 + $0x5d8] sm:$0xff]
                %405 = vst [vmem:[%s187 + $0x360] sm:$0xff] %v404
                %v406 = vld [vmem:[%s186 + $0x5e0] sm:$0xff]
                %407 = vst [vmem:[%s187 + $0x368] sm:$0xff] %v406
                %v408 = vld [vmem:[%s186 + $0x5e8] sm:$0xff]
                %409 = vst [vmem:[%s187 + $0x370] sm:$0xff] %v408
                %v410 = vld [vmem:[%s186 + $0x5f0] sm:$0xff]
                %411 = vst [vmem:[%s187 + $0x378] sm:$0xff] %v410
                %v412 = vld [vmem:[%s186 + $0x5f8] sm:$0xff]
                %413 = vst [vmem:[%s187 + $0x380] sm:$0xff] %v412
                %v414 = vld [vmem:[%s186 + $0x600] sm:$0xff]
                %415 = vst [vmem:[%s187 + $0x388] sm:$0xff] %v414
                %v416 = vld [vmem:[%s186 + $0x608] sm:$0xff]
                %417 = vst [vmem:[%s187 + $0x390] sm:$0xff] %v416
                %v418 = vld [vmem:[%s186 + $0x610] sm:$0xff]
                %419 = vst [vmem:[%s187 + $0x398] sm:$0xff] %v418
                %v420 = vld [vmem:[%s186 + $0x618] sm:$0xff]
                %421 = vst [vmem:[%s187 + $0x3a0] sm:$0xff] %v420
                %v422 = vld [vmem:[%s186 + $0x620] sm:$0xff]
                %423 = vst [vmem:[%s187 + $0x3a8] sm:$0xff] %v422
                %v424 = vld [vmem:[%s186 + $0x628] sm:$0xff]
                %425 = vst [vmem:[%s187 + $0x3b0] sm:$0xff] %v424
                %v426 = vld [vmem:[%s186 + $0x630] sm:$0xff]
                %427 = vst [vmem:[%s187 + $0x3b8] sm:$0xff] %v426
                %v428 = vld [vmem:[%s186 + $0x638] sm:$0xff]
                %429 = vst [vmem:[%s187 + $0x3c0] sm:$0xff] %v428
                %v430 = vld [vmem:[%s186 + $0x640] sm:$0xff]
                %431 = vst [vmem:[%s187 + $0x3c8] sm:$0xff] %v430
                %v432 = vld [vmem:[%s186 + $0x648] sm:$0xff]
                %433 = vst [vmem:[%s187 + $0x3d0] sm:$0xff] %v432
                %v434 = vld [vmem:[%s186 + $0x650] sm:$0xff]
                %435 = vst [vmem:[%s187 + $0x3d8] sm:$0xff] %v434
                %v436 = vld [vmem:[%s186 + $0x658] sm:$0xff]
                %437 = vst [vmem:[%s187 + $0x3e0] sm:$0xff] %v436
                %v438 = vld [vmem:[%s186 + $0x660] sm:$0xff]
                %439 = vst [vmem:[%s187 + $0x3e8] sm:$0xff] %v438
                %v440 = vld [vmem:[%s186 + $0x668] sm:$0xff]
                %441 = vst [vmem:[%s187 + $0x3f0] sm:$0xff] %v440
                %v442 = vld [vmem:[%s186 + $0x670] sm:$0xff]
                %443 = vst [vmem:[%s187 + $0x3f8] sm:$0xff] %v442
                %v444 = vld [vmem:[%s186 + $0x678] sm:$0xff]
                %445 = vst [vmem:[%s187 + $0x400] sm:$0xff] %v444
                %v446 = vld [vmem:[%s186 + $0x680] sm:$0xff]
                %447 = vst [vmem:[%s187 + $0x408] sm:$0xff] %v446
                %v448 = vld [vmem:[%s186 + $0x688] sm:$0xff]
                %449 = vst [vmem:[%s187 + $0x410] sm:$0xff] %v448
                %v450 = vld [vmem:[%s186 + $0x690] sm:$0xff]
                %451 = vst [vmem:[%s187 + $0x418] sm:$0xff] %v450
                %v452 = vld [vmem:[%s186 + $0x698] sm:$0xff]
                %453 = vst [vmem:[%s187 + $0x420] sm:$0xff] %v452
                %v454 = vld [vmem:[%s186 + $0x6a0] sm:$0xff]
                %455 = vst [vmem:[%s187 + $0x428] sm:$0xff] %v454
                %v456 = vld [vmem:[%s186 + $0x6a8] sm:$0xff]
                %457 = vst [vmem:[%s187 + $0x430] sm:$0xff] %v456
                %v458 = vld [vmem:[%s186 + $0x6b0] sm:$0xff]
                %459 = vst [vmem:[%s187 + $0x438] sm:$0xff] %v458
                %v460 = vld [vmem:[%s186 + $0x6b8] sm:$0xff]
                %461 = vst [vmem:[%s187 + $0x440] sm:$0xff] %v460
                %v462 = vld [vmem:[%s186 + $0x6c0] sm:$0xff]
                %463 = vst [vmem:[%s187 + $0x448] sm:$0xff] %v462
                %v464 = vld [vmem:[%s186 + $0x6c8] sm:$0xff]
                %465 = vst [vmem:[%s187 + $0x450] sm:$0xff] %v464
                %v466 = vld [vmem:[%s186 + $0x6d0] sm:$0xff]
                %467 = vst [vmem:[%s187 + $0x458] sm:$0xff] %v466
                %v468 = vld [vmem:[%s186 + $0x6d8] sm:$0xff]
                %469 = vst [vmem:[%s187 + $0x460] sm:$0xff] %v468
                %v470 = vld [vmem:[%s186 + $0x6e0] sm:$0xff]
                %471 = vst [vmem:[%s187 + $0x468] sm:$0xff] %v470
                %v472 = vld [vmem:[%s186 + $0x6e8] sm:$0xff]
                %473 = vst [vmem:[%s187 + $0x470] sm:$0xff] %v472
                %v474 = vld [vmem:[%s186 + $0x6f0] sm:$0xff]
                %475 = vst [vmem:[%s187 + $0x478] sm:$0xff] %v474
                %v476 = vld [vmem:[%s186 + $0x6f8] sm:$0xff]
                %477 = vst [vmem:[%s187 + $0x480] sm:$0xff] %v476
                %v478 = vld [vmem:[%s186 + $0x700] sm:$0xff]
                %479 = vst [vmem:[%s187 + $0x488] sm:$0xff] %v478
                %v480 = vld [vmem:[%s186 + $0x708] sm:$0xff]
                %481 = vst [vmem:[%s187 + $0x490] sm:$0xff] %v480
                %v482 = vld [vmem:[%s186 + $0x710] sm:$0xff]
                %483 = vst [vmem:[%s187 + $0x498] sm:$0xff] %v482
                %v484 = vld [vmem:[%s186 + $0x718] sm:$0xff]
                %485 = vst [vmem:[%s187 + $0x4a0] sm:$0xff] %v484
                %v486 = vld [vmem:[%s186 + $0x720] sm:$0xff]
                %487 = vst [vmem:[%s187 + $0x4a8] sm:$0xff] %v486
                %v488 = vld [vmem:[%s186 + $0x728] sm:$0xff]
                %489 = vst [vmem:[%s187 + $0x4b0] sm:$0xff] %v488
                %v490 = vld [vmem:[%s186 + $0x730] sm:$0xff]
                %491 = vst [vmem:[%s187 + $0x4b8] sm:$0xff] %v490
                %v492 = vld [vmem:[%s186 + $0x738] sm:$0xff]
                %493 = vst [vmem:[%s187 + $0x4c0] sm:$0xff] %v492
                %v494 = vld [vmem:[%s186 + $0x740] sm:$0xff]
                %495 = vst [vmem:[%s187 + $0x4c8] sm:$0xff] %v494
                %v496 = vld [vmem:[%s186 + $0x748] sm:$0xff]
                %497 = vst [vmem:[%s187 + $0x4d0] sm:$0xff] %v496
                %v498 = vld [vmem:[%s186 + $0x750] sm:$0xff]
                %499 = vst [vmem:[%s187 + $0x4d8] sm:$0xff] %v498
                %v500 = vld [vmem:[%s186 + $0x758] sm:$0xff]
                %501 = vst [vmem:[%s187 + $0x4e0] sm:$0xff] %v500
                %v502 = vld [vmem:[%s186 + $0x760] sm:$0xff]
                %503 = vst [vmem:[%s187 + $0x4e8] sm:$0xff] %v502
                %v504 = vld [vmem:[%s186 + $0x9e0] sm:$0xff]
                %505 = vst [vmem:[%s187 + $0x4f0] sm:$0xff] %v504
                %v506 = vld [vmem:[%s186 + $0x9e8] sm:$0xff]
                %507 = vst [vmem:[%s187 + $0x4f8] sm:$0xff] %v506
                %v508 = vld [vmem:[%s186 + $0x9f0] sm:$0xff]
                %509 = vst [vmem:[%s187 + $0x500] sm:$0xff] %v508
                %v510 = vld [vmem:[%s186 + $0x9f8] sm:$0xff]
                %511 = vst [vmem:[%s187 + $0x508] sm:$0xff] %v510
                %v512 = vld [vmem:[%s186 + $0xa00] sm:$0xff]
                %513 = vst [vmem:[%s187 + $0x510] sm:$0xff] %v512
                %v514 = vld [vmem:[%s186 + $0xa08] sm:$0xff]
                %515 = vst [vmem:[%s187 + $0x518] sm:$0xff] %v514
                %v516 = vld [vmem:[%s186 + $0xa10] sm:$0xff]
                %517 = vst [vmem:[%s187 + $0x520] sm:$0xff] %v516
                %v518 = vld [vmem:[%s186 + $0xa18] sm:$0xff]
                %519 = vst [vmem:[%s187 + $0x528] sm:$0xff] %v518
                %v520 = vld [vmem:[%s186 + $0xa20] sm:$0xff]
                %521 = vst [vmem:[%s187 + $0x530] sm:$0xff] %v520
                %v522 = vld [vmem:[%s186 + $0xa28] sm:$0xff]
                %523 = vst [vmem:[%s187 + $0x538] sm:$0xff] %v522
                %v524 = vld [vmem:[%s186 + $0xa30] sm:$0xff]
                %525 = vst [vmem:[%s187 + $0x540] sm:$0xff] %v524
                %v526 = vld [vmem:[%s186 + $0xa38] sm:$0xff]
                %527 = vst [vmem:[%s187 + $0x548] sm:$0xff] %v526
                %v528 = vld [vmem:[%s186 + $0xa40] sm:$0xff]
                %529 = vst [vmem:[%s187 + $0x550] sm:$0xff] %v528
                %v530 = vld [vmem:[%s186 + $0xa48] sm:$0xff]
                %531 = vst [vmem:[%s187 + $0x558] sm:$0xff] %v530
                %v532 = vld [vmem:[%s186 + $0xa50] sm:$0xff]
                %533 = vst [vmem:[%s187 + $0x560] sm:$0xff] %v532
                %v534 = vld [vmem:[%s186 + $0xa58] sm:$0xff]
                %535 = vst [vmem:[%s187 + $0x568] sm:$0xff] %v534
                %v536 = vld [vmem:[%s186 + $0xa60] sm:$0xff]
                %537 = vst [vmem:[%s187 + $0x570] sm:$0xff] %v536
                %v538 = vld [vmem:[%s186 + $0xa68] sm:$0xff]
                %539 = vst [vmem:[%s187 + $0x578] sm:$0xff] %v538
                %v540 = vld [vmem:[%s186 + $0xa70] sm:$0xff]
                %541 = vst [vmem:[%s187 + $0x580] sm:$0xff] %v540
                %v542 = vld [vmem:[%s186 + $0xa78] sm:$0xff]
                %543 = vst [vmem:[%s187 + $0x588] sm:$0xff] %v542
                %v544 = vld [vmem:[%s186 + $0xa80] sm:$0xff]
                %545 = vst [vmem:[%s187 + $0x590] sm:$0xff] %v544
                %v546 = vld [vmem:[%s186 + $0xa88] sm:$0xff]
                %547 = vst [vmem:[%s187 + $0x598] sm:$0xff] %v546
                %v548 = vld [vmem:[%s186 + $0xa90] sm:$0xff]
                %549 = vst [vmem:[%s187 + $0x5a0] sm:$0xff] %v548
                %v550 = vld [vmem:[%s186 + $0xa98] sm:$0xff]
                %551 = vst [vmem:[%s187 + $0x5a8] sm:$0xff] %v550
                %v552 = vld [vmem:[%s186 + $0xaa0] sm:$0xff]
                %553 = vst [vmem:[%s187 + $0x5b0] sm:$0xff] %v552
                %v554 = vld [vmem:[%s186 + $0xaa8] sm:$0xff]
                %555 = vst [vmem:[%s187 + $0x5b8] sm:$0xff] %v554
                %v556 = vld [vmem:[%s186 + $0xab0] sm:$0xff]
                %557 = vst [vmem:[%s187 + $0x5c0] sm:$0xff] %v556
                %v558 = vld [vmem:[%s186 + $0xab8] sm:$0xff]
                %559 = vst [vmem:[%s187 + $0x5c8] sm:$0xff] %v558
                %v560 = vld [vmem:[%s186 + $0xac0] sm:$0xff]
                %561 = vst [vmem:[%s187 + $0x5d0] sm:$0xff] %v560
                %v562 = vld [vmem:[%s186 + $0xac8] sm:$0xff]
                %563 = vst [vmem:[%s187 + $0x5d8] sm:$0xff] %v562
                %v564 = vld [vmem:[%s186 + $0xad0] sm:$0xff]
                %565 = vst [vmem:[%s187 + $0x5e0] sm:$0xff] %v564
                %v566 = vld [vmem:[%s186 + $0xad8] sm:$0xff]
                %567 = vst [vmem:[%s187 + $0x5e8] sm:$0xff] %v566
                %v568 = vld [vmem:[%s186 + $0xae0] sm:$0xff]
                %569 = vst [vmem:[%s187 + $0x5f0] sm:$0xff] %v568
                %v570 = vld [vmem:[%s186 + $0xae8] sm:$0xff]
                %571 = vst [vmem:[%s187 + $0x5f8] sm:$0xff] %v570
                %v572 = vld [vmem:[%s186 + $0xaf0] sm:$0xff]
                %573 = vst [vmem:[%s187 + $0x600] sm:$0xff] %v572
                %v574 = vld [vmem:[%s186 + $0xaf8] sm:$0xff]
                %575 = vst [vmem:[%s187 + $0x608] sm:$0xff] %v574
                %v576 = vld [vmem:[%s186 + $0xb00] sm:$0xff]
                %577 = vst [vmem:[%s187 + $0x610] sm:$0xff] %v576
                %v578 = vld [vmem:[%s186 + $0xb08] sm:$0xff]
                %579 = vst [vmem:[%s187 + $0x618] sm:$0xff] %v578
                %v580 = vld [vmem:[%s186 + $0xb10] sm:$0xff]
                %581 = vst [vmem:[%s187 + $0x620] sm:$0xff] %v580
                %v582 = vld [vmem:[%s186 + $0xb18] sm:$0xff]
                %583 = vst [vmem:[%s187 + $0x628] sm:$0xff] %v582
                %v584 = vld [vmem:[%s186 + $0xb20] sm:$0xff]
                %585 = vst [vmem:[%s187 + $0x630] sm:$0xff] %v584
                %v586 = vld [vmem:[%s186 + $0xb28] sm:$0xff]
                %587 = vst [vmem:[%s187 + $0x638] sm:$0xff] %v586
                %v588 = vld [vmem:[%s186 + $0xb30] sm:$0xff]
                %589 = vst [vmem:[%s187 + $0x640] sm:$0xff] %v588
                %v590 = vld [vmem:[%s186 + $0xb38] sm:$0xff]
                %591 = vst [vmem:[%s187 + $0x648] sm:$0xff] %v590
                %v592 = vld [vmem:[%s186 + $0xb40] sm:$0xff]
                %593 = vst [vmem:[%s187 + $0x650] sm:$0xff] %v592
                %v594 = vld [vmem:[%s186 + $0xb48] sm:$0xff]
                %595 = vst [vmem:[%s187 + $0x658] sm:$0xff] %v594
                %v596 = vld [vmem:[%s186 + $0xb50] sm:$0xff]
                %597 = vst [vmem:[%s187 + $0x660] sm:$0xff] %v596
                %v598 = vld [vmem:[%s186 + $0xb58] sm:$0xff]
                %599 = vst [vmem:[%s187 + $0x668] sm:$0xff] %v598
                %v600 = vld [vmem:[%s186 + $0xb60] sm:$0xff]
                %601 = vst [vmem:[%s187 + $0x670] sm:$0xff] %v600
                %v602 = vld [vmem:[%s186 + $0xb68] sm:$0xff]
                %603 = vst [vmem:[%s187 + $0x678] sm:$0xff] %v602
                %v604 = vld [vmem:[%s186 + $0xb70] sm:$0xff]
                %605 = vst [vmem:[%s187 + $0x680] sm:$0xff] %v604
                %v606 = vld [vmem:[%s186 + $0xb78] sm:$0xff]
                %607 = vst [vmem:[%s187 + $0x688] sm:$0xff] %v606
                %v608 = vld [vmem:[%s186 + $0xb80] sm:$0xff]
                %609 = vst [vmem:[%s187 + $0x690] sm:$0xff] %v608
                %v610 = vld [vmem:[%s186 + $0xb88] sm:$0xff]
                %611 = vst [vmem:[%s187 + $0x698] sm:$0xff] %v610
                %v612 = vld [vmem:[%s186 + $0xb90] sm:$0xff]
                %613 = vst [vmem:[%s187 + $0x6a0] sm:$0xff] %v612
                %v614 = vld [vmem:[%s186 + $0xb98] sm:$0xff]
                %615 = vst [vmem:[%s187 + $0x6a8] sm:$0xff] %v614
                %v616 = vld [vmem:[%s186 + $0xba0] sm:$0xff]
                %617 = vst [vmem:[%s187 + $0x6b0] sm:$0xff] %v616
                %v618 = vld [vmem:[%s186 + $0xba8] sm:$0xff]
                %619 = vst [vmem:[%s187 + $0x6b8] sm:$0xff] %v618
                %v620 = vld [vmem:[%s186 + $0xbb0] sm:$0xff]
                %621 = vst [vmem:[%s187 + $0x6c0] sm:$0xff] %v620
                %v622 = vld [vmem:[%s186 + $0xbb8] sm:$0xff]
                %623 = vst [vmem:[%s187 + $0x6c8] sm:$0xff] %v622
                %v624 = vld [vmem:[%s186 + $0xbc0] sm:$0xff]
                %625 = vst [vmem:[%s187 + $0x6d0] sm:$0xff] %v624
                %v626 = vld [vmem:[%s186 + $0xbc8] sm:$0xff]
                %627 = vst [vmem:[%s187 + $0x6d8] sm:$0xff] %v626
                %v628 = vld [vmem:[%s186 + $0xbd0] sm:$0xff]
                %629 = vst [vmem:[%s187 + $0x6e0] sm:$0xff] %v628
                %v630 = vld [vmem:[%s186 + $0xbd8] sm:$0xff]
                %631 = vst [vmem:[%s187 + $0x6e8] sm:$0xff] %v630
                %v632 = vld [vmem:[%s186 + $0xbe0] sm:$0xff]
                %633 = vst [vmem:[%s187 + $0x6f0] sm:$0xff] %v632
                %v634 = vld [vmem:[%s186 + $0xbe8] sm:$0xff]
                %635 = vst [vmem:[%s187 + $0x6f8] sm:$0xff] %v634
                %v636 = vld [vmem:[%s186 + $0xbf0] sm:$0xff]
                %637 = vst [vmem:[%s187 + $0x700] sm:$0xff] %v636
                %v638 = vld [vmem:[%s186 + $0xbf8] sm:$0xff]
                %639 = vst [vmem:[%s187 + $0x708] sm:$0xff] %v638
                %v640 = vld [vmem:[%s186 + $0xc00] sm:$0xff]
                %641 = vst [vmem:[%s187 + $0x710] sm:$0xff] %v640
                %v642 = vld [vmem:[%s186 + $0xc08] sm:$0xff]
                %643 = vst [vmem:[%s187 + $0x718] sm:$0xff] %v642
                %v644 = vld [vmem:[%s186 + $0xc10] sm:$0xff]
                %645 = vst [vmem:[%s187 + $0x720] sm:$0xff] %v644
                %v646 = vld [vmem:[%s186 + $0xc18] sm:$0xff]
                %647 = vst [vmem:[%s187 + $0x728] sm:$0xff] %v646
                %v648 = vld [vmem:[%s186 + $0xc20] sm:$0xff]
                %649 = vst [vmem:[%s187 + $0x730] sm:$0xff] %v648
                %v650 = vld [vmem:[%s186 + $0xc28] sm:$0xff]
                %651 = vst [vmem:[%s187 + $0x738] sm:$0xff] %v650
                %v652 = vld [vmem:[%s186 + $0xc30] sm:$0xff]
                %653 = vst [vmem:[%s187 + $0x740] sm:$0xff] %v652
                %v654 = vld [vmem:[%s186 + $0xc38] sm:$0xff]
                %655 = vst [vmem:[%s187 + $0x748] sm:$0xff] %v654
                %v656 = vld [vmem:[%s186 + $0xc40] sm:$0xff]
                %657 = vst [vmem:[%s187 + $0x750] sm:$0xff] %v656
                %v658 = vld [vmem:[%s186 + $0xc48] sm:$0xff]
                %659 = vst [vmem:[%s187 + $0x758] sm:$0xff] %v658
                %v660 = vld [vmem:[%s186 + $0xc50] sm:$0xff]
                %661 = vst [vmem:[%s187 + $0x760] sm:$0xff] %v660
                %v662 = vld [vmem:[%s186 + $0xed0] sm:$0xff]
                %663 = vst [vmem:[%s187 + $0x768] sm:$0xff] %v662
                %v664 = vld [vmem:[%s186 + $0xed8] sm:$0xff]
                %665 = vst [vmem:[%s187 + $0x770] sm:$0xff] %v664
                %v666 = vld [vmem:[%s186 + $0xee0] sm:$0xff]
                %667 = vst [vmem:[%s187 + $0x778] sm:$0xff] %v666
                %v668 = vld [vmem:[%s186 + $0xee8] sm:$0xff]
                %669 = vst [vmem:[%s187 + $0x780] sm:$0xff] %v668
                %v670 = vld [vmem:[%s186 + $0xef0] sm:$0xff]
                %671 = vst [vmem:[%s187 + $0x788] sm:$0xff] %v670
                %v672 = vld [vmem:[%s186 + $0xef8] sm:$0xff]
                %673 = vst [vmem:[%s187 + $0x790] sm:$0xff] %v672
                %v674 = vld [vmem:[%s186 + $0xf00] sm:$0xff]
                %675 = vst [vmem:[%s187 + $0x798] sm:$0xff] %v674
                %v676 = vld [vmem:[%s186 + $0xf08] sm:$0xff]
                %677 = vst [vmem:[%s187 + $0x7a0] sm:$0xff] %v676
                %v678 = vld [vmem:[%s186 + $0xf10] sm:$0xff]
                %679 = vst [vmem:[%s187 + $0x7a8] sm:$0xff] %v678
                %v680 = vld [vmem:[%s186 + $0xf18] sm:$0xff]
                %681 = vst [vmem:[%s187 + $0x7b0] sm:$0xff] %v680
                %v682 = vld [vmem:[%s186 + $0xf20] sm:$0xff]
                %683 = vst [vmem:[%s187 + $0x7b8] sm:$0xff] %v682
                %v684 = vld [vmem:[%s186 + $0xf28] sm:$0xff]
                %685 = vst [vmem:[%s187 + $0x7c0] sm:$0xff] %v684
                %v686 = vld [vmem:[%s186 + $0xf30] sm:$0xff]
                %687 = vst [vmem:[%s187 + $0x7c8] sm:$0xff] %v686
                %v688 = vld [vmem:[%s186 + $0xf38] sm:$0xff]
                %689 = vst [vmem:[%s187 + $0x7d0] sm:$0xff] %v688
                %v690 = vld [vmem:[%s186 + $0xf40] sm:$0xff]
                %691 = vst [vmem:[%s187 + $0x7d8] sm:$0xff] %v690
                %v692 = vld [vmem:[%s186 + $0xf48] sm:$0xff]
                %693 = vst [vmem:[%s187 + $0x7e0] sm:$0xff] %v692
                %v694 = vld [vmem:[%s186 + $0xf50] sm:$0xff]
                %695 = vst [vmem:[%s187 + $0x7e8] sm:$0xff] %v694
                %v696 = vld [vmem:[%s186 + $0xf58] sm:$0xff]
                %697 = vst [vmem:[%s187 + $0x7f0] sm:$0xff] %v696
                %v698 = vld [vmem:[%s186 + $0xf60] sm:$0xff]
                %699 = vst [vmem:[%s187 + $0x7f8] sm:$0xff] %v698
                %v700 = vld [vmem:[%s186 + $0xf68] sm:$0xff]
                %701 = vst [vmem:[%s187 + $0x800] sm:$0xff] %v700
                %v702 = vld [vmem:[%s186 + $0xf70] sm:$0xff]
                %703 = vst [vmem:[%s187 + $0x808] sm:$0xff] %v702
                %v704 = vld [vmem:[%s186 + $0xf78] sm:$0xff]
                %705 = vst [vmem:[%s187 + $0x810] sm:$0xff] %v704
                %v706 = vld [vmem:[%s186 + $0xf80] sm:$0xff]
                %707 = vst [vmem:[%s187 + $0x818] sm:$0xff] %v706
                %v708 = vld [vmem:[%s186 + $0xf88] sm:$0xff]
                %709 = vst [vmem:[%s187 + $0x820] sm:$0xff] %v708
                %v710 = vld [vmem:[%s186 + $0xf90] sm:$0xff]
                %711 = vst [vmem:[%s187 + $0x828] sm:$0xff] %v710
                %v712 = vld [vmem:[%s186 + $0xf98] sm:$0xff]
                %713 = vst [vmem:[%s187 + $0x830] sm:$0xff] %v712
                %v714 = vld [vmem:[%s186 + $0xfa0] sm:$0xff]
                %715 = vst [vmem:[%s187 + $0x838] sm:$0xff] %v714
                %v716 = vld [vmem:[%s186 + $0xfa8] sm:$0xff]
                %717 = vst [vmem:[%s187 + $0x840] sm:$0xff] %v716
                %v718 = vld [vmem:[%s186 + $0xfb0] sm:$0xff]
                %719 = vst [vmem:[%s187 + $0x848] sm:$0xff] %v718
                %v720 = vld [vmem:[%s186 + $0xfb8] sm:$0xff]
                %721 = vst [vmem:[%s187 + $0x850] sm:$0xff] %v720
                %v722 = vld [vmem:[%s186 + $0xfc0] sm:$0xff]
                %723 = vst [vmem:[%s187 + $0x858] sm:$0xff] %v722
                %v724 = vld [vmem:[%s186 + $0xfc8] sm:$0xff]
                %725 = vst [vmem:[%s187 + $0x860] sm:$0xff] %v724
                %v726 = vld [vmem:[%s186 + $0xfd0] sm:$0xff]
                %727 = vst [vmem:[%s187 + $0x868] sm:$0xff] %v726
                %v728 = vld [vmem:[%s186 + $0xfd8] sm:$0xff]
                %729 = vst [vmem:[%s187 + $0x870] sm:$0xff] %v728
                %v730 = vld [vmem:[%s186 + $0xfe0] sm:$0xff]
                %731 = vst [vmem:[%s187 + $0x878] sm:$0xff] %v730
                %v732 = vld [vmem:[%s186 + $0xfe8] sm:$0xff]
                %733 = vst [vmem:[%s187 + $0x880] sm:$0xff] %v732
                %v734 = vld [vmem:[%s186 + $0xff0] sm:$0xff]
                %735 = vst [vmem:[%s187 + $0x888] sm:$0xff] %v734
                %v736 = vld [vmem:[%s186 + $0xff8] sm:$0xff]
                %737 = vst [vmem:[%s187 + $0x890] sm:$0xff] %v736
                %v738 = vld [vmem:[%s186 + $0x1000] sm:$0xff]
                %739 = vst [vmem:[%s187 + $0x898] sm:$0xff] %v738
                %v740 = vld [vmem:[%s186 + $0x1008] sm:$0xff]
                %741 = vst [vmem:[%s187 + $0x8a0] sm:$0xff] %v740
                %v742 = vld [vmem:[%s186 + $0x1010] sm:$0xff]
                %743 = vst [vmem:[%s187 + $0x8a8] sm:$0xff] %v742
                %v744 = vld [vmem:[%s186 + $0x1018] sm:$0xff]
                %745 = vst [vmem:[%s187 + $0x8b0] sm:$0xff] %v744
                %v746 = vld [vmem:[%s186 + $0x1020] sm:$0xff]
                %747 = vst [vmem:[%s187 + $0x8b8] sm:$0xff] %v746
                %v748 = vld [vmem:[%s186 + $0x1028] sm:$0xff]
                %749 = vst [vmem:[%s187 + $0x8c0] sm:$0xff] %v748
                %v750 = vld [vmem:[%s186 + $0x1030] sm:$0xff]
                %751 = vst [vmem:[%s187 + $0x8c8] sm:$0xff] %v750
                %v752 = vld [vmem:[%s186 + $0x1038] sm:$0xff]
                %753 = vst [vmem:[%s187 + $0x8d0] sm:$0xff] %v752
                %v754 = vld [vmem:[%s186 + $0x1040] sm:$0xff]
                %755 = vst [vmem:[%s187 + $0x8d8] sm:$0xff] %v754
                %v756 = vld [vmem:[%s186 + $0x1048] sm:$0xff]
                %757 = vst [vmem:[%s187 + $0x8e0] sm:$0xff] %v756
                %v758 = vld [vmem:[%s186 + $0x1050] sm:$0xff]
                %759 = vst [vmem:[%s187 + $0x8e8] sm:$0xff] %v758
                %v760 = vld [vmem:[%s186 + $0x1058] sm:$0xff]
                %761 = vst [vmem:[%s187 + $0x8f0] sm:$0xff] %v760
                %v762 = vld [vmem:[%s186 + $0x1060] sm:$0xff]
                %763 = vst [vmem:[%s187 + $0x8f8] sm:$0xff] %v762
                %v764 = vld [vmem:[%s186 + $0x1068] sm:$0xff]
                %765 = vst [vmem:[%s187 + $0x900] sm:$0xff] %v764
                %v766 = vld [vmem:[%s186 + $0x1070] sm:$0xff]
                %767 = vst [vmem:[%s187 + $0x908] sm:$0xff] %v766
                %v768 = vld [vmem:[%s186 + $0x1078] sm:$0xff]
                %769 = vst [vmem:[%s187 + $0x910] sm:$0xff] %v768
                %v770 = vld [vmem:[%s186 + $0x1080] sm:$0xff]
                %771 = vst [vmem:[%s187 + $0x918] sm:$0xff] %v770
                %v772 = vld [vmem:[%s186 + $0x1088] sm:$0xff]
                %773 = vst [vmem:[%s187 + $0x920] sm:$0xff] %v772
                %v774 = vld [vmem:[%s186 + $0x1090] sm:$0xff]
                %775 = vst [vmem:[%s187 + $0x928] sm:$0xff] %v774
                %v776 = vld [vmem:[%s186 + $0x1098] sm:$0xff]
                %777 = vst [vmem:[%s187 + $0x930] sm:$0xff] %v776
                %v778 = vld [vmem:[%s186 + $0x10a0] sm:$0xff]
                %779 = vst [vmem:[%s187 + $0x938] sm:$0xff] %v778
                %v780 = vld [vmem:[%s186 + $0x10a8] sm:$0xff]
                %781 = vst [vmem:[%s187 + $0x940] sm:$0xff] %v780
                %v782 = vld [vmem:[%s186 + $0x10b0] sm:$0xff]
                %783 = vst [vmem:[%s187 + $0x948] sm:$0xff] %v782
                %v784 = vld [vmem:[%s186 + $0x10b8] sm:$0xff]
                %785 = vst [vmem:[%s187 + $0x950] sm:$0xff] %v784
                %v786 = vld [vmem:[%s186 + $0x10c0] sm:$0xff]
                %787 = vst [vmem:[%s187 + $0x958] sm:$0xff] %v786
                %v788 = vld [vmem:[%s186 + $0x10c8] sm:$0xff]
                %789 = vst [vmem:[%s187 + $0x960] sm:$0xff] %v788
                %v790 = vld [vmem:[%s186 + $0x10d0] sm:$0xff]
                %791 = vst [vmem:[%s187 + $0x968] sm:$0xff] %v790
                %v792 = vld [vmem:[%s186 + $0x10d8] sm:$0xff]
                %793 = vst [vmem:[%s187 + $0x970] sm:$0xff] %v792
                %v794 = vld [vmem:[%s186 + $0x10e0] sm:$0xff]
                %795 = vst [vmem:[%s187 + $0x978] sm:$0xff] %v794
                %v796 = vld [vmem:[%s186 + $0x10e8] sm:$0xff]
                %797 = vst [vmem:[%s187 + $0x980] sm:$0xff] %v796
                %v798 = vld [vmem:[%s186 + $0x10f0] sm:$0xff]
                %799 = vst [vmem:[%s187 + $0x988] sm:$0xff] %v798
                %v800 = vld [vmem:[%s186 + $0x10f8] sm:$0xff]
                %801 = vst [vmem:[%s187 + $0x990] sm:$0xff] %v800
                %v802 = vld [vmem:[%s186 + $0x1100] sm:$0xff]
                %803 = vst [vmem:[%s187 + $0x998] sm:$0xff] %v802
                %v804 = vld [vmem:[%s186 + $0x1108] sm:$0xff]
                %805 = vst [vmem:[%s187 + $0x9a0] sm:$0xff] %v804
                %v806 = vld [vmem:[%s186 + $0x1110] sm:$0xff]
                %807 = vst [vmem:[%s187 + $0x9a8] sm:$0xff] %v806
                %v808 = vld [vmem:[%s186 + $0x1118] sm:$0xff]
                %809 = vst [vmem:[%s187 + $0x9b0] sm:$0xff] %v808
                %v810 = vld [vmem:[%s186 + $0x1120] sm:$0xff]
                %811 = vst [vmem:[%s187 + $0x9b8] sm:$0xff] %v810
                %v812 = vld [vmem:[%s186 + $0x1128] sm:$0xff]
                %813 = vst [vmem:[%s187 + $0x9c0] sm:$0xff] %v812
                %v814 = vld [vmem:[%s186 + $0x1130] sm:$0xff]
                %815 = vst [vmem:[%s187 + $0x9c8] sm:$0xff] %v814
                %v816 = vld [vmem:[%s186 + $0x1138] sm:$0xff]
                %817 = vst [vmem:[%s187 + $0x9d0] sm:$0xff] %v816
                %v818 = vld [vmem:[%s186 + $0x1140] sm:$0xff]
                %819 = vst [vmem:[%s187 + $0x9d8] sm:$0xff] %v818
              $region41: #{tpu_custom_call.1} parent=35 // loop_footer
                %s185 = sadd.s32 1, %s181
              $region42: #{tpu_custom_call.1} parent=35 // loop_footer_branch
                %180 = sbr.rel target = $region38
              $region43: #{tpu_custom_call.1} parent=35 // loop_exit
                _
            $region36: #{tpu_custom_call.1} parent=31 // pred_fallthru
              _
            // Predicated region
            $region44: #{tpu_custom_call.1} parent=31 // pred_check
              _
            $region45: #{tpu_custom_call.1} parent=31 // pred_check_branch
              %821 = sbr.rel target = $region47
            $region46: #{tpu_custom_call.1} parent=31 // pred_region
              _
            $region47: #{tpu_custom_call.1} parent=31 // pred_fallthru
              _
          $region32: #{tpu_custom_call.1} parent=27 // pred_fallthru
            _
          %822 = vnop
        $region28: #{tpu_custom_call.1} parent=23 // pred_fallthru
          _
        // Predicated region
        $region48: #{tpu_custom_call.1} parent=23 // pred_check
          %p823 = pneg %p109
        $region49: #{tpu_custom_call.1} parent=23 // pred_check_branch
          %825 = sbr.rel (%p823) target = $region51
        $region50: #{tpu_custom_call.1} parent=23 // pred_region
          %s826 = smul.u32 79, %s21
          %p827 = scmp.lt.s32.totalorder %s826, 157
          %s828 = scalar_select %p827, %s826, 157
          %s829 = scalar_lea.vmem %s5, %s828
          %s830 = smul.u32 79, %s21
        $region51: #{tpu_custom_call.1} parent=23 // pred_fallthru
          _
      $region24: #{tpu_custom_call.1} parent=5 // pred_fallthru
        _
      %p831 = scmp.le.s32.totalorder 1, %s21
      %p832 = scmp.lt.s32.totalorder %s21, 3
      %p833 = pnand %p831, %p832
      %p834 = pneg %p833
      // Predicated region
      $region52: #{tpu_custom_call.1} parent=5 // pred_check
        _
      $region53: #{tpu_custom_call.1} parent=5 // pred_check_branch
        %836 = sbr.rel (%p833) target = $region55
      $region54: #{tpu_custom_call.1} parent=5 // pred_region
        %s837 = ssub.s32 %s21, 1
        %s838 = sand.u32 %s76, 1
        %s839 = sand.u32 %s76, 1
        %s840 = smul.addr %s839, 2528
        %s841 = scalar_lea.vmem [#allocation7], %s840
        // Predicated region
        $region56: #{tpu_custom_call.1} parent=54 // pred_check
          %p842 = pneg %p89
        $region57: #{tpu_custom_call.1} parent=54 // pred_check_branch
          %844 = sbr.rel (%p842) target = $region59
        $region58: #{tpu_custom_call.1} parent=54 // pred_region
          _
        $region59: #{tpu_custom_call.1} parent=54 // pred_fallthru
          _
        %p845 = pneg %p42
        %p846 = pneg %p39
        %p847 = pneg %p63
        %p848 = pneg %p60
        %s849 = sand.u32 %s76, 1
        %s850 = sand.u32 %s76, 1
        %s851 = smul.addr %s850, 2528
        %s852 = scalar_lea.vmem [#allocation7], %s851
        %p853 = pneg %p89
        %p854 = pneg %p86
        %s855 = smul.u32 79, %s26
        %p856 = scmp.lt.s32.totalorder %s855, 157
        %s857 = scalar_select %p856, %s855, 157
        %s858 = scalar_lea.vmem %s5, %s857
        %p859 = pneg %p115
        %p860 = pneg %p112
        %p861 = pneg %p141
        %p862 = pneg %p138
        %s863 = sand.u32 %s128, 1
        %s864 = scalar_lea.sflag [#allocation9], %s863
        %s865 = sand.u32 %s128, 1
        %s866 = smul.addr %s865, 158
        %s867 = scalar_lea.vmem [#allocation8], %s866
        %s868 = smul.u32 79, %s26
        %s869 = smul.u32 79, %s26
        %p870 = scmp.lt.s32.totalorder %s869, 157
        %s871 = scalar_select %p870, %s869, 157
        %s872 = scalar_lea.vmem %s5, %s871
        %s873 = smul.u32 79, %s26
        %s874 = smul.u32 79, %s26
        %p875 = scmp.eq.s32.totalorder %s26, 0
        // Predicated region
        $region60: #{tpu_custom_call.1} parent=54 // pred_check
          %p876 = pneg %p875
        $region61: #{tpu_custom_call.1} parent=54 // pred_check_branch
          %878 = sbr.rel (%p876) target = $region63
        $region62: #{tpu_custom_call.1} parent=54 // pred_region
          %s879 = sld [smem:[#allocation6]]
          %s880 = scalar_lea.vmem %s1, %s879
          %p882 = scmp.lt.u32.totalorder 1, 8
          %p883 = pneg %p882
          // Predicated region
          $region64: #{tpu_custom_call.1} parent=62 // pred_check
            _
          $region65: #{tpu_custom_call.1} parent=62 // pred_check_branch
            %885 = sbr.rel (%p882) target = $region67
          $region66: #{tpu_custom_call.1} parent=62 // pred_region
            %s900 = sand.u32 1, 7
            %p901 = scmp.eq.s32.totalorder %s900, 0
            %p902 = pneg %p901
            // Predicated region
            $region79: #{tpu_custom_call.1} parent=66 // pred_check
              _
            $region80: #{tpu_custom_call.1} parent=66 // pred_check_branch
              %904 = sbr.rel (%p901) target = $region82
            $region81: #{tpu_custom_call.1} parent=66 // pred_region
              %s905 = sand.u32 1, 7
              %s906 = ssub.s32 1, %s905
              %s907 = scalar_lea.vmem %s880, %s906
              %s908 = ssub.s32 1, %s905
              %s909 = scalar_lea.vmem [#allocation2], %s908
              %s910 = sshllo.u32 0, %s905
              loop: start=0, step=1, limit=1
              $region83: #{tpu_custom_call.1} parent=81 // loop_pre_header
                _
              $region84: #{tpu_custom_call.1} parent=81 // loop_header
                %s912 = sphi 0, %s916
                %p913 = scmp.ge.s32.totalorder %s912, 1
                %s917 = sphi %s907, %s907
                %s918 = sphi %s909, %s909
              $region85: #{tpu_custom_call.1} parent=81 // loop_header_branch
                %915 = sbr.rel (%p913) target = $region89
              $region86: #{tpu_custom_call.1} parent=81 // loop_body
                %v919 = vld [vmem:[%s917] sm:%s910]
                %920 = vst [vmem:[%s918] sm:%s910] %v919
              $region87: #{tpu_custom_call.1} parent=81 // loop_footer
                %s916 = sadd.s32 1, %s912
              $region88: #{tpu_custom_call.1} parent=81 // loop_footer_branch
                %911 = sbr.rel target = $region84
              $region89: #{tpu_custom_call.1} parent=81 // loop_exit
                _
            $region82: #{tpu_custom_call.1} parent=66 // pred_fallthru
              _
          $region67: #{tpu_custom_call.1} parent=62 // pred_fallthru
            _
          // Predicated region
          $region68: #{tpu_custom_call.1} parent=62 // pred_check
            %p886 = pneg %p882
          $region69: #{tpu_custom_call.1} parent=62 // pred_check_branch
            %888 = sbr.rel (%p886) target = $region71
          $region70: #{tpu_custom_call.1} parent=62 // pred_region
            %s889 = sshllo.u32 0, 1
            loop: start=0, step=1, limit=1
            $region72: #{tpu_custom_call.1} parent=70 // loop_pre_header
              _
            $region73: #{tpu_custom_call.1} parent=70 // loop_header
              %s891 = sphi 0, %s895
              %p892 = scmp.ge.s32.totalorder %s891, 1
              %s896 = sphi %s880, %s880
              %s897 = sphi [#allocation2], [#allocation2]
            $region74: #{tpu_custom_call.1} parent=70 // loop_header_branch
              %894 = sbr.rel (%p892) target = $region78
            $region75: #{tpu_custom_call.1} parent=70 // loop_body
              %v898 = vld [vmem:[%s896] sm:%s889]
              %899 = vst [vmem:[%s897] sm:%s889] %v898
            $region76: #{tpu_custom_call.1} parent=70 // loop_footer
              %s895 = sadd.s32 1, %s891
            $region77: #{tpu_custom_call.1} parent=70 // loop_footer_branch
              %890 = sbr.rel target = $region73
            $region78: #{tpu_custom_call.1} parent=70 // loop_exit
              _
          $region71: #{tpu_custom_call.1} parent=62 // pred_fallthru
            _
          // Predicated region
          $region90: #{tpu_custom_call.1} parent=62 // pred_check
            _
          $region91: #{tpu_custom_call.1} parent=62 // pred_check_branch
            %923 = sbr.rel (0) target = $region93
          $region92: #{tpu_custom_call.1} parent=62 // pred_region
            %924 = vsyncadd [#allocation4], 16
          $region93: #{tpu_custom_call.1} parent=62 // pred_fallthru
            _
          %s925 = sld [smem:[#allocation6 + $0x1]]
          %s926 = scalar_lea.vmem %s1, %s925
          %s927 = scalar_lea.vmem [#allocation2], 1
          %s928 = scalar_lea.sflag [#allocation4], 1
          %p930 = scmp.lt.u32.totalorder 1, 8
          %p931 = pneg %p930
          // Predicated region
          $region94: #{tpu_custom_call.1} parent=62 // pred_check
            _
          $region95: #{tpu_custom_call.1} parent=62 // pred_check_branch
            %933 = sbr.rel (%p930) target = $region97
          $region96: #{tpu_custom_call.1} parent=62 // pred_region
            %s948 = sand.u32 1, 7
            %p949 = scmp.eq.s32.totalorder %s948, 0
            %p950 = pneg %p949
            // Predicated region
            $region109: #{tpu_custom_call.1} parent=96 // pred_check
              _
            $region110: #{tpu_custom_call.1} parent=96 // pred_check_branch
              %952 = sbr.rel (%p949) target = $region112
            $region111: #{tpu_custom_call.1} parent=96 // pred_region
              %s953 = sand.u32 1, 7
              %s954 = ssub.s32 1, %s953
              %s955 = scalar_lea.vmem %s926, %s954
              %s956 = ssub.s32 1, %s953
              %s957 = scalar_lea.vmem %s927, %s956 [#allocation2]
              %s958 = sshllo.u32 0, %s953
              loop: start=0, step=1, limit=1
              $region113: #{tpu_custom_call.1} parent=111 // loop_pre_header
                _
              $region114: #{tpu_custom_call.1} parent=111 // loop_header
                %s960 = sphi 0, %s964
                %p961 = scmp.ge.s32.totalorder %s960, 1
                %s965 = sphi %s955, %s955
                %s966 = sphi %s957, %s957
              $region115: #{tpu_custom_call.1} parent=111 // loop_header_branch
                %963 = sbr.rel (%p961) target = $region119
              $region116: #{tpu_custom_call.1} parent=111 // loop_body
                %v967 = vld [vmem:[%s965] sm:%s958]
                %968 = vst [vmem:[%s966] sm:%s958] %v967
              $region117: #{tpu_custom_call.1} parent=111 // loop_footer
                %s964 = sadd.s32 1, %s960
              $region118: #{tpu_custom_call.1} parent=111 // loop_footer_branch
                %959 = sbr.rel target = $region114
              $region119: #{tpu_custom_call.1} parent=111 // loop_exit
                _
            $region112: #{tpu_custom_call.1} parent=96 // pred_fallthru
              _
          $region97: #{tpu_custom_call.1} parent=62 // pred_fallthru
            _
          // Predicated region
          $region98: #{tpu_custom_call.1} parent=62 // pred_check
            %p934 = pneg %p930
          $region99: #{tpu_custom_call.1} parent=62 // pred_check_branch
            %936 = sbr.rel (%p934) target = $region101
          $region100: #{tpu_custom_call.1} parent=62 // pred_region
            %s937 = sshllo.u32 0, 1
            loop: start=0, step=1, limit=1
            $region102: #{tpu_custom_call.1} parent=100 // loop_pre_header
              _
            $region103: #{tpu_custom_call.1} parent=100 // loop_header
              %s939 = sphi 0, %s943
              %p940 = scmp.ge.s32.totalorder %s939, 1
              %s944 = sphi %s926, %s926
              %s945 = sphi %s927, %s927
            $region104: #{tpu_custom_call.1} parent=100 // loop_header_branch
              %942 = sbr.rel (%p940) target = $region108
            $region105: #{tpu_custom_call.1} parent=100 // loop_body
              %v946 = vld [vmem:[%s944] sm:%s937]
              %947 = vst [vmem:[%s945] sm:%s937] %v946
            $region106: #{tpu_custom_call.1} parent=100 // loop_footer
              %s943 = sadd.s32 1, %s939
            $region107: #{tpu_custom_call.1} parent=100 // loop_footer_branch
              %938 = sbr.rel target = $region103
            $region108: #{tpu_custom_call.1} parent=100 // loop_exit
              _
          $region101: #{tpu_custom_call.1} parent=62 // pred_fallthru
            _
          // Predicated region
          $region120: #{tpu_custom_call.1} parent=62 // pred_check
            _
          $region121: #{tpu_custom_call.1} parent=62 // pred_check_branch
            %971 = sbr.rel (0) target = $region123
          $region122: #{tpu_custom_call.1} parent=62 // pred_region
            %972 = vsyncadd %s928, 16
          $region123: #{tpu_custom_call.1} parent=62 // pred_fallthru
            _
          %s973 = sld [smem:[#allocation6 + $0x2]]
          %s974 = scalar_lea.vmem %s1, %s973
          %s975 = scalar_lea.vmem [#allocation2], 2
          %s976 = scalar_lea.sflag [#allocation4], 2
          %p978 = scmp.lt.u32.totalorder 1, 8
          %p979 = pneg %p978
          // Predicated region
          $region124: #{tpu_custom_call.1} parent=62 // pred_check
            _
          $region125: #{tpu_custom_call.1} parent=62 // pred_check_branch
            %981 = sbr.rel (%p978) target = $region127
          $region126: #{tpu_custom_call.1} parent=62 // pred_region
            %s996 = sand.u32 1, 7
            %p997 = scmp.eq.s32.totalorder %s996, 0
            %p998 = pneg %p997
            // Predicated region
            $region139: #{tpu_custom_call.1} parent=126 // pred_check
              _
            $region140: #{tpu_custom_call.1} parent=126 // pred_check_branch
              %1000 = sbr.rel (%p997) target = $region142
            $region141: #{tpu_custom_call.1} parent=126 // pred_region
              %s1001 = sand.u32 1, 7
              %s1002 = ssub.s32 1, %s1001
              %s1003 = scalar_lea.vmem %s974, %s1002
              %s1004 = ssub.s32 1, %s1001
              %s1005 = scalar_lea.vmem %s975, %s1004 [#allocation2]
              %s1006 = sshllo.u32 0, %s1001
              loop: start=0, step=1, limit=1
              $region143: #{tpu_custom_call.1} parent=141 // loop_pre_header
                _
              $region144: #{tpu_custom_call.1} parent=141 // loop_header
                %s1008 = sphi 0, %s1012
                %p1009 = scmp.ge.s32.totalorder %s1008, 1
                %s1013 = sphi %s1003, %s1003
                %s1014 = sphi %s1005, %s1005
              $region145: #{tpu_custom_call.1} parent=141 // loop_header_branch
                %1011 = sbr.rel (%p1009) target = $region149
              $region146: #{tpu_custom_call.1} parent=141 // loop_body
                %v1015 = vld [vmem:[%s1013] sm:%s1006]
                %1016 = vst [vmem:[%s1014] sm:%s1006] %v1015
              $region147: #{tpu_custom_call.1} parent=141 // loop_footer
                %s1012 = sadd.s32 1, %s1008
              $region148: #{tpu_custom_call.1} parent=141 // loop_footer_branch
                %1007 = sbr.rel target = $region144
              $region149: #{tpu_custom_call.1} parent=141 // loop_exit
                _
            $region142: #{tpu_custom_call.1} parent=126 // pred_fallthru
              _
          $region127: #{tpu_custom_call.1} parent=62 // pred_fallthru
            _
          // Predicated region
          $region128: #{tpu_custom_call.1} parent=62 // pred_check
            %p982 = pneg %p978
          $region129: #{tpu_custom_call.1} parent=62 // pred_check_branch
            %984 = sbr.rel (%p982) target = $region131
          $region130: #{tpu_custom_call.1} parent=62 // pred_region
            %s985 = sshllo.u32 0, 1
            loop: start=0, step=1, limit=1
            $region132: #{tpu_custom_call.1} parent=130 // loop_pre_header
              _
            $region133: #{tpu_custom_call.1} parent=130 // loop_header
              %s987 = sphi 0, %s991
              %p988 = scmp.ge.s32.totalorder %s987, 1
              %s992 = sphi %s974, %s974
              %s993 = sphi %s975, %s975
            $region134: #{tpu_custom_call.1} parent=130 // loop_header_branch
              %990 = sbr.rel (%p988) target = $region138
            $region135: #{tpu_custom_call.1} parent=130 // loop_body
              %v994 = vld [vmem:[%s992] sm:%s985]
              %995 = vst [vmem:[%s993] sm:%s985] %v994
            $region136: #{tpu_custom_call.1} parent=130 // loop_footer
              %s991 = sadd.s32 1, %s987
            $region137: #{tpu_custom_call.1} parent=130 // loop_footer_branch
              %986 = sbr.rel target = $region133
            $region138: #{tpu_custom_call.1} parent=130 // loop_exit
              _
          $region131: #{tpu_custom_call.1} parent=62 // pred_fallthru
            _
          // Predicated region
          $region150: #{tpu_custom_call.1} parent=62 // pred_check
            _
          $region151: #{tpu_custom_call.1} parent=62 // pred_check_branch
            %1019 = sbr.rel (0) target = $region153
          $region152: #{tpu_custom_call.1} parent=62 // pred_region
            %1020 = vsyncadd %s976, 16
          $region153: #{tpu_custom_call.1} parent=62 // pred_fallthru
            _
          %s1021 = sld [smem:[#allocation6 + $0x3]]
          %s1022 = scalar_lea.vmem %s1, %s1021
          %s1023 = scalar_lea.vmem [#allocation2], 3
          %s1024 = scalar_lea.sflag [#allocation4], 3
          %p1026 = scmp.lt.u32.totalorder 1, 8
          %p1027 = pneg %p1026
          // Predicated region
          $region154: #{tpu_custom_call.1} parent=62 // pred_check
            _
          $region155: #{tpu_custom_call.1} parent=62 // pred_check_branch
            %1029 = sbr.rel (%p1026) target = $region157
          $region156: #{tpu_custom_call.1} parent=62 // pred_region
            %s1044 = sand.u32 1, 7
            %p1045 = scmp.eq.s32.totalorder %s1044, 0
            %p1046 = pneg %p1045
            // Predicated region
            $region169: #{tpu_custom_call.1} parent=156 // pred_check
              _
            $region170: #{tpu_custom_call.1} parent=156 // pred_check_branch
              %1048 = sbr.rel (%p1045) target = $region172
            $region171: #{tpu_custom_call.1} parent=156 // pred_region
              %s1049 = sand.u32 1, 7
              %s1050 = ssub.s32 1, %s1049
              %s1051 = scalar_lea.vmem %s1022, %s1050
              %s1052 = ssub.s32 1, %s1049
              %s1053 = scalar_lea.vmem %s1023, %s1052 [#allocation2]
              %s1054 = sshllo.u32 0, %s1049
              loop: start=0, step=1, limit=1
              $region173: #{tpu_custom_call.1} parent=171 // loop_pre_header
                _
              $region174: #{tpu_custom_call.1} parent=171 // loop_header
                %s1056 = sphi 0, %s1060
                %p1057 = scmp.ge.s32.totalorder %s1056, 1
                %s1061 = sphi %s1051, %s1051
                %s1062 = sphi %s1053, %s1053
              $region175: #{tpu_custom_call.1} parent=171 // loop_header_branch
                %1059 = sbr.rel (%p1057) target = $region179
              $region176: #{tpu_custom_call.1} parent=171 // loop_body
                %v1063 = vld [vmem:[%s1061] sm:%s1054]
                %1064 = vst [vmem:[%s1062] sm:%s1054] %v1063
              $region177: #{tpu_custom_call.1} parent=171 // loop_footer
                %s1060 = sadd.s32 1, %s1056
              $region178: #{tpu_custom_call.1} parent=171 // loop_footer_branch
                %1055 = sbr.rel target = $region174
              $region179: #{tpu_custom_call.1} parent=171 // loop_exit
                _
            $region172: #{tpu_custom_call.1} parent=156 // pred_fallthru
              _
          $region157: #{tpu_custom_call.1} parent=62 // pred_fallthru
            _
          // Predicated region
          $region158: #{tpu_custom_call.1} parent=62 // pred_check
            %p1030 = pneg %p1026
          $region159: #{tpu_custom_call.1} parent=62 // pred_check_branch
            %1032 = sbr.rel (%p1030) target = $region161
          $region160: #{tpu_custom_call.1} parent=62 // pred_region
            %s1033 = sshllo.u32 0, 1
            loop: start=0, step=1, limit=1
            $region162: #{tpu_custom_call.1} parent=160 // loop_pre_header
              _
            $region163: #{tpu_custom_call.1} parent=160 // loop_header
              %s1035 = sphi 0, %s1039
              %p1036 = scmp.ge.s32.totalorder %s1035, 1
              %s1040 = sphi %s1022, %s1022
              %s1041 = sphi %s1023, %s1023
            $region164: #{tpu_custom_call.1} parent=160 // loop_header_branch
              %1038 = sbr.rel (%p1036) target = $region168
            $region165: #{tpu_custom_call.1} parent=160 // loop_body
              %v1042 = vld [vmem:[%s1040] sm:%s1033]
              %1043 = vst [vmem:[%s1041] sm:%s1033] %v1042
            $region166: #{tpu_custom_call.1} parent=160 // loop_footer
              %s1039 = sadd.s32 1, %s1035
            $region167: #{tpu_custom_call.1} parent=160 // loop_footer_branch
              %1034 = sbr.rel target = $region163
            $region168: #{tpu_custom_call.1} parent=160 // loop_exit
              _
          $region161: #{tpu_custom_call.1} parent=62 // pred_fallthru
            _
          // Predicated region
          $region180: #{tpu_custom_call.1} parent=62 // pred_check
            _
          $region181: #{tpu_custom_call.1} parent=62 // pred_check_branch
            %1067 = sbr.rel (0) target = $region183
          $region182: #{tpu_custom_call.1} parent=62 // pred_region
            %1068 = vsyncadd %s1024, 16
          $region183: #{tpu_custom_call.1} parent=62 // pred_fallthru
            _
          %s1069 = sld [smem:[#allocation6 + $0x4]]
          %s1070 = scalar_lea.vmem %s1, %s1069
          %s1071 = scalar_lea.vmem [#allocation2], 4
          %s1072 = scalar_lea.sflag [#allocation4], 4
          %p1074 = scmp.lt.u32.totalorder 1, 8
          %p1075 = pneg %p1074
          // Predicated region
          $region184: #{tpu_custom_call.1} parent=62 // pred_check
            _
          $region185: #{tpu_custom_call.1} parent=62 // pred_check_branch
            %1077 = sbr.rel (%p1074) target = $region187
          $region186: #{tpu_custom_call.1} parent=62 // pred_region
            %s1092 = sand.u32 1, 7
            %p1093 = scmp.eq.s32.totalorder %s1092, 0
            %p1094 = pneg %p1093
            // Predicated region
            $region199: #{tpu_custom_call.1} parent=186 // pred_check
              _
            $region200: #{tpu_custom_call.1} parent=186 // pred_check_branch
              %1096 = sbr.rel (%p1093) target = $region202
            $region201: #{tpu_custom_call.1} parent=186 // pred_region
              %s1097 = sand.u32 1, 7
              %s1098 = ssub.s32 1, %s1097
              %s1099 = scalar_lea.vmem %s1070, %s1098
              %s1100 = ssub.s32 1, %s1097
              %s1101 = scalar_lea.vmem %s1071, %s1100 [#allocation2]
              %s1102 = sshllo.u32 0, %s1097
              loop: start=0, step=1, limit=1
              $region203: #{tpu_custom_call.1} parent=201 // loop_pre_header
                _
              $region204: #{tpu_custom_call.1} parent=201 // loop_header
                %s1104 = sphi 0, %s1108
                %p1105 = scmp.ge.s32.totalorder %s1104, 1
                %s1109 = sphi %s1099, %s1099
                %s1110 = sphi %s1101, %s1101
              $region205: #{tpu_custom_call.1} parent=201 // loop_header_branch
                %1107 = sbr.rel (%p1105) target = $region209
              $region206: #{tpu_custom_call.1} parent=201 // loop_body
                %v1111 = vld [vmem:[%s1109] sm:%s1102]
                %1112 = vst [vmem:[%s1110] sm:%s1102] %v1111
              $region207: #{tpu_custom_call.1} parent=201 // loop_footer
                %s1108 = sadd.s32 1, %s1104
              $region208: #{tpu_custom_call.1} parent=201 // loop_footer_branch
                %1103 = sbr.rel target = $region204
              $region209: #{tpu_custom_call.1} parent=201 // loop_exit
                _
            $region202: #{tpu_custom_call.1} parent=186 // pred_fallthru
              _
          $region187: #{tpu_custom_call.1} parent=62 // pred_fallthru
            _
          // Predicated region
          $region188: #{tpu_custom_call.1} parent=62 // pred_check
            %p1078 = pneg %p1074
          $region189: #{tpu_custom_call.1} parent=62 // pred_check_branch
            %1080 = sbr.rel (%p1078) target = $region191
          $region190: #{tpu_custom_call.1} parent=62 // pred_region
            %s1081 = sshllo.u32 0, 1
            loop: start=0, step=1, limit=1
            $region192: #{tpu_custom_call.1} parent=190 // loop_pre_header
              _
            $region193: #{tpu_custom_call.1} parent=190 // loop_header
              %s1083 = sphi 0, %s1087
              %p1084 = scmp.ge.s32.totalorder %s1083, 1
              %s1088 = sphi %s1070, %s1070
              %s1089 = sphi %s1071, %s1071
            $region194: #{tpu_custom_call.1} parent=190 // loop_header_branch
              %1086 = sbr.rel (%p1084) target = $region198
            $region195: #{tpu_custom_call.1} parent=190 // loop_body
              %v1090 = vld [vmem:[%s1088] sm:%s1081]
              %1091 = vst [vmem:[%s1089] sm:%s1081] %v1090
            $region196: #{tpu_custom_call.1} parent=190 // loop_footer
              %s1087 = sadd.s32 1, %s1083
            $region197: #{tpu_custom_call.1} parent=190 // loop_footer_branch
              %1082 = sbr.rel target = $region193
            $region198: #{tpu_custom_call.1} parent=190 // loop_exit
              _
          $region191: #{tpu_custom_call.1} parent=62 // pred_fallthru
            _
          // Predicated region
          $region210: #{tpu_custom_call.1} parent=62 // pred_check
            _
          $region211: #{tpu_custom_call.1} parent=62 // pred_check_branch
            %1115 = sbr.rel (0) target = $region213
          $region212: #{tpu_custom_call.1} parent=62 // pred_region
            %1116 = vsyncadd %s1072, 16
          $region213: #{tpu_custom_call.1} parent=62 // pred_fallthru
            _
          %s1117 = sld [smem:[#allocation6 + $0x5]]
          %s1118 = scalar_lea.vmem %s1, %s1117
          %s1119 = scalar_lea.vmem [#allocation2], 5
          %s1120 = scalar_lea.sflag [#allocation4], 5
          %p1122 = scmp.lt.u32.totalorder 1, 8
          %p1123 = pneg %p1122
          // Predicated region
          $region214: #{tpu_custom_call.1} parent=62 // pred_check
            _
          $region215: #{tpu_custom_call.1} parent=62 // pred_check_branch
            %1125 = sbr.rel (%p1122) target = $region217
          $region216: #{tpu_custom_call.1} parent=62 // pred_region
            %s1140 = sand.u32 1, 7
            %p1141 = scmp.eq.s32.totalorder %s1140, 0
            %p1142 = pneg %p1141
            // Predicated region
            $region229: #{tpu_custom_call.1} parent=216 // pred_check
              _
            $region230: #{tpu_custom_call.1} parent=216 // pred_check_branch
              %1144 = sbr.rel (%p1141) target = $region232
            $region231: #{tpu_custom_call.1} parent=216 // pred_region
              %s1145 = sand.u32 1, 7
              %s1146 = ssub.s32 1, %s1145
              %s1147 = scalar_lea.vmem %s1118, %s1146
              %s1148 = ssub.s32 1, %s1145
              %s1149 = scalar_lea.vmem %s1119, %s1148 [#allocation2]
              %s1150 = sshllo.u32 0, %s1145
              loop: start=0, step=1, limit=1
              $region233: #{tpu_custom_call.1} parent=231 // loop_pre_header
                _
              $region234: #{tpu_custom_call.1} parent=231 // loop_header
                %s1152 = sphi 0, %s1156
                %p1153 = scmp.ge.s32.totalorder %s1152, 1
                %s1157 = sphi %s1147, %s1147
                %s1158 = sphi %s1149, %s1149
              $region235: #{tpu_custom_call.1} parent=231 // loop_header_branch
                %1155 = sbr.rel (%p1153) target = $region239
              $region236: #{tpu_custom_call.1} parent=231 // loop_body
                %v1159 = vld [vmem:[%s1157] sm:%s1150]
                %1160 = vst [vmem:[%s1158] sm:%s1150] %v1159
              $region237: #{tpu_custom_call.1} parent=231 // loop_footer
                %s1156 = sadd.s32 1, %s1152
              $region238: #{tpu_custom_call.1} parent=231 // loop_footer_branch
                %1151 = sbr.rel target = $region234
              $region239: #{tpu_custom_call.1} parent=231 // loop_exit
                _
            $region232: #{tpu_custom_call.1} parent=216 // pred_fallthru
              _
          $region217: #{tpu_custom_call.1} parent=62 // pred_fallthru
            _
          // Predicated region
          $region218: #{tpu_custom_call.1} parent=62 // pred_check
            %p1126 = pneg %p1122
          $region219: #{tpu_custom_call.1} parent=62 // pred_check_branch
            %1128 = sbr.rel (%p1126) target = $region221
          $region220: #{tpu_custom_call.1} parent=62 // pred_region
            %s1129 = sshllo.u32 0, 1
            loop: start=0, step=1, limit=1
            $region222: #{tpu_custom_call.1} parent=220 // loop_pre_header
              _
            $region223: #{tpu_custom_call.1} parent=220 // loop_header
              %s1131 = sphi 0, %s1135
              %p1132 = scmp.ge.s32.totalorder %s1131, 1
              %s1136 = sphi %s1118, %s1118
              %s1137 = sphi %s1119, %s1119
            $region224: #{tpu_custom_call.1} parent=220 // loop_header_branch
              %1134 = sbr.rel (%p1132) target = $region228
            $region225: #{tpu_custom_call.1} parent=220 // loop_body
              %v1138 = vld [vmem:[%s1136] sm:%s1129]
              %1139 = vst [vmem:[%s1137] sm:%s1129] %v1138
            $region226: #{tpu_custom_call.1} parent=220 // loop_footer
              %s1135 = sadd.s32 1, %s1131
            $region227: #{tpu_custom_call.1} parent=220 // loop_footer_branch
              %1130 = sbr.rel target = $region223
            $region228: #{tpu_custom_call.1} parent=220 // loop_exit
              _
          $region221: #{tpu_custom_call.1} parent=62 // pred_fallthru
            _
          // Predicated region
          $region240: #{tpu_custom_call.1} parent=62 // pred_check
            _
          $region241: #{tpu_custom_call.1} parent=62 // pred_check_branch
            %1163 = sbr.rel (0) target = $region243
          $region242: #{tpu_custom_call.1} parent=62 // pred_region
            %1164 = vsyncadd %s1120, 16
          $region243: #{tpu_custom_call.1} parent=62 // pred_fallthru
            _
          %s1165 = sld [smem:[#allocation6 + $0x6]]
          %s1166 = scalar_lea.vmem %s1, %s1165
          %s1167 = scalar_lea.vmem [#allocation2], 6
          %s1168 = scalar_lea.sflag [#allocation4], 6
          %p1170 = scmp.lt.u32.totalorder 1, 8
          %p1171 = pneg %p1170
          // Predicated region
          $region244: #{tpu_custom_call.1} parent=62 // pred_check
            _
          $region245: #{tpu_custom_call.1} parent=62 // pred_check_branch
            %1173 = sbr.rel (%p1170) target = $region247
          $region246: #{tpu_custom_call.1} parent=62 // pred_region
            %s1188 = sand.u32 1, 7
            %p1189 = scmp.eq.s32.totalorder %s1188, 0
            %p1190 = pneg %p1189
            // Predicated region
            $region259: #{tpu_custom_call.1} parent=246 // pred_check
              _
            $region260: #{tpu_custom_call.1} parent=246 // pred_check_branch
              %1192 = sbr.rel (%p1189) target = $region262
            $region261: #{tpu_custom_call.1} parent=246 // pred_region
              %s1193 = sand.u32 1, 7
              %s1194 = ssub.s32 1, %s1193
              %s1195 = scalar_lea.vmem %s1166, %s1194
              %s1196 = ssub.s32 1, %s1193
              %s1197 = scalar_lea.vmem %s1167, %s1196 [#allocation2]
              %s1198 = sshllo.u32 0, %s1193
              loop: start=0, step=1, limit=1
              $region263: #{tpu_custom_call.1} parent=261 // loop_pre_header
                _
              $region264: #{tpu_custom_call.1} parent=261 // loop_header
                %s1200 = sphi 0, %s1204
                %p1201 = scmp.ge.s32.totalorder %s1200, 1
                %s1205 = sphi %s1195, %s1195
                %s1206 = sphi %s1197, %s1197
              $region265: #{tpu_custom_call.1} parent=261 // loop_header_branch
                %1203 = sbr.rel (%p1201) target = $region269
              $region266: #{tpu_custom_call.1} parent=261 // loop_body
                %v1207 = vld [vmem:[%s1205] sm:%s1198]
                %1208 = vst [vmem:[%s1206] sm:%s1198] %v1207
              $region267: #{tpu_custom_call.1} parent=261 // loop_footer
                %s1204 = sadd.s32 1, %s1200
              $region268: #{tpu_custom_call.1} parent=261 // loop_footer_branch
                %1199 = sbr.rel target = $region264
              $region269: #{tpu_custom_call.1} parent=261 // loop_exit
                _
            $region262: #{tpu_custom_call.1} parent=246 // pred_fallthru
              _
          $region247: #{tpu_custom_call.1} parent=62 // pred_fallthru
            _
          // Predicated region
          $region248: #{tpu_custom_call.1} parent=62 // pred_check
            %p1174 = pneg %p1170
          $region249: #{tpu_custom_call.1} parent=62 // pred_check_branch
            %1176 = sbr.rel (%p1174) target = $region251
          $region250: #{tpu_custom_call.1} parent=62 // pred_region
            %s1177 = sshllo.u32 0, 1
            loop: start=0, step=1, limit=1
            $region252: #{tpu_custom_call.1} parent=250 // loop_pre_header
              _
            $region253: #{tpu_custom_call.1} parent=250 // loop_header
              %s1179 = sphi 0, %s1183
              %p1180 = scmp.ge.s32.totalorder %s1179, 1
              %s1184 = sphi %s1166, %s1166
              %s1185 = sphi %s1167, %s1167
            $region254: #{tpu_custom_call.1} parent=250 // loop_header_branch
              %1182 = sbr.rel (%p1180) target = $region258
            $region255: #{tpu_custom_call.1} parent=250 // loop_body
              %v1186 = vld [vmem:[%s1184] sm:%s1177]
              %1187 = vst [vmem:[%s1185] sm:%s1177] %v1186
            $region256: #{tpu_custom_call.1} parent=250 // loop_footer
              %s1183 = sadd.s32 1, %s1179
            $region257: #{tpu_custom_call.1} parent=250 // loop_footer_branch
              %1178 = sbr.rel target = $region253
            $region258: #{tpu_custom_call.1} parent=250 // loop_exit
              _
          $region251: #{tpu_custom_call.1} parent=62 // pred_fallthru
            _
          // Predicated region
          $region270: #{tpu_custom_call.1} parent=62 // pred_check
            _
          $region271: #{tpu_custom_call.1} parent=62 // pred_check_branch
            %1211 = sbr.rel (0) target = $region273
          $region272: #{tpu_custom_call.1} parent=62 // pred_region
            %1212 = vsyncadd %s1168, 16
          $region273: #{tpu_custom_call.1} parent=62 // pred_fallthru
            _
          %s1213 = sld [smem:[#allocation6 + $0x7]]
          %s1214 = scalar_lea.vmem %s1, %s1213
          %s1215 = scalar_lea.vmem [#allocation2], 7
          %s1216 = scalar_lea.sflag [#allocation4], 7
          %p1218 = scmp.lt.u32.totalorder 1, 8
          %p1219 = pneg %p1218
          // Predicated region
          $region274: #{tpu_custom_call.1} parent=62 // pred_check
            _
          $region275: #{tpu_custom_call.1} parent=62 // pred_check_branch
            %1221 = sbr.rel (%p1218) target = $region277
          $region276: #{tpu_custom_call.1} parent=62 // pred_region
            %s1236 = sand.u32 1, 7
            %p1237 = scmp.eq.s32.totalorder %s1236, 0
            %p1238 = pneg %p1237
            // Predicated region
            $region289: #{tpu_custom_call.1} parent=276 // pred_check
              _
            $region290: #{tpu_custom_call.1} parent=276 // pred_check_branch
              %1240 = sbr.rel (%p1237) target = $region292
            $region291: #{tpu_custom_call.1} parent=276 // pred_region
              %s1241 = sand.u32 1, 7
              %s1242 = ssub.s32 1, %s1241
              %s1243 = scalar_lea.vmem %s1214, %s1242
              %s1244 = ssub.s32 1, %s1241
              %s1245 = scalar_lea.vmem %s1215, %s1244 [#allocation2]
              %s1246 = sshllo.u32 0, %s1241
              loop: start=0, step=1, limit=1
              $region293: #{tpu_custom_call.1} parent=291 // loop_pre_header
                _
              $region294: #{tpu_custom_call.1} parent=291 // loop_header
                %s1248 = sphi 0, %s1252
                %p1249 = scmp.ge.s32.totalorder %s1248, 1
                %s1253 = sphi %s1243, %s1243
                %s1254 = sphi %s1245, %s1245
              $region295: #{tpu_custom_call.1} parent=291 // loop_header_branch
                %1251 = sbr.rel (%p1249) target = $region299
              $region296: #{tpu_custom_call.1} parent=291 // loop_body
                %v1255 = vld [vmem:[%s1253] sm:%s1246]
                %1256 = vst [vmem:[%s1254] sm:%s1246] %v1255
              $region297: #{tpu_custom_call.1} parent=291 // loop_footer
                %s1252 = sadd.s32 1, %s1248
              $region298: #{tpu_custom_call.1} parent=291 // loop_footer_branch
                %1247 = sbr.rel target = $region294
              $region299: #{tpu_custom_call.1} parent=291 // loop_exit
                _
            $region292: #{tpu_custom_call.1} parent=276 // pred_fallthru
              _
          $region277: #{tpu_custom_call.1} parent=62 // pred_fallthru
            _
          // Predicated region
          $region278: #{tpu_custom_call.1} parent=62 // pred_check
            %p1222 = pneg %p1218
          $region279: #{tpu_custom_call.1} parent=62 // pred_check_branch
            %1224 = sbr.rel (%p1222) target = $region281
          $region280: #{tpu_custom_call.1} parent=62 // pred_region
            %s1225 = sshllo.u32 0, 1
            loop: start=0, step=1, limit=1
            $region282: #{tpu_custom_call.1} parent=280 // loop_pre_header
              _
            $region283: #{tpu_custom_call.1} parent=280 // loop_header
              %s1227 = sphi 0, %s1231
              %p1228 = scmp.ge.s32.totalorder %s1227, 1
              %s1232 = sphi %s1214, %s1214
              %s1233 = sphi %s1215, %s1215
            $region284: #{tpu_custom_call.1} parent=280 // loop_header_branch
              %1230 = sbr.rel (%p1228) target = $region288
            $region285: #{tpu_custom_call.1} parent=280 // loop_body
              %v1234 = vld [vmem:[%s1232] sm:%s1225]
              %1235 = vst [vmem:[%s1233] sm:%s1225] %v1234
            $region286: #{tpu_custom_call.1} parent=280 // loop_footer
              %s1231 = sadd.s32 1, %s1227
            $region287: #{tpu_custom_call.1} parent=280 // loop_footer_branch
              %1226 = sbr.rel target = $region283
            $region288: #{tpu_custom_call.1} parent=280 // loop_exit
              _
          $region281: #{tpu_custom_call.1} parent=62 // pred_fallthru
            _
          // Predicated region
          $region300: #{tpu_custom_call.1} parent=62 // pred_check
            _
          $region301: #{tpu_custom_call.1} parent=62 // pred_check_branch
            %1259 = sbr.rel (0) target = $region303
          $region302: #{tpu_custom_call.1} parent=62 // pred_region
            %1260 = vsyncadd %s1216, 16
          $region303: #{tpu_custom_call.1} parent=62 // pred_fallthru
            _
          %s1261 = sld [smem:[#allocation6 + $0x8]]
          %s1262 = scalar_lea.vmem %s1, %s1261
          %s1263 = scalar_lea.vmem [#allocation2], 8
          %s1264 = scalar_lea.sflag [#allocation4], 8
          %p1266 = scmp.lt.u32.totalorder 1, 8
          %p1267 = pneg %p1266
          // Predicated region
          $region304: #{tpu_custom_call.1} parent=62 // pred_check
            _
          $region305: #{tpu_custom_call.1} parent=62 // pred_check_branch
            %1269 = sbr.rel (%p1266) target = $region307
          $region306: #{tpu_custom_call.1} parent=62 // pred_region
            %s1284 = sand.u32 1, 7
            %p1285 = scmp.eq.s32.totalorder %s1284, 0
            %p1286 = pneg %p1285
            // Predicated region
            $region319: #{tpu_custom_call.1} parent=306 // pred_check
              _
            $region320: #{tpu_custom_call.1} parent=306 // pred_check_branch
              %1288 = sbr.rel (%p1285) target = $region322
            $region321: #{tpu_custom_call.1} parent=306 // pred_region
              %s1289 = sand.u32 1, 7
              %s1290 = ssub.s32 1, %s1289
              %s1291 = scalar_lea.vmem %s1262, %s1290
              %s1292 = ssub.s32 1, %s1289
              %s1293 = scalar_lea.vmem %s1263, %s1292 [#allocation2]
              %s1294 = sshllo.u32 0, %s1289
              loop: start=0, step=1, limit=1
              $region323: #{tpu_custom_call.1} parent=321 // loop_pre_header
                _
              $region324: #{tpu_custom_call.1} parent=321 // loop_header
                %s1296 = sphi 0, %s1300
                %p1297 = scmp.ge.s32.totalorder %s1296, 1
                %s1301 = sphi %s1291, %s1291
                %s1302 = sphi %s1293, %s1293
              $region325: #{tpu_custom_call.1} parent=321 // loop_header_branch
                %1299 = sbr.rel (%p1297) target = $region329
              $region326: #{tpu_custom_call.1} parent=321 // loop_body
                %v1303 = vld [vmem:[%s1301] sm:%s1294]
                %1304 = vst [vmem:[%s1302] sm:%s1294] %v1303
              $region327: #{tpu_custom_call.1} parent=321 // loop_footer
                %s1300 = sadd.s32 1, %s1296
              $region328: #{tpu_custom_call.1} parent=321 // loop_footer_branch
                %1295 = sbr.rel target = $region324
              $region329: #{tpu_custom_call.1} parent=321 // loop_exit
                _
            $region322: #{tpu_custom_call.1} parent=306 // pred_fallthru
              _
          $region307: #{tpu_custom_call.1} parent=62 // pred_fallthru
            _
          // Predicated region
          $region308: #{tpu_custom_call.1} parent=62 // pred_check
            %p1270 = pneg %p1266
          $region309: #{tpu_custom_call.1} parent=62 // pred_check_branch
            %1272 = sbr.rel (%p1270) target = $region311
          $region310: #{tpu_custom_call.1} parent=62 // pred_region
            %s1273 = sshllo.u32 0, 1
            loop: start=0, step=1, limit=1
            $region312: #{tpu_custom_call.1} parent=310 // loop_pre_header
              _
            $region313: #{tpu_custom_call.1} parent=310 // loop_header
              %s1275 = sphi 0, %s1279
              %p1276 = scmp.ge.s32.totalorder %s1275, 1
              %s1280 = sphi %s1262, %s1262
              %s1281 = sphi %s1263, %s1263
            $region314: #{tpu_custom_call.1} parent=310 // loop_header_branch
              %1278 = sbr.rel (%p1276) target = $region318
            $region315: #{tpu_custom_call.1} parent=310 // loop_body
              %v1282 = vld [vmem:[%s1280] sm:%s1273]
              %1283 = vst [vmem:[%s1281] sm:%s1273] %v1282
            $region316: #{tpu_custom_call.1} parent=310 // loop_footer
              %s1279 = sadd.s32 1, %s1275
            $region317: #{tpu_custom_call.1} parent=310 // loop_footer_branch
              %1274 = sbr.rel target = $region313
            $region318: #{tpu_custom_call.1} parent=310 // loop_exit
              _
          $region311: #{tpu_custom_call.1} parent=62 // pred_fallthru
            _
          // Predicated region
          $region330: #{tpu_custom_call.1} parent=62 // pred_check
            _
          $region331: #{tpu_custom_call.1} parent=62 // pred_check_branch
            %1307 = sbr.rel (0) target = $region333
          $region332: #{tpu_custom_call.1} parent=62 // pred_region
            %1308 = vsyncadd %s1264, 16
          $region333: #{tpu_custom_call.1} parent=62 // pred_fallthru
            _
          %s1309 = sld [smem:[#allocation6 + $0x9]]
          %s1310 = scalar_lea.vmem %s1, %s1309
          %s1311 = scalar_lea.vmem [#allocation2], 9
          %s1312 = scalar_lea.sflag [#allocation4], 9
          %p1314 = scmp.lt.u32.totalorder 1, 8
          %p1315 = pneg %p1314
          // Predicated region
          $region334: #{tpu_custom_call.1} parent=62 // pred_check
            _
          $region335: #{tpu_custom_call.1} parent=62 // pred_check_branch
            %1317 = sbr.rel (%p1314) target = $region337
          $region336: #{tpu_custom_call.1} parent=62 // pred_region
            %s1332 = sand.u32 1, 7
            %p1333 = scmp.eq.s32.totalorder %s1332, 0
            %p1334 = pneg %p1333
            // Predicated region
            $region349: #{tpu_custom_call.1} parent=336 // pred_check
              _
            $region350: #{tpu_custom_call.1} parent=336 // pred_check_branch
              %1336 = sbr.rel (%p1333) target = $region352
            $region351: #{tpu_custom_call.1} parent=336 // pred_region
              %s1337 = sand.u32 1, 7
              %s1338 = ssub.s32 1, %s1337
              %s1339 = scalar_lea.vmem %s1310, %s1338
              %s1340 = ssub.s32 1, %s1337
              %s1341 = scalar_lea.vmem %s1311, %s1340 [#allocation2]
              %s1342 = sshllo.u32 0, %s1337
              loop: start=0, step=1, limit=1
              $region353: #{tpu_custom_call.1} parent=351 // loop_pre_header
                _
              $region354: #{tpu_custom_call.1} parent=351 // loop_header
                %s1344 = sphi 0, %s1348
                %p1345 = scmp.ge.s32.totalorder %s1344, 1
                %s1349 = sphi %s1339, %s1339
                %s1350 = sphi %s1341, %s1341
              $region355: #{tpu_custom_call.1} parent=351 // loop_header_branch
                %1347 = sbr.rel (%p1345) target = $region359
              $region356: #{tpu_custom_call.1} parent=351 // loop_body
                %v1351 = vld [vmem:[%s1349] sm:%s1342]
                %1352 = vst [vmem:[%s1350] sm:%s1342] %v1351
              $region357: #{tpu_custom_call.1} parent=351 // loop_footer
                %s1348 = sadd.s32 1, %s1344
              $region358: #{tpu_custom_call.1} parent=351 // loop_footer_branch
                %1343 = sbr.rel target = $region354
              $region359: #{tpu_custom_call.1} parent=351 // loop_exit
                _
            $region352: #{tpu_custom_call.1} parent=336 // pred_fallthru
              _
          $region337: #{tpu_custom_call.1} parent=62 // pred_fallthru
            _
          // Predicated region
          $region338: #{tpu_custom_call.1} parent=62 // pred_check
            %p1318 = pneg %p1314
          $region339: #{tpu_custom_call.1} parent=62 // pred_check_branch
            %1320 = sbr.rel (%p1318) target = $region341
          $region340: #{tpu_custom_call.1} parent=62 // pred_region
            %s1321 = sshllo.u32 0, 1
            loop: start=0, step=1, limit=1
            $region342: #{tpu_custom_call.1} parent=340 // loop_pre_header
              _
            $region343: #{tpu_custom_call.1} parent=340 // loop_header
              %s1323 = sphi 0, %s1327
              %p1324 = scmp.ge.s32.totalorder %s1323, 1
              %s1328 = sphi %s1310, %s1310
              %s1329 = sphi %s1311, %s1311
            $region344: #{tpu_custom_call.1} parent=340 // loop_header_branch
              %1326 = sbr.rel (%p1324) target = $region348
            $region345: #{tpu_custom_call.1} parent=340 // loop_body
              %v1330 = vld [vmem:[%s1328] sm:%s1321]
              %1331 = vst [vmem:[%s1329] sm:%s1321] %v1330
            $region346: #{tpu_custom_call.1} parent=340 // loop_footer
              %s1327 = sadd.s32 1, %s1323
            $region347: #{tpu_custom_call.1} parent=340 // loop_footer_branch
              %1322 = sbr.rel target = $region343
            $region348: #{tpu_custom_call.1} parent=340 // loop_exit
              _
          $region341: #{tpu_custom_call.1} parent=62 // pred_fallthru
            _
          // Predicated region
          $region360: #{tpu_custom_call.1} parent=62 // pred_check
            _
          $region361: #{tpu_custom_call.1} parent=62 // pred_check_branch
            %1355 = sbr.rel (0) target = $region363
          $region362: #{tpu_custom_call.1} parent=62 // pred_region
            %1356 = vsyncadd %s1312, 16
          $region363: #{tpu_custom_call.1} parent=62 // pred_fallthru
            _
          %s1357 = sld [smem:[#allocation6 + $0xa]]
          %s1358 = scalar_lea.vmem %s1, %s1357
          %s1359 = scalar_lea.vmem [#allocation2], 10
          %s1360 = scalar_lea.sflag [#allocation4], 10
          %p1362 = scmp.lt.u32.totalorder 1, 8
          %p1363 = pneg %p1362
          // Predicated region
          $region364: #{tpu_custom_call.1} parent=62 // pred_check
            _
          $region365: #{tpu_custom_call.1} parent=62 // pred_check_branch
            %1365 = sbr.rel (%p1362) target = $region367
          $region366: #{tpu_custom_call.1} parent=62 // pred_region
            %s1380 = sand.u32 1, 7
            %p1381 = scmp.eq.s32.totalorder %s1380, 0
            %p1382 = pneg %p1381
            // Predicated region
            $region379: #{tpu_custom_call.1} parent=366 // pred_check
              _
            $region380: #{tpu_custom_call.1} parent=366 // pred_check_branch
              %1384 = sbr.rel (%p1381) target = $region382
            $region381: #{tpu_custom_call.1} parent=366 // pred_region
              %s1385 = sand.u32 1, 7
              %s1386 = ssub.s32 1, %s1385
              %s1387 = scalar_lea.vmem %s1358, %s1386
              %s1388 = ssub.s32 1, %s1385
              %s1389 = scalar_lea.vmem %s1359, %s1388 [#allocation2]
              %s1390 = sshllo.u32 0, %s1385
              loop: start=0, step=1, limit=1
              $region383: #{tpu_custom_call.1} parent=381 // loop_pre_header
                _
              $region384: #{tpu_custom_call.1} parent=381 // loop_header
                %s1392 = sphi 0, %s1396
                %p1393 = scmp.ge.s32.totalorder %s1392, 1
                %s1397 = sphi %s1387, %s1387
                %s1398 = sphi %s1389, %s1389
              $region385: #{tpu_custom_call.1} parent=381 // loop_header_branch
                %1395 = sbr.rel (%p1393) target = $region389
              $region386: #{tpu_custom_call.1} parent=381 // loop_body
                %v1399 = vld [vmem:[%s1397] sm:%s1390]
                %1400 = vst [vmem:[%s1398] sm:%s1390] %v1399
              $region387: #{tpu_custom_call.1} parent=381 // loop_footer
                %s1396 = sadd.s32 1, %s1392
              $region388: #{tpu_custom_call.1} parent=381 // loop_footer_branch
                %1391 = sbr.rel target = $region384
              $region389: #{tpu_custom_call.1} parent=381 // loop_exit
                _
            $region382: #{tpu_custom_call.1} parent=366 // pred_fallthru
              _
          $region367: #{tpu_custom_call.1} parent=62 // pred_fallthru
            _
          // Predicated region
          $region368: #{tpu_custom_call.1} parent=62 // pred_check
            %p1366 = pneg %p1362
          $region369: #{tpu_custom_call.1} parent=62 // pred_check_branch
            %1368 = sbr.rel (%p1366) target = $region371
          $region370: #{tpu_custom_call.1} parent=62 // pred_region
            %s1369 = sshllo.u32 0, 1
            loop: start=0, step=1, limit=1
            $region372: #{tpu_custom_call.1} parent=370 // loop_pre_header
              _
            $region373: #{tpu_custom_call.1} parent=370 // loop_header
              %s1371 = sphi 0, %s1375
              %p1372 = scmp.ge.s32.totalorder %s1371, 1
              %s1376 = sphi %s1358, %s1358
              %s1377 = sphi %s1359, %s1359
            $region374: #{tpu_custom_call.1} parent=370 // loop_header_branch
              %1374 = sbr.rel (%p1372) target = $region378
            $region375: #{tpu_custom_call.1} parent=370 // loop_body
              %v1378 = vld [vmem:[%s1376] sm:%s1369]
              %1379 = vst [vmem:[%s1377] sm:%s1369] %v1378
            $region376: #{tpu_custom_call.1} parent=370 // loop_footer
              %s1375 = sadd.s32 1, %s1371
            $region377: #{tpu_custom_call.1} parent=370 // loop_footer_branch
              %1370 = sbr.rel target = $region373
            $region378: #{tpu_custom_call.1} parent=370 // loop_exit
              _
          $region371: #{tpu_custom_call.1} parent=62 // pred_fallthru
            _
          // Predicated region
          $region390: #{tpu_custom_call.1} parent=62 // pred_check
            _
          $region391: #{tpu_custom_call.1} parent=62 // pred_check_branch
            %1403 = sbr.rel (0) target = $region393
          $region392: #{tpu_custom_call.1} parent=62 // pred_region
            %1404 = vsyncadd %s1360, 16
          $region393: #{tpu_custom_call.1} parent=62 // pred_fallthru
            _
          %s1405 = sld [smem:[#allocation6 + $0xb]]
          %s1406 = scalar_lea.vmem %s1, %s1405
          %s1407 = scalar_lea.vmem [#allocation2], 11
          %s1408 = scalar_lea.sflag [#allocation4], 11
          %p1410 = scmp.lt.u32.totalorder 1, 8
          %p1411 = pneg %p1410
          // Predicated region
          $region394: #{tpu_custom_call.1} parent=62 // pred_check
            _
          $region395: #{tpu_custom_call.1} parent=62 // pred_check_branch
            %1413 = sbr.rel (%p1410) target = $region397
          $region396: #{tpu_custom_call.1} parent=62 // pred_region
            %s1428 = sand.u32 1, 7
            %p1429 = scmp.eq.s32.totalorder %s1428, 0
            %p1430 = pneg %p1429
            // Predicated region
            $region409: #{tpu_custom_call.1} parent=396 // pred_check
              _
            $region410: #{tpu_custom_call.1} parent=396 // pred_check_branch
              %1432 = sbr.rel (%p1429) target = $region412
            $region411: #{tpu_custom_call.1} parent=396 // pred_region
              %s1433 = sand.u32 1, 7
              %s1434 = ssub.s32 1, %s1433
              %s1435 = scalar_lea.vmem %s1406, %s1434
              %s1436 = ssub.s32 1, %s1433
              %s1437 = scalar_lea.vmem %s1407, %s1436 [#allocation2]
              %s1438 = sshllo.u32 0, %s1433
              loop: start=0, step=1, limit=1
              $region413: #{tpu_custom_call.1} parent=411 // loop_pre_header
                _
              $region414: #{tpu_custom_call.1} parent=411 // loop_header
                %s1440 = sphi 0, %s1444
                %p1441 = scmp.ge.s32.totalorder %s1440, 1
                %s1445 = sphi %s1435, %s1435
                %s1446 = sphi %s1437, %s1437
              $region415: #{tpu_custom_call.1} parent=411 // loop_header_branch
                %1443 = sbr.rel (%p1441) target = $region419
              $region416: #{tpu_custom_call.1} parent=411 // loop_body
                %v1447 = vld [vmem:[%s1445] sm:%s1438]
                %1448 = vst [vmem:[%s1446] sm:%s1438] %v1447
              $region417: #{tpu_custom_call.1} parent=411 // loop_footer
                %s1444 = sadd.s32 1, %s1440
              $region418: #{tpu_custom_call.1} parent=411 // loop_footer_branch
                %1439 = sbr.rel target = $region414
              $region419: #{tpu_custom_call.1} parent=411 // loop_exit
                _
            $region412: #{tpu_custom_call.1} parent=396 // pred_fallthru
              _
          $region397: #{tpu_custom_call.1} parent=62 // pred_fallthru
            _
          // Predicated region
          $region398: #{tpu_custom_call.1} parent=62 // pred_check
            %p1414 = pneg %p1410
          $region399: #{tpu_custom_call.1} parent=62 // pred_check_branch
            %1416 = sbr.rel (%p1414) target = $region401
          $region400: #{tpu_custom_call.1} parent=62 // pred_region
            %s1417 = sshllo.u32 0, 1
            loop: start=0, step=1, limit=1
            $region402: #{tpu_custom_call.1} parent=400 // loop_pre_header
              _
            $region403: #{tpu_custom_call.1} parent=400 // loop_header
              %s1419 = sphi 0, %s1423
              %p1420 = scmp.ge.s32.totalorder %s1419, 1
              %s1424 = sphi %s1406, %s1406
              %s1425 = sphi %s1407, %s1407
            $region404: #{tpu_custom_call.1} parent=400 // loop_header_branch
              %1422 = sbr.rel (%p1420) target = $region408
            $region405: #{tpu_custom_call.1} parent=400 // loop_body
              %v1426 = vld [vmem:[%s1424] sm:%s1417]
              %1427 = vst [vmem:[%s1425] sm:%s1417] %v1426
            $region406: #{tpu_custom_call.1} parent=400 // loop_footer
              %s1423 = sadd.s32 1, %s1419
            $region407: #{tpu_custom_call.1} parent=400 // loop_footer_branch
              %1418 = sbr.rel target = $region403
            $region408: #{tpu_custom_call.1} parent=400 // loop_exit
              _
          $region401: #{tpu_custom_call.1} parent=62 // pred_fallthru
            _
          // Predicated region
          $region420: #{tpu_custom_call.1} parent=62 // pred_check
            _
          $region421: #{tpu_custom_call.1} parent=62 // pred_check_branch
            %1451 = sbr.rel (0) target = $region423
          $region422: #{tpu_custom_call.1} parent=62 // pred_region
            %1452 = vsyncadd %s1408, 16
          $region423: #{tpu_custom_call.1} parent=62 // pred_fallthru
            _
          %s1453 = sld [smem:[#allocation6 + $0xc]]
          %s1454 = scalar_lea.vmem %s1, %s1453
          %s1455 = scalar_lea.vmem [#allocation2], 12
          %s1456 = scalar_lea.sflag [#allocation4], 12
          %p1458 = scmp.lt.u32.totalorder 1, 8
          %p1459 = pneg %p1458
          // Predicated region
          $region424: #{tpu_custom_call.1} parent=62 // pred_check
            _
          $region425: #{tpu_custom_call.1} parent=62 // pred_check_branch
            %1461 = sbr.rel (%p1458) target = $region427
          $region426: #{tpu_custom_call.1} parent=62 // pred_region
            %s1476 = sand.u32 1, 7
            %p1477 = scmp.eq.s32.totalorder %s1476, 0
            %p1478 = pneg %p1477
            // Predicated region
            $region439: #{tpu_custom_call.1} parent=426 // pred_check
              _
            $region440: #{tpu_custom_call.1} parent=426 // pred_check_branch
              %1480 = sbr.rel (%p1477) target = $region442
            $region441: #{tpu_custom_call.1} parent=426 // pred_region
              %s1481 = sand.u32 1, 7
              %s1482 = ssub.s32 1, %s1481
              %s1483 = scalar_lea.vmem %s1454, %s1482
              %s1484 = ssub.s32 1, %s1481
              %s1485 = scalar_lea.vmem %s1455, %s1484 [#allocation2]
              %s1486 = sshllo.u32 0, %s1481
              loop: start=0, step=1, limit=1
              $region443: #{tpu_custom_call.1} parent=441 // loop_pre_header
                _
              $region444: #{tpu_custom_call.1} parent=441 // loop_header
                %s1488 = sphi 0, %s1492
                %p1489 = scmp.ge.s32.totalorder %s1488, 1
                %s1493 = sphi %s1483, %s1483
                %s1494 = sphi %s1485, %s1485
              $region445: #{tpu_custom_call.1} parent=441 // loop_header_branch
                %1491 = sbr.rel (%p1489) target = $region449
              $region446: #{tpu_custom_call.1} parent=441 // loop_body
                %v1495 = vld [vmem:[%s1493] sm:%s1486]
                %1496 = vst [vmem:[%s1494] sm:%s1486] %v1495
              $region447: #{tpu_custom_call.1} parent=441 // loop_footer
                %s1492 = sadd.s32 1, %s1488
              $region448: #{tpu_custom_call.1} parent=441 // loop_footer_branch
                %1487 = sbr.rel target = $region444
              $region449: #{tpu_custom_call.1} parent=441 // loop_exit
                _
            $region442: #{tpu_custom_call.1} parent=426 // pred_fallthru
              _
          $region427: #{tpu_custom_call.1} parent=62 // pred_fallthru
            _
          // Predicated region
          $region428: #{tpu_custom_call.1} parent=62 // pred_check
            %p1462 = pneg %p1458
          $region429: #{tpu_custom_call.1} parent=62 // pred_check_branch
            %1464 = sbr.rel (%p1462) target = $region431
          $region430: #{tpu_custom_call.1} parent=62 // pred_region
            %s1465 = sshllo.u32 0, 1
            loop: start=0, step=1, limit=1
            $region432: #{tpu_custom_call.1} parent=430 // loop_pre_header
              _
            $region433: #{tpu_custom_call.1} parent=430 // loop_header
              %s1467 = sphi 0, %s1471
              %p1468 = scmp.ge.s32.totalorder %s1467, 1
              %s1472 = sphi %s1454, %s1454
              %s1473 = sphi %s1455, %s1455
            $region434: #{tpu_custom_call.1} parent=430 // loop_header_branch
              %1470 = sbr.rel (%p1468) target = $region438
            $region435: #{tpu_custom_call.1} parent=430 // loop_body
              %v1474 = vld [vmem:[%s1472] sm:%s1465]
              %1475 = vst [vmem:[%s1473] sm:%s1465] %v1474
            $region436: #{tpu_custom_call.1} parent=430 // loop_footer
              %s1471 = sadd.s32 1, %s1467
            $region437: #{tpu_custom_call.1} parent=430 // loop_footer_branch
              %1466 = sbr.rel target = $region433
            $region438: #{tpu_custom_call.1} parent=430 // loop_exit
              _
          $region431: #{tpu_custom_call.1} parent=62 // pred_fallthru
            _
          // Predicated region
          $region450: #{tpu_custom_call.1} parent=62 // pred_check
            _
          $region451: #{tpu_custom_call.1} parent=62 // pred_check_branch
            %1499 = sbr.rel (0) target = $region453
          $region452: #{tpu_custom_call.1} parent=62 // pred_region
            %1500 = vsyncadd %s1456, 16
          $region453: #{tpu_custom_call.1} parent=62 // pred_fallthru
            _
          %s1501 = sld [smem:[#allocation6 + $0xd]]
          %s1502 = scalar_lea.vmem %s1, %s1501
          %s1503 = scalar_lea.vmem [#allocation2], 13
          %s1504 = scalar_lea.sflag [#allocation4], 13
          %p1506 = scmp.lt.u32.totalorder 1, 8
          %p1507 = pneg %p1506
          // Predicated region
          $region454: #{tpu_custom_call.1} parent=62 // pred_check
            _
          $region455: #{tpu_custom_call.1} parent=62 // pred_check_branch
            %1509 = sbr.rel (%p1506) target = $region457
          $region456: #{tpu_custom_call.1} parent=62 // pred_region
            %s1524 = sand.u32 1, 7
            %p1525 = scmp.eq.s32.totalorder %s1524, 0
            %p1526 = pneg %p1525
            // Predicated region
            $region469: #{tpu_custom_call.1} parent=456 // pred_check
              _
            $region470: #{tpu_custom_call.1} parent=456 // pred_check_branch
              %1528 = sbr.rel (%p1525) target = $region472
            $region471: #{tpu_custom_call.1} parent=456 // pred_region
              %s1529 = sand.u32 1, 7
              %s1530 = ssub.s32 1, %s1529
              %s1531 = scalar_lea.vmem %s1502, %s1530
              %s1532 = ssub.s32 1, %s1529
              %s1533 = scalar_lea.vmem %s1503, %s1532 [#allocation2]
              %s1534 = sshllo.u32 0, %s1529
              loop: start=0, step=1, limit=1
              $region473: #{tpu_custom_call.1} parent=471 // loop_pre_header
                _
              $region474: #{tpu_custom_call.1} parent=471 // loop_header
                %s1536 = sphi 0, %s1540
                %p1537 = scmp.ge.s32.totalorder %s1536, 1
                %s1541 = sphi %s1531, %s1531
                %s1542 = sphi %s1533, %s1533
              $region475: #{tpu_custom_call.1} parent=471 // loop_header_branch
                %1539 = sbr.rel (%p1537) target = $region479
              $region476: #{tpu_custom_call.1} parent=471 // loop_body
                %v1543 = vld [vmem:[%s1541] sm:%s1534]
                %1544 = vst [vmem:[%s1542] sm:%s1534] %v1543
              $region477: #{tpu_custom_call.1} parent=471 // loop_footer
                %s1540 = sadd.s32 1, %s1536
              $region478: #{tpu_custom_call.1} parent=471 // loop_footer_branch
                %1535 = sbr.rel target = $region474
              $region479: #{tpu_custom_call.1} parent=471 // loop_exit
                _
            $region472: #{tpu_custom_call.1} parent=456 // pred_fallthru
              _
          $region457: #{tpu_custom_call.1} parent=62 // pred_fallthru
            _
          // Predicated region
          $region458: #{tpu_custom_call.1} parent=62 // pred_check
            %p1510 = pneg %p1506
          $region459: #{tpu_custom_call.1} parent=62 // pred_check_branch
            %1512 = sbr.rel (%p1510) target = $region461
          $region460: #{tpu_custom_call.1} parent=62 // pred_region
            %s1513 = sshllo.u32 0, 1
            loop: start=0, step=1, limit=1
            $region462: #{tpu_custom_call.1} parent=460 // loop_pre_header
              _
            $region463: #{tpu_custom_call.1} parent=460 // loop_header
              %s1515 = sphi 0, %s1519
              %p1516 = scmp.ge.s32.totalorder %s1515, 1
              %s1520 = sphi %s1502, %s1502
              %s1521 = sphi %s1503, %s1503
            $region464: #{tpu_custom_call.1} parent=460 // loop_header_branch
              %1518 = sbr.rel (%p1516) target = $region468
            $region465: #{tpu_custom_call.1} parent=460 // loop_body
              %v1522 = vld [vmem:[%s1520] sm:%s1513]
              %1523 = vst [vmem:[%s1521] sm:%s1513] %v1522
            $region466: #{tpu_custom_call.1} parent=460 // loop_footer
              %s1519 = sadd.s32 1, %s1515
            $region467: #{tpu_custom_call.1} parent=460 // loop_footer_branch
              %1514 = sbr.rel target = $region463
            $region468: #{tpu_custom_call.1} parent=460 // loop_exit
              _
          $region461: #{tpu_custom_call.1} parent=62 // pred_fallthru
            _
          // Predicated region
          $region480: #{tpu_custom_call.1} parent=62 // pred_check
            _
          $region481: #{tpu_custom_call.1} parent=62 // pred_check_branch
            %1547 = sbr.rel (0) target = $region483
          $region482: #{tpu_custom_call.1} parent=62 // pred_region
            %1548 = vsyncadd %s1504, 16
          $region483: #{tpu_custom_call.1} parent=62 // pred_fallthru
            _
          %s1549 = sld [smem:[#allocation6 + $0xe]]
          %s1550 = scalar_lea.vmem %s1, %s1549
          %s1551 = scalar_lea.vmem [#allocation2], 14
          %s1552 = scalar_lea.sflag [#allocation4], 14
          %p1554 = scmp.lt.u32.totalorder 1, 8
          %p1555 = pneg %p1554
          // Predicated region
          $region484: #{tpu_custom_call.1} parent=62 // pred_check
            _
          $region485: #{tpu_custom_call.1} parent=62 // pred_check_branch
            %1557 = sbr.rel (%p1554) target = $region487
          $region486: #{tpu_custom_call.1} parent=62 // pred_region
            %s1572 = sand.u32 1, 7
            %p1573 = scmp.eq.s32.totalorder %s1572, 0
            %p1574 = pneg %p1573
            // Predicated region
            $region499: #{tpu_custom_call.1} parent=486 // pred_check
              _
            $region500: #{tpu_custom_call.1} parent=486 // pred_check_branch
              %1576 = sbr.rel (%p1573) target = $region502
            $region501: #{tpu_custom_call.1} parent=486 // pred_region
              %s1577 = sand.u32 1, 7
              %s1578 = ssub.s32 1, %s1577
              %s1579 = scalar_lea.vmem %s1550, %s1578
              %s1580 = ssub.s32 1, %s1577
              %s1581 = scalar_lea.vmem %s1551, %s1580 [#allocation2]
              %s1582 = sshllo.u32 0, %s1577
              loop: start=0, step=1, limit=1
              $region503: #{tpu_custom_call.1} parent=501 // loop_pre_header
                _
              $region504: #{tpu_custom_call.1} parent=501 // loop_header
                %s1584 = sphi 0, %s1588
                %p1585 = scmp.ge.s32.totalorder %s1584, 1
                %s1589 = sphi %s1579, %s1579
                %s1590 = sphi %s1581, %s1581
              $region505: #{tpu_custom_call.1} parent=501 // loop_header_branch
                %1587 = sbr.rel (%p1585) target = $region509
              $region506: #{tpu_custom_call.1} parent=501 // loop_body
                %v1591 = vld [vmem:[%s1589] sm:%s1582]
                %1592 = vst [vmem:[%s1590] sm:%s1582] %v1591
              $region507: #{tpu_custom_call.1} parent=501 // loop_footer
                %s1588 = sadd.s32 1, %s1584
              $region508: #{tpu_custom_call.1} parent=501 // loop_footer_branch
                %1583 = sbr.rel target = $region504
              $region509: #{tpu_custom_call.1} parent=501 // loop_exit
                _
            $region502: #{tpu_custom_call.1} parent=486 // pred_fallthru
              _
          $region487: #{tpu_custom_call.1} parent=62 // pred_fallthru
            _
          // Predicated region
          $region488: #{tpu_custom_call.1} parent=62 // pred_check
            %p1558 = pneg %p1554
          $region489: #{tpu_custom_call.1} parent=62 // pred_check_branch
            %1560 = sbr.rel (%p1558) target = $region491
          $region490: #{tpu_custom_call.1} parent=62 // pred_region
            %s1561 = sshllo.u32 0, 1
            loop: start=0, step=1, limit=1
            $region492: #{tpu_custom_call.1} parent=490 // loop_pre_header
              _
            $region493: #{tpu_custom_call.1} parent=490 // loop_header
              %s1563 = sphi 0, %s1567
              %p1564 = scmp.ge.s32.totalorder %s1563, 1
              %s1568 = sphi %s1550, %s1550
              %s1569 = sphi %s1551, %s1551
            $region494: #{tpu_custom_call.1} parent=490 // loop_header_branch
              %1566 = sbr.rel (%p1564) target = $region498
            $region495: #{tpu_custom_call.1} parent=490 // loop_body
              %v1570 = vld [vmem:[%s1568] sm:%s1561]
              %1571 = vst [vmem:[%s1569] sm:%s1561] %v1570
            $region496: #{tpu_custom_call.1} parent=490 // loop_footer
              %s1567 = sadd.s32 1, %s1563
            $region497: #{tpu_custom_call.1} parent=490 // loop_footer_branch
              %1562 = sbr.rel target = $region493
            $region498: #{tpu_custom_call.1} parent=490 // loop_exit
              _
          $region491: #{tpu_custom_call.1} parent=62 // pred_fallthru
            _
          // Predicated region
          $region510: #{tpu_custom_call.1} parent=62 // pred_check
            _
          $region511: #{tpu_custom_call.1} parent=62 // pred_check_branch
            %1595 = sbr.rel (0) target = $region513
          $region512: #{tpu_custom_call.1} parent=62 // pred_region
            %1596 = vsyncadd %s1552, 16
          $region513: #{tpu_custom_call.1} parent=62 // pred_fallthru
            _
          %s1597 = sld [smem:[#allocation6 + $0xf]]
          %s1598 = scalar_lea.vmem %s1, %s1597
          %s1599 = scalar_lea.vmem [#allocation2], 15
          %s1600 = scalar_lea.sflag [#allocation4], 15
          %p1602 = scmp.lt.u32.totalorder 1, 8
          %p1603 = pneg %p1602
          // Predicated region
          $region514: #{tpu_custom_call.1} parent=62 // pred_check
            _
          $region515: #{tpu_custom_call.1} parent=62 // pred_check_branch
            %1605 = sbr.rel (%p1602) target = $region517
          $region516: #{tpu_custom_call.1} parent=62 // pred_region
            %s1620 = sand.u32 1, 7
            %p1621 = scmp.eq.s32.totalorder %s1620, 0
            %p1622 = pneg %p1621
            // Predicated region
            $region529: #{tpu_custom_call.1} parent=516 // pred_check
              _
            $region530: #{tpu_custom_call.1} parent=516 // pred_check_branch
              %1624 = sbr.rel (%p1621) target = $region532
            $region531: #{tpu_custom_call.1} parent=516 // pred_region
              %s1625 = sand.u32 1, 7
              %s1626 = ssub.s32 1, %s1625
              %s1627 = scalar_lea.vmem %s1598, %s1626
              %s1628 = ssub.s32 1, %s1625
              %s1629 = scalar_lea.vmem %s1599, %s1628 [#allocation2]
              %s1630 = sshllo.u32 0, %s1625
              loop: start=0, step=1, limit=1
              $region533: #{tpu_custom_call.1} parent=531 // loop_pre_header
                _
              $region534: #{tpu_custom_call.1} parent=531 // loop_header
                %s1632 = sphi 0, %s1636
                %p1633 = scmp.ge.s32.totalorder %s1632, 1
                %s1637 = sphi %s1627, %s1627
                %s1638 = sphi %s1629, %s1629
              $region535: #{tpu_custom_call.1} parent=531 // loop_header_branch
                %1635 = sbr.rel (%p1633) target = $region539
              $region536: #{tpu_custom_call.1} parent=531 // loop_body
                %v1639 = vld [vmem:[%s1637] sm:%s1630]
                %1640 = vst [vmem:[%s1638] sm:%s1630] %v1639
              $region537: #{tpu_custom_call.1} parent=531 // loop_footer
                %s1636 = sadd.s32 1, %s1632
              $region538: #{tpu_custom_call.1} parent=531 // loop_footer_branch
                %1631 = sbr.rel target = $region534
              $region539: #{tpu_custom_call.1} parent=531 // loop_exit
                _
            $region532: #{tpu_custom_call.1} parent=516 // pred_fallthru
              _
          $region517: #{tpu_custom_call.1} parent=62 // pred_fallthru
            _
          // Predicated region
          $region518: #{tpu_custom_call.1} parent=62 // pred_check
            %p1606 = pneg %p1602
          $region519: #{tpu_custom_call.1} parent=62 // pred_check_branch
            %1608 = sbr.rel (%p1606) target = $region521
          $region520: #{tpu_custom_call.1} parent=62 // pred_region
            %s1609 = sshllo.u32 0, 1
            loop: start=0, step=1, limit=1
            $region522: #{tpu_custom_call.1} parent=520 // loop_pre_header
              _
            $region523: #{tpu_custom_call.1} parent=520 // loop_header
              %s1611 = sphi 0, %s1615
              %p1612 = scmp.ge.s32.totalorder %s1611, 1
              %s1616 = sphi %s1598, %s1598
              %s1617 = sphi %s1599, %s1599
            $region524: #{tpu_custom_call.1} parent=520 // loop_header_branch
              %1614 = sbr.rel (%p1612) target = $region528
            $region525: #{tpu_custom_call.1} parent=520 // loop_body
              %v1618 = vld [vmem:[%s1616] sm:%s1609]
              %1619 = vst [vmem:[%s1617] sm:%s1609] %v1618
            $region526: #{tpu_custom_call.1} parent=520 // loop_footer
              %s1615 = sadd.s32 1, %s1611
            $region527: #{tpu_custom_call.1} parent=520 // loop_footer_branch
              %1610 = sbr.rel target = $region523
            $region528: #{tpu_custom_call.1} parent=520 // loop_exit
              _
          $region521: #{tpu_custom_call.1} parent=62 // pred_fallthru
            _
          // Predicated region
          $region540: #{tpu_custom_call.1} parent=62 // pred_check
            _
          $region541: #{tpu_custom_call.1} parent=62 // pred_check_branch
            %1643 = sbr.rel (0) target = $region543
          $region542: #{tpu_custom_call.1} parent=62 // pred_region
            %1644 = vsyncadd %s1600, 16
          $region543: #{tpu_custom_call.1} parent=62 // pred_fallthru
            _
          %s1645 = smul.u32 1, 1
          %s1646 = sshll.u32 %s1645, 4
          %1647 = dma.done [#allocation4], %s1646
          %s1648 = sshll.u32 %s1645, 4
          %1649 = dma.done %s928, %s1648
          %s1650 = sshll.u32 %s1645, 4
          %1651 = dma.done %s976, %s1650
          %s1652 = sshll.u32 %s1645, 4
          %1653 = dma.done %s1024, %s1652
          %s1654 = sshll.u32 %s1645, 4
          %1655 = dma.done %s1072, %s1654
          %s1656 = sshll.u32 %s1645, 4
          %1657 = dma.done %s1120, %s1656
          %s1658 = sshll.u32 %s1645, 4
          %1659 = dma.done %s1168, %s1658
          %s1660 = sshll.u32 %s1645, 4
          %1661 = dma.done %s1216, %s1660
          %s1662 = sshll.u32 %s1645, 4
          %1663 = dma.done %s1264, %s1662
          %s1664 = sshll.u32 %s1645, 4
          %1665 = dma.done %s1312, %s1664
          %s1666 = sshll.u32 %s1645, 4
          %1667 = dma.done %s1360, %s1666
          %s1668 = sshll.u32 %s1645, 4
          %1669 = dma.done %s1408, %s1668
          %s1670 = sshll.u32 %s1645, 4
          %1671 = dma.done %s1456, %s1670
          %s1672 = sshll.u32 %s1645, 4
          %1673 = dma.done %s1504, %s1672
          %s1674 = sshll.u32 %s1645, 4
          %1675 = dma.done %s1552, %s1674
          %s1676 = sshll.u32 %s1645, 4
          %1677 = dma.done %s1600, %s1676
          %v1678 = vld [vmem:[#allocation2] sm:$0x3]
          %v1679 = vld [vmem:[%s2] sm:$0xff]
          %v1680 = vld [vmem:[%s2 + $0x8] sm:$0xff]
          %v1681 = vld [vmem:[#allocation2 + $0x2] sm:$0x3]
          %s1682 = scalar_lea.vmem %s2, 16
          %v1683 = vld [vmem:[%s1682] sm:$0xff]
          %v1684 = vld [vmem:[%s1682 + $0x8] sm:$0xff]
          %vm1685 = vcmask 130048
          %v1687 = vsel %vm1685, %v1681, 0
          %1689 = vmatprep.subr.mxu0 0.0
          %1690 = vmatpush1.msra.mxu0 %v1683
          %1691 = vmatprep.subr.mxu0 0.0
          %1692 = vmatpush1.msra.mxu0 %v1684
          %1693 = vmatprep.subr.mxu0 0.0
          %1694 = vmatpush1.msra.mxu0 0.0
          %1695 = vmatprep.subr.mxu0 0.0
          %1696 = vmatpush1.msra.mxu0 0.0
          %1697 = vmatprep.subr.mxu0 0.0
          %1698 = vmatpush1.msra.mxu0 0.0
          %1699 = vmatprep.subr.mxu0 0.0
          %1700 = vmatpush1.msra.mxu0 0.0
          %1701 = vmatprep.subr.mxu0 0.0
          %1702 = vmatpush1.msra.mxu0 0.0
          %1703 = vmatprep.subr.mxu0 0.0
          %1704 = vmatpush1.msra.mxu0 0.0
          %1705 = vmatprep.subr.mxu0 0.0
          %1706 = vmatpush1.msra.mxu0 0.0
          %1707 = vmatprep.subr.mxu0 0.0
          %1708 = vmatpush1.msra.mxu0 0.0
          %1709 = vmatprep.subr.mxu0 0.0
          %1710 = vmatpush1.msra.mxu0 0.0
          %1711 = vmatprep.subr.mxu0 0.0
          %1712 = vmatpush1.msra.mxu0 0.0
          %1713 = vmatprep.subr.mxu0 0.0
          %1714 = vmatpush1.msra.mxu0 0.0
          %1715 = vmatprep.subr.mxu0 0.0
          %1716 = vmatpush1.msra.mxu0 0.0
          %1717 = vmatprep.subr.mxu0 0.0
          %1718 = vmatpush1.msra.mxu0 0.0
          %1719 = vmatprep.subr.mxu0 0.0
          %1720 = vmatpush1.msra.mxu0 0.0
          %1721 = vmatprep.subr.mxu0 0.0
          %1722 = vmatpush1.msra.mxu0 0.0
          %1723 = vmatprep.subr.mxu0 0.0
          %1724 = vmatpush1.msra.mxu0 0.0
          %1725 = vmatprep.subr.mxu0 0.0
          %1726 = vmatpush1.msra.mxu0 0.0
          %1727 = vmatprep.subr.mxu0 0.0
          %1728 = vmatpush1.msra.mxu0 0.0
          %1729 = vmatprep.subr.mxu0 0.0
          %1730 = vmatpush1.msra.mxu0 0.0
          %1731 = vmatprep.subr.mxu0 0.0
          %1732 = vmatpush1.msra.mxu0 0.0
          %1733 = vmatprep.subr.mxu0 0.0
          %1734 = vmatpush1.msra.mxu0 0.0
          %1735 = vmatprep.subr.mxu0 0.0
          %1736 = vmatpush1.msra.mxu0 0.0
          %1737 = vmatprep.subr.mxu0 0.0
          %1738 = vmatpush1.msra.mxu0 0.0
          %1739 = vmatprep.subr.mxu0 0.0
          %1740 = vmatpush1.msra.mxu0 0.0
          %1741 = vmatprep.subr.mxu0 0.0
          %1742 = vmatpush1.msra.mxu0 0.0
          %1743 = vmatprep.subr.mxu0 0.0
          %1744 = vmatpush1.msra.mxu0 0.0
          %1745 = vmatprep.subr.mxu0 0.0
          %1746 = vmatpush1.msra.mxu0 0.0
          %1747 = vmatprep.subr.mxu0 0.0
          %1748 = vmatpush1.msra.mxu0 0.0
          %1749 = vmatprep.subr.mxu0 0.0
          %1750 = vmatpush1.msra.mxu0 0.0
          %1751 = vmatprep.subr.mxu0 0.0
          %1752 = vmatpush1.msra.mxu0 0.0
          %1753 = vmatprep.mubr.f32.mxu0 0.0
          %1754 = vmatmul.mubr.f32.gmra.mrb[0].mxu0 %v1687
          %v1755 = vpop.f32.mrb[0].mxu0
          %v1756 = vadd.f32 0.0, %v1755
          %v1757 = vpop.f32.mrb[0].mxu0
          %1758 = vdwg.mxu0
          %v1760 = vsel %vm1685, %v1678, 0
          %1762 = vmatprep.subr.mxu0 0.0
          %1763 = vmatpush1.msra.mxu0 %v1679
          %1764 = vmatprep.subr.mxu0 0.0
          %1765 = vmatpush1.msra.mxu0 %v1680
          %1766 = vmatprep.subr.mxu0 0.0
          %1767 = vmatpush1.msra.mxu0 0.0
          %1768 = vmatprep.subr.mxu0 0.0
          %1769 = vmatpush1.msra.mxu0 0.0
          %1770 = vmatprep.subr.mxu0 0.0
          %1771 = vmatpush1.msra.mxu0 0.0
          %1772 = vmatprep.subr.mxu0 0.0
          %1773 = vmatpush1.msra.mxu0 0.0
          %1774 = vmatprep.subr.mxu0 0.0
          %1775 = vmatpush1.msra.mxu0 0.0
          %1776 = vmatprep.subr.mxu0 0.0
          %1777 = vmatpush1.msra.mxu0 0.0
          %1778 = vmatprep.subr.mxu0 0.0
          %1779 = vmatpush1.msra.mxu0 0.0
          %1780 = vmatprep.subr.mxu0 0.0
          %1781 = vmatpush1.msra.mxu0 0.0
          %1782 = vmatprep.subr.mxu0 0.0
          %1783 = vmatpush1.msra.mxu0 0.0
          %1784 = vmatprep.subr.mxu0 0.0
          %1785 = vmatpush1.msra.mxu0 0.0
          %1786 = vmatprep.subr.mxu0 0.0
          %1787 = vmatpush1.msra.mxu0 0.0
          %1788 = vmatprep.subr.mxu0 0.0
          %1789 = vmatpush1.msra.mxu0 0.0
          %1790 = vmatprep.subr.mxu0 0.0
          %1791 = vmatpush1.msra.mxu0 0.0
          %1792 = vmatprep.subr.mxu0 0.0
          %1793 = vmatpush1.msra.mxu0 0.0
          %1794 = vmatprep.subr.mxu0 0.0
          %1795 = vmatpush1.msra.mxu0 0.0
          %1796 = vmatprep.subr.mxu0 0.0
          %1797 = vmatpush1.msra.mxu0 0.0
          %1798 = vmatprep.subr.mxu0 0.0
          %1799 = vmatpush1.msra.mxu0 0.0
          %1800 = vmatprep.subr.mxu0 0.0
          %1801 = vmatpush1.msra.mxu0 0.0
          %1802 = vmatprep.subr.mxu0 0.0
          %1803 = vmatpush1.msra.mxu0 0.0
          %1804 = vmatprep.subr.mxu0 0.0
          %1805 = vmatpush1.msra.mxu0 0.0
          %1806 = vmatprep.subr.mxu0 0.0
          %1807 = vmatpush1.msra.mxu0 0.0
          %1808 = vmatprep.subr.mxu0 0.0
          %1809 = vmatpush1.msra.mxu0 0.0
          %1810 = vmatprep.subr.mxu0 0.0
          %1811 = vmatpush1.msra.mxu0 0.0
          %1812 = vmatprep.subr.mxu0 0.0
          %1813 = vmatpush1.msra.mxu0 0.0
          %1814 = vmatprep.subr.mxu0 0.0
          %1815 = vmatpush1.msra.mxu0 0.0
          %1816 = vmatprep.subr.mxu0 0.0
          %1817 = vmatpush1.msra.mxu0 0.0
          %1818 = vmatprep.subr.mxu0 0.0
          %1819 = vmatpush1.msra.mxu0 0.0
          %1820 = vmatprep.subr.mxu0 0.0
          %1821 = vmatpush1.msra.mxu0 0.0
          %1822 = vmatprep.subr.mxu0 0.0
          %1823 = vmatpush1.msra.mxu0 0.0
          %1824 = vmatprep.subr.mxu0 0.0
          %1825 = vmatpush1.msra.mxu0 0.0
          %1826 = vmatprep.mubr.f32.mxu0 0.0
          %1827 = vmatmul.mubr.f32.gmra.mrb[0].mxu0 %v1760
          %v1828 = vpop.f32.mrb[0].mxu0
          %v1829 = vadd.f32 %v1756, %v1828
          %v1830 = vpop.f32.mrb[0].mxu0
          %1831 = vdwg.mxu0
          %v1832 = vld [vmem:[#allocation2 + $0x4] sm:$0x3]
          %s1833 = scalar_lea.vmem %s2, 32
          %v1834 = vld [vmem:[%s1833] sm:$0xff]
          %v1835 = vld [vmem:[%s1833 + $0x8] sm:$0xff]
          %v1837 = vsel %vm1685, %v1832, 0
          %1839 = vmatprep.subr.mxu0 0.0
          %1840 = vmatpush1.msra.mxu0 %v1834
          %1841 = vmatprep.subr.mxu0 0.0
          %1842 = vmatpush1.msra.mxu0 %v1835
          %1843 = vmatprep.subr.mxu0 0.0
          %1844 = vmatpush1.msra.mxu0 0.0
          %1845 = vmatprep.subr.mxu0 0.0
          %1846 = vmatpush1.msra.mxu0 0.0
          %1847 = vmatprep.subr.mxu0 0.0
          %1848 = vmatpush1.msra.mxu0 0.0
          %1849 = vmatprep.subr.mxu0 0.0
          %1850 = vmatpush1.msra.mxu0 0.0
          %1851 = vmatprep.subr.mxu0 0.0
          %1852 = vmatpush1.msra.mxu0 0.0
          %1853 = vmatprep.subr.mxu0 0.0
          %1854 = vmatpush1.msra.mxu0 0.0
          %1855 = vmatprep.subr.mxu0 0.0
          %1856 = vmatpush1.msra.mxu0 0.0
          %1857 = vmatprep.subr.mxu0 0.0
          %1858 = vmatpush1.msra.mxu0 0.0
          %1859 = vmatprep.subr.mxu0 0.0
          %1860 = vmatpush1.msra.mxu0 0.0
          %1861 = vmatprep.subr.mxu0 0.0
          %1862 = vmatpush1.msra.mxu0 0.0
          %1863 = vmatprep.subr.mxu0 0.0
          %1864 = vmatpush1.msra.mxu0 0.0
          %1865 = vmatprep.subr.mxu0 0.0
          %1866 = vmatpush1.msra.mxu0 0.0
          %1867 = vmatprep.subr.mxu0 0.0
          %1868 = vmatpush1.msra.mxu0 0.0
          %1869 = vmatprep.subr.mxu0 0.0
          %1870 = vmatpush1.msra.mxu0 0.0
          %1871 = vmatprep.subr.mxu0 0.0
          %1872 = vmatpush1.msra.mxu0 0.0
          %1873 = vmatprep.subr.mxu0 0.0
          %1874 = vmatpush1.msra.mxu0 0.0
          %1875 = vmatprep.subr.mxu0 0.0
          %1876 = vmatpush1.msra.mxu0 0.0
          %1877 = vmatprep.subr.mxu0 0.0
          %1878 = vmatpush1.msra.mxu0 0.0
          %1879 = vmatprep.subr.mxu0 0.0
          %1880 = vmatpush1.msra.mxu0 0.0
          %1881 = vmatprep.subr.mxu0 0.0
          %1882 = vmatpush1.msra.mxu0 0.0
          %1883 = vmatprep.subr.mxu0 0.0
          %1884 = vmatpush1.msra.mxu0 0.0
          %1885 = vmatprep.subr.mxu0 0.0
          %1886 = vmatpush1.msra.mxu0 0.0
          %1887 = vmatprep.subr.mxu0 0.0
          %1888 = vmatpush1.msra.mxu0 0.0
          %1889 = vmatprep.subr.mxu0 0.0
          %1890 = vmatpush1.msra.mxu0 0.0
          %1891 = vmatprep.subr.mxu0 0.0
          %1892 = vmatpush1.msra.mxu0 0.0
          %1893 = vmatprep.subr.mxu0 0.0
          %1894 = vmatpush1.msra.mxu0 0.0
          %1895 = vmatprep.subr.mxu0 0.0
          %1896 = vmatpush1.msra.mxu0 0.0
          %1897 = vmatprep.subr.mxu0 0.0
          %1898 = vmatpush1.msra.mxu0 0.0
          %1899 = vmatprep.subr.mxu0 0.0
          %1900 = vmatpush1.msra.mxu0 0.0
          %1901 = vmatprep.subr.mxu0 0.0
          %1902 = vmatpush1.msra.mxu0 0.0
          %1903 = vmatprep.mubr.f32.mxu0 0.0
          %1904 = vmatmul.mubr.f32.gmra.mrb[0].mxu0 %v1837
          %v1905 = vpop.f32.mrb[0].mxu0
          %v1906 = vadd.f32 0.0, %v1905
          %v1907 = vpop.f32.mrb[0].mxu0
          %1908 = vdwg.mxu0
          %v1909 = vadd.f32 %v1829, %v1906
          %v1910 = vld [vmem:[#allocation2 + $0x6] sm:$0x3]
          %s1911 = scalar_lea.vmem %s2, 48
          %v1912 = vld [vmem:[%s1911] sm:$0xff]
          %v1913 = vld [vmem:[%s1911 + $0x8] sm:$0xff]
          %v1915 = vsel %vm1685, %v1910, 0
          %1917 = vmatprep.subr.mxu0 0.0
          %1918 = vmatpush1.msra.mxu0 %v1912
          %1919 = vmatprep.subr.mxu0 0.0
          %1920 = vmatpush1.msra.mxu0 %v1913
          %1921 = vmatprep.subr.mxu0 0.0
          %1922 = vmatpush1.msra.mxu0 0.0
          %1923 = vmatprep.subr.mxu0 0.0
          %1924 = vmatpush1.msra.mxu0 0.0
          %1925 = vmatprep.subr.mxu0 0.0
          %1926 = vmatpush1.msra.mxu0 0.0
          %1927 = vmatprep.subr.mxu0 0.0
          %1928 = vmatpush1.msra.mxu0 0.0
          %1929 = vmatprep.subr.mxu0 0.0
          %1930 = vmatpush1.msra.mxu0 0.0
          %1931 = vmatprep.subr.mxu0 0.0
          %1932 = vmatpush1.msra.mxu0 0.0
          %1933 = vmatprep.subr.mxu0 0.0
          %1934 = vmatpush1.msra.mxu0 0.0
          %1935 = vmatprep.subr.mxu0 0.0
          %1936 = vmatpush1.msra.mxu0 0.0
          %1937 = vmatprep.subr.mxu0 0.0
          %1938 = vmatpush1.msra.mxu0 0.0
          %1939 = vmatprep.subr.mxu0 0.0
          %1940 = vmatpush1.msra.mxu0 0.0
          %1941 = vmatprep.subr.mxu0 0.0
          %1942 = vmatpush1.msra.mxu0 0.0
          %1943 = vmatprep.subr.mxu0 0.0
          %1944 = vmatpush1.msra.mxu0 0.0
          %1945 = vmatprep.subr.mxu0 0.0
          %1946 = vmatpush1.msra.mxu0 0.0
          %1947 = vmatprep.subr.mxu0 0.0
          %1948 = vmatpush1.msra.mxu0 0.0
          %1949 = vmatprep.subr.mxu0 0.0
          %1950 = vmatpush1.msra.mxu0 0.0
          %1951 = vmatprep.subr.mxu0 0.0
          %1952 = vmatpush1.msra.mxu0 0.0
          %1953 = vmatprep.subr.mxu0 0.0
          %1954 = vmatpush1.msra.mxu0 0.0
          %1955 = vmatprep.subr.mxu0 0.0
          %1956 = vmatpush1.msra.mxu0 0.0
          %1957 = vmatprep.subr.mxu0 0.0
          %1958 = vmatpush1.msra.mxu0 0.0
          %1959 = vmatprep.subr.mxu0 0.0
          %1960 = vmatpush1.msra.mxu0 0.0
          %1961 = vmatprep.subr.mxu0 0.0
          %1962 = vmatpush1.msra.mxu0 0.0
          %1963 = vmatprep.subr.mxu0 0.0
          %1964 = vmatpush1.msra.mxu0 0.0
          %1965 = vmatprep.subr.mxu0 0.0
          %1966 = vmatpush1.msra.mxu0 0.0
          %1967 = vmatprep.subr.mxu0 0.0
          %1968 = vmatpush1.msra.mxu0 0.0
          %1969 = vmatprep.subr.mxu0 0.0
          %1970 = vmatpush1.msra.mxu0 0.0
          %1971 = vmatprep.subr.mxu0 0.0
          %1972 = vmatpush1.msra.mxu0 0.0
          %1973 = vmatprep.subr.mxu0 0.0
          %1974 = vmatpush1.msra.mxu0 0.0
          %1975 = vmatprep.subr.mxu0 0.0
          %1976 = vmatpush1.msra.mxu0 0.0
          %1977 = vmatprep.subr.mxu0 0.0
          %1978 = vmatpush1.msra.mxu0 0.0
          %1979 = vmatprep.subr.mxu0 0.0
          %1980 = vmatpush1.msra.mxu0 0.0
          %1981 = vmatprep.mubr.f32.mxu0 0.0
          %1982 = vmatmul.mubr.f32.gmra.mrb[0].mxu0 %v1915
          %v1983 = vpop.f32.mrb[0].mxu0
          %v1984 = vadd.f32 0.0, %v1983
          %v1985 = vpop.f32.mrb[0].mxu0
          %1986 = vdwg.mxu0
          %v1987 = vadd.f32 %v1909, %v1984
          %v1988 = vld [vmem:[#allocation2 + $0x8] sm:$0x3]
          %s1989 = scalar_lea.vmem %s2, 64
          %v1990 = vld [vmem:[%s1989] sm:$0xff]
          %v1991 = vld [vmem:[%s1989 + $0x8] sm:$0xff]
          %v1993 = vsel %vm1685, %v1988, 0
          %1995 = vmatprep.subr.mxu0 0.0
          %1996 = vmatpush1.msra.mxu0 %v1990
          %1997 = vmatprep.subr.mxu0 0.0
          %1998 = vmatpush1.msra.mxu0 %v1991
          %1999 = vmatprep.subr.mxu0 0.0
          %2000 = vmatpush1.msra.mxu0 0.0
          %2001 = vmatprep.subr.mxu0 0.0
          %2002 = vmatpush1.msra.mxu0 0.0
          %2003 = vmatprep.subr.mxu0 0.0
          %2004 = vmatpush1.msra.mxu0 0.0
          %2005 = vmatprep.subr.mxu0 0.0
          %2006 = vmatpush1.msra.mxu0 0.0
          %2007 = vmatprep.subr.mxu0 0.0
          %2008 = vmatpush1.msra.mxu0 0.0
          %2009 = vmatprep.subr.mxu0 0.0
          %2010 = vmatpush1.msra.mxu0 0.0
          %2011 = vmatprep.subr.mxu0 0.0
          %2012 = vmatpush1.msra.mxu0 0.0
          %2013 = vmatprep.subr.mxu0 0.0
          %2014 = vmatpush1.msra.mxu0 0.0
          %2015 = vmatprep.subr.mxu0 0.0
          %2016 = vmatpush1.msra.mxu0 0.0
          %2017 = vmatprep.subr.mxu0 0.0
          %2018 = vmatpush1.msra.mxu0 0.0
          %2019 = vmatprep.subr.mxu0 0.0
          %2020 = vmatpush1.msra.mxu0 0.0
          %2021 = vmatprep.subr.mxu0 0.0
          %2022 = vmatpush1.msra.mxu0 0.0
          %2023 = vmatprep.subr.mxu0 0.0
          %2024 = vmatpush1.msra.mxu0 0.0
          %2025 = vmatprep.subr.mxu0 0.0
          %2026 = vmatpush1.msra.mxu0 0.0
          %2027 = vmatprep.subr.mxu0 0.0
          %2028 = vmatpush1.msra.mxu0 0.0
          %2029 = vmatprep.subr.mxu0 0.0
          %2030 = vmatpush1.msra.mxu0 0.0
          %2031 = vmatprep.subr.mxu0 0.0
          %2032 = vmatpush1.msra.mxu0 0.0
          %2033 = vmatprep.subr.mxu0 0.0
          %2034 = vmatpush1.msra.mxu0 0.0
          %2035 = vmatprep.subr.mxu0 0.0
          %2036 = vmatpush1.msra.mxu0 0.0
          %2037 = vmatprep.subr.mxu0 0.0
          %2038 = vmatpush1.msra.mxu0 0.0
          %2039 = vmatprep.subr.mxu0 0.0
          %2040 = vmatpush1.msra.mxu0 0.0
          %2041 = vmatprep.subr.mxu0 0.0
          %2042 = vmatpush1.msra.mxu0 0.0
          %2043 = vmatprep.subr.mxu0 0.0
          %2044 = vmatpush1.msra.mxu0 0.0
          %2045 = vmatprep.subr.mxu0 0.0
          %2046 = vmatpush1.msra.mxu0 0.0
          %2047 = vmatprep.subr.mxu0 0.0
          %2048 = vmatpush1.msra.mxu0 0.0
          %2049 = vmatprep.subr.mxu0 0.0
          %2050 = vmatpush1.msra.mxu0 0.0
          %2051 = vmatprep.subr.mxu0 0.0
          %2052 = vmatpush1.msra.mxu0 0.0
          %2053 = vmatprep.subr.mxu0 0.0
          %2054 = vmatpush1.msra.mxu0 0.0
          %2055 = vmatprep.subr.mxu0 0.0
          %2056 = vmatpush1.msra.mxu0 0.0
          %2057 = vmatprep.subr.mxu0 0.0
          %2058 = vmatpush1.msra.mxu0 0.0
          %2059 = vmatprep.mubr.f32.mxu0 0.0
          %2060 = vmatmul.mubr.f32.gmra.mrb[0].mxu0 %v1993
          %v2061 = vpop.f32.mrb[0].mxu0
          %v2062 = vadd.f32 0.0, %v2061
          %v2063 = vpop.f32.mrb[0].mxu0
          %2064 = vdwg.mxu0
          %v2065 = vadd.f32 %v1987, %v2062
          %v2066 = vld [vmem:[#allocation2 + $0xa] sm:$0x3]
          %s2067 = scalar_lea.vmem %s2, 80
          %v2068 = vld [vmem:[%s2067] sm:$0xff]
          %v2069 = vld [vmem:[%s2067 + $0x8] sm:$0xff]
          %v2071 = vsel %vm1685, %v2066, 0
          %2073 = vmatprep.subr.mxu0 0.0
          %2074 = vmatpush1.msra.mxu0 %v2068
          %2075 = vmatprep.subr.mxu0 0.0
          %2076 = vmatpush1.msra.mxu0 %v2069
          %2077 = vmatprep.subr.mxu0 0.0
          %2078 = vmatpush1.msra.mxu0 0.0
          %2079 = vmatprep.subr.mxu0 0.0
          %2080 = vmatpush1.msra.mxu0 0.0
          %2081 = vmatprep.subr.mxu0 0.0
          %2082 = vmatpush1.msra.mxu0 0.0
          %2083 = vmatprep.subr.mxu0 0.0
          %2084 = vmatpush1.msra.mxu0 0.0
          %2085 = vmatprep.subr.mxu0 0.0
          %2086 = vmatpush1.msra.mxu0 0.0
          %2087 = vmatprep.subr.mxu0 0.0
          %2088 = vmatpush1.msra.mxu0 0.0
          %2089 = vmatprep.subr.mxu0 0.0
          %2090 = vmatpush1.msra.mxu0 0.0
          %2091 = vmatprep.subr.mxu0 0.0
          %2092 = vmatpush1.msra.mxu0 0.0
          %2093 = vmatprep.subr.mxu0 0.0
          %2094 = vmatpush1.msra.mxu0 0.0
          %2095 = vmatprep.subr.mxu0 0.0
          %2096 = vmatpush1.msra.mxu0 0.0
          %2097 = vmatprep.subr.mxu0 0.0
          %2098 = vmatpush1.msra.mxu0 0.0
          %2099 = vmatprep.subr.mxu0 0.0
          %2100 = vmatpush1.msra.mxu0 0.0
          %2101 = vmatprep.subr.mxu0 0.0
          %2102 = vmatpush1.msra.mxu0 0.0
          %2103 = vmatprep.subr.mxu0 0.0
          %2104 = vmatpush1.msra.mxu0 0.0
          %2105 = vmatprep.subr.mxu0 0.0
          %2106 = vmatpush1.msra.mxu0 0.0
          %2107 = vmatprep.subr.mxu0 0.0
          %2108 = vmatpush1.msra.mxu0 0.0
          %2109 = vmatprep.subr.mxu0 0.0
          %2110 = vmatpush1.msra.mxu0 0.0
          %2111 = vmatprep.subr.mxu0 0.0
          %2112 = vmatpush1.msra.mxu0 0.0
          %2113 = vmatprep.subr.mxu0 0.0
          %2114 = vmatpush1.msra.mxu0 0.0
          %2115 = vmatprep.subr.mxu0 0.0
          %2116 = vmatpush1.msra.mxu0 0.0
          %2117 = vmatprep.subr.mxu0 0.0
          %2118 = vmatpush1.msra.mxu0 0.0
          %2119 = vmatprep.subr.mxu0 0.0
          %2120 = vmatpush1.msra.mxu0 0.0
          %2121 = vmatprep.subr.mxu0 0.0
          %2122 = vmatpush1.msra.mxu0 0.0
          %2123 = vmatprep.subr.mxu0 0.0
          %2124 = vmatpush1.msra.mxu0 0.0
          %2125 = vmatprep.subr.mxu0 0.0
          %2126 = vmatpush1.msra.mxu0 0.0
          %2127 = vmatprep.subr.mxu0 0.0
          %2128 = vmatpush1.msra.mxu0 0.0
          %2129 = vmatprep.subr.mxu0 0.0
          %2130 = vmatpush1.msra.mxu0 0.0
          %2131 = vmatprep.subr.mxu0 0.0
          %2132 = vmatpush1.msra.mxu0 0.0
          %2133 = vmatprep.subr.mxu0 0.0
          %2134 = vmatpush1.msra.mxu0 0.0
          %2135 = vmatprep.subr.mxu0 0.0
          %2136 = vmatpush1.msra.mxu0 0.0
          %2137 = vmatprep.mubr.f32.mxu0 0.0
          %2138 = vmatmul.mubr.f32.gmra.mrb[0].mxu0 %v2071
          %v2139 = vpop.f32.mrb[0].mxu0
          %v2140 = vadd.f32 0.0, %v2139
          %v2141 = vpop.f32.mrb[0].mxu0
          %2142 = vdwg.mxu0
          %v2143 = vadd.f32 %v2065, %v2140
          %v2144 = vld [vmem:[#allocation2 + $0xc] sm:$0x3]
          %s2145 = scalar_lea.vmem %s2, 96
          %v2146 = vld [vmem:[%s2145] sm:$0xff]
          %v2147 = vld [vmem:[%s2145 + $0x8] sm:$0xff]
          %v2149 = vsel %vm1685, %v2144, 0
          %2151 = vmatprep.subr.mxu0 0.0
          %2152 = vmatpush1.msra.mxu0 %v2146
          %2153 = vmatprep.subr.mxu0 0.0
          %2154 = vmatpush1.msra.mxu0 %v2147
          %2155 = vmatprep.subr.mxu0 0.0
          %2156 = vmatpush1.msra.mxu0 0.0
          %2157 = vmatprep.subr.mxu0 0.0
          %2158 = vmatpush1.msra.mxu0 0.0
          %2159 = vmatprep.subr.mxu0 0.0
          %2160 = vmatpush1.msra.mxu0 0.0
          %2161 = vmatprep.subr.mxu0 0.0
          %2162 = vmatpush1.msra.mxu0 0.0
          %2163 = vmatprep.subr.mxu0 0.0
          %2164 = vmatpush1.msra.mxu0 0.0
          %2165 = vmatprep.subr.mxu0 0.0
          %2166 = vmatpush1.msra.mxu0 0.0
          %2167 = vmatprep.subr.mxu0 0.0
          %2168 = vmatpush1.msra.mxu0 0.0
          %2169 = vmatprep.subr.mxu0 0.0
          %2170 = vmatpush1.msra.mxu0 0.0
          %2171 = vmatprep.subr.mxu0 0.0
          %2172 = vmatpush1.msra.mxu0 0.0
          %2173 = vmatprep.subr.mxu0 0.0
          %2174 = vmatpush1.msra.mxu0 0.0
          %2175 = vmatprep.subr.mxu0 0.0
          %2176 = vmatpush1.msra.mxu0 0.0
          %2177 = vmatprep.subr.mxu0 0.0
          %2178 = vmatpush1.msra.mxu0 0.0
          %2179 = vmatprep.subr.mxu0 0.0
          %2180 = vmatpush1.msra.mxu0 0.0
          %2181 = vmatprep.subr.mxu0 0.0
          %2182 = vmatpush1.msra.mxu0 0.0
          %2183 = vmatprep.subr.mxu0 0.0
          %2184 = vmatpush1.msra.mxu0 0.0
          %2185 = vmatprep.subr.mxu0 0.0
          %2186 = vmatpush1.msra.mxu0 0.0
          %2187 = vmatprep.subr.mxu0 0.0
          %2188 = vmatpush1.msra.mxu0 0.0
          %2189 = vmatprep.subr.mxu0 0.0
          %2190 = vmatpush1.msra.mxu0 0.0
          %2191 = vmatprep.subr.mxu0 0.0
          %2192 = vmatpush1.msra.mxu0 0.0
          %2193 = vmatprep.subr.mxu0 0.0
          %2194 = vmatpush1.msra.mxu0 0.0
          %2195 = vmatprep.subr.mxu0 0.0
          %2196 = vmatpush1.msra.mxu0 0.0
          %2197 = vmatprep.subr.mxu0 0.0
          %2198 = vmatpush1.msra.mxu0 0.0
          %2199 = vmatprep.subr.mxu0 0.0
          %2200 = vmatpush1.msra.mxu0 0.0
          %2201 = vmatprep.subr.mxu0 0.0
          %2202 = vmatpush1.msra.mxu0 0.0
          %2203 = vmatprep.subr.mxu0 0.0
          %2204 = vmatpush1.msra.mxu0 0.0
          %2205 = vmatprep.subr.mxu0 0.0
          %2206 = vmatpush1.msra.mxu0 0.0
          %2207 = vmatprep.subr.mxu0 0.0
          %2208 = vmatpush1.msra.mxu0 0.0
          %2209 = vmatprep.subr.mxu0 0.0
          %2210 = vmatpush1.msra.mxu0 0.0
          %2211 = vmatprep.subr.mxu0 0.0
          %2212 = vmatpush1.msra.mxu0 0.0
          %2213 = vmatprep.subr.mxu0 0.0
          %2214 = vmatpush1.msra.mxu0 0.0
          %2215 = vmatprep.mubr.f32.mxu0 0.0
          %2216 = vmatmul.mubr.f32.gmra.mrb[0].mxu0 %v2149
          %v2217 = vpop.f32.mrb[0].mxu0
          %v2218 = vadd.f32 0.0, %v2217
          %v2219 = vpop.f32.mrb[0].mxu0
          %2220 = vdwg.mxu0
          %v2221 = vadd.f32 %v2143, %v2218
          %v2222 = vld [vmem:[#allocation2 + $0xe] sm:$0x3]
          %s2223 = scalar_lea.vmem %s2, 112
          %v2224 = vld [vmem:[%s2223] sm:$0xff]
          %v2225 = vld [vmem:[%s2223 + $0x8] sm:$0xff]
          %v2227 = vsel %vm1685, %v2222, 0
          %2229 = vmatprep.subr.mxu0 0.0
          %2230 = vmatpush1.msra.mxu0 %v2224
          %2231 = vmatprep.subr.mxu0 0.0
          %2232 = vmatpush1.msra.mxu0 %v2225
          %2233 = vmatprep.subr.mxu0 0.0
          %2234 = vmatpush1.msra.mxu0 0.0
          %2235 = vmatprep.subr.mxu0 0.0
          %2236 = vmatpush1.msra.mxu0 0.0
          %2237 = vmatprep.subr.mxu0 0.0
          %2238 = vmatpush1.msra.mxu0 0.0
          %2239 = vmatprep.subr.mxu0 0.0
          %2240 = vmatpush1.msra.mxu0 0.0
          %2241 = vmatprep.subr.mxu0 0.0
          %2242 = vmatpush1.msra.mxu0 0.0
          %2243 = vmatprep.subr.mxu0 0.0
          %2244 = vmatpush1.msra.mxu0 0.0
          %2245 = vmatprep.subr.mxu0 0.0
          %2246 = vmatpush1.msra.mxu0 0.0
          %2247 = vmatprep.subr.mxu0 0.0
          %2248 = vmatpush1.msra.mxu0 0.0
          %2249 = vmatprep.subr.mxu0 0.0
          %2250 = vmatpush1.msra.mxu0 0.0
          %2251 = vmatprep.subr.mxu0 0.0
          %2252 = vmatpush1.msra.mxu0 0.0
          %2253 = vmatprep.subr.mxu0 0.0
          %2254 = vmatpush1.msra.mxu0 0.0
          %2255 = vmatprep.subr.mxu0 0.0
          %2256 = vmatpush1.msra.mxu0 0.0
          %2257 = vmatprep.subr.mxu0 0.0
          %2258 = vmatpush1.msra.mxu0 0.0
          %2259 = vmatprep.subr.mxu0 0.0
          %2260 = vmatpush1.msra.mxu0 0.0
          %2261 = vmatprep.subr.mxu0 0.0
          %2262 = vmatpush1.msra.mxu0 0.0
          %2263 = vmatprep.subr.mxu0 0.0
          %2264 = vmatpush1.msra.mxu0 0.0
          %2265 = vmatprep.subr.mxu0 0.0
          %2266 = vmatpush1.msra.mxu0 0.0
          %2267 = vmatprep.subr.mxu0 0.0
          %2268 = vmatpush1.msra.mxu0 0.0
          %2269 = vmatprep.subr.mxu0 0.0
          %2270 = vmatpush1.msra.mxu0 0.0
          %2271 = vmatprep.subr.mxu0 0.0
          %2272 = vmatpush1.msra.mxu0 0.0
          %2273 = vmatprep.subr.mxu0 0.0
          %2274 = vmatpush1.msra.mxu0 0.0
          %2275 = vmatprep.subr.mxu0 0.0
          %2276 = vmatpush1.msra.mxu0 0.0
          %2277 = vmatprep.subr.mxu0 0.0
          %2278 = vmatpush1.msra.mxu0 0.0
          %2279 = vmatprep.subr.mxu0 0.0
          %2280 = vmatpush1.msra.mxu0 0.0
          %2281 = vmatprep.subr.mxu0 0.0
          %2282 = vmatpush1.msra.mxu0 0.0
          %2283 = vmatprep.subr.mxu0 0.0
          %2284 = vmatpush1.msra.mxu0 0.0
          %2285 = vmatprep.subr.mxu0 0.0
          %2286 = vmatpush1.msra.mxu0 0.0
          %2287 = vmatprep.subr.mxu0 0.0
          %2288 = vmatpush1.msra.mxu0 0.0
          %2289 = vmatprep.subr.mxu0 0.0
          %2290 = vmatpush1.msra.mxu0 0.0
          %2291 = vmatprep.subr.mxu0 0.0
          %2292 = vmatpush1.msra.mxu0 0.0
          %2293 = vmatprep.mubr.f32.mxu0 0.0
          %2294 = vmatmul.mubr.f32.gmra.mrb[0].mxu0 %v2227
          %v2295 = vpop.f32.mrb[0].mxu0
          %v2296 = vadd.f32 0.0, %v2295
          %v2297 = vpop.f32.mrb[0].mxu0
          %2298 = vdwg.mxu0
          %v2299 = vadd.f32 %v2221, %v2296
          %v2300 = vld [vmem:[%s3] sm:$0x1]
          %v2302 = vlaneseq
          %v2303 = vshrl.u32 %v2302, 7
          %v2304 = vsub.s32 0, %v2303
          %v2305 = vrot.slane %v2300, %v2304
          %v2307 = vadd.f32 %v2299, %v2305
          %v2308 = vmax.f32 %v2307, 0.0
          %vm2309 = vcmask 254976
          %2310 = vst.msk [vmem:[#allocation3] sm:$0x3] %vm2309, %v2308
        $region63: #{tpu_custom_call.1} parent=54 // pred_fallthru
          _
        %v2311 = vld [vmem:[#allocation3] sm:$0x3]
        %v2312 = vld [vmem:[%s841] sm:$0xff]
        %v2313 = vld [vmem:[%s841 + $0x8] sm:$0xff]
        %v2314 = vld [vmem:[%s841 + $0x10] sm:$0xff]
        %v2315 = vld [vmem:[%s841 + $0x18] sm:$0xff]
        %v2316 = vld [vmem:[%s841 + $0x20] sm:$0xff]
        %v2317 = vld [vmem:[%s841 + $0x28] sm:$0xff]
        %v2318 = vld [vmem:[%s841 + $0x30] sm:$0xff]
        %v2319 = vld [vmem:[%s841 + $0x38] sm:$0xff]
        %v2320 = vld [vmem:[%s841 + $0x40] sm:$0xff]
        %v2321 = vld [vmem:[%s841 + $0x48] sm:$0xff]
        %v2322 = vld [vmem:[%s841 + $0x50] sm:$0xff]
        %v2323 = vld [vmem:[%s841 + $0x58] sm:$0xff]
        %v2324 = vld [vmem:[%s841 + $0x60] sm:$0xff]
        %v2325 = vld [vmem:[%s841 + $0x68] sm:$0xff]
        %v2326 = vld [vmem:[%s841 + $0x70] sm:$0xff]
        %v2327 = vld [vmem:[%s841 + $0x78] sm:$0xff]
        %v2328 = vld [vmem:[%s841 + $0x80] sm:$0xff]
        %v2329 = vld [vmem:[%s841 + $0x88] sm:$0xff]
        %v2330 = vld [vmem:[%s841 + $0x90] sm:$0xff]
        %v2331 = vld [vmem:[%s841 + $0x98] sm:$0xff]
        %v2332 = vld [vmem:[%s841 + $0xa0] sm:$0xff]
        %v2333 = vld [vmem:[%s841 + $0xa8] sm:$0xff]
        %v2334 = vld [vmem:[%s841 + $0xb0] sm:$0xff]
        %v2335 = vld [vmem:[%s841 + $0xb8] sm:$0xff]
        %v2336 = vld [vmem:[%s841 + $0xc0] sm:$0xff]
        %v2337 = vld [vmem:[%s841 + $0xc8] sm:$0xff]
        %v2338 = vld [vmem:[%s841 + $0xd0] sm:$0xff]
        %v2339 = vld [vmem:[%s841 + $0xd8] sm:$0xff]
        %v2340 = vld [vmem:[%s841 + $0xe0] sm:$0xff]
        %v2341 = vld [vmem:[%s841 + $0xe8] sm:$0xff]
        %v2342 = vld [vmem:[%s841 + $0xf0] sm:$0xff]
        %v2343 = vld [vmem:[%s841 + $0xf8] sm:$0xff]
        %v2344 = vld [vmem:[%s841 + $0x100] sm:$0xff]
        %v2345 = vld [vmem:[%s841 + $0x108] sm:$0xff]
        %v2346 = vld [vmem:[%s841 + $0x110] sm:$0xff]
        %v2347 = vld [vmem:[%s841 + $0x118] sm:$0xff]
        %v2348 = vld [vmem:[%s841 + $0x120] sm:$0xff]
        %v2349 = vld [vmem:[%s841 + $0x128] sm:$0xff]
        %v2350 = vld [vmem:[%s841 + $0x130] sm:$0xff]
        %v2351 = vld [vmem:[%s841 + $0x138] sm:$0xff]
        %v2352 = vld [vmem:[%s841 + $0x140] sm:$0xff]
        %v2353 = vld [vmem:[%s841 + $0x148] sm:$0xff]
        %v2354 = vld [vmem:[%s841 + $0x150] sm:$0xff]
        %v2355 = vld [vmem:[%s841 + $0x158] sm:$0xff]
        %v2356 = vld [vmem:[%s841 + $0x160] sm:$0xff]
        %v2357 = vld [vmem:[%s841 + $0x168] sm:$0xff]
        %v2358 = vld [vmem:[%s841 + $0x170] sm:$0xff]
        %v2359 = vld [vmem:[%s841 + $0x178] sm:$0xff]
        %v2360 = vld [vmem:[%s841 + $0x180] sm:$0xff]
        %v2361 = vld [vmem:[%s841 + $0x188] sm:$0xff]
        %v2362 = vld [vmem:[%s841 + $0x190] sm:$0xff]
        %v2363 = vld [vmem:[%s841 + $0x198] sm:$0xff]
        %v2364 = vld [vmem:[%s841 + $0x1a0] sm:$0xff]
        %v2365 = vld [vmem:[%s841 + $0x1a8] sm:$0xff]
        %v2366 = vld [vmem:[%s841 + $0x1b0] sm:$0xff]
        %v2367 = vld [vmem:[%s841 + $0x1b8] sm:$0xff]
        %v2368 = vld [vmem:[%s841 + $0x1c0] sm:$0xff]
        %v2369 = vld [vmem:[%s841 + $0x1c8] sm:$0xff]
        %v2370 = vld [vmem:[%s841 + $0x1d0] sm:$0xff]
        %v2371 = vld [vmem:[%s841 + $0x1d8] sm:$0xff]
        %v2372 = vld [vmem:[%s841 + $0x1e0] sm:$0xff]
        %v2373 = vld [vmem:[%s841 + $0x1e8] sm:$0xff]
        %v2374 = vld [vmem:[%s841 + $0x1f0] sm:$0xff]
        %v2375 = vld [vmem:[%s841 + $0x1f8] sm:$0xff]
        %v2376 = vld [vmem:[%s841 + $0x200] sm:$0xff]
        %v2377 = vld [vmem:[%s841 + $0x208] sm:$0xff]
        %v2378 = vld [vmem:[%s841 + $0x210] sm:$0xff]
        %v2379 = vld [vmem:[%s841 + $0x218] sm:$0xff]
        %v2380 = vld [vmem:[%s841 + $0x220] sm:$0xff]
        %v2381 = vld [vmem:[%s841 + $0x228] sm:$0xff]
        %v2382 = vld [vmem:[%s841 + $0x230] sm:$0xff]
        %v2383 = vld [vmem:[%s841 + $0x238] sm:$0xff]
        %v2384 = vld [vmem:[%s841 + $0x240] sm:$0xff]
        %v2385 = vld [vmem:[%s841 + $0x248] sm:$0xff]
        %v2386 = vld [vmem:[%s841 + $0x250] sm:$0xff]
        %v2387 = vld [vmem:[%s841 + $0x258] sm:$0xff]
        %v2388 = vld [vmem:[%s841 + $0x260] sm:$0xff]
        %v2389 = vld [vmem:[%s841 + $0x268] sm:$0xff]
        %v2390 = vld [vmem:[%s841 + $0x270] sm:$0xff]
        %v2391 = vld [vmem:[%s841 + $0x278] sm:$0xff]
        %v2392 = vld [vmem:[%s841 + $0x280] sm:$0xff]
        %v2393 = vld [vmem:[%s841 + $0x288] sm:$0xff]
        %v2394 = vld [vmem:[%s841 + $0x290] sm:$0xff]
        %v2395 = vld [vmem:[%s841 + $0x298] sm:$0xff]
        %v2396 = vld [vmem:[%s841 + $0x2a0] sm:$0xff]
        %v2397 = vld [vmem:[%s841 + $0x2a8] sm:$0xff]
        %v2398 = vld [vmem:[%s841 + $0x2b0] sm:$0xff]
        %v2399 = vld [vmem:[%s841 + $0x2b8] sm:$0xff]
        %v2400 = vld [vmem:[%s841 + $0x2c0] sm:$0xff]
        %v2401 = vld [vmem:[%s841 + $0x2c8] sm:$0xff]
        %v2402 = vld [vmem:[%s841 + $0x2d0] sm:$0xff]
        %v2403 = vld [vmem:[%s841 + $0x2d8] sm:$0xff]
        %v2404 = vld [vmem:[%s841 + $0x2e0] sm:$0xff]
        %v2405 = vld [vmem:[%s841 + $0x2e8] sm:$0xff]
        %v2406 = vld [vmem:[%s841 + $0x2f0] sm:$0xff]
        %v2407 = vld [vmem:[%s841 + $0x2f8] sm:$0xff]
        %v2408 = vld [vmem:[%s841 + $0x300] sm:$0xff]
        %v2409 = vld [vmem:[%s841 + $0x308] sm:$0xff]
        %v2410 = vld [vmem:[%s841 + $0x310] sm:$0xff]
        %v2411 = vld [vmem:[%s841 + $0x318] sm:$0xff]
        %v2412 = vld [vmem:[%s841 + $0x320] sm:$0xff]
        %v2413 = vld [vmem:[%s841 + $0x328] sm:$0xff]
        %v2414 = vld [vmem:[%s841 + $0x330] sm:$0xff]
        %v2415 = vld [vmem:[%s841 + $0x338] sm:$0xff]
        %v2416 = vld [vmem:[%s841 + $0x340] sm:$0xff]
        %v2417 = vld [vmem:[%s841 + $0x348] sm:$0xff]
        %v2418 = vld [vmem:[%s841 + $0x350] sm:$0xff]
        %v2419 = vld [vmem:[%s841 + $0x358] sm:$0xff]
        %v2420 = vld [vmem:[%s841 + $0x360] sm:$0xff]
        %v2421 = vld [vmem:[%s841 + $0x368] sm:$0xff]
        %v2422 = vld [vmem:[%s841 + $0x370] sm:$0xff]
        %v2423 = vld [vmem:[%s841 + $0x378] sm:$0xff]
        %v2424 = vld [vmem:[%s841 + $0x380] sm:$0xff]
        %v2425 = vld [vmem:[%s841 + $0x388] sm:$0xff]
        %v2426 = vld [vmem:[%s841 + $0x390] sm:$0xff]
        %v2427 = vld [vmem:[%s841 + $0x398] sm:$0xff]
        %v2428 = vld [vmem:[%s841 + $0x3a0] sm:$0xff]
        %v2429 = vld [vmem:[%s841 + $0x3a8] sm:$0xff]
        %v2430 = vld [vmem:[%s841 + $0x3b0] sm:$0xff]
        %v2431 = vld [vmem:[%s841 + $0x3b8] sm:$0xff]
        %v2432 = vld [vmem:[%s841 + $0x3c0] sm:$0xff]
        %v2433 = vld [vmem:[%s841 + $0x3c8] sm:$0xff]
        %v2434 = vld [vmem:[%s841 + $0x3d0] sm:$0xff]
        %v2435 = vld [vmem:[%s841 + $0x3d8] sm:$0xff]
        %v2436 = vld [vmem:[%s841 + $0x3e0] sm:$0xff]
        %v2437 = vld [vmem:[%s841 + $0x3e8] sm:$0xff]
        %v2438 = vld [vmem:[%s841 + $0x3f0] sm:$0xff]
        %v2439 = vld [vmem:[%s841 + $0x3f8] sm:$0xff]
        %v2440 = vld [vmem:[%s841 + $0x400] sm:$0xff]
        %v2441 = vld [vmem:[%s841 + $0x408] sm:$0xff]
        %v2442 = vld [vmem:[%s841 + $0x410] sm:$0xff]
        %v2443 = vld [vmem:[%s841 + $0x418] sm:$0xff]
        %v2444 = vld [vmem:[%s841 + $0x420] sm:$0xff]
        %v2445 = vld [vmem:[%s841 + $0x428] sm:$0xff]
        %v2446 = vld [vmem:[%s841 + $0x430] sm:$0xff]
        %v2447 = vld [vmem:[%s841 + $0x438] sm:$0xff]
        %v2448 = vld [vmem:[%s841 + $0x440] sm:$0xff]
        %v2449 = vld [vmem:[%s841 + $0x448] sm:$0xff]
        %v2450 = vld [vmem:[%s841 + $0x450] sm:$0xff]
        %v2451 = vld [vmem:[%s841 + $0x458] sm:$0xff]
        %v2452 = vld [vmem:[%s841 + $0x460] sm:$0xff]
        %v2453 = vld [vmem:[%s841 + $0x468] sm:$0xff]
        %v2454 = vld [vmem:[%s841 + $0x470] sm:$0xff]
        %v2455 = vld [vmem:[%s841 + $0x478] sm:$0xff]
        %v2456 = vld [vmem:[%s841 + $0x480] sm:$0xff]
        %v2457 = vld [vmem:[%s841 + $0x488] sm:$0xff]
        %v2458 = vld [vmem:[%s841 + $0x490] sm:$0xff]
        %v2459 = vld [vmem:[%s841 + $0x498] sm:$0xff]
        %v2460 = vld [vmem:[%s841 + $0x4a0] sm:$0xff]
        %v2461 = vld [vmem:[%s841 + $0x4a8] sm:$0xff]
        %v2462 = vld [vmem:[%s841 + $0x4b0] sm:$0xff]
        %v2463 = vld [vmem:[%s841 + $0x4b8] sm:$0xff]
        %v2464 = vld [vmem:[%s841 + $0x4c0] sm:$0xff]
        %v2465 = vld [vmem:[%s841 + $0x4c8] sm:$0xff]
        %v2466 = vld [vmem:[%s841 + $0x4d0] sm:$0xff]
        %v2467 = vld [vmem:[%s841 + $0x4d8] sm:$0xff]
        %v2468 = vld [vmem:[%s841 + $0x4e0] sm:$0xff]
        %v2469 = vld [vmem:[%s841 + $0x4e8] sm:$0xff]
        %v2470 = vld [vmem:[%s841 + $0x4f0] sm:$0xff]
        %v2471 = vld [vmem:[%s841 + $0x4f8] sm:$0xff]
        %v2472 = vld [vmem:[%s841 + $0x500] sm:$0xff]
        %v2473 = vld [vmem:[%s841 + $0x508] sm:$0xff]
        %v2474 = vld [vmem:[%s841 + $0x510] sm:$0xff]
        %v2475 = vld [vmem:[%s841 + $0x518] sm:$0xff]
        %v2476 = vld [vmem:[%s841 + $0x520] sm:$0xff]
        %v2477 = vld [vmem:[%s841 + $0x528] sm:$0xff]
        %v2478 = vld [vmem:[%s841 + $0x530] sm:$0xff]
        %v2479 = vld [vmem:[%s841 + $0x538] sm:$0xff]
        %v2480 = vld [vmem:[%s841 + $0x540] sm:$0xff]
        %v2481 = vld [vmem:[%s841 + $0x548] sm:$0xff]
        %v2482 = vld [vmem:[%s841 + $0x550] sm:$0xff]
        %v2483 = vld [vmem:[%s841 + $0x558] sm:$0xff]
        %v2484 = vld [vmem:[%s841 + $0x560] sm:$0xff]
        %v2485 = vld [vmem:[%s841 + $0x568] sm:$0xff]
        %v2486 = vld [vmem:[%s841 + $0x570] sm:$0xff]
        %v2487 = vld [vmem:[%s841 + $0x578] sm:$0xff]
        %v2488 = vld [vmem:[%s841 + $0x580] sm:$0xff]
        %v2489 = vld [vmem:[%s841 + $0x588] sm:$0xff]
        %v2490 = vld [vmem:[%s841 + $0x590] sm:$0xff]
        %v2491 = vld [vmem:[%s841 + $0x598] sm:$0xff]
        %v2492 = vld [vmem:[%s841 + $0x5a0] sm:$0xff]
        %v2493 = vld [vmem:[%s841 + $0x5a8] sm:$0xff]
        %v2494 = vld [vmem:[%s841 + $0x5b0] sm:$0xff]
        %v2495 = vld [vmem:[%s841 + $0x5b8] sm:$0xff]
        %v2496 = vld [vmem:[%s841 + $0x5c0] sm:$0xff]
        %v2497 = vld [vmem:[%s841 + $0x5c8] sm:$0xff]
        %v2498 = vld [vmem:[%s841 + $0x5d0] sm:$0xff]
        %v2499 = vld [vmem:[%s841 + $0x5d8] sm:$0xff]
        %v2500 = vld [vmem:[%s841 + $0x5e0] sm:$0xff]
        %v2501 = vld [vmem:[%s841 + $0x5e8] sm:$0xff]
        %v2502 = vld [vmem:[%s841 + $0x5f0] sm:$0xff]
        %v2503 = vld [vmem:[%s841 + $0x5f8] sm:$0xff]
        %v2504 = vld [vmem:[%s841 + $0x600] sm:$0xff]
        %v2505 = vld [vmem:[%s841 + $0x608] sm:$0xff]
        %v2506 = vld [vmem:[%s841 + $0x610] sm:$0xff]
        %v2507 = vld [vmem:[%s841 + $0x618] sm:$0xff]
        %v2508 = vld [vmem:[%s841 + $0x620] sm:$0xff]
        %v2509 = vld [vmem:[%s841 + $0x628] sm:$0xff]
        %v2510 = vld [vmem:[%s841 + $0x630] sm:$0xff]
        %v2511 = vld [vmem:[%s841 + $0x638] sm:$0xff]
        %v2512 = vld [vmem:[%s841 + $0x640] sm:$0xff]
        %v2513 = vld [vmem:[%s841 + $0x648] sm:$0xff]
        %v2514 = vld [vmem:[%s841 + $0x650] sm:$0xff]
        %v2515 = vld [vmem:[%s841 + $0x658] sm:$0xff]
        %v2516 = vld [vmem:[%s841 + $0x660] sm:$0xff]
        %v2517 = vld [vmem:[%s841 + $0x668] sm:$0xff]
        %v2518 = vld [vmem:[%s841 + $0x670] sm:$0xff]
        %v2519 = vld [vmem:[%s841 + $0x678] sm:$0xff]
        %v2520 = vld [vmem:[%s841 + $0x680] sm:$0xff]
        %v2521 = vld [vmem:[%s841 + $0x688] sm:$0xff]
        %v2522 = vld [vmem:[%s841 + $0x690] sm:$0xff]
        %v2523 = vld [vmem:[%s841 + $0x698] sm:$0xff]
        %v2524 = vld [vmem:[%s841 + $0x6a0] sm:$0xff]
        %v2525 = vld [vmem:[%s841 + $0x6a8] sm:$0xff]
        %v2526 = vld [vmem:[%s841 + $0x6b0] sm:$0xff]
        %v2527 = vld [vmem:[%s841 + $0x6b8] sm:$0xff]
        %v2528 = vld [vmem:[%s841 + $0x6c0] sm:$0xff]
        %v2529 = vld [vmem:[%s841 + $0x6c8] sm:$0xff]
        %v2530 = vld [vmem:[%s841 + $0x6d0] sm:$0xff]
        %v2531 = vld [vmem:[%s841 + $0x6d8] sm:$0xff]
        %v2532 = vld [vmem:[%s841 + $0x6e0] sm:$0xff]
        %v2533 = vld [vmem:[%s841 + $0x6e8] sm:$0xff]
        %v2534 = vld [vmem:[%s841 + $0x6f0] sm:$0xff]
        %v2535 = vld [vmem:[%s841 + $0x6f8] sm:$0xff]
        %v2536 = vld [vmem:[%s841 + $0x700] sm:$0xff]
        %v2537 = vld [vmem:[%s841 + $0x708] sm:$0xff]
        %v2538 = vld [vmem:[%s841 + $0x710] sm:$0xff]
        %v2539 = vld [vmem:[%s841 + $0x718] sm:$0xff]
        %v2540 = vld [vmem:[%s841 + $0x720] sm:$0xff]
        %v2541 = vld [vmem:[%s841 + $0x728] sm:$0xff]
        %v2542 = vld [vmem:[%s841 + $0x730] sm:$0xff]
        %v2543 = vld [vmem:[%s841 + $0x738] sm:$0xff]
        %v2544 = vld [vmem:[%s841 + $0x740] sm:$0xff]
        %v2545 = vld [vmem:[%s841 + $0x748] sm:$0xff]
        %v2546 = vld [vmem:[%s841 + $0x750] sm:$0xff]
        %v2547 = vld [vmem:[%s841 + $0x758] sm:$0xff]
        %v2548 = vld [vmem:[%s841 + $0x760] sm:$0xff]
        %v2549 = vld [vmem:[%s841 + $0x768] sm:$0xff]
        %v2550 = vld [vmem:[%s841 + $0x770] sm:$0xff]
        %v2551 = vld [vmem:[%s841 + $0x778] sm:$0xff]
        %v2552 = vld [vmem:[%s841 + $0x780] sm:$0xff]
        %v2553 = vld [vmem:[%s841 + $0x788] sm:$0xff]
        %v2554 = vld [vmem:[%s841 + $0x790] sm:$0xff]
        %v2555 = vld [vmem:[%s841 + $0x798] sm:$0xff]
        %v2556 = vld [vmem:[%s841 + $0x7a0] sm:$0xff]
        %v2557 = vld [vmem:[%s841 + $0x7a8] sm:$0xff]
        %v2558 = vld [vmem:[%s841 + $0x7b0] sm:$0xff]
        %v2559 = vld [vmem:[%s841 + $0x7b8] sm:$0xff]
        %v2560 = vld [vmem:[%s841 + $0x7c0] sm:$0xff]
        %v2561 = vld [vmem:[%s841 + $0x7c8] sm:$0xff]
        %v2562 = vld [vmem:[%s841 + $0x7d0] sm:$0xff]
        %v2563 = vld [vmem:[%s841 + $0x7d8] sm:$0xff]
        %v2564 = vld [vmem:[%s841 + $0x7e0] sm:$0xff]
        %v2565 = vld [vmem:[%s841 + $0x7e8] sm:$0xff]
        %v2566 = vld [vmem:[%s841 + $0x7f0] sm:$0xff]
        %v2567 = vld [vmem:[%s841 + $0x7f8] sm:$0xff]
        %v2568 = vld [vmem:[%s841 + $0x800] sm:$0xff]
        %v2569 = vld [vmem:[%s841 + $0x808] sm:$0xff]
        %v2570 = vld [vmem:[%s841 + $0x810] sm:$0xff]
        %v2571 = vld [vmem:[%s841 + $0x818] sm:$0xff]
        %v2572 = vld [vmem:[%s841 + $0x820] sm:$0xff]
        %v2573 = vld [vmem:[%s841 + $0x828] sm:$0xff]
        %v2574 = vld [vmem:[%s841 + $0x830] sm:$0xff]
        %v2575 = vld [vmem:[%s841 + $0x838] sm:$0xff]
        %v2576 = vld [vmem:[%s841 + $0x840] sm:$0xff]
        %v2577 = vld [vmem:[%s841 + $0x848] sm:$0xff]
        %v2578 = vld [vmem:[%s841 + $0x850] sm:$0xff]
        %v2579 = vld [vmem:[%s841 + $0x858] sm:$0xff]
        %v2580 = vld [vmem:[%s841 + $0x860] sm:$0xff]
        %v2581 = vld [vmem:[%s841 + $0x868] sm:$0xff]
        %v2582 = vld [vmem:[%s841 + $0x870] sm:$0xff]
        %v2583 = vld [vmem:[%s841 + $0x878] sm:$0xff]
        %v2584 = vld [vmem:[%s841 + $0x880] sm:$0xff]
        %v2585 = vld [vmem:[%s841 + $0x888] sm:$0xff]
        %v2586 = vld [vmem:[%s841 + $0x890] sm:$0xff]
        %v2587 = vld [vmem:[%s841 + $0x898] sm:$0xff]
        %v2588 = vld [vmem:[%s841 + $0x8a0] sm:$0xff]
        %v2589 = vld [vmem:[%s841 + $0x8a8] sm:$0xff]
        %v2590 = vld [vmem:[%s841 + $0x8b0] sm:$0xff]
        %v2591 = vld [vmem:[%s841 + $0x8b8] sm:$0xff]
        %v2592 = vld [vmem:[%s841 + $0x8c0] sm:$0xff]
        %v2593 = vld [vmem:[%s841 + $0x8c8] sm:$0xff]
        %v2594 = vld [vmem:[%s841 + $0x8d0] sm:$0xff]
        %v2595 = vld [vmem:[%s841 + $0x8d8] sm:$0xff]
        %v2596 = vld [vmem:[%s841 + $0x8e0] sm:$0xff]
        %v2597 = vld [vmem:[%s841 + $0x8e8] sm:$0xff]
        %v2598 = vld [vmem:[%s841 + $0x8f0] sm:$0xff]
        %v2599 = vld [vmem:[%s841 + $0x8f8] sm:$0xff]
        %v2600 = vld [vmem:[%s841 + $0x900] sm:$0xff]
        %v2601 = vld [vmem:[%s841 + $0x908] sm:$0xff]
        %v2602 = vld [vmem:[%s841 + $0x910] sm:$0xff]
        %v2603 = vld [vmem:[%s841 + $0x918] sm:$0xff]
        %v2604 = vld [vmem:[%s841 + $0x920] sm:$0xff]
        %v2605 = vld [vmem:[%s841 + $0x928] sm:$0xff]
        %v2606 = vld [vmem:[%s841 + $0x930] sm:$0xff]
        %v2607 = vld [vmem:[%s841 + $0x938] sm:$0xff]
        %v2608 = vld [vmem:[%s841 + $0x940] sm:$0xff]
        %v2609 = vld [vmem:[%s841 + $0x948] sm:$0xff]
        %v2610 = vld [vmem:[%s841 + $0x950] sm:$0xff]
        %v2611 = vld [vmem:[%s841 + $0x958] sm:$0xff]
        %v2612 = vld [vmem:[%s841 + $0x960] sm:$0xff]
        %v2613 = vld [vmem:[%s841 + $0x968] sm:$0xff]
        %v2614 = vld [vmem:[%s841 + $0x970] sm:$0xff]
        %v2615 = vld [vmem:[%s841 + $0x978] sm:$0xff]
        %v2616 = vld [vmem:[%s841 + $0x980] sm:$0xff]
        %v2617 = vld [vmem:[%s841 + $0x988] sm:$0xff]
        %v2618 = vld [vmem:[%s841 + $0x990] sm:$0xff]
        %v2619 = vld [vmem:[%s841 + $0x998] sm:$0xff]
        %v2620 = vld [vmem:[%s841 + $0x9a0] sm:$0xff]
        %v2621 = vld [vmem:[%s841 + $0x9a8] sm:$0xff]
        %v2622 = vld [vmem:[%s841 + $0x9b0] sm:$0xff]
        %v2623 = vld [vmem:[%s841 + $0x9b8] sm:$0xff]
        %v2624 = vld [vmem:[%s841 + $0x9c0] sm:$0xff]
        %v2625 = vld [vmem:[%s841 + $0x9c8] sm:$0xff]
        %v2626 = vld [vmem:[%s841 + $0x9d0] sm:$0xff]
        %v2627 = vld [vmem:[%s841 + $0x9d8] sm:$0xff]
        %v2628 = vld [vmem:[%s872] sm:$0xff]
        %v2629 = vld [vmem:[%s872 + $0x8] sm:$0xff]
        %v2630 = vld [vmem:[%s872 + $0x10] sm:$0xff]
        %v2631 = vld [vmem:[%s872 + $0x18] sm:$0xff]
        %v2632 = vld [vmem:[%s872 + $0x20] sm:$0xff]
        %v2633 = vld [vmem:[%s872 + $0x28] sm:$0xff]
        %v2634 = vld [vmem:[%s872 + $0x30] sm:$0xff]
        %v2635 = vld [vmem:[%s872 + $0x38] sm:$0xff]
        %v2636 = vld [vmem:[%s872 + $0x40] sm:$0xff]
        %v2637 = vld [vmem:[%s872 + $0x48] sm:$0xff]
        %v2648 = vlaneseq
        %v2649 = vshrl.u32 %v2648, 7
        %v2650 = vsub.s32 0, %v2649
        %v2651 = vrot.slane %v2628, %v2650
        %v2652 = vlaneseq
        %v2653 = vshrl.u32 %v2652, 7
        %v2654 = vsub.s32 1, %v2653
        %v2655 = vrot.slane %v2628, %v2654
        %v2656 = vlaneseq
        %v2657 = vshrl.u32 %v2656, 7
        %v2658 = vsub.s32 2, %v2657
        %v2659 = vrot.slane %v2628, %v2658
        %v2660 = vlaneseq
        %v2661 = vshrl.u32 %v2660, 7
        %v2662 = vsub.s32 3, %v2661
        %v2663 = vrot.slane %v2628, %v2662
        %v2664 = vlaneseq
        %v2665 = vshrl.u32 %v2664, 7
        %v2666 = vsub.s32 4, %v2665
        %v2667 = vrot.slane %v2628, %v2666
        %v2668 = vlaneseq
        %v2669 = vshrl.u32 %v2668, 7
        %v2670 = vsub.s32 5, %v2669
        %v2671 = vrot.slane %v2628, %v2670
        %v2672 = vlaneseq
        %v2673 = vshrl.u32 %v2672, 7
        %v2674 = vsub.s32 6, %v2673
        %v2675 = vrot.slane %v2628, %v2674
        %v2676 = vlaneseq
        %v2677 = vshrl.u32 %v2676, 7
        %v2678 = vsub.s32 7, %v2677
        %v2679 = vrot.slane %v2628, %v2678
        %v2680 = vlaneseq
        %v2681 = vshrl.u32 %v2680, 7
        %v2682 = vsub.s32 0, %v2681
        %v2683 = vrot.slane %v2629, %v2682
        %v2684 = vlaneseq
        %v2685 = vshrl.u32 %v2684, 7
        %v2686 = vsub.s32 1, %v2685
        %v2687 = vrot.slane %v2629, %v2686
        %v2688 = vlaneseq
        %v2689 = vshrl.u32 %v2688, 7
        %v2690 = vsub.s32 2, %v2689
        %v2691 = vrot.slane %v2629, %v2690
        %v2692 = vlaneseq
        %v2693 = vshrl.u32 %v2692, 7
        %v2694 = vsub.s32 3, %v2693
        %v2695 = vrot.slane %v2629, %v2694
        %v2696 = vlaneseq
        %v2697 = vshrl.u32 %v2696, 7
        %v2698 = vsub.s32 4, %v2697
        %v2699 = vrot.slane %v2629, %v2698
        %v2700 = vlaneseq
        %v2701 = vshrl.u32 %v2700, 7
        %v2702 = vsub.s32 5, %v2701
        %v2703 = vrot.slane %v2629, %v2702
        %v2704 = vlaneseq
        %v2705 = vshrl.u32 %v2704, 7
        %v2706 = vsub.s32 6, %v2705
        %v2707 = vrot.slane %v2629, %v2706
        %v2708 = vlaneseq
        %v2709 = vshrl.u32 %v2708, 7
        %v2710 = vsub.s32 7, %v2709
        %v2711 = vrot.slane %v2629, %v2710
        %v2712 = vlaneseq
        %v2713 = vshrl.u32 %v2712, 7
        %v2714 = vsub.s32 0, %v2713
        %v2715 = vrot.slane %v2630, %v2714
        %v2716 = vlaneseq
        %v2717 = vshrl.u32 %v2716, 7
        %v2718 = vsub.s32 1, %v2717
        %v2719 = vrot.slane %v2630, %v2718
        %v2720 = vlaneseq
        %v2721 = vshrl.u32 %v2720, 7
        %v2722 = vsub.s32 2, %v2721
        %v2723 = vrot.slane %v2630, %v2722
        %v2724 = vlaneseq
        %v2725 = vshrl.u32 %v2724, 7
        %v2726 = vsub.s32 3, %v2725
        %v2727 = vrot.slane %v2630, %v2726
        %v2728 = vlaneseq
        %v2729 = vshrl.u32 %v2728, 7
        %v2730 = vsub.s32 4, %v2729
        %v2731 = vrot.slane %v2630, %v2730
        %v2732 = vlaneseq
        %v2733 = vshrl.u32 %v2732, 7
        %v2734 = vsub.s32 5, %v2733
        %v2735 = vrot.slane %v2630, %v2734
        %v2736 = vlaneseq
        %v2737 = vshrl.u32 %v2736, 7
        %v2738 = vsub.s32 6, %v2737
        %v2739 = vrot.slane %v2630, %v2738
        %v2740 = vlaneseq
        %v2741 = vshrl.u32 %v2740, 7
        %v2742 = vsub.s32 7, %v2741
        %v2743 = vrot.slane %v2630, %v2742
        %v2744 = vlaneseq
        %v2745 = vshrl.u32 %v2744, 7
        %v2746 = vsub.s32 0, %v2745
        %v2747 = vrot.slane %v2631, %v2746
        %v2748 = vlaneseq
        %v2749 = vshrl.u32 %v2748, 7
        %v2750 = vsub.s32 1, %v2749
        %v2751 = vrot.slane %v2631, %v2750
        %v2752 = vlaneseq
        %v2753 = vshrl.u32 %v2752, 7
        %v2754 = vsub.s32 2, %v2753
        %v2755 = vrot.slane %v2631, %v2754
        %v2756 = vlaneseq
        %v2757 = vshrl.u32 %v2756, 7
        %v2758 = vsub.s32 3, %v2757
        %v2759 = vrot.slane %v2631, %v2758
        %v2760 = vlaneseq
        %v2761 = vshrl.u32 %v2760, 7
        %v2762 = vsub.s32 4, %v2761
        %v2763 = vrot.slane %v2631, %v2762
        %v2764 = vlaneseq
        %v2765 = vshrl.u32 %v2764, 7
        %v2766 = vsub.s32 5, %v2765
        %v2767 = vrot.slane %v2631, %v2766
        %v2768 = vlaneseq
        %v2769 = vshrl.u32 %v2768, 7
        %v2770 = vsub.s32 6, %v2769
        %v2771 = vrot.slane %v2631, %v2770
        %v2772 = vlaneseq
        %v2773 = vshrl.u32 %v2772, 7
        %v2774 = vsub.s32 7, %v2773
        %v2775 = vrot.slane %v2631, %v2774
        %v2776 = vlaneseq
        %v2777 = vshrl.u32 %v2776, 7
        %v2778 = vsub.s32 0, %v2777
        %v2779 = vrot.slane %v2632, %v2778
        %v2780 = vlaneseq
        %v2781 = vshrl.u32 %v2780, 7
        %v2782 = vsub.s32 1, %v2781
        %v2783 = vrot.slane %v2632, %v2782
        %v2784 = vlaneseq
        %v2785 = vshrl.u32 %v2784, 7
        %v2786 = vsub.s32 2, %v2785
        %v2787 = vrot.slane %v2632, %v2786
        %v2788 = vlaneseq
        %v2789 = vshrl.u32 %v2788, 7
        %v2790 = vsub.s32 3, %v2789
        %v2791 = vrot.slane %v2632, %v2790
        %v2792 = vlaneseq
        %v2793 = vshrl.u32 %v2792, 7
        %v2794 = vsub.s32 4, %v2793
        %v2795 = vrot.slane %v2632, %v2794
        %v2796 = vlaneseq
        %v2797 = vshrl.u32 %v2796, 7
        %v2798 = vsub.s32 5, %v2797
        %v2799 = vrot.slane %v2632, %v2798
        %v2800 = vlaneseq
        %v2801 = vshrl.u32 %v2800, 7
        %v2802 = vsub.s32 6, %v2801
        %v2803 = vrot.slane %v2632, %v2802
        %v2804 = vlaneseq
        %v2805 = vshrl.u32 %v2804, 7
        %v2806 = vsub.s32 7, %v2805
        %v2807 = vrot.slane %v2632, %v2806
        %v2808 = vlaneseq
        %v2809 = vshrl.u32 %v2808, 7
        %v2810 = vsub.s32 0, %v2809
        %v2811 = vrot.slane %v2633, %v2810
        %v2812 = vlaneseq
        %v2813 = vshrl.u32 %v2812, 7
        %v2814 = vsub.s32 1, %v2813
        %v2815 = vrot.slane %v2633, %v2814
        %v2816 = vlaneseq
        %v2817 = vshrl.u32 %v2816, 7
        %v2818 = vsub.s32 2, %v2817
        %v2819 = vrot.slane %v2633, %v2818
        %v2820 = vlaneseq
        %v2821 = vshrl.u32 %v2820, 7
        %v2822 = vsub.s32 3, %v2821
        %v2823 = vrot.slane %v2633, %v2822
        %v2824 = vlaneseq
        %v2825 = vshrl.u32 %v2824, 7
        %v2826 = vsub.s32 4, %v2825
        %v2827 = vrot.slane %v2633, %v2826
        %v2828 = vlaneseq
        %v2829 = vshrl.u32 %v2828, 7
        %v2830 = vsub.s32 5, %v2829
        %v2831 = vrot.slane %v2633, %v2830
        %v2832 = vlaneseq
        %v2833 = vshrl.u32 %v2832, 7
        %v2834 = vsub.s32 6, %v2833
        %v2835 = vrot.slane %v2633, %v2834
        %v2836 = vlaneseq
        %v2837 = vshrl.u32 %v2836, 7
        %v2838 = vsub.s32 7, %v2837
        %v2839 = vrot.slane %v2633, %v2838
        %v2840 = vlaneseq
        %v2841 = vshrl.u32 %v2840, 7
        %v2842 = vsub.s32 0, %v2841
        %v2843 = vrot.slane %v2634, %v2842
        %v2844 = vlaneseq
        %v2845 = vshrl.u32 %v2844, 7
        %v2846 = vsub.s32 1, %v2845
        %v2847 = vrot.slane %v2634, %v2846
        %v2848 = vlaneseq
        %v2849 = vshrl.u32 %v2848, 7
        %v2850 = vsub.s32 2, %v2849
        %v2851 = vrot.slane %v2634, %v2850
        %v2852 = vlaneseq
        %v2853 = vshrl.u32 %v2852, 7
        %v2854 = vsub.s32 3, %v2853
        %v2855 = vrot.slane %v2634, %v2854
        %v2856 = vlaneseq
        %v2857 = vshrl.u32 %v2856, 7
        %v2858 = vsub.s32 4, %v2857
        %v2859 = vrot.slane %v2634, %v2858
        %v2860 = vlaneseq
        %v2861 = vshrl.u32 %v2860, 7
        %v2862 = vsub.s32 5, %v2861
        %v2863 = vrot.slane %v2634, %v2862
        %v2864 = vlaneseq
        %v2865 = vshrl.u32 %v2864, 7
        %v2866 = vsub.s32 6, %v2865
        %v2867 = vrot.slane %v2634, %v2866
        %v2868 = vlaneseq
        %v2869 = vshrl.u32 %v2868, 7
        %v2870 = vsub.s32 7, %v2869
        %v2871 = vrot.slane %v2634, %v2870
        %v2872 = vlaneseq
        %v2873 = vshrl.u32 %v2872, 7
        %v2874 = vsub.s32 0, %v2873
        %v2875 = vrot.slane %v2635, %v2874
        %v2876 = vlaneseq
        %v2877 = vshrl.u32 %v2876, 7
        %v2878 = vsub.s32 1, %v2877
        %v2879 = vrot.slane %v2635, %v2878
        %v2880 = vlaneseq
        %v2881 = vshrl.u32 %v2880, 7
        %v2882 = vsub.s32 2, %v2881
        %v2883 = vrot.slane %v2635, %v2882
        %v2884 = vlaneseq
        %v2885 = vshrl.u32 %v2884, 7
        %v2886 = vsub.s32 3, %v2885
        %v2887 = vrot.slane %v2635, %v2886
        %v2888 = vlaneseq
        %v2889 = vshrl.u32 %v2888, 7
        %v2890 = vsub.s32 4, %v2889
        %v2891 = vrot.slane %v2635, %v2890
        %v2892 = vlaneseq
        %v2893 = vshrl.u32 %v2892, 7
        %v2894 = vsub.s32 5, %v2893
        %v2895 = vrot.slane %v2635, %v2894
        %v2896 = vlaneseq
        %v2897 = vshrl.u32 %v2896, 7
        %v2898 = vsub.s32 6, %v2897
        %v2899 = vrot.slane %v2635, %v2898
        %v2900 = vlaneseq
        %v2901 = vshrl.u32 %v2900, 7
        %v2902 = vsub.s32 7, %v2901
        %v2903 = vrot.slane %v2635, %v2902
        %v2904 = vlaneseq
        %v2905 = vshrl.u32 %v2904, 7
        %v2906 = vsub.s32 0, %v2905
        %v2907 = vrot.slane %v2636, %v2906
        %v2908 = vlaneseq
        %v2909 = vshrl.u32 %v2908, 7
        %v2910 = vsub.s32 1, %v2909
        %v2911 = vrot.slane %v2636, %v2910
        %v2912 = vlaneseq
        %v2913 = vshrl.u32 %v2912, 7
        %v2914 = vsub.s32 2, %v2913
        %v2915 = vrot.slane %v2636, %v2914
        %v2916 = vlaneseq
        %v2917 = vshrl.u32 %v2916, 7
        %v2918 = vsub.s32 3, %v2917
        %v2919 = vrot.slane %v2636, %v2918
        %v2920 = vlaneseq
        %v2921 = vshrl.u32 %v2920, 7
        %v2922 = vsub.s32 4, %v2921
        %v2923 = vrot.slane %v2636, %v2922
        %v2924 = vlaneseq
        %v2925 = vshrl.u32 %v2924, 7
        %v2926 = vsub.s32 5, %v2925
        %v2927 = vrot.slane %v2636, %v2926
        %v2928 = vlaneseq
        %v2929 = vshrl.u32 %v2928, 7
        %v2930 = vsub.s32 6, %v2929
        %v2931 = vrot.slane %v2636, %v2930
        %v2932 = vlaneseq
        %v2933 = vshrl.u32 %v2932, 7
        %v2934 = vsub.s32 7, %v2933
        %v2935 = vrot.slane %v2636, %v2934
        %v2936 = vlaneseq
        %v2937 = vshrl.u32 %v2936, 7
        %v2938 = vsub.s32 0, %v2937
        %v2939 = vrot.slane %v2637, %v2938
        %v2940 = vlaneseq
        %v2941 = vshrl.u32 %v2940, 7
        %v2942 = vsub.s32 1, %v2941
        %v2943 = vrot.slane %v2637, %v2942
        %v2944 = vlaneseq
        %v2945 = vshrl.u32 %v2944, 7
        %v2946 = vsub.s32 2, %v2945
        %v2947 = vrot.slane %v2637, %v2946
        %v2948 = vlaneseq
        %v2949 = vshrl.u32 %v2948, 7
        %v2950 = vsub.s32 3, %v2949
        %v2951 = vrot.slane %v2637, %v2950
        %v2952 = vlaneseq
        %v2953 = vshrl.u32 %v2952, 7
        %v2954 = vsub.s32 4, %v2953
        %v2955 = vrot.slane %v2637, %v2954
        %v2956 = vlaneseq
        %v2957 = vshrl.u32 %v2956, 7
        %v2958 = vsub.s32 5, %v2957
        %v2959 = vrot.slane %v2637, %v2958
        %v2960 = vlaneseq
        %v2961 = vshrl.u32 %v2960, 7
        %v2962 = vsub.s32 6, %v2961
        %v2963 = vrot.slane %v2637, %v2962
        %vm3043 = vcmask 261120
        %v3045 = vsel %vm3043, %v2311, 0
        %3047 = vmatprep.subr.mxu0 %v2313
        %3048 = vmatpush1.msra.mxu0 %v2312
        %3049 = vmatprep.subr.mxu0 %v2392
        %3050 = vmatpush1.msra.mxu0 %v2391
        %3051 = vmatprep.subr.mxu0 %v2471
        %3052 = vmatpush1.msra.mxu0 %v2470
        %3053 = vmatprep.subr.mxu0 %v2550
        %3054 = vmatpush1.msra.mxu0 %v2549
        %3055 = vmatprep.subr.mxu0 0.0
        %3056 = vmatpush1.msra.mxu0 0.0
        %3057 = vmatprep.subr.mxu0 0.0
        %3058 = vmatpush1.msra.mxu0 0.0
        %3059 = vmatprep.subr.mxu0 0.0
        %3060 = vmatpush1.msra.mxu0 0.0
        %3061 = vmatprep.subr.mxu0 0.0
        %3062 = vmatpush1.msra.mxu0 0.0
        %3063 = vmatprep.subr.mxu0 0.0
        %3064 = vmatpush1.msra.mxu0 0.0
        %3065 = vmatprep.subr.mxu0 0.0
        %3066 = vmatpush1.msra.mxu0 0.0
        %3067 = vmatprep.subr.mxu0 0.0
        %3068 = vmatpush1.msra.mxu0 0.0
        %3069 = vmatprep.subr.mxu0 0.0
        %3070 = vmatpush1.msra.mxu0 0.0
        %3071 = vmatprep.subr.mxu0 0.0
        %3072 = vmatpush1.msra.mxu0 0.0
        %3073 = vmatprep.subr.mxu0 0.0
        %3074 = vmatpush1.msra.mxu0 0.0
        %3075 = vmatprep.subr.mxu0 0.0
        %3076 = vmatpush1.msra.mxu0 0.0
        %3077 = vmatprep.subr.mxu0 0.0
        %3078 = vmatpush1.msra.mxu0 0.0
        %3079 = vmatprep.subr.mxu0 0.0
        %3080 = vmatpush1.msra.mxu0 0.0
        %3081 = vmatprep.subr.mxu0 0.0
        %3082 = vmatpush1.msra.mxu0 0.0
        %3083 = vmatprep.subr.mxu0 0.0
        %3084 = vmatpush1.msra.mxu0 0.0
        %3085 = vmatprep.subr.mxu0 0.0
        %3086 = vmatpush1.msra.mxu0 0.0
        %3087 = vmatprep.subr.mxu0 0.0
        %3088 = vmatpush1.msra.mxu0 0.0
        %3089 = vmatprep.subr.mxu0 0.0
        %3090 = vmatpush1.msra.mxu0 0.0
        %3091 = vmatprep.subr.mxu0 0.0
        %3092 = vmatpush1.msra.mxu0 0.0
        %3093 = vmatprep.subr.mxu0 0.0
        %3094 = vmatpush1.msra.mxu0 0.0
        %3095 = vmatprep.subr.mxu0 0.0
        %3096 = vmatpush1.msra.mxu0 0.0
        %3097 = vmatprep.subr.mxu0 0.0
        %3098 = vmatpush1.msra.mxu0 0.0
        %3099 = vmatprep.subr.mxu0 0.0
        %3100 = vmatpush1.msra.mxu0 0.0
        %3101 = vmatprep.subr.mxu0 0.0
        %3102 = vmatpush1.msra.mxu0 0.0
        %3103 = vmatprep.subr.mxu0 0.0
        %3104 = vmatpush1.msra.mxu0 0.0
        %3105 = vmatprep.subr.mxu0 0.0
        %3106 = vmatpush1.msra.mxu0 0.0
        %3107 = vmatprep.subr.mxu0 0.0
        %3108 = vmatpush1.msra.mxu0 0.0
        %3109 = vmatprep.subr.mxu0 0.0
        %3110 = vmatpush1.msra.mxu0 0.0
        %3111 = vmatprep.mubr.f32.mxu0 0.0
        %3112 = vmatmul.mubr.f32.gmra.mrb[0].mxu0 %v3045
        %v3113 = vpop.f32.mrb[0].mxu0
        %v3114 = vadd.f32 %v2651, %v3113
        %v3115 = vpop.f32.mrb[0].mxu0
        %v3116 = vadd.f32 %v2655, %v3115
        %3117 = vdwg.mxu0
        %3118 = vmatprep.subr.mxu0 %v2315
        %3119 = vmatpush1.msra.mxu0 %v2314
        %3120 = vmatprep.subr.mxu0 %v2394
        %3121 = vmatpush1.msra.mxu0 %v2393
        %3122 = vmatprep.subr.mxu0 %v2473
        %3123 = vmatpush1.msra.mxu0 %v2472
        %3124 = vmatprep.subr.mxu0 %v2552
        %3125 = vmatpush1.msra.mxu0 %v2551
        %3126 = vmatprep.subr.mxu0 0.0
        %3127 = vmatpush1.msra.mxu0 0.0
        %3128 = vmatprep.subr.mxu0 0.0
        %3129 = vmatpush1.msra.mxu0 0.0
        %3130 = vmatprep.subr.mxu0 0.0
        %3131 = vmatpush1.msra.mxu0 0.0
        %3132 = vmatprep.subr.mxu0 0.0
        %3133 = vmatpush1.msra.mxu0 0.0
        %3134 = vmatprep.subr.mxu0 0.0
        %3135 = vmatpush1.msra.mxu0 0.0
        %3136 = vmatprep.subr.mxu0 0.0
        %3137 = vmatpush1.msra.mxu0 0.0
        %3138 = vmatprep.subr.mxu0 0.0
        %3139 = vmatpush1.msra.mxu0 0.0
        %3140 = vmatprep.subr.mxu0 0.0
        %3141 = vmatpush1.msra.mxu0 0.0
        %3142 = vmatprep.subr.mxu0 0.0
        %3143 = vmatpush1.msra.mxu0 0.0
        %3144 = vmatprep.subr.mxu0 0.0
        %3145 = vmatpush1.msra.mxu0 0.0
        %3146 = vmatprep.subr.mxu0 0.0
        %3147 = vmatpush1.msra.mxu0 0.0
        %3148 = vmatprep.subr.mxu0 0.0
        %3149 = vmatpush1.msra.mxu0 0.0
        %3150 = vmatprep.subr.mxu0 0.0
        %3151 = vmatpush1.msra.mxu0 0.0
        %3152 = vmatprep.subr.mxu0 0.0
        %3153 = vmatpush1.msra.mxu0 0.0
        %3154 = vmatprep.subr.mxu0 0.0
        %3155 = vmatpush1.msra.mxu0 0.0
        %3156 = vmatprep.subr.mxu0 0.0
        %3157 = vmatpush1.msra.mxu0 0.0
        %3158 = vmatprep.subr.mxu0 0.0
        %3159 = vmatpush1.msra.mxu0 0.0
        %3160 = vmatprep.subr.mxu0 0.0
        %3161 = vmatpush1.msra.mxu0 0.0
        %3162 = vmatprep.subr.mxu0 0.0
        %3163 = vmatpush1.msra.mxu0 0.0
        %3164 = vmatprep.subr.mxu0 0.0
        %3165 = vmatpush1.msra.mxu0 0.0
        %3166 = vmatprep.subr.mxu0 0.0
        %3167 = vmatpush1.msra.mxu0 0.0
        %3168 = vmatprep.subr.mxu0 0.0
        %3169 = vmatpush1.msra.mxu0 0.0
        %3170 = vmatprep.subr.mxu0 0.0
        %3171 = vmatpush1.msra.mxu0 0.0
        %3172 = vmatprep.subr.mxu0 0.0
        %3173 = vmatpush1.msra.mxu0 0.0
        %3174 = vmatprep.subr.mxu0 0.0
        %3175 = vmatpush1.msra.mxu0 0.0
        %3176 = vmatprep.subr.mxu0 0.0
        %3177 = vmatpush1.msra.mxu0 0.0
        %3178 = vmatprep.subr.mxu0 0.0
        %3179 = vmatpush1.msra.mxu0 0.0
        %3180 = vmatprep.subr.mxu0 0.0
        %3181 = vmatpush1.msra.mxu0 0.0
        %3182 = vmatprep.mubr.f32.mxu0 0.0
        %3183 = vmatmul.mubr.f32.gmra.mrb[0].mxu0 %v3045
        %v3184 = vpop.f32.mrb[0].mxu0
        %v3185 = vadd.f32 %v2659, %v3184
        %v3186 = vpop.f32.mrb[0].mxu0
        %v3187 = vadd.f32 %v2663, %v3186
        %3188 = vdwg.mxu0
        %3189 = vmatprep.subr.mxu0 %v2317
        %3190 = vmatpush1.msra.mxu0 %v2316
        %3191 = vmatprep.subr.mxu0 %v2396
        %3192 = vmatpush1.msra.mxu0 %v2395
        %3193 = vmatprep.subr.mxu0 %v2475
        %3194 = vmatpush1.msra.mxu0 %v2474
        %3195 = vmatprep.subr.mxu0 %v2554
        %3196 = vmatpush1.msra.mxu0 %v2553
        %3197 = vmatprep.subr.mxu0 0.0
        %3198 = vmatpush1.msra.mxu0 0.0
        %3199 = vmatprep.subr.mxu0 0.0
        %3200 = vmatpush1.msra.mxu0 0.0
        %3201 = vmatprep.subr.mxu0 0.0
        %3202 = vmatpush1.msra.mxu0 0.0
        %3203 = vmatprep.subr.mxu0 0.0
        %3204 = vmatpush1.msra.mxu0 0.0
        %3205 = vmatprep.subr.mxu0 0.0
        %3206 = vmatpush1.msra.mxu0 0.0
        %3207 = vmatprep.subr.mxu0 0.0
        %3208 = vmatpush1.msra.mxu0 0.0
        %3209 = vmatprep.subr.mxu0 0.0
        %3210 = vmatpush1.msra.mxu0 0.0
        %3211 = vmatprep.subr.mxu0 0.0
        %3212 = vmatpush1.msra.mxu0 0.0
        %3213 = vmatprep.subr.mxu0 0.0
        %3214 = vmatpush1.msra.mxu0 0.0
        %3215 = vmatprep.subr.mxu0 0.0
        %3216 = vmatpush1.msra.mxu0 0.0
        %3217 = vmatprep.subr.mxu0 0.0
        %3218 = vmatpush1.msra.mxu0 0.0
        %3219 = vmatprep.subr.mxu0 0.0
        %3220 = vmatpush1.msra.mxu0 0.0
        %3221 = vmatprep.subr.mxu0 0.0
        %3222 = vmatpush1.msra.mxu0 0.0
        %3223 = vmatprep.subr.mxu0 0.0
        %3224 = vmatpush1.msra.mxu0 0.0
        %3225 = vmatprep.subr.mxu0 0.0
        %3226 = vmatpush1.msra.mxu0 0.0
        %3227 = vmatprep.subr.mxu0 0.0
        %3228 = vmatpush1.msra.mxu0 0.0
        %3229 = vmatprep.subr.mxu0 0.0
        %3230 = vmatpush1.msra.mxu0 0.0
        %3231 = vmatprep.subr.mxu0 0.0
        %3232 = vmatpush1.msra.mxu0 0.0
        %3233 = vmatprep.subr.mxu0 0.0
        %3234 = vmatpush1.msra.mxu0 0.0
        %3235 = vmatprep.subr.mxu0 0.0
        %3236 = vmatpush1.msra.mxu0 0.0
        %3237 = vmatprep.subr.mxu0 0.0
        %3238 = vmatpush1.msra.mxu0 0.0
        %3239 = vmatprep.subr.mxu0 0.0
        %3240 = vmatpush1.msra.mxu0 0.0
        %3241 = vmatprep.subr.mxu0 0.0
        %3242 = vmatpush1.msra.mxu0 0.0
        %3243 = vmatprep.subr.mxu0 0.0
        %3244 = vmatpush1.msra.mxu0 0.0
        %3245 = vmatprep.subr.mxu0 0.0
        %3246 = vmatpush1.msra.mxu0 0.0
        %3247 = vmatprep.subr.mxu0 0.0
        %3248 = vmatpush1.msra.mxu0 0.0
        %3249 = vmatprep.subr.mxu0 0.0
        %3250 = vmatpush1.msra.mxu0 0.0
        %3251 = vmatprep.subr.mxu0 0.0
        %3252 = vmatpush1.msra.mxu0 0.0
        %3253 = vmatprep.mubr.f32.mxu0 0.0
        %3254 = vmatmul.mubr.f32.gmra.mrb[0].mxu0 %v3045
        %v3255 = vpop.f32.mrb[0].mxu0
        %v3256 = vadd.f32 %v2667, %v3255
        %v3257 = vpop.f32.mrb[0].mxu0
        %v3258 = vadd.f32 %v2671, %v3257
        %3259 = vdwg.mxu0
        %3260 = vmatprep.subr.mxu0 %v2319
        %3261 = vmatpush1.msra.mxu0 %v2318
        %3262 = vmatprep.subr.mxu0 %v2398
        %3263 = vmatpush1.msra.mxu0 %v2397
        %3264 = vmatprep.subr.mxu0 %v2477
        %3265 = vmatpush1.msra.mxu0 %v2476
        %3266 = vmatprep.subr.mxu0 %v2556
        %3267 = vmatpush1.msra.mxu0 %v2555
        %3268 = vmatprep.subr.mxu0 0.0
        %3269 = vmatpush1.msra.mxu0 0.0
        %3270 = vmatprep.subr.mxu0 0.0
        %3271 = vmatpush1.msra.mxu0 0.0
        %3272 = vmatprep.subr.mxu0 0.0
        %3273 = vmatpush1.msra.mxu0 0.0
        %3274 = vmatprep.subr.mxu0 0.0
        %3275 = vmatpush1.msra.mxu0 0.0
        %3276 = vmatprep.subr.mxu0 0.0
        %3277 = vmatpush1.msra.mxu0 0.0
        %3278 = vmatprep.subr.mxu0 0.0
        %3279 = vmatpush1.msra.mxu0 0.0
        %3280 = vmatprep.subr.mxu0 0.0
        %3281 = vmatpush1.msra.mxu0 0.0
        %3282 = vmatprep.subr.mxu0 0.0
        %3283 = vmatpush1.msra.mxu0 0.0
        %3284 = vmatprep.subr.mxu0 0.0
        %3285 = vmatpush1.msra.mxu0 0.0
        %3286 = vmatprep.subr.mxu0 0.0
        %3287 = vmatpush1.msra.mxu0 0.0
        %3288 = vmatprep.subr.mxu0 0.0
        %3289 = vmatpush1.msra.mxu0 0.0
        %3290 = vmatprep.subr.mxu0 0.0
        %3291 = vmatpush1.msra.mxu0 0.0
        %3292 = vmatprep.subr.mxu0 0.0
        %3293 = vmatpush1.msra.mxu0 0.0
        %3294 = vmatprep.subr.mxu0 0.0
        %3295 = vmatpush1.msra.mxu0 0.0
        %3296 = vmatprep.subr.mxu0 0.0
        %3297 = vmatpush1.msra.mxu0 0.0
        %3298 = vmatprep.subr.mxu0 0.0
        %3299 = vmatpush1.msra.mxu0 0.0
        %3300 = vmatprep.subr.mxu0 0.0
        %3301 = vmatpush1.msra.mxu0 0.0
        %3302 = vmatprep.subr.mxu0 0.0
        %3303 = vmatpush1.msra.mxu0 0.0
        %3304 = vmatprep.subr.mxu0 0.0
        %3305 = vmatpush1.msra.mxu0 0.0
        %3306 = vmatprep.subr.mxu0 0.0
        %3307 = vmatpush1.msra.mxu0 0.0
        %3308 = vmatprep.subr.mxu0 0.0
        %3309 = vmatpush1.msra.mxu0 0.0
        %3310 = vmatprep.subr.mxu0 0.0
        %3311 = vmatpush1.msra.mxu0 0.0
        %3312 = vmatprep.subr.mxu0 0.0
        %3313 = vmatpush1.msra.mxu0 0.0
        %3314 = vmatprep.subr.mxu0 0.0
        %3315 = vmatpush1.msra.mxu0 0.0
        %3316 = vmatprep.subr.mxu0 0.0
        %3317 = vmatpush1.msra.mxu0 0.0
        %3318 = vmatprep.subr.mxu0 0.0
        %3319 = vmatpush1.msra.mxu0 0.0
        %3320 = vmatprep.subr.mxu0 0.0
        %3321 = vmatpush1.msra.mxu0 0.0
        %3322 = vmatprep.subr.mxu0 0.0
        %3323 = vmatpush1.msra.mxu0 0.0
        %3324 = vmatprep.mubr.f32.mxu0 0.0
        %3325 = vmatmul.mubr.f32.gmra.mrb[0].mxu0 %v3045
        %v3326 = vpop.f32.mrb[0].mxu0
        %v3327 = vadd.f32 %v2675, %v3326
        %v3328 = vpop.f32.mrb[0].mxu0
        %v3329 = vadd.f32 %v2679, %v3328
        %3330 = vdwg.mxu0
        %3331 = vmatprep.subr.mxu0 %v2321
        %3332 = vmatpush1.msra.mxu0 %v2320
        %3333 = vmatprep.subr.mxu0 %v2400
        %3334 = vmatpush1.msra.mxu0 %v2399
        %3335 = vmatprep.subr.mxu0 %v2479
        %3336 = vmatpush1.msra.mxu0 %v2478
        %3337 = vmatprep.subr.mxu0 %v2558
        %3338 = vmatpush1.msra.mxu0 %v2557
        %3339 = vmatprep.subr.mxu0 0.0
        %3340 = vmatpush1.msra.mxu0 0.0
        %3341 = vmatprep.subr.mxu0 0.0
        %3342 = vmatpush1.msra.mxu0 0.0
        %3343 = vmatprep.subr.mxu0 0.0
        %3344 = vmatpush1.msra.mxu0 0.0
        %3345 = vmatprep.subr.mxu0 0.0
        %3346 = vmatpush1.msra.mxu0 0.0
        %3347 = vmatprep.subr.mxu0 0.0
        %3348 = vmatpush1.msra.mxu0 0.0
        %3349 = vmatprep.subr.mxu0 0.0
        %3350 = vmatpush1.msra.mxu0 0.0
        %3351 = vmatprep.subr.mxu0 0.0
        %3352 = vmatpush1.msra.mxu0 0.0
        %3353 = vmatprep.subr.mxu0 0.0
        %3354 = vmatpush1.msra.mxu0 0.0
        %3355 = vmatprep.subr.mxu0 0.0
        %3356 = vmatpush1.msra.mxu0 0.0
        %3357 = vmatprep.subr.mxu0 0.0
        %3358 = vmatpush1.msra.mxu0 0.0
        %3359 = vmatprep.subr.mxu0 0.0
        %3360 = vmatpush1.msra.mxu0 0.0
        %3361 = vmatprep.subr.mxu0 0.0
        %3362 = vmatpush1.msra.mxu0 0.0
        %3363 = vmatprep.subr.mxu0 0.0
        %3364 = vmatpush1.msra.mxu0 0.0
        %3365 = vmatprep.subr.mxu0 0.0
        %3366 = vmatpush1.msra.mxu0 0.0
        %3367 = vmatprep.subr.mxu0 0.0
        %3368 = vmatpush1.msra.mxu0 0.0
        %3369 = vmatprep.subr.mxu0 0.0
        %3370 = vmatpush1.msra.mxu0 0.0
        %3371 = vmatprep.subr.mxu0 0.0
        %3372 = vmatpush1.msra.mxu0 0.0
        %3373 = vmatprep.subr.mxu0 0.0
        %3374 = vmatpush1.msra.mxu0 0.0
        %3375 = vmatprep.subr.mxu0 0.0
        %3376 = vmatpush1.msra.mxu0 0.0
        %3377 = vmatprep.subr.mxu0 0.0
        %3378 = vmatpush1.msra.mxu0 0.0
        %3379 = vmatprep.subr.mxu0 0.0
        %3380 = vmatpush1.msra.mxu0 0.0
        %3381 = vmatprep.subr.mxu0 0.0
        %3382 = vmatpush1.msra.mxu0 0.0
        %3383 = vmatprep.subr.mxu0 0.0
        %3384 = vmatpush1.msra.mxu0 0.0
        %3385 = vmatprep.subr.mxu0 0.0
        %3386 = vmatpush1.msra.mxu0 0.0
        %3387 = vmatprep.subr.mxu0 0.0
        %3388 = vmatpush1.msra.mxu0 0.0
        %3389 = vmatprep.subr.mxu0 0.0
        %3390 = vmatpush1.msra.mxu0 0.0
        %3391 = vmatprep.subr.mxu0 0.0
        %3392 = vmatpush1.msra.mxu0 0.0
        %3393 = vmatprep.subr.mxu0 0.0
        %3394 = vmatpush1.msra.mxu0 0.0
        %3395 = vmatprep.mubr.f32.mxu0 0.0
        %3396 = vmatmul.mubr.f32.gmra.mrb[0].mxu0 %v3045
        %v3397 = vpop.f32.mrb[0].mxu0
        %v3398 = vadd.f32 %v2683, %v3397
        %v3399 = vpop.f32.mrb[0].mxu0
        %v3400 = vadd.f32 %v2687, %v3399
        %3401 = vdwg.mxu0
        %3402 = vmatprep.subr.mxu0 %v2323
        %3403 = vmatpush1.msra.mxu0 %v2322
        %3404 = vmatprep.subr.mxu0 %v2402
        %3405 = vmatpush1.msra.mxu0 %v2401
        %3406 = vmatprep.subr.mxu0 %v2481
        %3407 = vmatpush1.msra.mxu0 %v2480
        %3408 = vmatprep.subr.mxu0 %v2560
        %3409 = vmatpush1.msra.mxu0 %v2559
        %3410 = vmatprep.subr.mxu0 0.0
        %3411 = vmatpush1.msra.mxu0 0.0
        %3412 = vmatprep.subr.mxu0 0.0
        %3413 = vmatpush1.msra.mxu0 0.0
        %3414 = vmatprep.subr.mxu0 0.0
        %3415 = vmatpush1.msra.mxu0 0.0
        %3416 = vmatprep.subr.mxu0 0.0
        %3417 = vmatpush1.msra.mxu0 0.0
        %3418 = vmatprep.subr.mxu0 0.0
        %3419 = vmatpush1.msra.mxu0 0.0
        %3420 = vmatprep.subr.mxu0 0.0
        %3421 = vmatpush1.msra.mxu0 0.0
        %3422 = vmatprep.subr.mxu0 0.0
        %3423 = vmatpush1.msra.mxu0 0.0
        %3424 = vmatprep.subr.mxu0 0.0
        %3425 = vmatpush1.msra.mxu0 0.0
        %3426 = vmatprep.subr.mxu0 0.0
        %3427 = vmatpush1.msra.mxu0 0.0
        %3428 = vmatprep.subr.mxu0 0.0
        %3429 = vmatpush1.msra.mxu0 0.0
        %3430 = vmatprep.subr.mxu0 0.0
        %3431 = vmatpush1.msra.mxu0 0.0
        %3432 = vmatprep.subr.mxu0 0.0
        %3433 = vmatpush1.msra.mxu0 0.0
        %3434 = vmatprep.subr.mxu0 0.0
        %3435 = vmatpush1.msra.mxu0 0.0
        %3436 = vmatprep.subr.mxu0 0.0
        %3437 = vmatpush1.msra.mxu0 0.0
        %3438 = vmatprep.subr.mxu0 0.0
        %3439 = vmatpush1.msra.mxu0 0.0
        %3440 = vmatprep.subr.mxu0 0.0
        %3441 = vmatpush1.msra.mxu0 0.0
        %3442 = vmatprep.subr.mxu0 0.0
        %3443 = vmatpush1.msra.mxu0 0.0
        %3444 = vmatprep.subr.mxu0 0.0
        %3445 = vmatpush1.msra.mxu0 0.0
        %3446 = vmatprep.subr.mxu0 0.0
        %3447 = vmatpush1.msra.mxu0 0.0
        %3448 = vmatprep.subr.mxu0 0.0
        %3449 = vmatpush1.msra.mxu0 0.0
        %3450 = vmatprep.subr.mxu0 0.0
        %3451 = vmatpush1.msra.mxu0 0.0
        %3452 = vmatprep.subr.mxu0 0.0
        %3453 = vmatpush1.msra.mxu0 0.0
        %3454 = vmatprep.subr.mxu0 0.0
        %3455 = vmatpush1.msra.mxu0 0.0
        %3456 = vmatprep.subr.mxu0 0.0
        %3457 = vmatpush1.msra.mxu0 0.0
        %3458 = vmatprep.subr.mxu0 0.0
        %3459 = vmatpush1.msra.mxu0 0.0
        %3460 = vmatprep.subr.mxu0 0.0
        %3461 = vmatpush1.msra.mxu0 0.0
        %3462 = vmatprep.subr.mxu0 0.0
        %3463 = vmatpush1.msra.mxu0 0.0
        %3464 = vmatprep.subr.mxu0 0.0
        %3465 = vmatpush1.msra.mxu0 0.0
        %3466 = vmatprep.mubr.f32.mxu0 0.0
        %3467 = vmatmul.mubr.f32.gmra.mrb[0].mxu0 %v3045
        %v3468 = vpop.f32.mrb[0].mxu0
        %v3469 = vadd.f32 %v2691, %v3468
        %v3470 = vpop.f32.mrb[0].mxu0
        %v3471 = vadd.f32 %v2695, %v3470
        %3472 = vdwg.mxu0
        %3473 = vmatprep.subr.mxu0 %v2325
        %3474 = vmatpush1.msra.mxu0 %v2324
        %3475 = vmatprep.subr.mxu0 %v2404
        %3476 = vmatpush1.msra.mxu0 %v2403
        %3477 = vmatprep.subr.mxu0 %v2483
        %3478 = vmatpush1.msra.mxu0 %v2482
        %3479 = vmatprep.subr.mxu0 %v2562
        %3480 = vmatpush1.msra.mxu0 %v2561
        %3481 = vmatprep.subr.mxu0 0.0
        %3482 = vmatpush1.msra.mxu0 0.0
        %3483 = vmatprep.subr.mxu0 0.0
        %3484 = vmatpush1.msra.mxu0 0.0
        %3485 = vmatprep.subr.mxu0 0.0
        %3486 = vmatpush1.msra.mxu0 0.0
        %3487 = vmatprep.subr.mxu0 0.0
        %3488 = vmatpush1.msra.mxu0 0.0
        %3489 = vmatprep.subr.mxu0 0.0
        %3490 = vmatpush1.msra.mxu0 0.0
        %3491 = vmatprep.subr.mxu0 0.0
        %3492 = vmatpush1.msra.mxu0 0.0
        %3493 = vmatprep.subr.mxu0 0.0
        %3494 = vmatpush1.msra.mxu0 0.0
        %3495 = vmatprep.subr.mxu0 0.0
        %3496 = vmatpush1.msra.mxu0 0.0
        %3497 = vmatprep.subr.mxu0 0.0
        %3498 = vmatpush1.msra.mxu0 0.0
        %3499 = vmatprep.subr.mxu0 0.0
        %3500 = vmatpush1.msra.mxu0 0.0
        %3501 = vmatprep.subr.mxu0 0.0
        %3502 = vmatpush1.msra.mxu0 0.0
        %3503 = vmatprep.subr.mxu0 0.0
        %3504 = vmatpush1.msra.mxu0 0.0
        %3505 = vmatprep.subr.mxu0 0.0
        %3506 = vmatpush1.msra.mxu0 0.0
        %3507 = vmatprep.subr.mxu0 0.0
        %3508 = vmatpush1.msra.mxu0 0.0
        %3509 = vmatprep.subr.mxu0 0.0
        %3510 = vmatpush1.msra.mxu0 0.0
        %3511 = vmatprep.subr.mxu0 0.0
        %3512 = vmatpush1.msra.mxu0 0.0
        %3513 = vmatprep.subr.mxu0 0.0
        %3514 = vmatpush1.msra.mxu0 0.0
        %3515 = vmatprep.subr.mxu0 0.0
        %3516 = vmatpush1.msra.mxu0 0.0
        %3517 = vmatprep.subr.mxu0 0.0
        %3518 = vmatpush1.msra.mxu0 0.0
        %3519 = vmatprep.subr.mxu0 0.0
        %3520 = vmatpush1.msra.mxu0 0.0
        %3521 = vmatprep.subr.mxu0 0.0
        %3522 = vmatpush1.msra.mxu0 0.0
        %3523 = vmatprep.subr.mxu0 0.0
        %3524 = vmatpush1.msra.mxu0 0.0
        %3525 = vmatprep.subr.mxu0 0.0
        %3526 = vmatpush1.msra.mxu0 0.0
        %3527 = vmatprep.subr.mxu0 0.0
        %3528 = vmatpush1.msra.mxu0 0.0
        %3529 = vmatprep.subr.mxu0 0.0
        %3530 = vmatpush1.msra.mxu0 0.0
        %3531 = vmatprep.subr.mxu0 0.0
        %3532 = vmatpush1.msra.mxu0 0.0
        %3533 = vmatprep.subr.mxu0 0.0
        %3534 = vmatpush1.msra.mxu0 0.0
        %3535 = vmatprep.subr.mxu0 0.0
        %3536 = vmatpush1.msra.mxu0 0.0
        %3537 = vmatprep.mubr.f32.mxu0 0.0
        %3538 = vmatmul.mubr.f32.gmra.mrb[0].mxu0 %v3045
        %v3539 = vpop.f32.mrb[0].mxu0
        %v3540 = vadd.f32 %v2699, %v3539
        %v3541 = vpop.f32.mrb[0].mxu0
        %v3542 = vadd.f32 %v2703, %v3541
        %3543 = vdwg.mxu0
        %3544 = vmatprep.subr.mxu0 %v2327
        %3545 = vmatpush1.msra.mxu0 %v2326
        %3546 = vmatprep.subr.mxu0 %v2406
        %3547 = vmatpush1.msra.mxu0 %v2405
        %3548 = vmatprep.subr.mxu0 %v2485
        %3549 = vmatpush1.msra.mxu0 %v2484
        %3550 = vmatprep.subr.mxu0 %v2564
        %3551 = vmatpush1.msra.mxu0 %v2563
        %3552 = vmatprep.subr.mxu0 0.0
        %3553 = vmatpush1.msra.mxu0 0.0
        %3554 = vmatprep.subr.mxu0 0.0
        %3555 = vmatpush1.msra.mxu0 0.0
        %3556 = vmatprep.subr.mxu0 0.0
        %3557 = vmatpush1.msra.mxu0 0.0
        %3558 = vmatprep.subr.mxu0 0.0
        %3559 = vmatpush1.msra.mxu0 0.0
        %3560 = vmatprep.subr.mxu0 0.0
        %3561 = vmatpush1.msra.mxu0 0.0
        %3562 = vmatprep.subr.mxu0 0.0
        %3563 = vmatpush1.msra.mxu0 0.0
        %3564 = vmatprep.subr.mxu0 0.0
        %3565 = vmatpush1.msra.mxu0 0.0
        %3566 = vmatprep.subr.mxu0 0.0
        %3567 = vmatpush1.msra.mxu0 0.0
        %3568 = vmatprep.subr.mxu0 0.0
        %3569 = vmatpush1.msra.mxu0 0.0
        %3570 = vmatprep.subr.mxu0 0.0
        %3571 = vmatpush1.msra.mxu0 0.0
        %3572 = vmatprep.subr.mxu0 0.0
        %3573 = vmatpush1.msra.mxu0 0.0
        %3574 = vmatprep.subr.mxu0 0.0
        %3575 = vmatpush1.msra.mxu0 0.0
        %3576 = vmatprep.subr.mxu0 0.0
        %3577 = vmatpush1.msra.mxu0 0.0
        %3578 = vmatprep.subr.mxu0 0.0
        %3579 = vmatpush1.msra.mxu0 0.0
        %3580 = vmatprep.subr.mxu0 0.0
        %3581 = vmatpush1.msra.mxu0 0.0
        %3582 = vmatprep.subr.mxu0 0.0
        %3583 = vmatpush1.msra.mxu0 0.0
        %3584 = vmatprep.subr.mxu0 0.0
        %3585 = vmatpush1.msra.mxu0 0.0
        %3586 = vmatprep.subr.mxu0 0.0
        %3587 = vmatpush1.msra.mxu0 0.0
        %3588 = vmatprep.subr.mxu0 0.0
        %3589 = vmatpush1.msra.mxu0 0.0
        %3590 = vmatprep.subr.mxu0 0.0
        %3591 = vmatpush1.msra.mxu0 0.0
        %3592 = vmatprep.subr.mxu0 0.0
        %3593 = vmatpush1.msra.mxu0 0.0
        %3594 = vmatprep.subr.mxu0 0.0
        %3595 = vmatpush1.msra.mxu0 0.0
        %3596 = vmatprep.subr.mxu0 0.0
        %3597 = vmatpush1.msra.mxu0 0.0
        %3598 = vmatprep.subr.mxu0 0.0
        %3599 = vmatpush1.msra.mxu0 0.0
        %3600 = vmatprep.subr.mxu0 0.0
        %3601 = vmatpush1.msra.mxu0 0.0
        %3602 = vmatprep.subr.mxu0 0.0
        %3603 = vmatpush1.msra.mxu0 0.0
        %3604 = vmatprep.subr.mxu0 0.0
        %3605 = vmatpush1.msra.mxu0 0.0
        %3606 = vmatprep.subr.mxu0 0.0
        %3607 = vmatpush1.msra.mxu0 0.0
        %3608 = vmatprep.mubr.f32.mxu0 0.0
        %3609 = vmatmul.mubr.f32.gmra.mrb[0].mxu0 %v3045
        %v3610 = vpop.f32.mrb[0].mxu0
        %v3611 = vadd.f32 %v2707, %v3610
        %v3612 = vpop.f32.mrb[0].mxu0
        %v3613 = vadd.f32 %v2711, %v3612
        %3614 = vdwg.mxu0
        %3615 = vmatprep.subr.mxu0 %v2329
        %3616 = vmatpush1.msra.mxu0 %v2328
        %3617 = vmatprep.subr.mxu0 %v2408
        %3618 = vmatpush1.msra.mxu0 %v2407
        %3619 = vmatprep.subr.mxu0 %v2487
        %3620 = vmatpush1.msra.mxu0 %v2486
        %3621 = vmatprep.subr.mxu0 %v2566
        %3622 = vmatpush1.msra.mxu0 %v2565
        %3623 = vmatprep.subr.mxu0 0.0
        %3624 = vmatpush1.msra.mxu0 0.0
        %3625 = vmatprep.subr.mxu0 0.0
        %3626 = vmatpush1.msra.mxu0 0.0
        %3627 = vmatprep.subr.mxu0 0.0
        %3628 = vmatpush1.msra.mxu0 0.0
        %3629 = vmatprep.subr.mxu0 0.0
        %3630 = vmatpush1.msra.mxu0 0.0
        %3631 = vmatprep.subr.mxu0 0.0
        %3632 = vmatpush1.msra.mxu0 0.0
        %3633 = vmatprep.subr.mxu0 0.0
        %3634 = vmatpush1.msra.mxu0 0.0
        %3635 = vmatprep.subr.mxu0 0.0
        %3636 = vmatpush1.msra.mxu0 0.0
        %3637 = vmatprep.subr.mxu0 0.0
        %3638 = vmatpush1.msra.mxu0 0.0
        %3639 = vmatprep.subr.mxu0 0.0
        %3640 = vmatpush1.msra.mxu0 0.0
        %3641 = vmatprep.subr.mxu0 0.0
        %3642 = vmatpush1.msra.mxu0 0.0
        %3643 = vmatprep.subr.mxu0 0.0
        %3644 = vmatpush1.msra.mxu0 0.0
        %3645 = vmatprep.subr.mxu0 0.0
        %3646 = vmatpush1.msra.mxu0 0.0
        %3647 = vmatprep.subr.mxu0 0.0
        %3648 = vmatpush1.msra.mxu0 0.0
        %3649 = vmatprep.subr.mxu0 0.0
        %3650 = vmatpush1.msra.mxu0 0.0
        %3651 = vmatprep.subr.mxu0 0.0
        %3652 = vmatpush1.msra.mxu0 0.0
        %3653 = vmatprep.subr.mxu0 0.0
        %3654 = vmatpush1.msra.mxu0 0.0
        %3655 = vmatprep.subr.mxu0 0.0
        %3656 = vmatpush1.msra.mxu0 0.0
        %3657 = vmatprep.subr.mxu0 0.0
        %3658 = vmatpush1.msra.mxu0 0.0
        %3659 = vmatprep.subr.mxu0 0.0
        %3660 = vmatpush1.msra.mxu0 0.0
        %3661 = vmatprep.subr.mxu0 0.0
        %3662 = vmatpush1.msra.mxu0 0.0
        %3663 = vmatprep.subr.mxu0 0.0
        %3664 = vmatpush1.msra.mxu0 0.0
        %3665 = vmatprep.subr.mxu0 0.0
        %3666 = vmatpush1.msra.mxu0 0.0
        %3667 = vmatprep.subr.mxu0 0.0
        %3668 = vmatpush1.msra.mxu0 0.0
        %3669 = vmatprep.subr.mxu0 0.0
        %3670 = vmatpush1.msra.mxu0 0.0
        %3671 = vmatprep.subr.mxu0 0.0
        %3672 = vmatpush1.msra.mxu0 0.0
        %3673 = vmatprep.subr.mxu0 0.0
        %3674 = vmatpush1.msra.mxu0 0.0
        %3675 = vmatprep.subr.mxu0 0.0
        %3676 = vmatpush1.msra.mxu0 0.0
        %3677 = vmatprep.subr.mxu0 0.0
        %3678 = vmatpush1.msra.mxu0 0.0
        %3679 = vmatprep.mubr.f32.mxu0 0.0
        %3680 = vmatmul.mubr.f32.gmra.mrb[0].mxu0 %v3045
        %v3681 = vpop.f32.mrb[0].mxu0
        %v3682 = vadd.f32 %v2715, %v3681
        %v3683 = vpop.f32.mrb[0].mxu0
        %v3684 = vadd.f32 %v2719, %v3683
        %3685 = vdwg.mxu0
        %3686 = vmatprep.subr.mxu0 %v2331
        %3687 = vmatpush1.msra.mxu0 %v2330
        %3688 = vmatprep.subr.mxu0 %v2410
        %3689 = vmatpush1.msra.mxu0 %v2409
        %3690 = vmatprep.subr.mxu0 %v2489
        %3691 = vmatpush1.msra.mxu0 %v2488
        %3692 = vmatprep.subr.mxu0 %v2568
        %3693 = vmatpush1.msra.mxu0 %v2567
        %3694 = vmatprep.subr.mxu0 0.0
        %3695 = vmatpush1.msra.mxu0 0.0
        %3696 = vmatprep.subr.mxu0 0.0
        %3697 = vmatpush1.msra.mxu0 0.0
        %3698 = vmatprep.subr.mxu0 0.0
        %3699 = vmatpush1.msra.mxu0 0.0
        %3700 = vmatprep.subr.mxu0 0.0
        %3701 = vmatpush1.msra.mxu0 0.0
        %3702 = vmatprep.subr.mxu0 0.0
        %3703 = vmatpush1.msra.mxu0 0.0
        %3704 = vmatprep.subr.mxu0 0.0
        %3705 = vmatpush1.msra.mxu0 0.0
        %3706 = vmatprep.subr.mxu0 0.0
        %3707 = vmatpush1.msra.mxu0 0.0
        %3708 = vmatprep.subr.mxu0 0.0
        %3709 = vmatpush1.msra.mxu0 0.0
        %3710 = vmatprep.subr.mxu0 0.0
        %3711 = vmatpush1.msra.mxu0 0.0
        %3712 = vmatprep.subr.mxu0 0.0
        %3713 = vmatpush1.msra.mxu0 0.0
        %3714 = vmatprep.subr.mxu0 0.0
        %3715 = vmatpush1.msra.mxu0 0.0
        %3716 = vmatprep.subr.mxu0 0.0
        %3717 = vmatpush1.msra.mxu0 0.0
        %3718 = vmatprep.subr.mxu0 0.0
        %3719 = vmatpush1.msra.mxu0 0.0
        %3720 = vmatprep.subr.mxu0 0.0
        %3721 = vmatpush1.msra.mxu0 0.0
        %3722 = vmatprep.subr.mxu0 0.0
        %3723 = vmatpush1.msra.mxu0 0.0
        %3724 = vmatprep.subr.mxu0 0.0
        %3725 = vmatpush1.msra.mxu0 0.0
        %3726 = vmatprep.subr.mxu0 0.0
        %3727 = vmatpush1.msra.mxu0 0.0
        %3728 = vmatprep.subr.mxu0 0.0
        %3729 = vmatpush1.msra.mxu0 0.0
        %3730 = vmatprep.subr.mxu0 0.0
        %3731 = vmatpush1.msra.mxu0 0.0
        %3732 = vmatprep.subr.mxu0 0.0
        %3733 = vmatpush1.msra.mxu0 0.0
        %3734 = vmatprep.subr.mxu0 0.0
        %3735 = vmatpush1.msra.mxu0 0.0
        %3736 = vmatprep.subr.mxu0 0.0
        %3737 = vmatpush1.msra.mxu0 0.0
        %3738 = vmatprep.subr.mxu0 0.0
        %3739 = vmatpush1.msra.mxu0 0.0
        %3740 = vmatprep.subr.mxu0 0.0
        %3741 = vmatpush1.msra.mxu0 0.0
        %3742 = vmatprep.subr.mxu0 0.0
        %3743 = vmatpush1.msra.mxu0 0.0
        %3744 = vmatprep.subr.mxu0 0.0
        %3745 = vmatpush1.msra.mxu0 0.0
        %3746 = vmatprep.subr.mxu0 0.0
        %3747 = vmatpush1.msra.mxu0 0.0
        %3748 = vmatprep.subr.mxu0 0.0
        %3749 = vmatpush1.msra.mxu0 0.0
        %3750 = vmatprep.mubr.f32.mxu0 0.0
        %3751 = vmatmul.mubr.f32.gmra.mrb[0].mxu0 %v3045
        %v3752 = vpop.f32.mrb[0].mxu0
        %v3753 = vadd.f32 %v2723, %v3752
        %v3754 = vpop.f32.mrb[0].mxu0
        %v3755 = vadd.f32 %v2727, %v3754
        %3756 = vdwg.mxu0
        %3757 = vmatprep.subr.mxu0 %v2333
        %3758 = vmatpush1.msra.mxu0 %v2332
        %3759 = vmatprep.subr.mxu0 %v2412
        %3760 = vmatpush1.msra.mxu0 %v2411
        %3761 = vmatprep.subr.mxu0 %v2491
        %3762 = vmatpush1.msra.mxu0 %v2490
        %3763 = vmatprep.subr.mxu0 %v2570
        %3764 = vmatpush1.msra.mxu0 %v2569
        %3765 = vmatprep.subr.mxu0 0.0
        %3766 = vmatpush1.msra.mxu0 0.0
        %3767 = vmatprep.subr.mxu0 0.0
        %3768 = vmatpush1.msra.mxu0 0.0
        %3769 = vmatprep.subr.mxu0 0.0
        %3770 = vmatpush1.msra.mxu0 0.0
        %3771 = vmatprep.subr.mxu0 0.0
        %3772 = vmatpush1.msra.mxu0 0.0
        %3773 = vmatprep.subr.mxu0 0.0
        %3774 = vmatpush1.msra.mxu0 0.0
        %3775 = vmatprep.subr.mxu0 0.0
        %3776 = vmatpush1.msra.mxu0 0.0
        %3777 = vmatprep.subr.mxu0 0.0
        %3778 = vmatpush1.msra.mxu0 0.0
        %3779 = vmatprep.subr.mxu0 0.0
        %3780 = vmatpush1.msra.mxu0 0.0
        %3781 = vmatprep.subr.mxu0 0.0
        %3782 = vmatpush1.msra.mxu0 0.0
        %3783 = vmatprep.subr.mxu0 0.0
        %3784 = vmatpush1.msra.mxu0 0.0
        %3785 = vmatprep.subr.mxu0 0.0
        %3786 = vmatpush1.msra.mxu0 0.0
        %3787 = vmatprep.subr.mxu0 0.0
        %3788 = vmatpush1.msra.mxu0 0.0
        %3789 = vmatprep.subr.mxu0 0.0
        %3790 = vmatpush1.msra.mxu0 0.0
        %3791 = vmatprep.subr.mxu0 0.0
        %3792 = vmatpush1.msra.mxu0 0.0
        %3793 = vmatprep.subr.mxu0 0.0
        %3794 = vmatpush1.msra.mxu0 0.0
        %3795 = vmatprep.subr.mxu0 0.0
        %3796 = vmatpush1.msra.mxu0 0.0
        %3797 = vmatprep.subr.mxu0 0.0
        %3798 = vmatpush1.msra.mxu0 0.0
        %3799 = vmatprep.subr.mxu0 0.0
        %3800 = vmatpush1.msra.mxu0 0.0
        %3801 = vmatprep.subr.mxu0 0.0
        %3802 = vmatpush1.msra.mxu0 0.0
        %3803 = vmatprep.subr.mxu0 0.0
        %3804 = vmatpush1.msra.mxu0 0.0
        %3805 = vmatprep.subr.mxu0 0.0
        %3806 = vmatpush1.msra.mxu0 0.0
        %3807 = vmatprep.subr.mxu0 0.0
        %3808 = vmatpush1.msra.mxu0 0.0
        %3809 = vmatprep.subr.mxu0 0.0
        %3810 = vmatpush1.msra.mxu0 0.0
        %3811 = vmatprep.subr.mxu0 0.0
        %3812 = vmatpush1.msra.mxu0 0.0
        %3813 = vmatprep.subr.mxu0 0.0
        %3814 = vmatpush1.msra.mxu0 0.0
        %3815 = vmatprep.subr.mxu0 0.0
        %3816 = vmatpush1.msra.mxu0 0.0
        %3817 = vmatprep.subr.mxu0 0.0
        %3818 = vmatpush1.msra.mxu0 0.0
        %3819 = vmatprep.subr.mxu0 0.0
        %3820 = vmatpush1.msra.mxu0 0.0
        %3821 = vmatprep.mubr.f32.mxu0 0.0
        %3822 = vmatmul.mubr.f32.gmra.mrb[0].mxu0 %v3045
        %v3823 = vpop.f32.mrb[0].mxu0
        %v3824 = vadd.f32 %v2731, %v3823
        %v3825 = vpop.f32.mrb[0].mxu0
        %v3826 = vadd.f32 %v2735, %v3825
        %3827 = vdwg.mxu0
        %3828 = vmatprep.subr.mxu0 %v2335
        %3829 = vmatpush1.msra.mxu0 %v2334
        %3830 = vmatprep.subr.mxu0 %v2414
        %3831 = vmatpush1.msra.mxu0 %v2413
        %3832 = vmatprep.subr.mxu0 %v2493
        %3833 = vmatpush1.msra.mxu0 %v2492
        %3834 = vmatprep.subr.mxu0 %v2572
        %3835 = vmatpush1.msra.mxu0 %v2571
        %3836 = vmatprep.subr.mxu0 0.0
        %3837 = vmatpush1.msra.mxu0 0.0
        %3838 = vmatprep.subr.mxu0 0.0
        %3839 = vmatpush1.msra.mxu0 0.0
        %3840 = vmatprep.subr.mxu0 0.0
        %3841 = vmatpush1.msra.mxu0 0.0
        %3842 = vmatprep.subr.mxu0 0.0
        %3843 = vmatpush1.msra.mxu0 0.0
        %3844 = vmatprep.subr.mxu0 0.0
        %3845 = vmatpush1.msra.mxu0 0.0
        %3846 = vmatprep.subr.mxu0 0.0
        %3847 = vmatpush1.msra.mxu0 0.0
        %3848 = vmatprep.subr.mxu0 0.0
        %3849 = vmatpush1.msra.mxu0 0.0
        %3850 = vmatprep.subr.mxu0 0.0
        %3851 = vmatpush1.msra.mxu0 0.0
        %3852 = vmatprep.subr.mxu0 0.0
        %3853 = vmatpush1.msra.mxu0 0.0
        %3854 = vmatprep.subr.mxu0 0.0
        %3855 = vmatpush1.msra.mxu0 0.0
        %3856 = vmatprep.subr.mxu0 0.0
        %3857 = vmatpush1.msra.mxu0 0.0
        %3858 = vmatprep.subr.mxu0 0.0
        %3859 = vmatpush1.msra.mxu0 0.0
        %3860 = vmatprep.subr.mxu0 0.0
        %3861 = vmatpush1.msra.mxu0 0.0
        %3862 = vmatprep.subr.mxu0 0.0
        %3863 = vmatpush1.msra.mxu0 0.0
        %3864 = vmatprep.subr.mxu0 0.0
        %3865 = vmatpush1.msra.mxu0 0.0
        %3866 = vmatprep.subr.mxu0 0.0
        %3867 = vmatpush1.msra.mxu0 0.0
        %3868 = vmatprep.subr.mxu0 0.0
        %3869 = vmatpush1.msra.mxu0 0.0
        %3870 = vmatprep.subr.mxu0 0.0
        %3871 = vmatpush1.msra.mxu0 0.0
        %3872 = vmatprep.subr.mxu0 0.0
        %3873 = vmatpush1.msra.mxu0 0.0
        %3874 = vmatprep.subr.mxu0 0.0
        %3875 = vmatpush1.msra.mxu0 0.0
        %3876 = vmatprep.subr.mxu0 0.0
        %3877 = vmatpush1.msra.mxu0 0.0
        %3878 = vmatprep.subr.mxu0 0.0
        %3879 = vmatpush1.msra.mxu0 0.0
        %3880 = vmatprep.subr.mxu0 0.0
        %3881 = vmatpush1.msra.mxu0 0.0
        %3882 = vmatprep.subr.mxu0 0.0
        %3883 = vmatpush1.msra.mxu0 0.0
        %3884 = vmatprep.subr.mxu0 0.0
        %3885 = vmatpush1.msra.mxu0 0.0
        %3886 = vmatprep.subr.mxu0 0.0
        %3887 = vmatpush1.msra.mxu0 0.0
        %3888 = vmatprep.subr.mxu0 0.0
        %3889 = vmatpush1.msra.mxu0 0.0
        %3890 = vmatprep.subr.mxu0 0.0
        %3891 = vmatpush1.msra.mxu0 0.0
        %3892 = vmatprep.mubr.f32.mxu0 0.0
        %3893 = vmatmul.mubr.f32.gmra.mrb[0].mxu0 %v3045
        %v3894 = vpop.f32.mrb[0].mxu0
        %v3895 = vadd.f32 %v2739, %v3894
        %v3896 = vpop.f32.mrb[0].mxu0
        %v3897 = vadd.f32 %v2743, %v3896
        %3898 = vdwg.mxu0
        %3899 = vmatprep.subr.mxu0 %v2337
        %3900 = vmatpush1.msra.mxu0 %v2336
        %3901 = vmatprep.subr.mxu0 %v2416
        %3902 = vmatpush1.msra.mxu0 %v2415
        %3903 = vmatprep.subr.mxu0 %v2495
        %3904 = vmatpush1.msra.mxu0 %v2494
        %3905 = vmatprep.subr.mxu0 %v2574
        %3906 = vmatpush1.msra.mxu0 %v2573
        %3907 = vmatprep.subr.mxu0 0.0
        %3908 = vmatpush1.msra.mxu0 0.0
        %3909 = vmatprep.subr.mxu0 0.0
        %3910 = vmatpush1.msra.mxu0 0.0
        %3911 = vmatprep.subr.mxu0 0.0
        %3912 = vmatpush1.msra.mxu0 0.0
        %3913 = vmatprep.subr.mxu0 0.0
        %3914 = vmatpush1.msra.mxu0 0.0
        %3915 = vmatprep.subr.mxu0 0.0
        %3916 = vmatpush1.msra.mxu0 0.0
        %3917 = vmatprep.subr.mxu0 0.0
        %3918 = vmatpush1.msra.mxu0 0.0
        %3919 = vmatprep.subr.mxu0 0.0
        %3920 = vmatpush1.msra.mxu0 0.0
        %3921 = vmatprep.subr.mxu0 0.0
        %3922 = vmatpush1.msra.mxu0 0.0
        %3923 = vmatprep.subr.mxu0 0.0
        %3924 = vmatpush1.msra.mxu0 0.0
        %3925 = vmatprep.subr.mxu0 0.0
        %3926 = vmatpush1.msra.mxu0 0.0
        %3927 = vmatprep.subr.mxu0 0.0
        %3928 = vmatpush1.msra.mxu0 0.0
        %3929 = vmatprep.subr.mxu0 0.0
        %3930 = vmatpush1.msra.mxu0 0.0
        %3931 = vmatprep.subr.mxu0 0.0
        %3932 = vmatpush1.msra.mxu0 0.0
        %3933 = vmatprep.subr.mxu0 0.0
        %3934 = vmatpush1.msra.mxu0 0.0
        %3935 = vmatprep.subr.mxu0 0.0
        %3936 = vmatpush1.msra.mxu0 0.0
        %3937 = vmatprep.subr.mxu0 0.0
        %3938 = vmatpush1.msra.mxu0 0.0
        %3939 = vmatprep.subr.mxu0 0.0
        %3940 = vmatpush1.msra.mxu0 0.0
        %3941 = vmatprep.subr.mxu0 0.0
        %3942 = vmatpush1.msra.mxu0 0.0
        %3943 = vmatprep.subr.mxu0 0.0
        %3944 = vmatpush1.msra.mxu0 0.0
        %3945 = vmatprep.subr.mxu0 0.0
        %3946 = vmatpush1.msra.mxu0 0.0
        %3947 = vmatprep.subr.mxu0 0.0
        %3948 = vmatpush1.msra.mxu0 0.0
        %3949 = vmatprep.subr.mxu0 0.0
        %3950 = vmatpush1.msra.mxu0 0.0
        %3951 = vmatprep.subr.mxu0 0.0
        %3952 = vmatpush1.msra.mxu0 0.0
        %3953 = vmatprep.subr.mxu0 0.0
        %3954 = vmatpush1.msra.mxu0 0.0
        %3955 = vmatprep.subr.mxu0 0.0
        %3956 = vmatpush1.msra.mxu0 0.0
        %3957 = vmatprep.subr.mxu0 0.0
        %3958 = vmatpush1.msra.mxu0 0.0
        %3959 = vmatprep.subr.mxu0 0.0
        %3960 = vmatpush1.msra.mxu0 0.0
        %3961 = vmatprep.subr.mxu0 0.0
        %3962 = vmatpush1.msra.mxu0 0.0
        %3963 = vmatprep.mubr.f32.mxu0 0.0
        %3964 = vmatmul.mubr.f32.gmra.mrb[0].mxu0 %v3045
        %v3965 = vpop.f32.mrb[0].mxu0
        %v3966 = vadd.f32 %v2747, %v3965
        %v3967 = vpop.f32.mrb[0].mxu0
        %v3968 = vadd.f32 %v2751, %v3967
        %3969 = vdwg.mxu0
        %3970 = vmatprep.subr.mxu0 %v2339
        %3971 = vmatpush1.msra.mxu0 %v2338
        %3972 = vmatprep.subr.mxu0 %v2418
        %3973 = vmatpush1.msra.mxu0 %v2417
        %3974 = vmatprep.subr.mxu0 %v2497
        %3975 = vmatpush1.msra.mxu0 %v2496
        %3976 = vmatprep.subr.mxu0 %v2576
        %3977 = vmatpush1.msra.mxu0 %v2575
        %3978 = vmatprep.subr.mxu0 0.0
        %3979 = vmatpush1.msra.mxu0 0.0
        %3980 = vmatprep.subr.mxu0 0.0
        %3981 = vmatpush1.msra.mxu0 0.0
        %3982 = vmatprep.subr.mxu0 0.0
        %3983 = vmatpush1.msra.mxu0 0.0
        %3984 = vmatprep.subr.mxu0 0.0
        %3985 = vmatpush1.msra.mxu0 0.0
        %3986 = vmatprep.subr.mxu0 0.0
        %3987 = vmatpush1.msra.mxu0 0.0
        %3988 = vmatprep.subr.mxu0 0.0
        %3989 = vmatpush1.msra.mxu0 0.0
        %3990 = vmatprep.subr.mxu0 0.0
        %3991 = vmatpush1.msra.mxu0 0.0
        %3992 = vmatprep.subr.mxu0 0.0
        %3993 = vmatpush1.msra.mxu0 0.0
        %3994 = vmatprep.subr.mxu0 0.0
        %3995 = vmatpush1.msra.mxu0 0.0
        %3996 = vmatprep.subr.mxu0 0.0
        %3997 = vmatpush1.msra.mxu0 0.0
        %3998 = vmatprep.subr.mxu0 0.0
        %3999 = vmatpush1.msra.mxu0 0.0
        %4000 = vmatprep.subr.mxu0 0.0
        %4001 = vmatpush1.msra.mxu0 0.0
        %4002 = vmatprep.subr.mxu0 0.0
        %4003 = vmatpush1.msra.mxu0 0.0
        %4004 = vmatprep.subr.mxu0 0.0
        %4005 = vmatpush1.msra.mxu0 0.0
        %4006 = vmatprep.subr.mxu0 0.0
        %4007 = vmatpush1.msra.mxu0 0.0
        %4008 = vmatprep.subr.mxu0 0.0
        %4009 = vmatpush1.msra.mxu0 0.0
        %4010 = vmatprep.subr.mxu0 0.0
        %4011 = vmatpush1.msra.mxu0 0.0
        %4012 = vmatprep.subr.mxu0 0.0
        %4013 = vmatpush1.msra.mxu0 0.0
        %4014 = vmatprep.subr.mxu0 0.0
        %4015 = vmatpush1.msra.mxu0 0.0
        %4016 = vmatprep.subr.mxu0 0.0
        %4017 = vmatpush1.msra.mxu0 0.0
        %4018 = vmatprep.subr.mxu0 0.0
        %4019 = vmatpush1.msra.mxu0 0.0
        %4020 = vmatprep.subr.mxu0 0.0
        %4021 = vmatpush1.msra.mxu0 0.0
        %4022 = vmatprep.subr.mxu0 0.0
        %4023 = vmatpush1.msra.mxu0 0.0
        %4024 = vmatprep.subr.mxu0 0.0
        %4025 = vmatpush1.msra.mxu0 0.0
        %4026 = vmatprep.subr.mxu0 0.0
        %4027 = vmatpush1.msra.mxu0 0.0
        %4028 = vmatprep.subr.mxu0 0.0
        %4029 = vmatpush1.msra.mxu0 0.0
        %4030 = vmatprep.subr.mxu0 0.0
        %4031 = vmatpush1.msra.mxu0 0.0
        %4032 = vmatprep.subr.mxu0 0.0
        %4033 = vmatpush1.msra.mxu0 0.0
        %4034 = vmatprep.mubr.f32.mxu0 0.0
        %4035 = vmatmul.mubr.f32.gmra.mrb[0].mxu0 %v3045
        %v4036 = vpop.f32.mrb[0].mxu0
        %v4037 = vadd.f32 %v2755, %v4036
        %v4038 = vpop.f32.mrb[0].mxu0
        %v4039 = vadd.f32 %v2759, %v4038
        %4040 = vdwg.mxu0
        %4041 = vmatprep.subr.mxu0 %v2341
        %4042 = vmatpush1.msra.mxu0 %v2340
        %4043 = vmatprep.subr.mxu0 %v2420
        %4044 = vmatpush1.msra.mxu0 %v2419
        %4045 = vmatprep.subr.mxu0 %v2499
        %4046 = vmatpush1.msra.mxu0 %v2498
        %4047 = vmatprep.subr.mxu0 %v2578
        %4048 = vmatpush1.msra.mxu0 %v2577
        %4049 = vmatprep.subr.mxu0 0.0
        %4050 = vmatpush1.msra.mxu0 0.0
        %4051 = vmatprep.subr.mxu0 0.0
        %4052 = vmatpush1.msra.mxu0 0.0
        %4053 = vmatprep.subr.mxu0 0.0
        %4054 = vmatpush1.msra.mxu0 0.0
        %4055 = vmatprep.subr.mxu0 0.0
        %4056 = vmatpush1.msra.mxu0 0.0
        %4057 = vmatprep.subr.mxu0 0.0
        %4058 = vmatpush1.msra.mxu0 0.0
        %4059 = vmatprep.subr.mxu0 0.0
        %4060 = vmatpush1.msra.mxu0 0.0
        %4061 = vmatprep.subr.mxu0 0.0
        %4062 = vmatpush1.msra.mxu0 0.0
        %4063 = vmatprep.subr.mxu0 0.0
        %4064 = vmatpush1.msra.mxu0 0.0
        %4065 = vmatprep.subr.mxu0 0.0
        %4066 = vmatpush1.msra.mxu0 0.0
        %4067 = vmatprep.subr.mxu0 0.0
        %4068 = vmatpush1.msra.mxu0 0.0
        %4069 = vmatprep.subr.mxu0 0.0
        %4070 = vmatpush1.msra.mxu0 0.0
        %4071 = vmatprep.subr.mxu0 0.0
        %4072 = vmatpush1.msra.mxu0 0.0
        %4073 = vmatprep.subr.mxu0 0.0
        %4074 = vmatpush1.msra.mxu0 0.0
        %4075 = vmatprep.subr.mxu0 0.0
        %4076 = vmatpush1.msra.mxu0 0.0
        %4077 = vmatprep.subr.mxu0 0.0
        %4078 = vmatpush1.msra.mxu0 0.0
        %4079 = vmatprep.subr.mxu0 0.0
        %4080 = vmatpush1.msra.mxu0 0.0
        %4081 = vmatprep.subr.mxu0 0.0
        %4082 = vmatpush1.msra.mxu0 0.0
        %4083 = vmatprep.subr.mxu0 0.0
        %4084 = vmatpush1.msra.mxu0 0.0
        %4085 = vmatprep.subr.mxu0 0.0
        %4086 = vmatpush1.msra.mxu0 0.0
        %4087 = vmatprep.subr.mxu0 0.0
        %4088 = vmatpush1.msra.mxu0 0.0
        %4089 = vmatprep.subr.mxu0 0.0
        %4090 = vmatpush1.msra.mxu0 0.0
        %4091 = vmatprep.subr.mxu0 0.0
        %4092 = vmatpush1.msra.mxu0 0.0
        %4093 = vmatprep.subr.mxu0 0.0
        %4094 = vmatpush1.msra.mxu0 0.0
        %4095 = vmatprep.subr.mxu0 0.0
        %4096 = vmatpush1.msra.mxu0 0.0
        %4097 = vmatprep.subr.mxu0 0.0
        %4098 = vmatpush1.msra.mxu0 0.0
        %4099 = vmatprep.subr.mxu0 0.0
        %4100 = vmatpush1.msra.mxu0 0.0
        %4101 = vmatprep.subr.mxu0 0.0
        %4102 = vmatpush1.msra.mxu0 0.0
        %4103 = vmatprep.subr.mxu0 0.0
        %4104 = vmatpush1.msra.mxu0 0.0
        %4105 = vmatprep.mubr.f32.mxu0 0.0
        %4106 = vmatmul.mubr.f32.gmra.mrb[0].mxu0 %v3045
        %v4107 = vpop.f32.mrb[0].mxu0
        %v4108 = vadd.f32 %v2763, %v4107
        %v4109 = vpop.f32.mrb[0].mxu0
        %v4110 = vadd.f32 %v2767, %v4109
        %4111 = vdwg.mxu0
        %4112 = vmatprep.subr.mxu0 %v2343
        %4113 = vmatpush1.msra.mxu0 %v2342
        %4114 = vmatprep.subr.mxu0 %v2422
        %4115 = vmatpush1.msra.mxu0 %v2421
        %4116 = vmatprep.subr.mxu0 %v2501
        %4117 = vmatpush1.msra.mxu0 %v2500
        %4118 = vmatprep.subr.mxu0 %v2580
        %4119 = vmatpush1.msra.mxu0 %v2579
        %4120 = vmatprep.subr.mxu0 0.0
        %4121 = vmatpush1.msra.mxu0 0.0
        %4122 = vmatprep.subr.mxu0 0.0
        %4123 = vmatpush1.msra.mxu0 0.0
        %4124 = vmatprep.subr.mxu0 0.0
        %4125 = vmatpush1.msra.mxu0 0.0
        %4126 = vmatprep.subr.mxu0 0.0
        %4127 = vmatpush1.msra.mxu0 0.0
        %4128 = vmatprep.subr.mxu0 0.0
        %4129 = vmatpush1.msra.mxu0 0.0
        %4130 = vmatprep.subr.mxu0 0.0
        %4131 = vmatpush1.msra.mxu0 0.0
        %4132 = vmatprep.subr.mxu0 0.0
        %4133 = vmatpush1.msra.mxu0 0.0
        %4134 = vmatprep.subr.mxu0 0.0
        %4135 = vmatpush1.msra.mxu0 0.0
        %4136 = vmatprep.subr.mxu0 0.0
        %4137 = vmatpush1.msra.mxu0 0.0
        %4138 = vmatprep.subr.mxu0 0.0
        %4139 = vmatpush1.msra.mxu0 0.0
        %4140 = vmatprep.subr.mxu0 0.0
        %4141 = vmatpush1.msra.mxu0 0.0
        %4142 = vmatprep.subr.mxu0 0.0
        %4143 = vmatpush1.msra.mxu0 0.0
        %4144 = vmatprep.subr.mxu0 0.0
        %4145 = vmatpush1.msra.mxu0 0.0
        %4146 = vmatprep.subr.mxu0 0.0
        %4147 = vmatpush1.msra.mxu0 0.0
        %4148 = vmatprep.subr.mxu0 0.0
        %4149 = vmatpush1.msra.mxu0 0.0
        %4150 = vmatprep.subr.mxu0 0.0
        %4151 = vmatpush1.msra.mxu0 0.0
        %4152 = vmatprep.subr.mxu0 0.0
        %4153 = vmatpush1.msra.mxu0 0.0
        %4154 = vmatprep.subr.mxu0 0.0
        %4155 = vmatpush1.msra.mxu0 0.0
        %4156 = vmatprep.subr.mxu0 0.0
        %4157 = vmatpush1.msra.mxu0 0.0
        %4158 = vmatprep.subr.mxu0 0.0
        %4159 = vmatpush1.msra.mxu0 0.0
        %4160 = vmatprep.subr.mxu0 0.0
        %4161 = vmatpush1.msra.mxu0 0.0
        %4162 = vmatprep.subr.mxu0 0.0
        %4163 = vmatpush1.msra.mxu0 0.0
        %4164 = vmatprep.subr.mxu0 0.0
        %4165 = vmatpush1.msra.mxu0 0.0
        %4166 = vmatprep.subr.mxu0 0.0
        %4167 = vmatpush1.msra.mxu0 0.0
        %4168 = vmatprep.subr.mxu0 0.0
        %4169 = vmatpush1.msra.mxu0 0.0
        %4170 = vmatprep.subr.mxu0 0.0
        %4171 = vmatpush1.msra.mxu0 0.0
        %4172 = vmatprep.subr.mxu0 0.0
        %4173 = vmatpush1.msra.mxu0 0.0
        %4174 = vmatprep.subr.mxu0 0.0
        %4175 = vmatpush1.msra.mxu0 0.0
        %4176 = vmatprep.mubr.f32.mxu0 0.0
        %4177 = vmatmul.mubr.f32.gmra.mrb[0].mxu0 %v3045
        %v4178 = vpop.f32.mrb[0].mxu0
        %v4179 = vadd.f32 %v2771, %v4178
        %v4180 = vpop.f32.mrb[0].mxu0
        %v4181 = vadd.f32 %v2775, %v4180
        %4182 = vdwg.mxu0
        %4183 = vmatprep.subr.mxu0 %v2345
        %4184 = vmatpush1.msra.mxu0 %v2344
        %4185 = vmatprep.subr.mxu0 %v2424
        %4186 = vmatpush1.msra.mxu0 %v2423
        %4187 = vmatprep.subr.mxu0 %v2503
        %4188 = vmatpush1.msra.mxu0 %v2502
        %4189 = vmatprep.subr.mxu0 %v2582
        %4190 = vmatpush1.msra.mxu0 %v2581
        %4191 = vmatprep.subr.mxu0 0.0
        %4192 = vmatpush1.msra.mxu0 0.0
        %4193 = vmatprep.subr.mxu0 0.0
        %4194 = vmatpush1.msra.mxu0 0.0
        %4195 = vmatprep.subr.mxu0 0.0
        %4196 = vmatpush1.msra.mxu0 0.0
        %4197 = vmatprep.subr.mxu0 0.0
        %4198 = vmatpush1.msra.mxu0 0.0
        %4199 = vmatprep.subr.mxu0 0.0
        %4200 = vmatpush1.msra.mxu0 0.0
        %4201 = vmatprep.subr.mxu0 0.0
        %4202 = vmatpush1.msra.mxu0 0.0
        %4203 = vmatprep.subr.mxu0 0.0
        %4204 = vmatpush1.msra.mxu0 0.0
        %4205 = vmatprep.subr.mxu0 0.0
        %4206 = vmatpush1.msra.mxu0 0.0
        %4207 = vmatprep.subr.mxu0 0.0
        %4208 = vmatpush1.msra.mxu0 0.0
        %4209 = vmatprep.subr.mxu0 0.0
        %4210 = vmatpush1.msra.mxu0 0.0
        %4211 = vmatprep.subr.mxu0 0.0
        %4212 = vmatpush1.msra.mxu0 0.0
        %4213 = vmatprep.subr.mxu0 0.0
        %4214 = vmatpush1.msra.mxu0 0.0
        %4215 = vmatprep.subr.mxu0 0.0
        %4216 = vmatpush1.msra.mxu0 0.0
        %4217 = vmatprep.subr.mxu0 0.0
        %4218 = vmatpush1.msra.mxu0 0.0
        %4219 = vmatprep.subr.mxu0 0.0
        %4220 = vmatpush1.msra.mxu0 0.0
        %4221 = vmatprep.subr.mxu0 0.0
        %4222 = vmatpush1.msra.mxu0 0.0
        %4223 = vmatprep.subr.mxu0 0.0
        %4224 = vmatpush1.msra.mxu0 0.0
        %4225 = vmatprep.subr.mxu0 0.0
        %4226 = vmatpush1.msra.mxu0 0.0
        %4227 = vmatprep.subr.mxu0 0.0
        %4228 = vmatpush1.msra.mxu0 0.0
        %4229 = vmatprep.subr.mxu0 0.0
        %4230 = vmatpush1.msra.mxu0 0.0
        %4231 = vmatprep.subr.mxu0 0.0
        %4232 = vmatpush1.msra.mxu0 0.0
        %4233 = vmatprep.subr.mxu0 0.0
        %4234 = vmatpush1.msra.mxu0 0.0
        %4235 = vmatprep.subr.mxu0 0.0
        %4236 = vmatpush1.msra.mxu0 0.0
        %4237 = vmatprep.subr.mxu0 0.0
        %4238 = vmatpush1.msra.mxu0 0.0
        %4239 = vmatprep.subr.mxu0 0.0
        %4240 = vmatpush1.msra.mxu0 0.0
        %4241 = vmatprep.subr.mxu0 0.0
        %4242 = vmatpush1.msra.mxu0 0.0
        %4243 = vmatprep.subr.mxu0 0.0
        %4244 = vmatpush1.msra.mxu0 0.0
        %4245 = vmatprep.subr.mxu0 0.0
        %4246 = vmatpush1.msra.mxu0 0.0
        %4247 = vmatprep.mubr.f32.mxu0 0.0
        %4248 = vmatmul.mubr.f32.gmra.mrb[0].mxu0 %v3045
        %v4249 = vpop.f32.mrb[0].mxu0
        %v4250 = vadd.f32 %v2779, %v4249
        %v4251 = vpop.f32.mrb[0].mxu0
        %v4252 = vadd.f32 %v2783, %v4251
        %4253 = vdwg.mxu0
        %4254 = vmatprep.subr.mxu0 %v2347
        %4255 = vmatpush1.msra.mxu0 %v2346
        %4256 = vmatprep.subr.mxu0 %v2426
        %4257 = vmatpush1.msra.mxu0 %v2425
        %4258 = vmatprep.subr.mxu0 %v2505
        %4259 = vmatpush1.msra.mxu0 %v2504
        %4260 = vmatprep.subr.mxu0 %v2584
        %4261 = vmatpush1.msra.mxu0 %v2583
        %4262 = vmatprep.subr.mxu0 0.0
        %4263 = vmatpush1.msra.mxu0 0.0
        %4264 = vmatprep.subr.mxu0 0.0
        %4265 = vmatpush1.msra.mxu0 0.0
        %4266 = vmatprep.subr.mxu0 0.0
        %4267 = vmatpush1.msra.mxu0 0.0
        %4268 = vmatprep.subr.mxu0 0.0
        %4269 = vmatpush1.msra.mxu0 0.0
        %4270 = vmatprep.subr.mxu0 0.0
        %4271 = vmatpush1.msra.mxu0 0.0
        %4272 = vmatprep.subr.mxu0 0.0
        %4273 = vmatpush1.msra.mxu0 0.0
        %4274 = vmatprep.subr.mxu0 0.0
        %4275 = vmatpush1.msra.mxu0 0.0
        %4276 = vmatprep.subr.mxu0 0.0
        %4277 = vmatpush1.msra.mxu0 0.0
        %4278 = vmatprep.subr.mxu0 0.0
        %4279 = vmatpush1.msra.mxu0 0.0
        %4280 = vmatprep.subr.mxu0 0.0
        %4281 = vmatpush1.msra.mxu0 0.0
        %4282 = vmatprep.subr.mxu0 0.0
        %4283 = vmatpush1.msra.mxu0 0.0
        %4284 = vmatprep.subr.mxu0 0.0
        %4285 = vmatpush1.msra.mxu0 0.0
        %4286 = vmatprep.subr.mxu0 0.0
        %4287 = vmatpush1.msra.mxu0 0.0
        %4288 = vmatprep.subr.mxu0 0.0
        %4289 = vmatpush1.msra.mxu0 0.0
        %4290 = vmatprep.subr.mxu0 0.0
        %4291 = vmatpush1.msra.mxu0 0.0
        %4292 = vmatprep.subr.mxu0 0.0
        %4293 = vmatpush1.msra.mxu0 0.0
        %4294 = vmatprep.subr.mxu0 0.0
        %4295 = vmatpush1.msra.mxu0 0.0
        %4296 = vmatprep.subr.mxu0 0.0
        %4297 = vmatpush1.msra.mxu0 0.0
        %4298 = vmatprep.subr.mxu0 0.0
        %4299 = vmatpush1.msra.mxu0 0.0
        %4300 = vmatprep.subr.mxu0 0.0
        %4301 = vmatpush1.msra.mxu0 0.0
        %4302 = vmatprep.subr.mxu0 0.0
        %4303 = vmatpush1.msra.mxu0 0.0
        %4304 = vmatprep.subr.mxu0 0.0
        %4305 = vmatpush1.msra.mxu0 0.0
        %4306 = vmatprep.subr.mxu0 0.0
        %4307 = vmatpush1.msra.mxu0 0.0
        %4308 = vmatprep.subr.mxu0 0.0
        %4309 = vmatpush1.msra.mxu0 0.0
        %4310 = vmatprep.subr.mxu0 0.0
        %4311 = vmatpush1.msra.mxu0 0.0
        %4312 = vmatprep.subr.mxu0 0.0
        %4313 = vmatpush1.msra.mxu0 0.0
        %4314 = vmatprep.subr.mxu0 0.0
        %4315 = vmatpush1.msra.mxu0 0.0
        %4316 = vmatprep.subr.mxu0 0.0
        %4317 = vmatpush1.msra.mxu0 0.0
        %4318 = vmatprep.mubr.f32.mxu0 0.0
        %4319 = vmatmul.mubr.f32.gmra.mrb[0].mxu0 %v3045
        %v4320 = vpop.f32.mrb[0].mxu0
        %v4321 = vadd.f32 %v2787, %v4320
        %v4322 = vpop.f32.mrb[0].mxu0
        %v4323 = vadd.f32 %v2791, %v4322
        %4324 = vdwg.mxu0
        %4325 = vmatprep.subr.mxu0 %v2349
        %4326 = vmatpush1.msra.mxu0 %v2348
        %4327 = vmatprep.subr.mxu0 %v2428
        %4328 = vmatpush1.msra.mxu0 %v2427
        %4329 = vmatprep.subr.mxu0 %v2507
        %4330 = vmatpush1.msra.mxu0 %v2506
        %4331 = vmatprep.subr.mxu0 %v2586
        %4332 = vmatpush1.msra.mxu0 %v2585
        %4333 = vmatprep.subr.mxu0 0.0
        %4334 = vmatpush1.msra.mxu0 0.0
        %4335 = vmatprep.subr.mxu0 0.0
        %4336 = vmatpush1.msra.mxu0 0.0
        %4337 = vmatprep.subr.mxu0 0.0
        %4338 = vmatpush1.msra.mxu0 0.0
        %4339 = vmatprep.subr.mxu0 0.0
        %4340 = vmatpush1.msra.mxu0 0.0
        %4341 = vmatprep.subr.mxu0 0.0
        %4342 = vmatpush1.msra.mxu0 0.0
        %4343 = vmatprep.subr.mxu0 0.0
        %4344 = vmatpush1.msra.mxu0 0.0
        %4345 = vmatprep.subr.mxu0 0.0
        %4346 = vmatpush1.msra.mxu0 0.0
        %4347 = vmatprep.subr.mxu0 0.0
        %4348 = vmatpush1.msra.mxu0 0.0
        %4349 = vmatprep.subr.mxu0 0.0
        %4350 = vmatpush1.msra.mxu0 0.0
        %4351 = vmatprep.subr.mxu0 0.0
        %4352 = vmatpush1.msra.mxu0 0.0
        %4353 = vmatprep.subr.mxu0 0.0
        %4354 = vmatpush1.msra.mxu0 0.0
        %4355 = vmatprep.subr.mxu0 0.0
        %4356 = vmatpush1.msra.mxu0 0.0
        %4357 = vmatprep.subr.mxu0 0.0
        %4358 = vmatpush1.msra.mxu0 0.0
        %4359 = vmatprep.subr.mxu0 0.0
        %4360 = vmatpush1.msra.mxu0 0.0
        %4361 = vmatprep.subr.mxu0 0.0
        %4362 = vmatpush1.msra.mxu0 0.0
        %4363 = vmatprep.subr.mxu0 0.0
        %4364 = vmatpush1.msra.mxu0 0.0
        %4365 = vmatprep.subr.mxu0 0.0
        %4366 = vmatpush1.msra.mxu0 0.0
        %4367 = vmatprep.subr.mxu0 0.0
        %4368 = vmatpush1.msra.mxu0 0.0
        %4369 = vmatprep.subr.mxu0 0.0
        %4370 = vmatpush1.msra.mxu0 0.0
        %4371 = vmatprep.subr.mxu0 0.0
        %4372 = vmatpush1.msra.mxu0 0.0
        %4373 = vmatprep.subr.mxu0 0.0
        %4374 = vmatpush1.msra.mxu0 0.0
        %4375 = vmatprep.subr.mxu0 0.0
        %4376 = vmatpush1.msra.mxu0 0.0
        %4377 = vmatprep.subr.mxu0 0.0
        %4378 = vmatpush1.msra.mxu0 0.0
        %4379 = vmatprep.subr.mxu0 0.0
        %4380 = vmatpush1.msra.mxu0 0.0
        %4381 = vmatprep.subr.mxu0 0.0
        %4382 = vmatpush1.msra.mxu0 0.0
        %4383 = vmatprep.subr.mxu0 0.0
        %4384 = vmatpush1.msra.mxu0 0.0
        %4385 = vmatprep.subr.mxu0 0.0
        %4386 = vmatpush1.msra.mxu0 0.0
        %4387 = vmatprep.subr.mxu0 0.0
        %4388 = vmatpush1.msra.mxu0 0.0
        %4389 = vmatprep.mubr.f32.mxu0 0.0
        %4390 = vmatmul.mubr.f32.gmra.mrb[0].mxu0 %v3045
        %v4391 = vpop.f32.mrb[0].mxu0
        %v4392 = vadd.f32 %v2795, %v4391
        %v4393 = vpop.f32.mrb[0].mxu0
        %v4394 = vadd.f32 %v2799, %v4393
        %4395 = vdwg.mxu0
        %4396 = vmatprep.subr.mxu0 %v2351
        %4397 = vmatpush1.msra.mxu0 %v2350
        %4398 = vmatprep.subr.mxu0 %v2430
        %4399 = vmatpush1.msra.mxu0 %v2429
        %4400 = vmatprep.subr.mxu0 %v2509
        %4401 = vmatpush1.msra.mxu0 %v2508
        %4402 = vmatprep.subr.mxu0 %v2588
        %4403 = vmatpush1.msra.mxu0 %v2587
        %4404 = vmatprep.subr.mxu0 0.0
        %4405 = vmatpush1.msra.mxu0 0.0
        %4406 = vmatprep.subr.mxu0 0.0
        %4407 = vmatpush1.msra.mxu0 0.0
        %4408 = vmatprep.subr.mxu0 0.0
        %4409 = vmatpush1.msra.mxu0 0.0
        %4410 = vmatprep.subr.mxu0 0.0
        %4411 = vmatpush1.msra.mxu0 0.0
        %4412 = vmatprep.subr.mxu0 0.0
        %4413 = vmatpush1.msra.mxu0 0.0
        %4414 = vmatprep.subr.mxu0 0.0
        %4415 = vmatpush1.msra.mxu0 0.0
        %4416 = vmatprep.subr.mxu0 0.0
        %4417 = vmatpush1.msra.mxu0 0.0
        %4418 = vmatprep.subr.mxu0 0.0
        %4419 = vmatpush1.msra.mxu0 0.0
        %4420 = vmatprep.subr.mxu0 0.0
        %4421 = vmatpush1.msra.mxu0 0.0
        %4422 = vmatprep.subr.mxu0 0.0
        %4423 = vmatpush1.msra.mxu0 0.0
        %4424 = vmatprep.subr.mxu0 0.0
        %4425 = vmatpush1.msra.mxu0 0.0
        %4426 = vmatprep.subr.mxu0 0.0
        %4427 = vmatpush1.msra.mxu0 0.0
        %4428 = vmatprep.subr.mxu0 0.0
        %4429 = vmatpush1.msra.mxu0 0.0
        %4430 = vmatprep.subr.mxu0 0.0
        %4431 = vmatpush1.msra.mxu0 0.0
        %4432 = vmatprep.subr.mxu0 0.0
        %4433 = vmatpush1.msra.mxu0 0.0
        %4434 = vmatprep.subr.mxu0 0.0
        %4435 = vmatpush1.msra.mxu0 0.0
        %4436 = vmatprep.subr.mxu0 0.0
        %4437 = vmatpush1.msra.mxu0 0.0
        %4438 = vmatprep.subr.mxu0 0.0
        %4439 = vmatpush1.msra.mxu0 0.0
        %4440 = vmatprep.subr.mxu0 0.0
        %4441 = vmatpush1.msra.mxu0 0.0
        %4442 = vmatprep.subr.mxu0 0.0
        %4443 = vmatpush1.msra.mxu0 0.0
        %4444 = vmatprep.subr.mxu0 0.0
        %4445 = vmatpush1.msra.mxu0 0.0
        %4446 = vmatprep.subr.mxu0 0.0
        %4447 = vmatpush1.msra.mxu0 0.0
        %4448 = vmatprep.subr.mxu0 0.0
        %4449 = vmatpush1.msra.mxu0 0.0
        %4450 = vmatprep.subr.mxu0 0.0
        %4451 = vmatpush1.msra.mxu0 0.0
        %4452 = vmatprep.subr.mxu0 0.0
        %4453 = vmatpush1.msra.mxu0 0.0
        %4454 = vmatprep.subr.mxu0 0.0
        %4455 = vmatpush1.msra.mxu0 0.0
        %4456 = vmatprep.subr.mxu0 0.0
        %4457 = vmatpush1.msra.mxu0 0.0
        %4458 = vmatprep.subr.mxu0 0.0
        %4459 = vmatpush1.msra.mxu0 0.0
        %4460 = vmatprep.mubr.f32.mxu0 0.0
        %4461 = vmatmul.mubr.f32.gmra.mrb[0].mxu0 %v3045
        %v4462 = vpop.f32.mrb[0].mxu0
        %v4463 = vadd.f32 %v2803, %v4462
        %v4464 = vpop.f32.mrb[0].mxu0
        %v4465 = vadd.f32 %v2807, %v4464
        %4466 = vdwg.mxu0
        %4467 = vmatprep.subr.mxu0 %v2353
        %4468 = vmatpush1.msra.mxu0 %v2352
        %4469 = vmatprep.subr.mxu0 %v2432
        %4470 = vmatpush1.msra.mxu0 %v2431
        %4471 = vmatprep.subr.mxu0 %v2511
        %4472 = vmatpush1.msra.mxu0 %v2510
        %4473 = vmatprep.subr.mxu0 %v2590
        %4474 = vmatpush1.msra.mxu0 %v2589
        %4475 = vmatprep.subr.mxu0 0.0
        %4476 = vmatpush1.msra.mxu0 0.0
        %4477 = vmatprep.subr.mxu0 0.0
        %4478 = vmatpush1.msra.mxu0 0.0
        %4479 = vmatprep.subr.mxu0 0.0
        %4480 = vmatpush1.msra.mxu0 0.0
        %4481 = vmatprep.subr.mxu0 0.0
        %4482 = vmatpush1.msra.mxu0 0.0
        %4483 = vmatprep.subr.mxu0 0.0
        %4484 = vmatpush1.msra.mxu0 0.0
        %4485 = vmatprep.subr.mxu0 0.0
        %4486 = vmatpush1.msra.mxu0 0.0
        %4487 = vmatprep.subr.mxu0 0.0
        %4488 = vmatpush1.msra.mxu0 0.0
        %4489 = vmatprep.subr.mxu0 0.0
        %4490 = vmatpush1.msra.mxu0 0.0
        %4491 = vmatprep.subr.mxu0 0.0
        %4492 = vmatpush1.msra.mxu0 0.0
        %4493 = vmatprep.subr.mxu0 0.0
        %4494 = vmatpush1.msra.mxu0 0.0
        %4495 = vmatprep.subr.mxu0 0.0
        %4496 = vmatpush1.msra.mxu0 0.0
        %4497 = vmatprep.subr.mxu0 0.0
        %4498 = vmatpush1.msra.mxu0 0.0
        %4499 = vmatprep.subr.mxu0 0.0
        %4500 = vmatpush1.msra.mxu0 0.0
        %4501 = vmatprep.subr.mxu0 0.0
        %4502 = vmatpush1.msra.mxu0 0.0
        %4503 = vmatprep.subr.mxu0 0.0
        %4504 = vmatpush1.msra.mxu0 0.0
        %4505 = vmatprep.subr.mxu0 0.0
        %4506 = vmatpush1.msra.mxu0 0.0
        %4507 = vmatprep.subr.mxu0 0.0
        %4508 = vmatpush1.msra.mxu0 0.0
        %4509 = vmatprep.subr.mxu0 0.0
        %4510 = vmatpush1.msra.mxu0 0.0
        %4511 = vmatprep.subr.mxu0 0.0
        %4512 = vmatpush1.msra.mxu0 0.0
        %4513 = vmatprep.subr.mxu0 0.0
        %4514 = vmatpush1.msra.mxu0 0.0
        %4515 = vmatprep.subr.mxu0 0.0
        %4516 = vmatpush1.msra.mxu0 0.0
        %4517 = vmatprep.subr.mxu0 0.0
        %4518 = vmatpush1.msra.mxu0 0.0
        %4519 = vmatprep.subr.mxu0 0.0
        %4520 = vmatpush1.msra.mxu0 0.0
        %4521 = vmatprep.subr.mxu0 0.0
        %4522 = vmatpush1.msra.mxu0 0.0
        %4523 = vmatprep.subr.mxu0 0.0
        %4524 = vmatpush1.msra.mxu0 0.0
        %4525 = vmatprep.subr.mxu0 0.0
        %4526 = vmatpush1.msra.mxu0 0.0
        %4527 = vmatprep.subr.mxu0 0.0
        %4528 = vmatpush1.msra.mxu0 0.0
        %4529 = vmatprep.subr.mxu0 0.0
        %4530 = vmatpush1.msra.mxu0 0.0
        %4531 = vmatprep.mubr.f32.mxu0 0.0
        %4532 = vmatmul.mubr.f32.gmra.mrb[0].mxu0 %v3045
        %v4533 = vpop.f32.mrb[0].mxu0
        %v4534 = vadd.f32 %v2811, %v4533
        %v4535 = vpop.f32.mrb[0].mxu0
        %v4536 = vadd.f32 %v2815, %v4535
        %4537 = vdwg.mxu0
        %4538 = vmatprep.subr.mxu0 %v2355
        %4539 = vmatpush1.msra.mxu0 %v2354
        %4540 = vmatprep.subr.mxu0 %v2434
        %4541 = vmatpush1.msra.mxu0 %v2433
        %4542 = vmatprep.subr.mxu0 %v2513
        %4543 = vmatpush1.msra.mxu0 %v2512
        %4544 = vmatprep.subr.mxu0 %v2592
        %4545 = vmatpush1.msra.mxu0 %v2591
        %4546 = vmatprep.subr.mxu0 0.0
        %4547 = vmatpush1.msra.mxu0 0.0
        %4548 = vmatprep.subr.mxu0 0.0
        %4549 = vmatpush1.msra.mxu0 0.0
        %4550 = vmatprep.subr.mxu0 0.0
        %4551 = vmatpush1.msra.mxu0 0.0
        %4552 = vmatprep.subr.mxu0 0.0
        %4553 = vmatpush1.msra.mxu0 0.0
        %4554 = vmatprep.subr.mxu0 0.0
        %4555 = vmatpush1.msra.mxu0 0.0
        %4556 = vmatprep.subr.mxu0 0.0
        %4557 = vmatpush1.msra.mxu0 0.0
        %4558 = vmatprep.subr.mxu0 0.0
        %4559 = vmatpush1.msra.mxu0 0.0
        %4560 = vmatprep.subr.mxu0 0.0
        %4561 = vmatpush1.msra.mxu0 0.0
        %4562 = vmatprep.subr.mxu0 0.0
        %4563 = vmatpush1.msra.mxu0 0.0
        %4564 = vmatprep.subr.mxu0 0.0
        %4565 = vmatpush1.msra.mxu0 0.0
        %4566 = vmatprep.subr.mxu0 0.0
        %4567 = vmatpush1.msra.mxu0 0.0
        %4568 = vmatprep.subr.mxu0 0.0
        %4569 = vmatpush1.msra.mxu0 0.0
        %4570 = vmatprep.subr.mxu0 0.0
        %4571 = vmatpush1.msra.mxu0 0.0
        %4572 = vmatprep.subr.mxu0 0.0
        %4573 = vmatpush1.msra.mxu0 0.0
        %4574 = vmatprep.subr.mxu0 0.0
        %4575 = vmatpush1.msra.mxu0 0.0
        %4576 = vmatprep.subr.mxu0 0.0
        %4577 = vmatpush1.msra.mxu0 0.0
        %4578 = vmatprep.subr.mxu0 0.0
        %4579 = vmatpush1.msra.mxu0 0.0
        %4580 = vmatprep.subr.mxu0 0.0
        %4581 = vmatpush1.msra.mxu0 0.0
        %4582 = vmatprep.subr.mxu0 0.0
        %4583 = vmatpush1.msra.mxu0 0.0
        %4584 = vmatprep.subr.mxu0 0.0
        %4585 = vmatpush1.msra.mxu0 0.0
        %4586 = vmatprep.subr.mxu0 0.0
        %4587 = vmatpush1.msra.mxu0 0.0
        %4588 = vmatprep.subr.mxu0 0.0
        %4589 = vmatpush1.msra.mxu0 0.0
        %4590 = vmatprep.subr.mxu0 0.0
        %4591 = vmatpush1.msra.mxu0 0.0
        %4592 = vmatprep.subr.mxu0 0.0
        %4593 = vmatpush1.msra.mxu0 0.0
        %4594 = vmatprep.subr.mxu0 0.0
        %4595 = vmatpush1.msra.mxu0 0.0
        %4596 = vmatprep.subr.mxu0 0.0
        %4597 = vmatpush1.msra.mxu0 0.0
        %4598 = vmatprep.subr.mxu0 0.0
        %4599 = vmatpush1.msra.mxu0 0.0
        %4600 = vmatprep.subr.mxu0 0.0
        %4601 = vmatpush1.msra.mxu0 0.0
        %4602 = vmatprep.mubr.f32.mxu0 0.0
        %4603 = vmatmul.mubr.f32.gmra.mrb[0].mxu0 %v3045
        %v4604 = vpop.f32.mrb[0].mxu0
        %v4605 = vadd.f32 %v2819, %v4604
        %v4606 = vpop.f32.mrb[0].mxu0
        %v4607 = vadd.f32 %v2823, %v4606
        %4608 = vdwg.mxu0
        %4609 = vmatprep.subr.mxu0 %v2357
        %4610 = vmatpush1.msra.mxu0 %v2356
        %4611 = vmatprep.subr.mxu0 %v2436
        %4612 = vmatpush1.msra.mxu0 %v2435
        %4613 = vmatprep.subr.mxu0 %v2515
        %4614 = vmatpush1.msra.mxu0 %v2514
        %4615 = vmatprep.subr.mxu0 %v2594
        %4616 = vmatpush1.msra.mxu0 %v2593
        %4617 = vmatprep.subr.mxu0 0.0
        %4618 = vmatpush1.msra.mxu0 0.0
        %4619 = vmatprep.subr.mxu0 0.0
        %4620 = vmatpush1.msra.mxu0 0.0
        %4621 = vmatprep.subr.mxu0 0.0
        %4622 = vmatpush1.msra.mxu0 0.0
        %4623 = vmatprep.subr.mxu0 0.0
        %4624 = vmatpush1.msra.mxu0 0.0
        %4625 = vmatprep.subr.mxu0 0.0
        %4626 = vmatpush1.msra.mxu0 0.0
        %4627 = vmatprep.subr.mxu0 0.0
        %4628 = vmatpush1.msra.mxu0 0.0
        %4629 = vmatprep.subr.mxu0 0.0
        %4630 = vmatpush1.msra.mxu0 0.0
        %4631 = vmatprep.subr.mxu0 0.0
        %4632 = vmatpush1.msra.mxu0 0.0
        %4633 = vmatprep.subr.mxu0 0.0
        %4634 = vmatpush1.msra.mxu0 0.0
        %4635 = vmatprep.subr.mxu0 0.0
        %4636 = vmatpush1.msra.mxu0 0.0
        %4637 = vmatprep.subr.mxu0 0.0
        %4638 = vmatpush1.msra.mxu0 0.0
        %4639 = vmatprep.subr.mxu0 0.0
        %4640 = vmatpush1.msra.mxu0 0.0
        %4641 = vmatprep.subr.mxu0 0.0
        %4642 = vmatpush1.msra.mxu0 0.0
        %4643 = vmatprep.subr.mxu0 0.0
        %4644 = vmatpush1.msra.mxu0 0.0
        %4645 = vmatprep.subr.mxu0 0.0
        %4646 = vmatpush1.msra.mxu0 0.0
        %4647 = vmatprep.subr.mxu0 0.0
        %4648 = vmatpush1.msra.mxu0 0.0
        %4649 = vmatprep.subr.mxu0 0.0
        %4650 = vmatpush1.msra.mxu0 0.0
        %4651 = vmatprep.subr.mxu0 0.0
        %4652 = vmatpush1.msra.mxu0 0.0
        %4653 = vmatprep.subr.mxu0 0.0
        %4654 = vmatpush1.msra.mxu0 0.0
        %4655 = vmatprep.subr.mxu0 0.0
        %4656 = vmatpush1.msra.mxu0 0.0
        %4657 = vmatprep.subr.mxu0 0.0
        %4658 = vmatpush1.msra.mxu0 0.0
        %4659 = vmatprep.subr.mxu0 0.0
        %4660 = vmatpush1.msra.mxu0 0.0
        %4661 = vmatprep.subr.mxu0 0.0
        %4662 = vmatpush1.msra.mxu0 0.0
        %4663 = vmatprep.subr.mxu0 0.0
        %4664 = vmatpush1.msra.mxu0 0.0
        %4665 = vmatprep.subr.mxu0 0.0
        %4666 = vmatpush1.msra.mxu0 0.0
        %4667 = vmatprep.subr.mxu0 0.0
        %4668 = vmatpush1.msra.mxu0 0.0
        %4669 = vmatprep.subr.mxu0 0.0
        %4670 = vmatpush1.msra.mxu0 0.0
        %4671 = vmatprep.subr.mxu0 0.0
        %4672 = vmatpush1.msra.mxu0 0.0
        %4673 = vmatprep.mubr.f32.mxu0 0.0
        %4674 = vmatmul.mubr.f32.gmra.mrb[0].mxu0 %v3045
        %v4675 = vpop.f32.mrb[0].mxu0
        %v4676 = vadd.f32 %v2827, %v4675
        %v4677 = vpop.f32.mrb[0].mxu0
        %v4678 = vadd.f32 %v2831, %v4677
        %4679 = vdwg.mxu0
        %4680 = vmatprep.subr.mxu0 %v2359
        %4681 = vmatpush1.msra.mxu0 %v2358
        %4682 = vmatprep.subr.mxu0 %v2438
        %4683 = vmatpush1.msra.mxu0 %v2437
        %4684 = vmatprep.subr.mxu0 %v2517
        %4685 = vmatpush1.msra.mxu0 %v2516
        %4686 = vmatprep.subr.mxu0 %v2596
        %4687 = vmatpush1.msra.mxu0 %v2595
        %4688 = vmatprep.subr.mxu0 0.0
        %4689 = vmatpush1.msra.mxu0 0.0
        %4690 = vmatprep.subr.mxu0 0.0
        %4691 = vmatpush1.msra.mxu0 0.0
        %4692 = vmatprep.subr.mxu0 0.0
        %4693 = vmatpush1.msra.mxu0 0.0
        %4694 = vmatprep.subr.mxu0 0.0
        %4695 = vmatpush1.msra.mxu0 0.0
        %4696 = vmatprep.subr.mxu0 0.0
        %4697 = vmatpush1.msra.mxu0 0.0
        %4698 = vmatprep.subr.mxu0 0.0
        %4699 = vmatpush1.msra.mxu0 0.0
        %4700 = vmatprep.subr.mxu0 0.0
        %4701 = vmatpush1.msra.mxu0 0.0
        %4702 = vmatprep.subr.mxu0 0.0
        %4703 = vmatpush1.msra.mxu0 0.0
        %4704 = vmatprep.subr.mxu0 0.0
        %4705 = vmatpush1.msra.mxu0 0.0
        %4706 = vmatprep.subr.mxu0 0.0
        %4707 = vmatpush1.msra.mxu0 0.0
        %4708 = vmatprep.subr.mxu0 0.0
        %4709 = vmatpush1.msra.mxu0 0.0
        %4710 = vmatprep.subr.mxu0 0.0
        %4711 = vmatpush1.msra.mxu0 0.0
        %4712 = vmatprep.subr.mxu0 0.0
        %4713 = vmatpush1.msra.mxu0 0.0
        %4714 = vmatprep.subr.mxu0 0.0
        %4715 = vmatpush1.msra.mxu0 0.0
        %4716 = vmatprep.subr.mxu0 0.0
        %4717 = vmatpush1.msra.mxu0 0.0
        %4718 = vmatprep.subr.mxu0 0.0
        %4719 = vmatpush1.msra.mxu0 0.0
        %4720 = vmatprep.subr.mxu0 0.0
        %4721 = vmatpush1.msra.mxu0 0.0
        %4722 = vmatprep.subr.mxu0 0.0
        %4723 = vmatpush1.msra.mxu0 0.0
        %4724 = vmatprep.subr.mxu0 0.0
        %4725 = vmatpush1.msra.mxu0 0.0
        %4726 = vmatprep.subr.mxu0 0.0
        %4727 = vmatpush1.msra.mxu0 0.0
        %4728 = vmatprep.subr.mxu0 0.0
        %4729 = vmatpush1.msra.mxu0 0.0
        %4730 = vmatprep.subr.mxu0 0.0
        %4731 = vmatpush1.msra.mxu0 0.0
        %4732 = vmatprep.subr.mxu0 0.0
        %4733 = vmatpush1.msra.mxu0 0.0
        %4734 = vmatprep.subr.mxu0 0.0
        %4735 = vmatpush1.msra.mxu0 0.0
        %4736 = vmatprep.subr.mxu0 0.0
        %4737 = vmatpush1.msra.mxu0 0.0
        %4738 = vmatprep.subr.mxu0 0.0
        %4739 = vmatpush1.msra.mxu0 0.0
        %4740 = vmatprep.subr.mxu0 0.0
        %4741 = vmatpush1.msra.mxu0 0.0
        %4742 = vmatprep.subr.mxu0 0.0
        %4743 = vmatpush1.msra.mxu0 0.0
        %4744 = vmatprep.mubr.f32.mxu0 0.0
        %4745 = vmatmul.mubr.f32.gmra.mrb[0].mxu0 %v3045
        %v4746 = vpop.f32.mrb[0].mxu0
        %v4747 = vadd.f32 %v2835, %v4746
        %v4748 = vpop.f32.mrb[0].mxu0
        %v4749 = vadd.f32 %v2839, %v4748
        %4750 = vdwg.mxu0
        %4751 = vmatprep.subr.mxu0 %v2361
        %4752 = vmatpush1.msra.mxu0 %v2360
        %4753 = vmatprep.subr.mxu0 %v2440
        %4754 = vmatpush1.msra.mxu0 %v2439
        %4755 = vmatprep.subr.mxu0 %v2519
        %4756 = vmatpush1.msra.mxu0 %v2518
        %4757 = vmatprep.subr.mxu0 %v2598
        %4758 = vmatpush1.msra.mxu0 %v2597
        %4759 = vmatprep.subr.mxu0 0.0
        %4760 = vmatpush1.msra.mxu0 0.0
        %4761 = vmatprep.subr.mxu0 0.0
        %4762 = vmatpush1.msra.mxu0 0.0
        %4763 = vmatprep.subr.mxu0 0.0
        %4764 = vmatpush1.msra.mxu0 0.0
        %4765 = vmatprep.subr.mxu0 0.0
        %4766 = vmatpush1.msra.mxu0 0.0
        %4767 = vmatprep.subr.mxu0 0.0
        %4768 = vmatpush1.msra.mxu0 0.0
        %4769 = vmatprep.subr.mxu0 0.0
        %4770 = vmatpush1.msra.mxu0 0.0
        %4771 = vmatprep.subr.mxu0 0.0
        %4772 = vmatpush1.msra.mxu0 0.0
        %4773 = vmatprep.subr.mxu0 0.0
        %4774 = vmatpush1.msra.mxu0 0.0
        %4775 = vmatprep.subr.mxu0 0.0
        %4776 = vmatpush1.msra.mxu0 0.0
        %4777 = vmatprep.subr.mxu0 0.0
        %4778 = vmatpush1.msra.mxu0 0.0
        %4779 = vmatprep.subr.mxu0 0.0
        %4780 = vmatpush1.msra.mxu0 0.0
        %4781 = vmatprep.subr.mxu0 0.0
        %4782 = vmatpush1.msra.mxu0 0.0
        %4783 = vmatprep.subr.mxu0 0.0
        %4784 = vmatpush1.msra.mxu0 0.0
        %4785 = vmatprep.subr.mxu0 0.0
        %4786 = vmatpush1.msra.mxu0 0.0
        %4787 = vmatprep.subr.mxu0 0.0
        %4788 = vmatpush1.msra.mxu0 0.0
        %4789 = vmatprep.subr.mxu0 0.0
        %4790 = vmatpush1.msra.mxu0 0.0
        %4791 = vmatprep.subr.mxu0 0.0
        %4792 = vmatpush1.msra.mxu0 0.0
        %4793 = vmatprep.subr.mxu0 0.0
        %4794 = vmatpush1.msra.mxu0 0.0
        %4795 = vmatprep.subr.mxu0 0.0
        %4796 = vmatpush1.msra.mxu0 0.0
        %4797 = vmatprep.subr.mxu0 0.0
        %4798 = vmatpush1.msra.mxu0 0.0
        %4799 = vmatprep.subr.mxu0 0.0
        %4800 = vmatpush1.msra.mxu0 0.0
        %4801 = vmatprep.subr.mxu0 0.0
        %4802 = vmatpush1.msra.mxu0 0.0
        %4803 = vmatprep.subr.mxu0 0.0
        %4804 = vmatpush1.msra.mxu0 0.0
        %4805 = vmatprep.subr.mxu0 0.0
        %4806 = vmatpush1.msra.mxu0 0.0
        %4807 = vmatprep.subr.mxu0 0.0
        %4808 = vmatpush1.msra.mxu0 0.0
        %4809 = vmatprep.subr.mxu0 0.0
        %4810 = vmatpush1.msra.mxu0 0.0
        %4811 = vmatprep.subr.mxu0 0.0
        %4812 = vmatpush1.msra.mxu0 0.0
        %4813 = vmatprep.subr.mxu0 0.0
        %4814 = vmatpush1.msra.mxu0 0.0
        %4815 = vmatprep.mubr.f32.mxu0 0.0
        %4816 = vmatmul.mubr.f32.gmra.mrb[0].mxu0 %v3045
        %v4817 = vpop.f32.mrb[0].mxu0
        %v4818 = vadd.f32 %v2843, %v4817
        %v4819 = vpop.f32.mrb[0].mxu0
        %v4820 = vadd.f32 %v2847, %v4819
        %4821 = vdwg.mxu0
        %4822 = vmatprep.subr.mxu0 %v2363
        %4823 = vmatpush1.msra.mxu0 %v2362
        %4824 = vmatprep.subr.mxu0 %v2442
        %4825 = vmatpush1.msra.mxu0 %v2441
        %4826 = vmatprep.subr.mxu0 %v2521
        %4827 = vmatpush1.msra.mxu0 %v2520
        %4828 = vmatprep.subr.mxu0 %v2600
        %4829 = vmatpush1.msra.mxu0 %v2599
        %4830 = vmatprep.subr.mxu0 0.0
        %4831 = vmatpush1.msra.mxu0 0.0
        %4832 = vmatprep.subr.mxu0 0.0
        %4833 = vmatpush1.msra.mxu0 0.0
        %4834 = vmatprep.subr.mxu0 0.0
        %4835 = vmatpush1.msra.mxu0 0.0
        %4836 = vmatprep.subr.mxu0 0.0
        %4837 = vmatpush1.msra.mxu0 0.0
        %4838 = vmatprep.subr.mxu0 0.0
        %4839 = vmatpush1.msra.mxu0 0.0
        %4840 = vmatprep.subr.mxu0 0.0
        %4841 = vmatpush1.msra.mxu0 0.0
        %4842 = vmatprep.subr.mxu0 0.0
        %4843 = vmatpush1.msra.mxu0 0.0
        %4844 = vmatprep.subr.mxu0 0.0
        %4845 = vmatpush1.msra.mxu0 0.0
        %4846 = vmatprep.subr.mxu0 0.0
        %4847 = vmatpush1.msra.mxu0 0.0
        %4848 = vmatprep.subr.mxu0 0.0
        %4849 = vmatpush1.msra.mxu0 0.0
        %4850 = vmatprep.subr.mxu0 0.0
        %4851 = vmatpush1.msra.mxu0 0.0
        %4852 = vmatprep.subr.mxu0 0.0
        %4853 = vmatpush1.msra.mxu0 0.0
        %4854 = vmatprep.subr.mxu0 0.0
        %4855 = vmatpush1.msra.mxu0 0.0
        %4856 = vmatprep.subr.mxu0 0.0
        %4857 = vmatpush1.msra.mxu0 0.0
        %4858 = vmatprep.subr.mxu0 0.0
        %4859 = vmatpush1.msra.mxu0 0.0
        %4860 = vmatprep.subr.mxu0 0.0
        %4861 = vmatpush1.msra.mxu0 0.0
        %4862 = vmatprep.subr.mxu0 0.0
        %4863 = vmatpush1.msra.mxu0 0.0
        %4864 = vmatprep.subr.mxu0 0.0
        %4865 = vmatpush1.msra.mxu0 0.0
        %4866 = vmatprep.subr.mxu0 0.0
        %4867 = vmatpush1.msra.mxu0 0.0
        %4868 = vmatprep.subr.mxu0 0.0
        %4869 = vmatpush1.msra.mxu0 0.0
        %4870 = vmatprep.subr.mxu0 0.0
        %4871 = vmatpush1.msra.mxu0 0.0
        %4872 = vmatprep.subr.mxu0 0.0
        %4873 = vmatpush1.msra.mxu0 0.0
        %4874 = vmatprep.subr.mxu0 0.0
        %4875 = vmatpush1.msra.mxu0 0.0
        %4876 = vmatprep.subr.mxu0 0.0
        %4877 = vmatpush1.msra.mxu0 0.0
        %4878 = vmatprep.subr.mxu0 0.0
        %4879 = vmatpush1.msra.mxu0 0.0
        %4880 = vmatprep.subr.mxu0 0.0
        %4881 = vmatpush1.msra.mxu0 0.0
        %4882 = vmatprep.subr.mxu0 0.0
        %4883 = vmatpush1.msra.mxu0 0.0
        %4884 = vmatprep.subr.mxu0 0.0
        %4885 = vmatpush1.msra.mxu0 0.0
        %4886 = vmatprep.mubr.f32.mxu0 0.0
        %4887 = vmatmul.mubr.f32.gmra.mrb[0].mxu0 %v3045
        %v4888 = vpop.f32.mrb[0].mxu0
        %v4889 = vadd.f32 %v2851, %v4888
        %v4890 = vpop.f32.mrb[0].mxu0
        %v4891 = vadd.f32 %v2855, %v4890
        %4892 = vdwg.mxu0
        %4893 = vmatprep.subr.mxu0 %v2365
        %4894 = vmatpush1.msra.mxu0 %v2364
        %4895 = vmatprep.subr.mxu0 %v2444
        %4896 = vmatpush1.msra.mxu0 %v2443
        %4897 = vmatprep.subr.mxu0 %v2523
        %4898 = vmatpush1.msra.mxu0 %v2522
        %4899 = vmatprep.subr.mxu0 %v2602
        %4900 = vmatpush1.msra.mxu0 %v2601
        %4901 = vmatprep.subr.mxu0 0.0
        %4902 = vmatpush1.msra.mxu0 0.0
        %4903 = vmatprep.subr.mxu0 0.0
        %4904 = vmatpush1.msra.mxu0 0.0
        %4905 = vmatprep.subr.mxu0 0.0
        %4906 = vmatpush1.msra.mxu0 0.0
        %4907 = vmatprep.subr.mxu0 0.0
        %4908 = vmatpush1.msra.mxu0 0.0
        %4909 = vmatprep.subr.mxu0 0.0
        %4910 = vmatpush1.msra.mxu0 0.0
        %4911 = vmatprep.subr.mxu0 0.0
        %4912 = vmatpush1.msra.mxu0 0.0
        %4913 = vmatprep.subr.mxu0 0.0
        %4914 = vmatpush1.msra.mxu0 0.0
        %4915 = vmatprep.subr.mxu0 0.0
        %4916 = vmatpush1.msra.mxu0 0.0
        %4917 = vmatprep.subr.mxu0 0.0
        %4918 = vmatpush1.msra.mxu0 0.0
        %4919 = vmatprep.subr.mxu0 0.0
        %4920 = vmatpush1.msra.mxu0 0.0
        %4921 = vmatprep.subr.mxu0 0.0
        %4922 = vmatpush1.msra.mxu0 0.0
        %4923 = vmatprep.subr.mxu0 0.0
        %4924 = vmatpush1.msra.mxu0 0.0
        %4925 = vmatprep.subr.mxu0 0.0
        %4926 = vmatpush1.msra.mxu0 0.0
        %4927 = vmatprep.subr.mxu0 0.0
        %4928 = vmatpush1.msra.mxu0 0.0
        %4929 = vmatprep.subr.mxu0 0.0
        %4930 = vmatpush1.msra.mxu0 0.0
        %4931 = vmatprep.subr.mxu0 0.0
        %4932 = vmatpush1.msra.mxu0 0.0
        %4933 = vmatprep.subr.mxu0 0.0
        %4934 = vmatpush1.msra.mxu0 0.0
        %4935 = vmatprep.subr.mxu0 0.0
        %4936 = vmatpush1.msra.mxu0 0.0
        %4937 = vmatprep.subr.mxu0 0.0
        %4938 = vmatpush1.msra.mxu0 0.0
        %4939 = vmatprep.subr.mxu0 0.0
        %4940 = vmatpush1.msra.mxu0 0.0
        %4941 = vmatprep.subr.mxu0 0.0
        %4942 = vmatpush1.msra.mxu0 0.0
        %4943 = vmatprep.subr.mxu0 0.0
        %4944 = vmatpush1.msra.mxu0 0.0
        %4945 = vmatprep.subr.mxu0 0.0
        %4946 = vmatpush1.msra.mxu0 0.0
        %4947 = vmatprep.subr.mxu0 0.0
        %4948 = vmatpush1.msra.mxu0 0.0
        %4949 = vmatprep.subr.mxu0 0.0
        %4950 = vmatpush1.msra.mxu0 0.0
        %4951 = vmatprep.subr.mxu0 0.0
        %4952 = vmatpush1.msra.mxu0 0.0
        %4953 = vmatprep.subr.mxu0 0.0
        %4954 = vmatpush1.msra.mxu0 0.0
        %4955 = vmatprep.subr.mxu0 0.0
        %4956 = vmatpush1.msra.mxu0 0.0
        %4957 = vmatprep.mubr.f32.mxu0 0.0
        %4958 = vmatmul.mubr.f32.gmra.mrb[0].mxu0 %v3045
        %v4959 = vpop.f32.mrb[0].mxu0
        %v4960 = vadd.f32 %v2859, %v4959
        %v4961 = vpop.f32.mrb[0].mxu0
        %v4962 = vadd.f32 %v2863, %v4961
        %4963 = vdwg.mxu0
        %4964 = vmatprep.subr.mxu0 %v2367
        %4965 = vmatpush1.msra.mxu0 %v2366
        %4966 = vmatprep.subr.mxu0 %v2446
        %4967 = vmatpush1.msra.mxu0 %v2445
        %4968 = vmatprep.subr.mxu0 %v2525
        %4969 = vmatpush1.msra.mxu0 %v2524
        %4970 = vmatprep.subr.mxu0 %v2604
        %4971 = vmatpush1.msra.mxu0 %v2603
        %4972 = vmatprep.subr.mxu0 0.0
        %4973 = vmatpush1.msra.mxu0 0.0
        %4974 = vmatprep.subr.mxu0 0.0
        %4975 = vmatpush1.msra.mxu0 0.0
        %4976 = vmatprep.subr.mxu0 0.0
        %4977 = vmatpush1.msra.mxu0 0.0
        %4978 = vmatprep.subr.mxu0 0.0
        %4979 = vmatpush1.msra.mxu0 0.0
        %4980 = vmatprep.subr.mxu0 0.0
        %4981 = vmatpush1.msra.mxu0 0.0
        %4982 = vmatprep.subr.mxu0 0.0
        %4983 = vmatpush1.msra.mxu0 0.0
        %4984 = vmatprep.subr.mxu0 0.0
        %4985 = vmatpush1.msra.mxu0 0.0
        %4986 = vmatprep.subr.mxu0 0.0
        %4987 = vmatpush1.msra.mxu0 0.0
        %4988 = vmatprep.subr.mxu0 0.0
        %4989 = vmatpush1.msra.mxu0 0.0
        %4990 = vmatprep.subr.mxu0 0.0
        %4991 = vmatpush1.msra.mxu0 0.0
        %4992 = vmatprep.subr.mxu0 0.0
        %4993 = vmatpush1.msra.mxu0 0.0
        %4994 = vmatprep.subr.mxu0 0.0
        %4995 = vmatpush1.msra.mxu0 0.0
        %4996 = vmatprep.subr.mxu0 0.0
        %4997 = vmatpush1.msra.mxu0 0.0
        %4998 = vmatprep.subr.mxu0 0.0
        %4999 = vmatpush1.msra.mxu0 0.0
        %5000 = vmatprep.subr.mxu0 0.0
        %5001 = vmatpush1.msra.mxu0 0.0
        %5002 = vmatprep.subr.mxu0 0.0
        %5003 = vmatpush1.msra.mxu0 0.0
        %5004 = vmatprep.subr.mxu0 0.0
        %5005 = vmatpush1.msra.mxu0 0.0
        %5006 = vmatprep.subr.mxu0 0.0
        %5007 = vmatpush1.msra.mxu0 0.0
        %5008 = vmatprep.subr.mxu0 0.0
        %5009 = vmatpush1.msra.mxu0 0.0
        %5010 = vmatprep.subr.mxu0 0.0
        %5011 = vmatpush1.msra.mxu0 0.0
        %5012 = vmatprep.subr.mxu0 0.0
        %5013 = vmatpush1.msra.mxu0 0.0
        %5014 = vmatprep.subr.mxu0 0.0
        %5015 = vmatpush1.msra.mxu0 0.0
        %5016 = vmatprep.subr.mxu0 0.0
        %5017 = vmatpush1.msra.mxu0 0.0
        %5018 = vmatprep.subr.mxu0 0.0
        %5019 = vmatpush1.msra.mxu0 0.0
        %5020 = vmatprep.subr.mxu0 0.0
        %5021 = vmatpush1.msra.mxu0 0.0
        %5022 = vmatprep.subr.mxu0 0.0
        %5023 = vmatpush1.msra.mxu0 0.0
        %5024 = vmatprep.subr.mxu0 0.0
        %5025 = vmatpush1.msra.mxu0 0.0
        %5026 = vmatprep.subr.mxu0 0.0
        %5027 = vmatpush1.msra.mxu0 0.0
        %5028 = vmatprep.mubr.f32.mxu0 0.0
        %5029 = vmatmul.mubr.f32.gmra.mrb[0].mxu0 %v3045
        %v5030 = vpop.f32.mrb[0].mxu0
        %v5031 = vadd.f32 %v2867, %v5030
        %v5032 = vpop.f32.mrb[0].mxu0
        %v5033 = vadd.f32 %v2871, %v5032
        %5034 = vdwg.mxu0
        %5035 = vmatprep.subr.mxu0 %v2369
        %5036 = vmatpush1.msra.mxu0 %v2368
        %5037 = vmatprep.subr.mxu0 %v2448
        %5038 = vmatpush1.msra.mxu0 %v2447
        %5039 = vmatprep.subr.mxu0 %v2527
        %5040 = vmatpush1.msra.mxu0 %v2526
        %5041 = vmatprep.subr.mxu0 %v2606
        %5042 = vmatpush1.msra.mxu0 %v2605
        %5043 = vmatprep.subr.mxu0 0.0
        %5044 = vmatpush1.msra.mxu0 0.0
        %5045 = vmatprep.subr.mxu0 0.0
        %5046 = vmatpush1.msra.mxu0 0.0
        %5047 = vmatprep.subr.mxu0 0.0
        %5048 = vmatpush1.msra.mxu0 0.0
        %5049 = vmatprep.subr.mxu0 0.0
        %5050 = vmatpush1.msra.mxu0 0.0
        %5051 = vmatprep.subr.mxu0 0.0
        %5052 = vmatpush1.msra.mxu0 0.0
        %5053 = vmatprep.subr.mxu0 0.0
        %5054 = vmatpush1.msra.mxu0 0.0
        %5055 = vmatprep.subr.mxu0 0.0
        %5056 = vmatpush1.msra.mxu0 0.0
        %5057 = vmatprep.subr.mxu0 0.0
        %5058 = vmatpush1.msra.mxu0 0.0
        %5059 = vmatprep.subr.mxu0 0.0
        %5060 = vmatpush1.msra.mxu0 0.0
        %5061 = vmatprep.subr.mxu0 0.0
        %5062 = vmatpush1.msra.mxu0 0.0
        %5063 = vmatprep.subr.mxu0 0.0
        %5064 = vmatpush1.msra.mxu0 0.0
        %5065 = vmatprep.subr.mxu0 0.0
        %5066 = vmatpush1.msra.mxu0 0.0
        %5067 = vmatprep.subr.mxu0 0.0
        %5068 = vmatpush1.msra.mxu0 0.0
        %5069 = vmatprep.subr.mxu0 0.0
        %5070 = vmatpush1.msra.mxu0 0.0
        %5071 = vmatprep.subr.mxu0 0.0
        %5072 = vmatpush1.msra.mxu0 0.0
        %5073 = vmatprep.subr.mxu0 0.0
        %5074 = vmatpush1.msra.mxu0 0.0
        %5075 = vmatprep.subr.mxu0 0.0
        %5076 = vmatpush1.msra.mxu0 0.0
        %5077 = vmatprep.subr.mxu0 0.0
        %5078 = vmatpush1.msra.mxu0 0.0
        %5079 = vmatprep.subr.mxu0 0.0
        %5080 = vmatpush1.msra.mxu0 0.0
        %5081 = vmatprep.subr.mxu0 0.0
        %5082 = vmatpush1.msra.mxu0 0.0
        %5083 = vmatprep.subr.mxu0 0.0
        %5084 = vmatpush1.msra.mxu0 0.0
        %5085 = vmatprep.subr.mxu0 0.0
        %5086 = vmatpush1.msra.mxu0 0.0
        %5087 = vmatprep.subr.mxu0 0.0
        %5088 = vmatpush1.msra.mxu0 0.0
        %5089 = vmatprep.subr.mxu0 0.0
        %5090 = vmatpush1.msra.mxu0 0.0
        %5091 = vmatprep.subr.mxu0 0.0
        %5092 = vmatpush1.msra.mxu0 0.0
        %5093 = vmatprep.subr.mxu0 0.0
        %5094 = vmatpush1.msra.mxu0 0.0
        %5095 = vmatprep.subr.mxu0 0.0
        %5096 = vmatpush1.msra.mxu0 0.0
        %5097 = vmatprep.subr.mxu0 0.0
        %5098 = vmatpush1.msra.mxu0 0.0
        %5099 = vmatprep.mubr.f32.mxu0 0.0
        %5100 = vmatmul.mubr.f32.gmra.mrb[0].mxu0 %v3045
        %v5101 = vpop.f32.mrb[0].mxu0
        %v5102 = vadd.f32 %v2875, %v5101
        %v5103 = vpop.f32.mrb[0].mxu0
        %v5104 = vadd.f32 %v2879, %v5103
        %5105 = vdwg.mxu0
        %5106 = vmatprep.subr.mxu0 %v2371
        %5107 = vmatpush1.msra.mxu0 %v2370
        %5108 = vmatprep.subr.mxu0 %v2450
        %5109 = vmatpush1.msra.mxu0 %v2449
        %5110 = vmatprep.subr.mxu0 %v2529
        %5111 = vmatpush1.msra.mxu0 %v2528
        %5112 = vmatprep.subr.mxu0 %v2608
        %5113 = vmatpush1.msra.mxu0 %v2607
        %5114 = vmatprep.subr.mxu0 0.0
        %5115 = vmatpush1.msra.mxu0 0.0
        %5116 = vmatprep.subr.mxu0 0.0
        %5117 = vmatpush1.msra.mxu0 0.0
        %5118 = vmatprep.subr.mxu0 0.0
        %5119 = vmatpush1.msra.mxu0 0.0
        %5120 = vmatprep.subr.mxu0 0.0
        %5121 = vmatpush1.msra.mxu0 0.0
        %5122 = vmatprep.subr.mxu0 0.0
        %5123 = vmatpush1.msra.mxu0 0.0
        %5124 = vmatprep.subr.mxu0 0.0
        %5125 = vmatpush1.msra.mxu0 0.0
        %5126 = vmatprep.subr.mxu0 0.0
        %5127 = vmatpush1.msra.mxu0 0.0
        %5128 = vmatprep.subr.mxu0 0.0
        %5129 = vmatpush1.msra.mxu0 0.0
        %5130 = vmatprep.subr.mxu0 0.0
        %5131 = vmatpush1.msra.mxu0 0.0
        %5132 = vmatprep.subr.mxu0 0.0
        %5133 = vmatpush1.msra.mxu0 0.0
        %5134 = vmatprep.subr.mxu0 0.0
        %5135 = vmatpush1.msra.mxu0 0.0
        %5136 = vmatprep.subr.mxu0 0.0
        %5137 = vmatpush1.msra.mxu0 0.0
        %5138 = vmatprep.subr.mxu0 0.0
        %5139 = vmatpush1.msra.mxu0 0.0
        %5140 = vmatprep.subr.mxu0 0.0
        %5141 = vmatpush1.msra.mxu0 0.0
        %5142 = vmatprep.subr.mxu0 0.0
        %5143 = vmatpush1.msra.mxu0 0.0
        %5144 = vmatprep.subr.mxu0 0.0
        %5145 = vmatpush1.msra.mxu0 0.0
        %5146 = vmatprep.subr.mxu0 0.0
        %5147 = vmatpush1.msra.mxu0 0.0
        %5148 = vmatprep.subr.mxu0 0.0
        %5149 = vmatpush1.msra.mxu0 0.0
        %5150 = vmatprep.subr.mxu0 0.0
        %5151 = vmatpush1.msra.mxu0 0.0
        %5152 = vmatprep.subr.mxu0 0.0
        %5153 = vmatpush1.msra.mxu0 0.0
        %5154 = vmatprep.subr.mxu0 0.0
        %5155 = vmatpush1.msra.mxu0 0.0
        %5156 = vmatprep.subr.mxu0 0.0
        %5157 = vmatpush1.msra.mxu0 0.0
        %5158 = vmatprep.subr.mxu0 0.0
        %5159 = vmatpush1.msra.mxu0 0.0
        %5160 = vmatprep.subr.mxu0 0.0
        %5161 = vmatpush1.msra.mxu0 0.0
        %5162 = vmatprep.subr.mxu0 0.0
        %5163 = vmatpush1.msra.mxu0 0.0
        %5164 = vmatprep.subr.mxu0 0.0
        %5165 = vmatpush1.msra.mxu0 0.0
        %5166 = vmatprep.subr.mxu0 0.0
        %5167 = vmatpush1.msra.mxu0 0.0
        %5168 = vmatprep.subr.mxu0 0.0
        %5169 = vmatpush1.msra.mxu0 0.0
        %5170 = vmatprep.mubr.f32.mxu0 0.0
        %5171 = vmatmul.mubr.f32.gmra.mrb[0].mxu0 %v3045
        %v5172 = vpop.f32.mrb[0].mxu0
        %v5173 = vadd.f32 %v2883, %v5172
        %v5174 = vpop.f32.mrb[0].mxu0
        %v5175 = vadd.f32 %v2887, %v5174
        %5176 = vdwg.mxu0
        %5177 = vmatprep.subr.mxu0 %v2373
        %5178 = vmatpush1.msra.mxu0 %v2372
        %5179 = vmatprep.subr.mxu0 %v2452
        %5180 = vmatpush1.msra.mxu0 %v2451
        %5181 = vmatprep.subr.mxu0 %v2531
        %5182 = vmatpush1.msra.mxu0 %v2530
        %5183 = vmatprep.subr.mxu0 %v2610
        %5184 = vmatpush1.msra.mxu0 %v2609
        %5185 = vmatprep.subr.mxu0 0.0
        %5186 = vmatpush1.msra.mxu0 0.0
        %5187 = vmatprep.subr.mxu0 0.0
        %5188 = vmatpush1.msra.mxu0 0.0
        %5189 = vmatprep.subr.mxu0 0.0
        %5190 = vmatpush1.msra.mxu0 0.0
        %5191 = vmatprep.subr.mxu0 0.0
        %5192 = vmatpush1.msra.mxu0 0.0
        %5193 = vmatprep.subr.mxu0 0.0
        %5194 = vmatpush1.msra.mxu0 0.0
        %5195 = vmatprep.subr.mxu0 0.0
        %5196 = vmatpush1.msra.mxu0 0.0
        %5197 = vmatprep.subr.mxu0 0.0
        %5198 = vmatpush1.msra.mxu0 0.0
        %5199 = vmatprep.subr.mxu0 0.0
        %5200 = vmatpush1.msra.mxu0 0.0
        %5201 = vmatprep.subr.mxu0 0.0
        %5202 = vmatpush1.msra.mxu0 0.0
        %5203 = vmatprep.subr.mxu0 0.0
        %5204 = vmatpush1.msra.mxu0 0.0
        %5205 = vmatprep.subr.mxu0 0.0
        %5206 = vmatpush1.msra.mxu0 0.0
        %5207 = vmatprep.subr.mxu0 0.0
        %5208 = vmatpush1.msra.mxu0 0.0
        %5209 = vmatprep.subr.mxu0 0.0
        %5210 = vmatpush1.msra.mxu0 0.0
        %5211 = vmatprep.subr.mxu0 0.0
        %5212 = vmatpush1.msra.mxu0 0.0
        %5213 = vmatprep.subr.mxu0 0.0
        %5214 = vmatpush1.msra.mxu0 0.0
        %5215 = vmatprep.subr.mxu0 0.0
        %5216 = vmatpush1.msra.mxu0 0.0
        %5217 = vmatprep.subr.mxu0 0.0
        %5218 = vmatpush1.msra.mxu0 0.0
        %5219 = vmatprep.subr.mxu0 0.0
        %5220 = vmatpush1.msra.mxu0 0.0
        %5221 = vmatprep.subr.mxu0 0.0
        %5222 = vmatpush1.msra.mxu0 0.0
        %5223 = vmatprep.subr.mxu0 0.0
        %5224 = vmatpush1.msra.mxu0 0.0
        %5225 = vmatprep.subr.mxu0 0.0
        %5226 = vmatpush1.msra.mxu0 0.0
        %5227 = vmatprep.subr.mxu0 0.0
        %5228 = vmatpush1.msra.mxu0 0.0
        %5229 = vmatprep.subr.mxu0 0.0
        %5230 = vmatpush1.msra.mxu0 0.0
        %5231 = vmatprep.subr.mxu0 0.0
        %5232 = vmatpush1.msra.mxu0 0.0
        %5233 = vmatprep.subr.mxu0 0.0
        %5234 = vmatpush1.msra.mxu0 0.0
        %5235 = vmatprep.subr.mxu0 0.0
        %5236 = vmatpush1.msra.mxu0 0.0
        %5237 = vmatprep.subr.mxu0 0.0
        %5238 = vmatpush1.msra.mxu0 0.0
        %5239 = vmatprep.subr.mxu0 0.0
        %5240 = vmatpush1.msra.mxu0 0.0
        %5241 = vmatprep.mubr.f32.mxu0 0.0
        %5242 = vmatmul.mubr.f32.gmra.mrb[0].mxu0 %v3045
        %v5243 = vpop.f32.mrb[0].mxu0
        %v5244 = vadd.f32 %v2891, %v5243
        %v5245 = vpop.f32.mrb[0].mxu0
        %v5246 = vadd.f32 %v2895, %v5245
        %5247 = vdwg.mxu0
        %5248 = vmatprep.subr.mxu0 %v2375
        %5249 = vmatpush1.msra.mxu0 %v2374
        %5250 = vmatprep.subr.mxu0 %v2454
        %5251 = vmatpush1.msra.mxu0 %v2453
        %5252 = vmatprep.subr.mxu0 %v2533
        %5253 = vmatpush1.msra.mxu0 %v2532
        %5254 = vmatprep.subr.mxu0 %v2612
        %5255 = vmatpush1.msra.mxu0 %v2611
        %5256 = vmatprep.subr.mxu0 0.0
        %5257 = vmatpush1.msra.mxu0 0.0
        %5258 = vmatprep.subr.mxu0 0.0
        %5259 = vmatpush1.msra.mxu0 0.0
        %5260 = vmatprep.subr.mxu0 0.0
        %5261 = vmatpush1.msra.mxu0 0.0
        %5262 = vmatprep.subr.mxu0 0.0
        %5263 = vmatpush1.msra.mxu0 0.0
        %5264 = vmatprep.subr.mxu0 0.0
        %5265 = vmatpush1.msra.mxu0 0.0
        %5266 = vmatprep.subr.mxu0 0.0
        %5267 = vmatpush1.msra.mxu0 0.0
        %5268 = vmatprep.subr.mxu0 0.0
        %5269 = vmatpush1.msra.mxu0 0.0
        %5270 = vmatprep.subr.mxu0 0.0
        %5271 = vmatpush1.msra.mxu0 0.0
        %5272 = vmatprep.subr.mxu0 0.0
        %5273 = vmatpush1.msra.mxu0 0.0
        %5274 = vmatprep.subr.mxu0 0.0
        %5275 = vmatpush1.msra.mxu0 0.0
        %5276 = vmatprep.subr.mxu0 0.0
        %5277 = vmatpush1.msra.mxu0 0.0
        %5278 = vmatprep.subr.mxu0 0.0
        %5279 = vmatpush1.msra.mxu0 0.0
        %5280 = vmatprep.subr.mxu0 0.0
        %5281 = vmatpush1.msra.mxu0 0.0
        %5282 = vmatprep.subr.mxu0 0.0
        %5283 = vmatpush1.msra.mxu0 0.0
        %5284 = vmatprep.subr.mxu0 0.0
        %5285 = vmatpush1.msra.mxu0 0.0
        %5286 = vmatprep.subr.mxu0 0.0
        %5287 = vmatpush1.msra.mxu0 0.0
        %5288 = vmatprep.subr.mxu0 0.0
        %5289 = vmatpush1.msra.mxu0 0.0
        %5290 = vmatprep.subr.mxu0 0.0
        %5291 = vmatpush1.msra.mxu0 0.0
        %5292 = vmatprep.subr.mxu0 0.0
        %5293 = vmatpush1.msra.mxu0 0.0
        %5294 = vmatprep.subr.mxu0 0.0
        %5295 = vmatpush1.msra.mxu0 0.0
        %5296 = vmatprep.subr.mxu0 0.0
        %5297 = vmatpush1.msra.mxu0 0.0
        %5298 = vmatprep.subr.mxu0 0.0
        %5299 = vmatpush1.msra.mxu0 0.0
        %5300 = vmatprep.subr.mxu0 0.0
        %5301 = vmatpush1.msra.mxu0 0.0
        %5302 = vmatprep.subr.mxu0 0.0
        %5303 = vmatpush1.msra.mxu0 0.0
        %5304 = vmatprep.subr.mxu0 0.0
        %5305 = vmatpush1.msra.mxu0 0.0
        %5306 = vmatprep.subr.mxu0 0.0
        %5307 = vmatpush1.msra.mxu0 0.0
        %5308 = vmatprep.subr.mxu0 0.0
        %5309 = vmatpush1.msra.mxu0 0.0
        %5310 = vmatprep.subr.mxu0 0.0
        %5311 = vmatpush1.msra.mxu0 0.0
        %5312 = vmatprep.mubr.f32.mxu0 0.0
        %5313 = vmatmul.mubr.f32.gmra.mrb[0].mxu0 %v3045
        %v5314 = vpop.f32.mrb[0].mxu0
        %v5315 = vadd.f32 %v2899, %v5314
        %v5316 = vpop.f32.mrb[0].mxu0
        %v5317 = vadd.f32 %v2903, %v5316
        %5318 = vdwg.mxu0
        %5319 = vmatprep.subr.mxu0 %v2377
        %5320 = vmatpush1.msra.mxu0 %v2376
        %5321 = vmatprep.subr.mxu0 %v2456
        %5322 = vmatpush1.msra.mxu0 %v2455
        %5323 = vmatprep.subr.mxu0 %v2535
        %5324 = vmatpush1.msra.mxu0 %v2534
        %5325 = vmatprep.subr.mxu0 %v2614
        %5326 = vmatpush1.msra.mxu0 %v2613
        %5327 = vmatprep.subr.mxu0 0.0
        %5328 = vmatpush1.msra.mxu0 0.0
        %5329 = vmatprep.subr.mxu0 0.0
        %5330 = vmatpush1.msra.mxu0 0.0
        %5331 = vmatprep.subr.mxu0 0.0
        %5332 = vmatpush1.msra.mxu0 0.0
        %5333 = vmatprep.subr.mxu0 0.0
        %5334 = vmatpush1.msra.mxu0 0.0
        %5335 = vmatprep.subr.mxu0 0.0
        %5336 = vmatpush1.msra.mxu0 0.0
        %5337 = vmatprep.subr.mxu0 0.0
        %5338 = vmatpush1.msra.mxu0 0.0
        %5339 = vmatprep.subr.mxu0 0.0
        %5340 = vmatpush1.msra.mxu0 0.0
        %5341 = vmatprep.subr.mxu0 0.0
        %5342 = vmatpush1.msra.mxu0 0.0
        %5343 = vmatprep.subr.mxu0 0.0
        %5344 = vmatpush1.msra.mxu0 0.0
        %5345 = vmatprep.subr.mxu0 0.0
        %5346 = vmatpush1.msra.mxu0 0.0
        %5347 = vmatprep.subr.mxu0 0.0
        %5348 = vmatpush1.msra.mxu0 0.0
        %5349 = vmatprep.subr.mxu0 0.0
        %5350 = vmatpush1.msra.mxu0 0.0
        %5351 = vmatprep.subr.mxu0 0.0
        %5352 = vmatpush1.msra.mxu0 0.0
        %5353 = vmatprep.subr.mxu0 0.0
        %5354 = vmatpush1.msra.mxu0 0.0
        %5355 = vmatprep.subr.mxu0 0.0
        %5356 = vmatpush1.msra.mxu0 0.0
        %5357 = vmatprep.subr.mxu0 0.0
        %5358 = vmatpush1.msra.mxu0 0.0
        %5359 = vmatprep.subr.mxu0 0.0
        %5360 = vmatpush1.msra.mxu0 0.0
        %5361 = vmatprep.subr.mxu0 0.0
        %5362 = vmatpush1.msra.mxu0 0.0
        %5363 = vmatprep.subr.mxu0 0.0
        %5364 = vmatpush1.msra.mxu0 0.0
        %5365 = vmatprep.subr.mxu0 0.0
        %5366 = vmatpush1.msra.mxu0 0.0
        %5367 = vmatprep.subr.mxu0 0.0
        %5368 = vmatpush1.msra.mxu0 0.0
        %5369 = vmatprep.subr.mxu0 0.0
        %5370 = vmatpush1.msra.mxu0 0.0
        %5371 = vmatprep.subr.mxu0 0.0
        %5372 = vmatpush1.msra.mxu0 0.0
        %5373 = vmatprep.subr.mxu0 0.0
        %5374 = vmatpush1.msra.mxu0 0.0
        %5375 = vmatprep.subr.mxu0 0.0
        %5376 = vmatpush1.msra.mxu0 0.0
        %5377 = vmatprep.subr.mxu0 0.0
        %5378 = vmatpush1.msra.mxu0 0.0
        %5379 = vmatprep.subr.mxu0 0.0
        %5380 = vmatpush1.msra.mxu0 0.0
        %5381 = vmatprep.subr.mxu0 0.0
        %5382 = vmatpush1.msra.mxu0 0.0
        %5383 = vmatprep.mubr.f32.mxu0 0.0
        %5384 = vmatmul.mubr.f32.gmra.mrb[0].mxu0 %v3045
        %v5385 = vpop.f32.mrb[0].mxu0
        %v5386 = vadd.f32 %v2907, %v5385
        %v5387 = vpop.f32.mrb[0].mxu0
        %v5388 = vadd.f32 %v2911, %v5387
        %5389 = vdwg.mxu0
        %5390 = vmatprep.subr.mxu0 %v2379
        %5391 = vmatpush1.msra.mxu0 %v2378
        %5392 = vmatprep.subr.mxu0 %v2458
        %5393 = vmatpush1.msra.mxu0 %v2457
        %5394 = vmatprep.subr.mxu0 %v2537
        %5395 = vmatpush1.msra.mxu0 %v2536
        %5396 = vmatprep.subr.mxu0 %v2616
        %5397 = vmatpush1.msra.mxu0 %v2615
        %5398 = vmatprep.subr.mxu0 0.0
        %5399 = vmatpush1.msra.mxu0 0.0
        %5400 = vmatprep.subr.mxu0 0.0
        %5401 = vmatpush1.msra.mxu0 0.0
        %5402 = vmatprep.subr.mxu0 0.0
        %5403 = vmatpush1.msra.mxu0 0.0
        %5404 = vmatprep.subr.mxu0 0.0
        %5405 = vmatpush1.msra.mxu0 0.0
        %5406 = vmatprep.subr.mxu0 0.0
        %5407 = vmatpush1.msra.mxu0 0.0
        %5408 = vmatprep.subr.mxu0 0.0
        %5409 = vmatpush1.msra.mxu0 0.0
        %5410 = vmatprep.subr.mxu0 0.0
        %5411 = vmatpush1.msra.mxu0 0.0
        %5412 = vmatprep.subr.mxu0 0.0
        %5413 = vmatpush1.msra.mxu0 0.0
        %5414 = vmatprep.subr.mxu0 0.0
        %5415 = vmatpush1.msra.mxu0 0.0
        %5416 = vmatprep.subr.mxu0 0.0
        %5417 = vmatpush1.msra.mxu0 0.0
        %5418 = vmatprep.subr.mxu0 0.0
        %5419 = vmatpush1.msra.mxu0 0.0
        %5420 = vmatprep.subr.mxu0 0.0
        %5421 = vmatpush1.msra.mxu0 0.0
        %5422 = vmatprep.subr.mxu0 0.0
        %5423 = vmatpush1.msra.mxu0 0.0
        %5424 = vmatprep.subr.mxu0 0.0
        %5425 = vmatpush1.msra.mxu0 0.0
        %5426 = vmatprep.subr.mxu0 0.0
        %5427 = vmatpush1.msra.mxu0 0.0
        %5428 = vmatprep.subr.mxu0 0.0
        %5429 = vmatpush1.msra.mxu0 0.0
        %5430 = vmatprep.subr.mxu0 0.0
        %5431 = vmatpush1.msra.mxu0 0.0
        %5432 = vmatprep.subr.mxu0 0.0
        %5433 = vmatpush1.msra.mxu0 0.0
        %5434 = vmatprep.subr.mxu0 0.0
        %5435 = vmatpush1.msra.mxu0 0.0
        %5436 = vmatprep.subr.mxu0 0.0
        %5437 = vmatpush1.msra.mxu0 0.0
        %5438 = vmatprep.subr.mxu0 0.0
        %5439 = vmatpush1.msra.mxu0 0.0
        %5440 = vmatprep.subr.mxu0 0.0
        %5441 = vmatpush1.msra.mxu0 0.0
        %5442 = vmatprep.subr.mxu0 0.0
        %5443 = vmatpush1.msra.mxu0 0.0
        %5444 = vmatprep.subr.mxu0 0.0
        %5445 = vmatpush1.msra.mxu0 0.0
        %5446 = vmatprep.subr.mxu0 0.0
        %5447 = vmatpush1.msra.mxu0 0.0
        %5448 = vmatprep.subr.mxu0 0.0
        %5449 = vmatpush1.msra.mxu0 0.0
        %5450 = vmatprep.subr.mxu0 0.0
        %5451 = vmatpush1.msra.mxu0 0.0
        %5452 = vmatprep.subr.mxu0 0.0
        %5453 = vmatpush1.msra.mxu0 0.0
        %5454 = vmatprep.mubr.f32.mxu0 0.0
        %5455 = vmatmul.mubr.f32.gmra.mrb[0].mxu0 %v3045
        %v5456 = vpop.f32.mrb[0].mxu0
        %v5457 = vadd.f32 %v2915, %v5456
        %v5458 = vpop.f32.mrb[0].mxu0
        %v5459 = vadd.f32 %v2919, %v5458
        %5460 = vdwg.mxu0
        %5461 = vmatprep.subr.mxu0 %v2381
        %5462 = vmatpush1.msra.mxu0 %v2380
        %5463 = vmatprep.subr.mxu0 %v2460
        %5464 = vmatpush1.msra.mxu0 %v2459
        %5465 = vmatprep.subr.mxu0 %v2539
        %5466 = vmatpush1.msra.mxu0 %v2538
        %5467 = vmatprep.subr.mxu0 %v2618
        %5468 = vmatpush1.msra.mxu0 %v2617
        %5469 = vmatprep.subr.mxu0 0.0
        %5470 = vmatpush1.msra.mxu0 0.0
        %5471 = vmatprep.subr.mxu0 0.0
        %5472 = vmatpush1.msra.mxu0 0.0
        %5473 = vmatprep.subr.mxu0 0.0
        %5474 = vmatpush1.msra.mxu0 0.0
        %5475 = vmatprep.subr.mxu0 0.0
        %5476 = vmatpush1.msra.mxu0 0.0
        %5477 = vmatprep.subr.mxu0 0.0
        %5478 = vmatpush1.msra.mxu0 0.0
        %5479 = vmatprep.subr.mxu0 0.0
        %5480 = vmatpush1.msra.mxu0 0.0
        %5481 = vmatprep.subr.mxu0 0.0
        %5482 = vmatpush1.msra.mxu0 0.0
        %5483 = vmatprep.subr.mxu0 0.0
        %5484 = vmatpush1.msra.mxu0 0.0
        %5485 = vmatprep.subr.mxu0 0.0
        %5486 = vmatpush1.msra.mxu0 0.0
        %5487 = vmatprep.subr.mxu0 0.0
        %5488 = vmatpush1.msra.mxu0 0.0
        %5489 = vmatprep.subr.mxu0 0.0
        %5490 = vmatpush1.msra.mxu0 0.0
        %5491 = vmatprep.subr.mxu0 0.0
        %5492 = vmatpush1.msra.mxu0 0.0
        %5493 = vmatprep.subr.mxu0 0.0
        %5494 = vmatpush1.msra.mxu0 0.0
        %5495 = vmatprep.subr.mxu0 0.0
        %5496 = vmatpush1.msra.mxu0 0.0
        %5497 = vmatprep.subr.mxu0 0.0
        %5498 = vmatpush1.msra.mxu0 0.0
        %5499 = vmatprep.subr.mxu0 0.0
        %5500 = vmatpush1.msra.mxu0 0.0
        %5501 = vmatprep.subr.mxu0 0.0
        %5502 = vmatpush1.msra.mxu0 0.0
        %5503 = vmatprep.subr.mxu0 0.0
        %5504 = vmatpush1.msra.mxu0 0.0
        %5505 = vmatprep.subr.mxu0 0.0
        %5506 = vmatpush1.msra.mxu0 0.0
        %5507 = vmatprep.subr.mxu0 0.0
        %5508 = vmatpush1.msra.mxu0 0.0
        %5509 = vmatprep.subr.mxu0 0.0
        %5510 = vmatpush1.msra.mxu0 0.0
        %5511 = vmatprep.subr.mxu0 0.0
        %5512 = vmatpush1.msra.mxu0 0.0
        %5513 = vmatprep.subr.mxu0 0.0
        %5514 = vmatpush1.msra.mxu0 0.0
        %5515 = vmatprep.subr.mxu0 0.0
        %5516 = vmatpush1.msra.mxu0 0.0
        %5517 = vmatprep.subr.mxu0 0.0
        %5518 = vmatpush1.msra.mxu0 0.0
        %5519 = vmatprep.subr.mxu0 0.0
        %5520 = vmatpush1.msra.mxu0 0.0
        %5521 = vmatprep.subr.mxu0 0.0
        %5522 = vmatpush1.msra.mxu0 0.0
        %5523 = vmatprep.subr.mxu0 0.0
        %5524 = vmatpush1.msra.mxu0 0.0
        %5525 = vmatprep.mubr.f32.mxu0 0.0
        %5526 = vmatmul.mubr.f32.gmra.mrb[0].mxu0 %v3045
        %v5527 = vpop.f32.mrb[0].mxu0
        %v5528 = vadd.f32 %v2923, %v5527
        %v5529 = vpop.f32.mrb[0].mxu0
        %v5530 = vadd.f32 %v2927, %v5529
        %5531 = vdwg.mxu0
        %5532 = vmatprep.subr.mxu0 %v2383
        %5533 = vmatpush1.msra.mxu0 %v2382
        %5534 = vmatprep.subr.mxu0 %v2462
        %5535 = vmatpush1.msra.mxu0 %v2461
        %5536 = vmatprep.subr.mxu0 %v2541
        %5537 = vmatpush1.msra.mxu0 %v2540
        %5538 = vmatprep.subr.mxu0 %v2620
        %5539 = vmatpush1.msra.mxu0 %v2619
        %5540 = vmatprep.subr.mxu0 0.0
        %5541 = vmatpush1.msra.mxu0 0.0
        %5542 = vmatprep.subr.mxu0 0.0
        %5543 = vmatpush1.msra.mxu0 0.0
        %5544 = vmatprep.subr.mxu0 0.0
        %5545 = vmatpush1.msra.mxu0 0.0
        %5546 = vmatprep.subr.mxu0 0.0
        %5547 = vmatpush1.msra.mxu0 0.0
        %5548 = vmatprep.subr.mxu0 0.0
        %5549 = vmatpush1.msra.mxu0 0.0
        %5550 = vmatprep.subr.mxu0 0.0
        %5551 = vmatpush1.msra.mxu0 0.0
        %5552 = vmatprep.subr.mxu0 0.0
        %5553 = vmatpush1.msra.mxu0 0.0
        %5554 = vmatprep.subr.mxu0 0.0
        %5555 = vmatpush1.msra.mxu0 0.0
        %5556 = vmatprep.subr.mxu0 0.0
        %5557 = vmatpush1.msra.mxu0 0.0
        %5558 = vmatprep.subr.mxu0 0.0
        %5559 = vmatpush1.msra.mxu0 0.0
        %5560 = vmatprep.subr.mxu0 0.0
        %5561 = vmatpush1.msra.mxu0 0.0
        %5562 = vmatprep.subr.mxu0 0.0
        %5563 = vmatpush1.msra.mxu0 0.0
        %5564 = vmatprep.subr.mxu0 0.0
        %5565 = vmatpush1.msra.mxu0 0.0
        %5566 = vmatprep.subr.mxu0 0.0
        %5567 = vmatpush1.msra.mxu0 0.0
        %5568 = vmatprep.subr.mxu0 0.0
        %5569 = vmatpush1.msra.mxu0 0.0
        %5570 = vmatprep.subr.mxu0 0.0
        %5571 = vmatpush1.msra.mxu0 0.0
        %5572 = vmatprep.subr.mxu0 0.0
        %5573 = vmatpush1.msra.mxu0 0.0
        %5574 = vmatprep.subr.mxu0 0.0
        %5575 = vmatpush1.msra.mxu0 0.0
        %5576 = vmatprep.subr.mxu0 0.0
        %5577 = vmatpush1.msra.mxu0 0.0
        %5578 = vmatprep.subr.mxu0 0.0
        %5579 = vmatpush1.msra.mxu0 0.0
        %5580 = vmatprep.subr.mxu0 0.0
        %5581 = vmatpush1.msra.mxu0 0.0
        %5582 = vmatprep.subr.mxu0 0.0
        %5583 = vmatpush1.msra.mxu0 0.0
        %5584 = vmatprep.subr.mxu0 0.0
        %5585 = vmatpush1.msra.mxu0 0.0
        %5586 = vmatprep.subr.mxu0 0.0
        %5587 = vmatpush1.msra.mxu0 0.0
        %5588 = vmatprep.subr.mxu0 0.0
        %5589 = vmatpush1.msra.mxu0 0.0
        %5590 = vmatprep.subr.mxu0 0.0
        %5591 = vmatpush1.msra.mxu0 0.0
        %5592 = vmatprep.subr.mxu0 0.0
        %5593 = vmatpush1.msra.mxu0 0.0
        %5594 = vmatprep.subr.mxu0 0.0
        %5595 = vmatpush1.msra.mxu0 0.0
        %5596 = vmatprep.mubr.f32.mxu0 0.0
        %5597 = vmatmul.mubr.f32.gmra.mrb[0].mxu0 %v3045
        %v5598 = vpop.f32.mrb[0].mxu0
        %v5599 = vadd.f32 %v2931, %v5598
        %v5600 = vpop.f32.mrb[0].mxu0
        %v5601 = vadd.f32 %v2935, %v5600
        %5602 = vdwg.mxu0
        %5603 = vmatprep.subr.mxu0 %v2385
        %5604 = vmatpush1.msra.mxu0 %v2384
        %5605 = vmatprep.subr.mxu0 %v2464
        %5606 = vmatpush1.msra.mxu0 %v2463
        %5607 = vmatprep.subr.mxu0 %v2543
        %5608 = vmatpush1.msra.mxu0 %v2542
        %5609 = vmatprep.subr.mxu0 %v2622
        %5610 = vmatpush1.msra.mxu0 %v2621
        %5611 = vmatprep.subr.mxu0 0.0
        %5612 = vmatpush1.msra.mxu0 0.0
        %5613 = vmatprep.subr.mxu0 0.0
        %5614 = vmatpush1.msra.mxu0 0.0
        %5615 = vmatprep.subr.mxu0 0.0
        %5616 = vmatpush1.msra.mxu0 0.0
        %5617 = vmatprep.subr.mxu0 0.0
        %5618 = vmatpush1.msra.mxu0 0.0
        %5619 = vmatprep.subr.mxu0 0.0
        %5620 = vmatpush1.msra.mxu0 0.0
        %5621 = vmatprep.subr.mxu0 0.0
        %5622 = vmatpush1.msra.mxu0 0.0
        %5623 = vmatprep.subr.mxu0 0.0
        %5624 = vmatpush1.msra.mxu0 0.0
        %5625 = vmatprep.subr.mxu0 0.0
        %5626 = vmatpush1.msra.mxu0 0.0
        %5627 = vmatprep.subr.mxu0 0.0
        %5628 = vmatpush1.msra.mxu0 0.0
        %5629 = vmatprep.subr.mxu0 0.0
        %5630 = vmatpush1.msra.mxu0 0.0
        %5631 = vmatprep.subr.mxu0 0.0
        %5632 = vmatpush1.msra.mxu0 0.0
        %5633 = vmatprep.subr.mxu0 0.0
        %5634 = vmatpush1.msra.mxu0 0.0
        %5635 = vmatprep.subr.mxu0 0.0
        %5636 = vmatpush1.msra.mxu0 0.0
        %5637 = vmatprep.subr.mxu0 0.0
        %5638 = vmatpush1.msra.mxu0 0.0
        %5639 = vmatprep.subr.mxu0 0.0
        %5640 = vmatpush1.msra.mxu0 0.0
        %5641 = vmatprep.subr.mxu0 0.0
        %5642 = vmatpush1.msra.mxu0 0.0
        %5643 = vmatprep.subr.mxu0 0.0
        %5644 = vmatpush1.msra.mxu0 0.0
        %5645 = vmatprep.subr.mxu0 0.0
        %5646 = vmatpush1.msra.mxu0 0.0
        %5647 = vmatprep.subr.mxu0 0.0
        %5648 = vmatpush1.msra.mxu0 0.0
        %5649 = vmatprep.subr.mxu0 0.0
        %5650 = vmatpush1.msra.mxu0 0.0
        %5651 = vmatprep.subr.mxu0 0.0
        %5652 = vmatpush1.msra.mxu0 0.0
        %5653 = vmatprep.subr.mxu0 0.0
        %5654 = vmatpush1.msra.mxu0 0.0
        %5655 = vmatprep.subr.mxu0 0.0
        %5656 = vmatpush1.msra.mxu0 0.0
        %5657 = vmatprep.subr.mxu0 0.0
        %5658 = vmatpush1.msra.mxu0 0.0
        %5659 = vmatprep.subr.mxu0 0.0
        %5660 = vmatpush1.msra.mxu0 0.0
        %5661 = vmatprep.subr.mxu0 0.0
        %5662 = vmatpush1.msra.mxu0 0.0
        %5663 = vmatprep.subr.mxu0 0.0
        %5664 = vmatpush1.msra.mxu0 0.0
        %5665 = vmatprep.subr.mxu0 0.0
        %5666 = vmatpush1.msra.mxu0 0.0
        %5667 = vmatprep.mubr.f32.mxu0 0.0
        %5668 = vmatmul.mubr.f32.gmra.mrb[0].mxu0 %v3045
        %v5669 = vpop.f32.mrb[0].mxu0
        %v5670 = vadd.f32 %v2939, %v5669
        %v5671 = vpop.f32.mrb[0].mxu0
        %v5672 = vadd.f32 %v2943, %v5671
        %5673 = vdwg.mxu0
        %5674 = vmatprep.subr.mxu0 %v2387
        %5675 = vmatpush1.msra.mxu0 %v2386
        %5676 = vmatprep.subr.mxu0 %v2466
        %5677 = vmatpush1.msra.mxu0 %v2465
        %5678 = vmatprep.subr.mxu0 %v2545
        %5679 = vmatpush1.msra.mxu0 %v2544
        %5680 = vmatprep.subr.mxu0 %v2624
        %5681 = vmatpush1.msra.mxu0 %v2623
        %5682 = vmatprep.subr.mxu0 0.0
        %5683 = vmatpush1.msra.mxu0 0.0
        %5684 = vmatprep.subr.mxu0 0.0
        %5685 = vmatpush1.msra.mxu0 0.0
        %5686 = vmatprep.subr.mxu0 0.0
        %5687 = vmatpush1.msra.mxu0 0.0
        %5688 = vmatprep.subr.mxu0 0.0
        %5689 = vmatpush1.msra.mxu0 0.0
        %5690 = vmatprep.subr.mxu0 0.0
        %5691 = vmatpush1.msra.mxu0 0.0
        %5692 = vmatprep.subr.mxu0 0.0
        %5693 = vmatpush1.msra.mxu0 0.0
        %5694 = vmatprep.subr.mxu0 0.0
        %5695 = vmatpush1.msra.mxu0 0.0
        %5696 = vmatprep.subr.mxu0 0.0
        %5697 = vmatpush1.msra.mxu0 0.0
        %5698 = vmatprep.subr.mxu0 0.0
        %5699 = vmatpush1.msra.mxu0 0.0
        %5700 = vmatprep.subr.mxu0 0.0
        %5701 = vmatpush1.msra.mxu0 0.0
        %5702 = vmatprep.subr.mxu0 0.0
        %5703 = vmatpush1.msra.mxu0 0.0
        %5704 = vmatprep.subr.mxu0 0.0
        %5705 = vmatpush1.msra.mxu0 0.0
        %5706 = vmatprep.subr.mxu0 0.0
        %5707 = vmatpush1.msra.mxu0 0.0
        %5708 = vmatprep.subr.mxu0 0.0
        %5709 = vmatpush1.msra.mxu0 0.0
        %5710 = vmatprep.subr.mxu0 0.0
        %5711 = vmatpush1.msra.mxu0 0.0
        %5712 = vmatprep.subr.mxu0 0.0
        %5713 = vmatpush1.msra.mxu0 0.0
        %5714 = vmatprep.subr.mxu0 0.0
        %5715 = vmatpush1.msra.mxu0 0.0
        %5716 = vmatprep.subr.mxu0 0.0
        %5717 = vmatpush1.msra.mxu0 0.0
        %5718 = vmatprep.subr.mxu0 0.0
        %5719 = vmatpush1.msra.mxu0 0.0
        %5720 = vmatprep.subr.mxu0 0.0
        %5721 = vmatpush1.msra.mxu0 0.0
        %5722 = vmatprep.subr.mxu0 0.0
        %5723 = vmatpush1.msra.mxu0 0.0
        %5724 = vmatprep.subr.mxu0 0.0
        %5725 = vmatpush1.msra.mxu0 0.0
        %5726 = vmatprep.subr.mxu0 0.0
        %5727 = vmatpush1.msra.mxu0 0.0
        %5728 = vmatprep.subr.mxu0 0.0
        %5729 = vmatpush1.msra.mxu0 0.0
        %5730 = vmatprep.subr.mxu0 0.0
        %5731 = vmatpush1.msra.mxu0 0.0
        %5732 = vmatprep.subr.mxu0 0.0
        %5733 = vmatpush1.msra.mxu0 0.0
        %5734 = vmatprep.subr.mxu0 0.0
        %5735 = vmatpush1.msra.mxu0 0.0
        %5736 = vmatprep.subr.mxu0 0.0
        %5737 = vmatpush1.msra.mxu0 0.0
        %5738 = vmatprep.mubr.f32.mxu0 0.0
        %5739 = vmatmul.mubr.f32.gmra.mrb[0].mxu0 %v3045
        %v5740 = vpop.f32.mrb[0].mxu0
        %v5741 = vadd.f32 %v2947, %v5740
        %v5742 = vpop.f32.mrb[0].mxu0
        %v5743 = vadd.f32 %v2951, %v5742
        %5744 = vdwg.mxu0
        %5745 = vmatprep.subr.mxu0 %v2389
        %5746 = vmatpush1.msra.mxu0 %v2388
        %5747 = vmatprep.subr.mxu0 %v2468
        %5748 = vmatpush1.msra.mxu0 %v2467
        %5749 = vmatprep.subr.mxu0 %v2547
        %5750 = vmatpush1.msra.mxu0 %v2546
        %5751 = vmatprep.subr.mxu0 %v2626
        %5752 = vmatpush1.msra.mxu0 %v2625
        %5753 = vmatprep.subr.mxu0 0.0
        %5754 = vmatpush1.msra.mxu0 0.0
        %5755 = vmatprep.subr.mxu0 0.0
        %5756 = vmatpush1.msra.mxu0 0.0
        %5757 = vmatprep.subr.mxu0 0.0
        %5758 = vmatpush1.msra.mxu0 0.0
        %5759 = vmatprep.subr.mxu0 0.0
        %5760 = vmatpush1.msra.mxu0 0.0
        %5761 = vmatprep.subr.mxu0 0.0
        %5762 = vmatpush1.msra.mxu0 0.0
        %5763 = vmatprep.subr.mxu0 0.0
        %5764 = vmatpush1.msra.mxu0 0.0
        %5765 = vmatprep.subr.mxu0 0.0
        %5766 = vmatpush1.msra.mxu0 0.0
        %5767 = vmatprep.subr.mxu0 0.0
        %5768 = vmatpush1.msra.mxu0 0.0
        %5769 = vmatprep.subr.mxu0 0.0
        %5770 = vmatpush1.msra.mxu0 0.0
        %5771 = vmatprep.subr.mxu0 0.0
        %5772 = vmatpush1.msra.mxu0 0.0
        %5773 = vmatprep.subr.mxu0 0.0
        %5774 = vmatpush1.msra.mxu0 0.0
        %5775 = vmatprep.subr.mxu0 0.0
        %5776 = vmatpush1.msra.mxu0 0.0
        %5777 = vmatprep.subr.mxu0 0.0
        %5778 = vmatpush1.msra.mxu0 0.0
        %5779 = vmatprep.subr.mxu0 0.0
        %5780 = vmatpush1.msra.mxu0 0.0
        %5781 = vmatprep.subr.mxu0 0.0
        %5782 = vmatpush1.msra.mxu0 0.0
        %5783 = vmatprep.subr.mxu0 0.0
        %5784 = vmatpush1.msra.mxu0 0.0
        %5785 = vmatprep.subr.mxu0 0.0
        %5786 = vmatpush1.msra.mxu0 0.0
        %5787 = vmatprep.subr.mxu0 0.0
        %5788 = vmatpush1.msra.mxu0 0.0
        %5789 = vmatprep.subr.mxu0 0.0
        %5790 = vmatpush1.msra.mxu0 0.0
        %5791 = vmatprep.subr.mxu0 0.0
        %5792 = vmatpush1.msra.mxu0 0.0
        %5793 = vmatprep.subr.mxu0 0.0
        %5794 = vmatpush1.msra.mxu0 0.0
        %5795 = vmatprep.subr.mxu0 0.0
        %5796 = vmatpush1.msra.mxu0 0.0
        %5797 = vmatprep.subr.mxu0 0.0
        %5798 = vmatpush1.msra.mxu0 0.0
        %5799 = vmatprep.subr.mxu0 0.0
        %5800 = vmatpush1.msra.mxu0 0.0
        %5801 = vmatprep.subr.mxu0 0.0
        %5802 = vmatpush1.msra.mxu0 0.0
        %5803 = vmatprep.subr.mxu0 0.0
        %5804 = vmatpush1.msra.mxu0 0.0
        %5805 = vmatprep.subr.mxu0 0.0
        %5806 = vmatpush1.msra.mxu0 0.0
        %5807 = vmatprep.subr.mxu0 0.0
        %5808 = vmatpush1.msra.mxu0 0.0
        %5809 = vmatprep.mubr.f32.mxu0 0.0
        %5810 = vmatmul.mubr.f32.gmra.mrb[0].mxu0 %v3045
        %v5811 = vpop.f32.mrb[0].mxu0
        %v5812 = vadd.f32 %v2955, %v5811
        %v5813 = vpop.f32.mrb[0].mxu0
        %v5814 = vadd.f32 %v2959, %v5813
        %5815 = vdwg.mxu0
        %5816 = vmatprep.subr.mxu0 0.0
        %5817 = vmatpush1.msra.mxu0 %v2390
        %5818 = vmatprep.subr.mxu0 0.0
        %5819 = vmatpush1.msra.mxu0 %v2469
        %5820 = vmatprep.subr.mxu0 0.0
        %5821 = vmatpush1.msra.mxu0 %v2548
        %5822 = vmatprep.subr.mxu0 0.0
        %5823 = vmatpush1.msra.mxu0 %v2627
        %5824 = vmatprep.subr.mxu0 0.0
        %5825 = vmatpush1.msra.mxu0 0.0
        %5826 = vmatprep.subr.mxu0 0.0
        %5827 = vmatpush1.msra.mxu0 0.0
        %5828 = vmatprep.subr.mxu0 0.0
        %5829 = vmatpush1.msra.mxu0 0.0
        %5830 = vmatprep.subr.mxu0 0.0
        %5831 = vmatpush1.msra.mxu0 0.0
        %5832 = vmatprep.subr.mxu0 0.0
        %5833 = vmatpush1.msra.mxu0 0.0
        %5834 = vmatprep.subr.mxu0 0.0
        %5835 = vmatpush1.msra.mxu0 0.0
        %5836 = vmatprep.subr.mxu0 0.0
        %5837 = vmatpush1.msra.mxu0 0.0
        %5838 = vmatprep.subr.mxu0 0.0
        %5839 = vmatpush1.msra.mxu0 0.0
        %5840 = vmatprep.subr.mxu0 0.0
        %5841 = vmatpush1.msra.mxu0 0.0
        %5842 = vmatprep.subr.mxu0 0.0
        %5843 = vmatpush1.msra.mxu0 0.0
        %5844 = vmatprep.subr.mxu0 0.0
        %5845 = vmatpush1.msra.mxu0 0.0
        %5846 = vmatprep.subr.mxu0 0.0
        %5847 = vmatpush1.msra.mxu0 0.0
        %5848 = vmatprep.subr.mxu0 0.0
        %5849 = vmatpush1.msra.mxu0 0.0
        %5850 = vmatprep.subr.mxu0 0.0
        %5851 = vmatpush1.msra.mxu0 0.0
        %5852 = vmatprep.subr.mxu0 0.0
        %5853 = vmatpush1.msra.mxu0 0.0
        %5854 = vmatprep.subr.mxu0 0.0
        %5855 = vmatpush1.msra.mxu0 0.0
        %5856 = vmatprep.subr.mxu0 0.0
        %5857 = vmatpush1.msra.mxu0 0.0
        %5858 = vmatprep.subr.mxu0 0.0
        %5859 = vmatpush1.msra.mxu0 0.0
        %5860 = vmatprep.subr.mxu0 0.0
        %5861 = vmatpush1.msra.mxu0 0.0
        %5862 = vmatprep.subr.mxu0 0.0
        %5863 = vmatpush1.msra.mxu0 0.0
        %5864 = vmatprep.subr.mxu0 0.0
        %5865 = vmatpush1.msra.mxu0 0.0
        %5866 = vmatprep.subr.mxu0 0.0
        %5867 = vmatpush1.msra.mxu0 0.0
        %5868 = vmatprep.subr.mxu0 0.0
        %5869 = vmatpush1.msra.mxu0 0.0
        %5870 = vmatprep.subr.mxu0 0.0
        %5871 = vmatpush1.msra.mxu0 0.0
        %5872 = vmatprep.subr.mxu0 0.0
        %5873 = vmatpush1.msra.mxu0 0.0
        %5874 = vmatprep.subr.mxu0 0.0
        %5875 = vmatpush1.msra.mxu0 0.0
        %5876 = vmatprep.subr.mxu0 0.0
        %5877 = vmatpush1.msra.mxu0 0.0
        %5878 = vmatprep.subr.mxu0 0.0
        %5879 = vmatpush1.msra.mxu0 0.0
        %5880 = vmatprep.mubr.f32.mxu0 0.0
        %5881 = vmatmul.mubr.f32.gmra.mrb[0].mxu0 %v3045
        %v5882 = vpop.f32.mrb[0].mxu0
        %v5883 = vadd.f32 %v2963, %v5882
        %v5884 = vpop.f32.mrb[0].mxu0
        %5885 = vdwg.mxu0
        %v5965 = vcombine.low %v3114, %v3116
        %v5966 = vcombine.low %v3185, %v3187
        %v5968 = vunpack.c.l.s4 1983009808
        %v5969 = vunpack.c.0.s8 %v5968
        %v5970 = vlaneseq
        %v5971 = vshrl.u32 %v5970, 7
        %v5972 = vsub.s32 %v5969, %v5971
        %v5973 = vrot.slane %v5965, %v5972
        %v5975 = vunpack.c.l.s4 1983009808
        %v5976 = vunpack.c.0.s8 %v5975
        %v5977 = vlaneseq
        %v5978 = vshrl.u32 %v5977, 7
        %v5979 = vsub.s32 %v5976, %v5978
        %v5980 = vrot.slane %v5966, %v5979
        %v5981 = vcombine.low %v5973, %v5980
        %v5982 = vcombine.low %v3256, %v3258
        %v5983 = vcombine.low %v3327, %v3329
        %v5985 = vunpack.c.l.s4 1983009808
        %v5986 = vunpack.c.0.s8 %v5985
        %v5987 = vlaneseq
        %v5988 = vshrl.u32 %v5987, 7
        %v5989 = vsub.s32 %v5986, %v5988
        %v5990 = vrot.slane %v5982, %v5989
        %v5992 = vunpack.c.l.s4 1983009808
        %v5993 = vunpack.c.0.s8 %v5992
        %v5994 = vlaneseq
        %v5995 = vshrl.u32 %v5994, 7
        %v5996 = vsub.s32 %v5993, %v5995
        %v5997 = vrot.slane %v5983, %v5996
        %v5998 = vcombine.low %v5990, %v5997
        %v5999 = vcombine.low %v3398, %v3400
        %v6000 = vcombine.low %v3469, %v3471
        %v6002 = vunpack.c.l.s4 1983009808
        %v6003 = vunpack.c.0.s8 %v6002
        %v6004 = vlaneseq
        %v6005 = vshrl.u32 %v6004, 7
        %v6006 = vsub.s32 %v6003, %v6005
        %v6007 = vrot.slane %v5999, %v6006
        %v6009 = vunpack.c.l.s4 1983009808
        %v6010 = vunpack.c.0.s8 %v6009
        %v6011 = vlaneseq
        %v6012 = vshrl.u32 %v6011, 7
        %v6013 = vsub.s32 %v6010, %v6012
        %v6014 = vrot.slane %v6000, %v6013
        %v6015 = vcombine.low %v6007, %v6014
        %v6016 = vcombine.low %v3540, %v3542
        %v6017 = vcombine.low %v3611, %v3613
        %v6019 = vunpack.c.l.s4 1983009808
        %v6020 = vunpack.c.0.s8 %v6019
        %v6021 = vlaneseq
        %v6022 = vshrl.u32 %v6021, 7
        %v6023 = vsub.s32 %v6020, %v6022
        %v6024 = vrot.slane %v6016, %v6023
        %v6026 = vunpack.c.l.s4 1983009808
        %v6027 = vunpack.c.0.s8 %v6026
        %v6028 = vlaneseq
        %v6029 = vshrl.u32 %v6028, 7
        %v6030 = vsub.s32 %v6027, %v6029
        %v6031 = vrot.slane %v6017, %v6030
        %v6032 = vcombine.low %v6024, %v6031
        %v6033 = vcombine.low %v3682, %v3684
        %v6034 = vcombine.low %v3753, %v3755
        %v6036 = vunpack.c.l.s4 1983009808
        %v6037 = vunpack.c.0.s8 %v6036
        %v6038 = vlaneseq
        %v6039 = vshrl.u32 %v6038, 7
        %v6040 = vsub.s32 %v6037, %v6039
        %v6041 = vrot.slane %v6033, %v6040
        %v6043 = vunpack.c.l.s4 1983009808
        %v6044 = vunpack.c.0.s8 %v6043
        %v6045 = vlaneseq
        %v6046 = vshrl.u32 %v6045, 7
        %v6047 = vsub.s32 %v6044, %v6046
        %v6048 = vrot.slane %v6034, %v6047
        %v6049 = vcombine.low %v6041, %v6048
        %v6050 = vcombine.low %v3824, %v3826
        %v6051 = vcombine.low %v3895, %v3897
        %v6053 = vunpack.c.l.s4 1983009808
        %v6054 = vunpack.c.0.s8 %v6053
        %v6055 = vlaneseq
        %v6056 = vshrl.u32 %v6055, 7
        %v6057 = vsub.s32 %v6054, %v6056
        %v6058 = vrot.slane %v6050, %v6057
        %v6060 = vunpack.c.l.s4 1983009808
        %v6061 = vunpack.c.0.s8 %v6060
        %v6062 = vlaneseq
        %v6063 = vshrl.u32 %v6062, 7
        %v6064 = vsub.s32 %v6061, %v6063
        %v6065 = vrot.slane %v6051, %v6064
        %v6066 = vcombine.low %v6058, %v6065
        %v6067 = vcombine.low %v3966, %v3968
        %v6068 = vcombine.low %v4037, %v4039
        %v6070 = vunpack.c.l.s4 1983009808
        %v6071 = vunpack.c.0.s8 %v6070
        %v6072 = vlaneseq
        %v6073 = vshrl.u32 %v6072, 7
        %v6074 = vsub.s32 %v6071, %v6073
        %v6075 = vrot.slane %v6067, %v6074
        %v6077 = vunpack.c.l.s4 1983009808
        %v6078 = vunpack.c.0.s8 %v6077
        %v6079 = vlaneseq
        %v6080 = vshrl.u32 %v6079, 7
        %v6081 = vsub.s32 %v6078, %v6080
        %v6082 = vrot.slane %v6068, %v6081
        %v6083 = vcombine.low %v6075, %v6082
        %v6084 = vcombine.low %v4108, %v4110
        %v6085 = vcombine.low %v4179, %v4181
        %v6087 = vunpack.c.l.s4 1983009808
        %v6088 = vunpack.c.0.s8 %v6087
        %v6089 = vlaneseq
        %v6090 = vshrl.u32 %v6089, 7
        %v6091 = vsub.s32 %v6088, %v6090
        %v6092 = vrot.slane %v6084, %v6091
        %v6094 = vunpack.c.l.s4 1983009808
        %v6095 = vunpack.c.0.s8 %v6094
        %v6096 = vlaneseq
        %v6097 = vshrl.u32 %v6096, 7
        %v6098 = vsub.s32 %v6095, %v6097
        %v6099 = vrot.slane %v6085, %v6098
        %v6100 = vcombine.low %v6092, %v6099
        %v6101 = vcombine.low %v4250, %v4252
        %v6102 = vcombine.low %v4321, %v4323
        %v6104 = vunpack.c.l.s4 1983009808
        %v6105 = vunpack.c.0.s8 %v6104
        %v6106 = vlaneseq
        %v6107 = vshrl.u32 %v6106, 7
        %v6108 = vsub.s32 %v6105, %v6107
        %v6109 = vrot.slane %v6101, %v6108
        %v6111 = vunpack.c.l.s4 1983009808
        %v6112 = vunpack.c.0.s8 %v6111
        %v6113 = vlaneseq
        %v6114 = vshrl.u32 %v6113, 7
        %v6115 = vsub.s32 %v6112, %v6114
        %v6116 = vrot.slane %v6102, %v6115
        %v6117 = vcombine.low %v6109, %v6116
        %v6118 = vcombine.low %v4392, %v4394
        %v6119 = vcombine.low %v4463, %v4465
        %v6121 = vunpack.c.l.s4 1983009808
        %v6122 = vunpack.c.0.s8 %v6121
        %v6123 = vlaneseq
        %v6124 = vshrl.u32 %v6123, 7
        %v6125 = vsub.s32 %v6122, %v6124
        %v6126 = vrot.slane %v6118, %v6125
        %v6128 = vunpack.c.l.s4 1983009808
        %v6129 = vunpack.c.0.s8 %v6128
        %v6130 = vlaneseq
        %v6131 = vshrl.u32 %v6130, 7
        %v6132 = vsub.s32 %v6129, %v6131
        %v6133 = vrot.slane %v6119, %v6132
        %v6134 = vcombine.low %v6126, %v6133
        %v6135 = vcombine.low %v4534, %v4536
        %v6136 = vcombine.low %v4605, %v4607
        %v6138 = vunpack.c.l.s4 1983009808
        %v6139 = vunpack.c.0.s8 %v6138
        %v6140 = vlaneseq
        %v6141 = vshrl.u32 %v6140, 7
        %v6142 = vsub.s32 %v6139, %v6141
        %v6143 = vrot.slane %v6135, %v6142
        %v6145 = vunpack.c.l.s4 1983009808
        %v6146 = vunpack.c.0.s8 %v6145
        %v6147 = vlaneseq
        %v6148 = vshrl.u32 %v6147, 7
        %v6149 = vsub.s32 %v6146, %v6148
        %v6150 = vrot.slane %v6136, %v6149
        %v6151 = vcombine.low %v6143, %v6150
        %v6152 = vcombine.low %v4676, %v4678
        %v6153 = vcombine.low %v4747, %v4749
        %v6155 = vunpack.c.l.s4 1983009808
        %v6156 = vunpack.c.0.s8 %v6155
        %v6157 = vlaneseq
        %v6158 = vshrl.u32 %v6157, 7
        %v6159 = vsub.s32 %v6156, %v6158
        %v6160 = vrot.slane %v6152, %v6159
        %v6162 = vunpack.c.l.s4 1983009808
        %v6163 = vunpack.c.0.s8 %v6162
        %v6164 = vlaneseq
        %v6165 = vshrl.u32 %v6164, 7
        %v6166 = vsub.s32 %v6163, %v6165
        %v6167 = vrot.slane %v6153, %v6166
        %v6168 = vcombine.low %v6160, %v6167
        %v6169 = vcombine.low %v4818, %v4820
        %v6170 = vcombine.low %v4889, %v4891
        %v6172 = vunpack.c.l.s4 1983009808
        %v6173 = vunpack.c.0.s8 %v6172
        %v6174 = vlaneseq
        %v6175 = vshrl.u32 %v6174, 7
        %v6176 = vsub.s32 %v6173, %v6175
        %v6177 = vrot.slane %v6169, %v6176
        %v6179 = vunpack.c.l.s4 1983009808
        %v6180 = vunpack.c.0.s8 %v6179
        %v6181 = vlaneseq
        %v6182 = vshrl.u32 %v6181, 7
        %v6183 = vsub.s32 %v6180, %v6182
        %v6184 = vrot.slane %v6170, %v6183
        %v6185 = vcombine.low %v6177, %v6184
        %v6186 = vcombine.low %v4960, %v4962
        %v6187 = vcombine.low %v5031, %v5033
        %v6189 = vunpack.c.l.s4 1983009808
        %v6190 = vunpack.c.0.s8 %v6189
        %v6191 = vlaneseq
        %v6192 = vshrl.u32 %v6191, 7
        %v6193 = vsub.s32 %v6190, %v6192
        %v6194 = vrot.slane %v6186, %v6193
        %v6196 = vunpack.c.l.s4 1983009808
        %v6197 = vunpack.c.0.s8 %v6196
        %v6198 = vlaneseq
        %v6199 = vshrl.u32 %v6198, 7
        %v6200 = vsub.s32 %v6197, %v6199
        %v6201 = vrot.slane %v6187, %v6200
        %v6202 = vcombine.low %v6194, %v6201
        %v6203 = vcombine.low %v5102, %v5104
        %v6204 = vcombine.low %v5173, %v5175
        %v6206 = vunpack.c.l.s4 1983009808
        %v6207 = vunpack.c.0.s8 %v6206
        %v6208 = vlaneseq
        %v6209 = vshrl.u32 %v6208, 7
        %v6210 = vsub.s32 %v6207, %v6209
        %v6211 = vrot.slane %v6203, %v6210
        %v6213 = vunpack.c.l.s4 1983009808
        %v6214 = vunpack.c.0.s8 %v6213
        %v6215 = vlaneseq
        %v6216 = vshrl.u32 %v6215, 7
        %v6217 = vsub.s32 %v6214, %v6216
        %v6218 = vrot.slane %v6204, %v6217
        %v6219 = vcombine.low %v6211, %v6218
        %v6220 = vcombine.low %v5244, %v5246
        %v6221 = vcombine.low %v5315, %v5317
        %v6223 = vunpack.c.l.s4 1983009808
        %v6224 = vunpack.c.0.s8 %v6223
        %v6225 = vlaneseq
        %v6226 = vshrl.u32 %v6225, 7
        %v6227 = vsub.s32 %v6224, %v6226
        %v6228 = vrot.slane %v6220, %v6227
        %v6230 = vunpack.c.l.s4 1983009808
        %v6231 = vunpack.c.0.s8 %v6230
        %v6232 = vlaneseq
        %v6233 = vshrl.u32 %v6232, 7
        %v6234 = vsub.s32 %v6231, %v6233
        %v6235 = vrot.slane %v6221, %v6234
        %v6236 = vcombine.low %v6228, %v6235
        %v6237 = vcombine.low %v5386, %v5388
        %v6238 = vcombine.low %v5457, %v5459
        %v6240 = vunpack.c.l.s4 1983009808
        %v6241 = vunpack.c.0.s8 %v6240
        %v6242 = vlaneseq
        %v6243 = vshrl.u32 %v6242, 7
        %v6244 = vsub.s32 %v6241, %v6243
        %v6245 = vrot.slane %v6237, %v6244
        %v6247 = vunpack.c.l.s4 1983009808
        %v6248 = vunpack.c.0.s8 %v6247
        %v6249 = vlaneseq
        %v6250 = vshrl.u32 %v6249, 7
        %v6251 = vsub.s32 %v6248, %v6250
        %v6252 = vrot.slane %v6238, %v6251
        %v6253 = vcombine.low %v6245, %v6252
        %v6254 = vcombine.low %v5528, %v5530
        %v6255 = vcombine.low %v5599, %v5601
        %v6257 = vunpack.c.l.s4 1983009808
        %v6258 = vunpack.c.0.s8 %v6257
        %v6259 = vlaneseq
        %v6260 = vshrl.u32 %v6259, 7
        %v6261 = vsub.s32 %v6258, %v6260
        %v6262 = vrot.slane %v6254, %v6261
        %v6264 = vunpack.c.l.s4 1983009808
        %v6265 = vunpack.c.0.s8 %v6264
        %v6266 = vlaneseq
        %v6267 = vshrl.u32 %v6266, 7
        %v6268 = vsub.s32 %v6265, %v6267
        %v6269 = vrot.slane %v6255, %v6268
        %v6270 = vcombine.low %v6262, %v6269
        %v6271 = vcombine.low %v5670, %v5672
        %v6272 = vcombine.low %v5741, %v5743
        %v6274 = vunpack.c.l.s4 1983009808
        %v6275 = vunpack.c.0.s8 %v6274
        %v6276 = vlaneseq
        %v6277 = vshrl.u32 %v6276, 7
        %v6278 = vsub.s32 %v6275, %v6277
        %v6279 = vrot.slane %v6271, %v6278
        %v6281 = vunpack.c.l.s4 1983009808
        %v6282 = vunpack.c.0.s8 %v6281
        %v6283 = vlaneseq
        %v6284 = vshrl.u32 %v6283, 7
        %v6285 = vsub.s32 %v6282, %v6284
        %v6286 = vrot.slane %v6272, %v6285
        %v6287 = vcombine.low %v6279, %v6286
        %v6288 = vcombine.low %v5812, %v5814
        %v6290 = vunpack.c.l.s4 1983009808
        %v6291 = vunpack.c.0.s8 %v6290
        %v6292 = vlaneseq
        %v6293 = vshrl.u32 %v6292, 7
        %v6294 = vsub.s32 %v6291, %v6293
        %v6295 = vrot.slane %v6288, %v6294
        %v6297 = vunpack.c.l.s4 1983009808
        %v6298 = vunpack.c.0.s8 %v6297
        %v6299 = vlaneseq
        %v6300 = vshrl.u32 %v6299, 7
        %v6301 = vsub.s32 %v6298, %v6300
        %v6302 = vrot.slane %v5883, %v6301
        %v6303 = vcombine.low %v6295, %v6302
        %6324 = vst [vmem:[%s867] sm:$0xff] %v5981
        %6325 = vst [vmem:[%s867 + $0x8] sm:$0xff] %v5998
        %6326 = vst [vmem:[%s867 + $0x10] sm:$0xff] %v6015
        %6327 = vst [vmem:[%s867 + $0x18] sm:$0xff] %v6032
        %6328 = vst [vmem:[%s867 + $0x20] sm:$0xff] %v6049
        %6329 = vst [vmem:[%s867 + $0x28] sm:$0xff] %v6066
        %6330 = vst [vmem:[%s867 + $0x30] sm:$0xff] %v6083
        %6331 = vst [vmem:[%s867 + $0x38] sm:$0xff] %v6100
        %6332 = vst [vmem:[%s867 + $0x40] sm:$0xff] %v6117
        %6333 = vst [vmem:[%s867 + $0x48] sm:$0xff] %v6134
        %6334 = vst [vmem:[%s867 + $0x50] sm:$0xff] %v6151
        %6335 = vst [vmem:[%s867 + $0x58] sm:$0xff] %v6168
        %6336 = vst [vmem:[%s867 + $0x60] sm:$0xff] %v6185
        %6337 = vst [vmem:[%s867 + $0x68] sm:$0xff] %v6202
        %6338 = vst [vmem:[%s867 + $0x70] sm:$0xff] %v6219
        %6339 = vst [vmem:[%s867 + $0x78] sm:$0xff] %v6236
        %6340 = vst [vmem:[%s867 + $0x80] sm:$0xff] %v6253
        %6341 = vst [vmem:[%s867 + $0x88] sm:$0xff] %v6270
        %6342 = vst [vmem:[%s867 + $0x90] sm:$0xff] %v6287
        %6343 = vst [vmem:[%s867 + $0x98] sm:$0x3f] %v6303
        %s6344 = sand.u32 %s128, 1
        %s6345 = scalar_lea.sflag [#allocation9], %s6344
        %s6346 = sand.u32 %s128, 1
        %s6347 = smul.addr %s6346, 158
        %s6348 = scalar_lea.vmem [#allocation8], %s6347
        // Predicated region
        $region544: #{tpu_custom_call.1} parent=54 // pred_check
          %p6349 = pneg %p138
        $region545: #{tpu_custom_call.1} parent=54 // pred_check_branch
          %6351 = sbr.rel (%p6349) target = $region547
        $region546: #{tpu_custom_call.1} parent=54 // pred_region
          %s6352 = smul.u32 79, %s26
          %s6354 = ssub.s32 2528, 2528
          %6355 = vsyncadd %s6345, %s6354
          %s6356 = smul.addr %s6352, 32
          %s6357 = scalar_lea.hbm %s6, %s6356
          %s6359 = sshll.u32 %s6348, 4
          %s6360 = int_to_ptr.vmem [resolvable:$true] %s6359
          %6362 = dma.vmem_to_hbm [thread:$0]  %s6360, 2528, %s6357, %s6345
        $region547: #{tpu_custom_call.1} parent=54 // pred_fallthru
          _
      $region55: #{tpu_custom_call.1} parent=5 // pred_fallthru
        _
      %p6363 = scmp.le.s32.totalorder 2, %s21
      // Predicated region
      $region548: #{tpu_custom_call.1} parent=5 // pred_check
        %p6364 = pneg %p6363
      $region549: #{tpu_custom_call.1} parent=5 // pred_check_branch
        %6366 = sbr.rel (%p6364) target = $region551
      $region550: #{tpu_custom_call.1} parent=5 // pred_region
        %s6367 = ssub.s32 %s21, 2
        // Predicated region
        $region552: #{tpu_custom_call.1} parent=550 // pred_check
          %p6368 = pneg %p144
        $region553: #{tpu_custom_call.1} parent=550 // pred_check_branch
          %6370 = sbr.rel (%p6368) target = $region555
        $region554: #{tpu_custom_call.1} parent=550 // pred_region
          %s6371 = sand.u32 %s129, 1
          %s6372 = scalar_lea.sflag [#allocation9], %s6371
          %s6373 = sand.u32 %s129, 1
          %s6374 = smul.addr %s6373, 158
          %s6375 = scalar_lea.vmem [#allocation8], %s6374
          %6376 = dma.done %s6372, 2528
        $region555: #{tpu_custom_call.1} parent=550 // pred_fallthru
          _
      $region551: #{tpu_custom_call.1} parent=5 // pred_fallthru
        _
    $region6: #{tpu_custom_call.1} parent=1 // loop_footer
      %s25 = sadd.s32 1, %s21
    $region7: #{tpu_custom_call.1} parent=1 // loop_footer_branch
      %20 = sbr.rel target = $region3
    $region8: #{tpu_custom_call.1} parent=1 // loop_exit
      _
    %6377 = vsyncpa [#allocation9], 1
    %s6378 = scalar_lea.sflag [#allocation9], 1
    %6379 = vsyncpa %s6378, 1
  %6380 = vsyncmov [#allocation4]
  %s6381 = vpop.sfrf %6380
  %p6382 = scmp.eq.s32.totalorder %s6381, 0
  %p6383 = pneg %p6382
  %6385 = shalt.err (%p6383)
  %s6386 = scalar_lea.sflag [#allocation4], 1
  %6387 = vsyncmov %s6386
  %s6388 = vpop.sfrf %6387
  %p6389 = scmp.eq.s32.totalorder %s6388, 0
  %p6390 = pneg %p6389
  %6392 = shalt.err (%p6390)
  %s6393 = scalar_lea.sflag [#allocation4], 2
  %6394 = vsyncmov %s6393
  %s6395 = vpop.sfrf %6394
  %p6396 = scmp.eq.s32.totalorder %s6395, 0
  %p6397 = pneg %p6396
  %6399 = shalt.err (%p6397)
  %s6400 = scalar_lea.sflag [#allocation4], 3
  %6401 = vsyncmov %s6400
  %s6402 = vpop.sfrf %6401
  %p6403 = scmp.eq.s32.totalorder %s6402, 0
  %p6404 = pneg %p6403
  %6406 = shalt.err (%p6404)
  %s6407 = scalar_lea.sflag [#allocation4], 4
  %6408 = vsyncmov %s6407
  %s6409 = vpop.sfrf %6408
  %p6410 = scmp.eq.s32.totalorder %s6409, 0
  %p6411 = pneg %p6410
  %6413 = shalt.err (%p6411)
  %s6414 = scalar_lea.sflag [#allocation4], 5
  %6415 = vsyncmov %s6414
  %s6416 = vpop.sfrf %6415
  %p6417 = scmp.eq.s32.totalorder %s6416, 0
  %p6418 = pneg %p6417
  %6420 = shalt.err (%p6418)
  %s6421 = scalar_lea.sflag [#allocation4], 6
  %6422 = vsyncmov %s6421
  %s6423 = vpop.sfrf %6422
  %p6424 = scmp.eq.s32.totalorder %s6423, 0
  %p6425 = pneg %p6424
  %6427 = shalt.err (%p6425)
  %s6428 = scalar_lea.sflag [#allocation4], 7
  %6429 = vsyncmov %s6428
  %s6430 = vpop.sfrf %6429
  %p6431 = scmp.eq.s32.totalorder %s6430, 0
  %p6432 = pneg %p6431
  %6434 = shalt.err (%p6432)
  %s6435 = scalar_lea.sflag [#allocation4], 8
  %6436 = vsyncmov %s6435
  %s6437 = vpop.sfrf %6436
  %p6438 = scmp.eq.s32.totalorder %s6437, 0
  %p6439 = pneg %p6438
  %6441 = shalt.err (%p6439)
  %s6442 = scalar_lea.sflag [#allocation4], 9
  %6443 = vsyncmov %s6442
  %s6444 = vpop.sfrf %6443
  %p6445 = scmp.eq.s32.totalorder %s6444, 0
  %p6446 = pneg %p6445
  %6448 = shalt.err (%p6446)
  %s6449 = scalar_lea.sflag [#allocation4], 10
  %6450 = vsyncmov %s6449
  %s6451 = vpop.sfrf %6450
  %p6452 = scmp.eq.s32.totalorder %s6451, 0
  %p6453 = pneg %p6452
  %6455 = shalt.err (%p6453)
  %s6456 = scalar_lea.sflag [#allocation4], 11
  %6457 = vsyncmov %s6456
  %s6458 = vpop.sfrf %6457
  %p6459 = scmp.eq.s32.totalorder %s6458, 0
  %p6460 = pneg %p6459
  %6462 = shalt.err (%p6460)
  %s6463 = scalar_lea.sflag [#allocation4], 12
  %6464 = vsyncmov %s6463
  %s6465 = vpop.sfrf %6464
  %p6466 = scmp.eq.s32.totalorder %s6465, 0
  %p6467 = pneg %p6466
  %6469 = shalt.err (%p6467)
  %s6470 = scalar_lea.sflag [#allocation4], 13
  %6471 = vsyncmov %s6470
  %s6472 = vpop.sfrf %6471
  %p6473 = scmp.eq.s32.totalorder %s6472, 0
  %p6474 = pneg %p6473
  %6476 = shalt.err (%p6474)
  %s6477 = scalar_lea.sflag [#allocation4], 14
  %6478 = vsyncmov %s6477
  %s6479 = vpop.sfrf %6478
  %p6480 = scmp.eq.s32.totalorder %s6479, 0
  %p6481 = pneg %p6480
  %6483 = shalt.err (%p6481)
  %s6484 = scalar_lea.sflag [#allocation4], 15
  %6485 = vsyncmov %s6484
  %s6486 = vpop.sfrf %6485
  %p6487 = scmp.eq.s32.totalorder %s6486, 0
  %p6488 = pneg %p6487
  %6490 = shalt.err (%p6488)

</llo_original>
